<compile_context>
chip_gen: v7x
topology: tpu7x:2x2x1
jax: 0.10.0
libtpu: 0.0.40
codegen_flags: <defaults>
</compile_context>

<pallas_src>
import math

import jax
import jax.numpy as jnp
from jax.experimental import pallas as pl
from jax.experimental.pallas import tpu as pltpu  # noqa: F401  (kept for TPU-specific tuning hooks)

# -------------------- small, lane-aligned hyperparameters --------------------
D_MODEL = 128
N_HEADS = 4
D_FF = 256
ENC_DIM = 128
N_LAYERS = 2
VOCAB = 128
LN_EPS = 1e-5


# ================================ fused Pallas kernel ================================

def _decoder_kernel(
    emb_ref, pe_ref, enc_ref, encmask_ref,
    wqkv1_ref, bqkv1_ref, wo1_ref, bo1_ref,
    wq2_ref, bq2_ref, wkv2_ref, bkv2_ref, wo2_ref, bo2_ref,
    wf1_ref, bf1_ref, wf2_ref, bf2_ref,
    ln1g_ref, ln1b_ref, ln2g_ref, ln2b_ref, ln3g_ref, ln3b_ref,
    embT_ref, outb_ref,
    logits_ref, attn1_ref, attn2_ref,
):
    # Static shapes derived from the output refs.
    BH, T, _ = attn1_ref.shape
    S = attn2_ref.shape[2]
    H = N_HEADS
    B = BH // H
    D = D_MODEL
    dk = D // H
    scale = 1.0 / math.sqrt(dk)

    def layer_norm(h, g, b):
        mean = jnp.mean(h, axis=-1, keepdims=True)
        var = jnp.mean((h - mean) ** 2, axis=-1, keepdims=True)
        return (h - mean) * jax.lax.rsqrt(var + LN_EPS) * g + b

    def softmax(scores):
        m = jnp.max(scores, axis=-1, keepdims=True)
        e = jnp.exp(scores - m)
        s = jnp.sum(e, axis=-1, keepdims=True)
        return e * pl.reciprocal(s, approx=True)

    def qk(q_bh, k_bh):
        # q @ k.T without materializing a transpose (contract last dims).
        return jax.lax.dot_general(
            q_bh, k_bh, (((1,), (1,)), ((), ())),
            preferred_element_type=jnp.float32) * scale

    # Embedding scale + positional encoding (dropout = identity in eval mode).
    x = emb_ref[...] * math.sqrt(D) + pe_ref[...]              # (B*T, D)
    enc = enc_ref[...]                                         # (B*S, ENC_DIM)
    enc_mask = encmask_ref[...]                                # (B, S) float {0,1}

    # Causal mask built in-register (get_transformer_decoder_mask).
    row = jax.lax.broadcasted_iota(jnp.int32, (T, T), 0)
    col = jax.lax.broadcasted_iota(jnp.int32, (T, T), 1)
    causal = col <= row

    for l in range(N_LAYERS):
        last = l == N_LAYERS - 1

        # ---------------- self-attention sublayer (post-norm) ----------------
        residual = x
        qkv = jnp.dot(x, wqkv1_ref[l], preferred_element_type=jnp.float32) + bqkv1_ref[l]
        q = qkv[:, 0 * D:1 * D]
        k = qkv[:, 1 * D:2 * D]
        v = qkv[:, 2 * D:3 * D]
        ctx_rows = []
        for b in range(B):
            head_ctx = []
            for h in range(H):
                q_bh = q[b * T:(b + 1) * T, h * dk:(h + 1) * dk]
                k_bh = k[b * T:(b + 1) * T, h * dk:(h + 1) * dk]
                v_bh = v[b * T:(b + 1) * T, h * dk:(h + 1) * dk]
                scores = jnp.where(causal, qk(q_bh, k_bh), -1e9)
                p = softmax(scores)
                head_ctx.append(jnp.dot(p, v_bh, preferred_element_type=jnp.float32))
                if last:
                    attn1_ref[b * H + h] = p
            ctx_rows.append(jnp.concatenate(head_ctx, axis=1))   # (T, D)
        ctx = jnp.concatenate(ctx_rows, axis=0)                  # (B*T, D)
        a = jnp.dot(ctx, wo1_ref[l], preferred_element_type=jnp.float32) + bo1_ref[l]
        x = layer_norm(residual + a, ln1g_ref[l], ln1b_ref[l])

        # ---------------- cross-attention sublayer ----------------
        residual = x
        q2 = jnp.dot(x, wq2_ref[l], preferred_element_type=jnp.float32) + bq2_ref[l]
        kv2 = jnp.dot(enc, wkv2_ref[l], preferred_element_type=jnp.float32) + bkv2_ref[l]
        k2 = kv2[:, 0 * D:1 * D]
        v2 = kv2[:, 1 * D:2 * D]
        ctx_rows = []
        for b in range(B):
            m_b = enc_mask[b:b + 1, :] > 0.0                     # (1, S) -> bcast to (T, S)
            head_ctx = []
            for h in range(H):
                q_bh = q2[b * T:(b + 1) * T, h * dk:(h + 1) * dk]
                k_bh = k2[b * S:(b + 1) * S, h * dk:(h + 1) * dk]
                v_bh = v2[b * S:(b + 1) * S, h * dk:(h + 1) * dk]
                scores = jnp.where(m_b, qk(q_bh, k_bh), -1e9)
                p = softmax(scores)
                head_ctx.append(jnp.dot(p, v_bh, preferred_element_type=jnp.float32))
                if last:
                    attn2_ref[b * H + h] = p
            ctx_rows.append(jnp.concatenate(head_ctx, axis=1))   # (T, D)
        ctx = jnp.concatenate(ctx_rows, axis=0)                  # (B*T, D)
        a = jnp.dot(ctx, wo2_ref[l], preferred_element_type=jnp.float32) + bo2_ref[l]
        x = layer_norm(residual + a, ln2g_ref[l], ln2b_ref[l])

        # ---------------- position-wise feed-forward sublayer ----------------
        residual = x
        hidden = jnp.maximum(
            jnp.dot(x, wf1_ref[l], preferred_element_type=jnp.float32) + bf1_ref[l], 0.0)
        f = jnp.dot(hidden, wf2_ref[l], preferred_element_type=jnp.float32) + bf2_ref[l]
        x = layer_norm(residual + f, ln3g_ref[l], ln3b_ref[l])

    # Tied output projection (lane-dense (B*T, VOCAB=128) store).
    logits_ref[...] = (
        jnp.dot(x, embT_ref[...], preferred_element_type=jnp.float32) + outb_ref[...])


# ================================ JAX glue ================================

def positional_encoding(length, d_model):
    pos = jnp.arange(length, dtype=jnp.float32)[:, None]
    div = jnp.exp(jnp.arange(0, d_model, 2, dtype=jnp.float32)
                  * (-math.log(10000.0) / d_model))
    pe = jnp.zeros((length, d_model), jnp.float32)
    pe = pe.at[:, 0::2].set(jnp.sin(pos * div))
    pe = pe.at[:, 1::2].set(jnp.cos(pos * div))
    return pe


def transformer_decoder(params, tokens, enc_out, enc_mask):
    B, T = tokens.shape
    S = enc_out.shape[1]
    D = D_MODEL
    H = N_HEADS

    # TODO(synk): embedding lookup (gather) is done in plain JAX glue, not in Pallas.
    emb = jnp.take(params["embedding"], tokens, axis=0).reshape(B * T, D)
    pe = jnp.broadcast_to(positional_encoding(T, D)[None], (B, T, D)).reshape(B * T, D)
    enc_flat = enc_out.reshape(B * S, ENC_DIM)

    st = params["stacked"]
    args = (
        emb, pe, enc_flat, enc_mask.astype(jnp.float32),
        st["wqkv1"], st["bqkv1"], st["wo1"], st["bo1"],
        st["wq2"], st["bq2"], st["wkv2"], st["bkv2"], st["wo2"], st["bo2"],
        st["wf1"], st["bf1"], st["wf2"], st["bf2"],
        st["ln1g"], st["ln1b"], st["ln2g"], st["ln2b"], st["ln3g"], st["ln3b"],
        params["embedding_t"], params["out_bias"].reshape(1, VOCAB),
    )

    logits, attn1, attn2 = pl.pallas_call(
        _decoder_kernel,
        out_shape=(
            jax.ShapeDtypeStruct((B * T, VOCAB), jnp.float32),
            jax.ShapeDtypeStruct((B * H, T, T), jnp.float32),
            jax.ShapeDtypeStruct((B * H, T, S), jnp.float32),
        ),
    )(*args)

    return (logits.reshape(B, T, VOCAB),
            {"attn1": attn1.reshape(B, H, T, T),
             "attn2": attn2.reshape(B, H, T, S)})


def init_params(key):
    keys = iter(jax.random.split(key, 16))

    def nrm(shape):
        return 0.02 * jax.random.normal(next(keys), shape, jnp.float32)

    L, D, F, E, V = N_LAYERS, D_MODEL, D_FF, ENC_DIM, VOCAB
    zeros = lambda s: jnp.zeros(s, jnp.float32)
    ones = lambda s: jnp.ones(s, jnp.float32)

    embedding = nrm((V, D))
    stacked = {
        # self-attn: fused QKV, output proj
        "wqkv1": nrm((L, D, 3 * D)), "bqkv1": zeros((L, 1, 3 * D)),
        "wo1": nrm((L, D, D)), "bo1": zeros((L, 1, D)),
        # cross-attn: Q from x, fused KV from enc_out, output proj
        "wq2": nrm((L, D, D)), "bq2": zeros((L, 1, D)),
        "wkv2": nrm((L, E, 2 * D)), "bkv2": zeros((L, 1, 2 * D)),
        "wo2": nrm((L, D, D)), "bo2": zeros((L, 1, D)),
        # FFN
        "wf1": nrm((L, D, F)), "bf1": zeros((L, 1, F)),
        "wf2": nrm((L, F, D)), "bf2": zeros((L, 1, D)),
        # LayerNorms
        "ln1g": ones((L, 1, D)), "ln1b": zeros((L, 1, D)),
        "ln2g": ones((L, 1, D)), "ln2b": zeros((L, 1, D)),
        "ln3g": ones((L, 1, D)), "ln3b": zeros((L, 1, D)),
    }
    return {
        "embedding": embedding,
        "embedding_t": embedding.T,          # pre-transposed tied output weight
        "out_bias": zeros((V,)),
        "stacked": stacked,
    }


if __name__ == "__main__":
    key = jax.random.PRNGKey(0)
    k_tok, k_enc, k_par = jax.random.split(key, 3)

    B, T, S = 2, 8, 16
    tokens = jax.random.randint(k_tok, (B, T), 0, VOCAB, dtype=jnp.int32)
    enc_out = jax.random.normal(k_enc, (B, S, ENC_DIM), jnp.float32)
    # encoder padding mask: batch 0 fully valid, batch 1 has 4 padded frames
    enc_mask = (jnp.arange(S)[None, :] < jnp.array([S, S - 4])[:, None]).astype(jnp.float32)

    params = init_params(k_par)

    fwd = jax.jit(transformer_decoder)
    logits, attns = fwd(params, tokens, enc_out, enc_mask)
    jax.block_until_ready((logits, attns))

    assert logits.shape == (B, T, VOCAB)
    assert attns["attn1"].shape == (B, N_HEADS, T, T)
    assert attns["attn2"].shape == (B, N_HEADS, T, S)
    assert bool(jnp.all(jnp.isfinite(logits)))
    assert bool(jnp.all(jnp.isfinite(attns["attn1"])))
    assert bool(jnp.all(jnp.isfinite(attns["attn2"])))
    print("KERNEL_OK")
</pallas_src>

<mosaic_0001>
module attributes {stable_mosaic.version = 11 : i64} {
  func.func @_decoder_kernel(%arg0: memref<16x128xf32, #tpu.memory_space<vmem>>, %arg1: memref<16x128xf32, #tpu.memory_space<vmem>>, %arg2: memref<32x128xf32, #tpu.memory_space<vmem>>, %arg3: memref<2x16xf32, #tpu.memory_space<vmem>>, %arg4: memref<2x128x384xf32, #tpu.memory_space<vmem>>, %arg5: memref<2x1x384xf32, #tpu.memory_space<vmem>>, %arg6: memref<2x128x128xf32, #tpu.memory_space<vmem>>, %arg7: memref<2x1x128xf32, #tpu.memory_space<vmem>>, %arg8: memref<2x128x128xf32, #tpu.memory_space<vmem>>, %arg9: memref<2x1x128xf32, #tpu.memory_space<vmem>>, %arg10: memref<2x128x256xf32, #tpu.memory_space<vmem>>, %arg11: memref<2x1x256xf32, #tpu.memory_space<vmem>>, %arg12: memref<2x128x128xf32, #tpu.memory_space<vmem>>, %arg13: memref<2x1x128xf32, #tpu.memory_space<vmem>>, %arg14: memref<2x128x256xf32, #tpu.memory_space<vmem>>, %arg15: memref<2x1x256xf32, #tpu.memory_space<vmem>>, %arg16: memref<2x256x128xf32, #tpu.memory_space<vmem>>, %arg17: memref<2x1x128xf32, #tpu.memory_space<vmem>>, %arg18: memref<2x1x128xf32, #tpu.memory_space<vmem>>, %arg19: memref<2x1x128xf32, #tpu.memory_space<vmem>>, %arg20: memref<2x1x128xf32, #tpu.memory_space<vmem>>, %arg21: memref<2x1x128xf32, #tpu.memory_space<vmem>>, %arg22: memref<2x1x128xf32, #tpu.memory_space<vmem>>, %arg23: memref<2x1x128xf32, #tpu.memory_space<vmem>>, %arg24: memref<128x128xf32, #tpu.memory_space<vmem>>, %arg25: memref<1x128xf32, #tpu.memory_space<vmem>>, %arg26: memref<16x128xf32, #tpu.memory_space<vmem>>, %arg27: memref<8x8x8xf32, #tpu.memory_space<vmem>>, %arg28: memref<8x8x16xf32, #tpu.memory_space<vmem>>) attributes {dimension_semantics = [], scalar_prefetch = 0 : i64, scratch_operands = 0 : i64, tpu.core_type = #tpu.core_type<tc>} {
    %c0 = arith.constant 0 : index
    %c0_0 = arith.constant 0 : index
    %0 = vector.load %arg0[%c0, %c0_0] : memref<16x128xf32, #tpu.memory_space<vmem>>, vector<16x128xf32>
    %cst = arith.constant 11.3137083 : f32
    %1 = vector.broadcast %cst : f32 to vector<16x128xf32>
    %2 = arith.mulf %0, %1 : vector<16x128xf32>
    %c0_1 = arith.constant 0 : index
    %c0_2 = arith.constant 0 : index
    %3 = vector.load %arg1[%c0_1, %c0_2] : memref<16x128xf32, #tpu.memory_space<vmem>>, vector<16x128xf32>
    %4 = arith.addf %2, %3 : vector<16x128xf32>
    %c0_3 = arith.constant 0 : index
    %c0_4 = arith.constant 0 : index
    %5 = vector.load %arg2[%c0_3, %c0_4] : memref<32x128xf32, #tpu.memory_space<vmem>>, vector<32x128xf32>
    %c0_5 = arith.constant 0 : index
    %c0_6 = arith.constant 0 : index
    %6 = vector.load %arg3[%c0_5, %c0_6] : memref<2x16xf32, #tpu.memory_space<vmem>>, vector<2x16xf32>
    %7 = tpu.iota {dimensions = array<i32: 0>} : vector<8x8xi32>
    %8 = tpu.iota {dimensions = array<i32: 1>} : vector<8x8xi32>
    %9 = arith.cmpi sle, %8, %7 : vector<8x8xi32>
    %c0_7 = arith.constant 0 : index
    %c0_8 = arith.constant 0 : index
    %c0_9 = arith.constant 0 : index
    %10 = vector.load %arg4[%c0_7, %c0_8, %c0_9] : memref<2x128x384xf32, #tpu.memory_space<vmem>>, vector<1x128x384xf32>
    %11 = vector.shape_cast %10 : vector<1x128x384xf32> to vector<128x384xf32>
    %cst_10 = arith.constant dense<0.000000e+00> : vector<16x384xf32>
    %12 = tpu.matmul %4, %11, %cst_10 {dimension_numbers = #tpu.dot_dimension_numbers<[1], [0], [0], [1], [0, 0, 1, 1], [], []>} : vector<16x128xf32>, vector<128x384xf32>, vector<16x384xf32> -> vector<16x384xf32>
    %c0_11 = arith.constant 0 : index
    %c0_12 = arith.constant 0 : index
    %c0_13 = arith.constant 0 : index
    %13 = vector.load %arg5[%c0_11, %c0_12, %c0_13] : memref<2x1x384xf32, #tpu.memory_space<vmem>>, vector<1x1x384xf32>
    %14 = vector.shape_cast %13 : vector<1x1x384xf32> to vector<1x384xf32>
    %15 = vector.broadcast %14 : vector<1x384xf32> to vector<16x384xf32>
    %16 = arith.addf %12, %15 : vector<16x384xf32>
    %17 = vector.extract_strided_slice %16 {offsets = [0, 0], sizes = [16, 128], strides = [1, 1]} : vector<16x384xf32> to vector<16x128xf32>
    %18 = vector.extract_strided_slice %16 {offsets = [0, 128], sizes = [16, 128], strides = [1, 1]} : vector<16x384xf32> to vector<16x128xf32>
    %19 = vector.extract_strided_slice %16 {offsets = [0, 256], sizes = [16, 128], strides = [1, 1]} : vector<16x384xf32> to vector<16x128xf32>
    %20 = vector.extract_strided_slice %17 {offsets = [0, 0], sizes = [8, 32], strides = [1, 1]} : vector<16x128xf32> to vector<8x32xf32>
    %21 = vector.extract_strided_slice %18 {offsets = [0, 0], sizes = [8, 32], strides = [1, 1]} : vector<16x128xf32> to vector<8x32xf32>
    %22 = vector.extract_strided_slice %19 {offsets = [0, 0], sizes = [8, 32], strides = [1, 1]} : vector<16x128xf32> to vector<8x32xf32>
    %cst_14 = arith.constant dense<0.000000e+00> : vector<8x8xf32>
    %23 = tpu.matmul %20, %21, %cst_14 {dimension_numbers = #tpu.dot_dimension_numbers<[1], [1], [0], [0], [0, 0, 1, 0], [], []>} : vector<8x32xf32>, vector<8x32xf32>, vector<8x8xf32> -> vector<8x8xf32>
    %cst_15 = arith.constant 0.176776692 : f32
    %24 = vector.broadcast %cst_15 : f32 to vector<8x8xf32>
    %25 = arith.mulf %23, %24 : vector<8x8xf32>
    %cst_16 = arith.constant -1.000000e+09 : f32
    %26 = vector.broadcast %cst_16 : f32 to vector<8x8xf32>
    %27 = arith.select %9, %25, %26 : vector<8x8xi1>, vector<8x8xf32>
    %cst_17 = arith.constant dense<0xFF800000> : vector<8xf32>
    %28 = vector.multi_reduction <maximumf>, %27, %cst_17 [1] : vector<8x8xf32> to vector<8xf32>
    %29 = vector.shape_cast %28 : vector<8xf32> to vector<8x1xf32>
    %30 = vector.broadcast %29 : vector<8x1xf32> to vector<8x8xf32>
    %31 = arith.subf %27, %30 : vector<8x8xf32>
    %32 = math.exp %31 : vector<8x8xf32>
    %cst_18 = arith.constant dense<0.000000e+00> : vector<8xf32>
    %33 = vector.multi_reduction <add>, %32, %cst_18 [1] : vector<8x8xf32> to vector<8xf32>
    %34 = vector.shape_cast %33 : vector<8xf32> to vector<8x1xf32>
    %35 = tpu.reciprocal %34 {approx = true} : vector<8x1xf32> -> vector<8x1xf32>
    %36 = vector.broadcast %35 : vector<8x1xf32> to vector<8x8xf32>
    %37 = arith.mulf %32, %36 : vector<8x8xf32>
    %cst_19 = arith.constant dense<0.000000e+00> : vector<8x32xf32>
    %38 = tpu.matmul %37, %22, %cst_19 {dimension_numbers = #tpu.dot_dimension_numbers<[1], [0], [0], [1], [0, 0, 1, 1], [], []>} : vector<8x8xf32>, vector<8x32xf32>, vector<8x32xf32> -> vector<8x32xf32>
    %39 = vector.extract_strided_slice %17 {offsets = [0, 32], sizes = [8, 32], strides = [1, 1]} : vector<16x128xf32> to vector<8x32xf32>
    %40 = vector.extract_strided_slice %18 {offsets = [0, 32], sizes = [8, 32], strides = [1, 1]} : vector<16x128xf32> to vector<8x32xf32>
    %41 = vector.extract_strided_slice %19 {offsets = [0, 32], sizes = [8, 32], strides = [1, 1]} : vector<16x128xf32> to vector<8x32xf32>
    %cst_20 = arith.constant dense<0.000000e+00> : vector<8x8xf32>
    %42 = tpu.matmul %39, %40, %cst_20 {dimension_numbers = #tpu.dot_dimension_numbers<[1], [1], [0], [0], [0, 0, 1, 0], [], []>} : vector<8x32xf32>, vector<8x32xf32>, vector<8x8xf32> -> vector<8x8xf32>
    %cst_21 = arith.constant 0.176776692 : f32
    %43 = vector.broadcast %cst_21 : f32 to vector<8x8xf32>
    %44 = arith.mulf %42, %43 : vector<8x8xf32>
    %cst_22 = arith.constant -1.000000e+09 : f32
    %45 = vector.broadcast %cst_22 : f32 to vector<8x8xf32>
    %46 = arith.select %9, %44, %45 : vector<8x8xi1>, vector<8x8xf32>
    %cst_23 = arith.constant dense<0xFF800000> : vector<8xf32>
    %47 = vector.multi_reduction <maximumf>, %46, %cst_23 [1] : vector<8x8xf32> to vector<8xf32>
    %48 = vector.shape_cast %47 : vector<8xf32> to vector<8x1xf32>
    %49 = vector.broadcast %48 : vector<8x1xf32> to vector<8x8xf32>
    %50 = arith.subf %46, %49 : vector<8x8xf32>
    %51 = math.exp %50 : vector<8x8xf32>
    %cst_24 = arith.constant dense<0.000000e+00> : vector<8xf32>
    %52 = vector.multi_reduction <add>, %51, %cst_24 [1] : vector<8x8xf32> to vector<8xf32>
    %53 = vector.shape_cast %52 : vector<8xf32> to vector<8x1xf32>
    %54 = tpu.reciprocal %53 {approx = true} : vector<8x1xf32> -> vector<8x1xf32>
    %55 = vector.broadcast %54 : vector<8x1xf32> to vector<8x8xf32>
    %56 = arith.mulf %51, %55 : vector<8x8xf32>
    %cst_25 = arith.constant dense<0.000000e+00> : vector<8x32xf32>
    %57 = tpu.matmul %56, %41, %cst_25 {dimension_numbers = #tpu.dot_dimension_numbers<[1], [0], [0], [1], [0, 0, 1, 1], [], []>} : vector<8x8xf32>, vector<8x32xf32>, vector<8x32xf32> -> vector<8x32xf32>
    %58 = vector.extract_strided_slice %17 {offsets = [0, 64], sizes = [8, 32], strides = [1, 1]} : vector<16x128xf32> to vector<8x32xf32>
    %59 = vector.extract_strided_slice %18 {offsets = [0, 64], sizes = [8, 32], strides = [1, 1]} : vector<16x128xf32> to vector<8x32xf32>
    %60 = vector.extract_strided_slice %19 {offsets = [0, 64], sizes = [8, 32], strides = [1, 1]} : vector<16x128xf32> to vector<8x32xf32>
    %cst_26 = arith.constant dense<0.000000e+00> : vector<8x8xf32>
    %61 = tpu.matmul %58, %59, %cst_26 {dimension_numbers = #tpu.dot_dimension_numbers<[1], [1], [0], [0], [0, 0, 1, 0], [], []>} : vector<8x32xf32>, vector<8x32xf32>, vector<8x8xf32> -> vector<8x8xf32>
    %cst_27 = arith.constant 0.176776692 : f32
    %62 = vector.broadcast %cst_27 : f32 to vector<8x8xf32>
    %63 = arith.mulf %61, %62 : vector<8x8xf32>
    %cst_28 = arith.constant -1.000000e+09 : f32
    %64 = vector.broadcast %cst_28 : f32 to vector<8x8xf32>
    %65 = arith.select %9, %63, %64 : vector<8x8xi1>, vector<8x8xf32>
    %cst_29 = arith.constant dense<0xFF800000> : vector<8xf32>
    %66 = vector.multi_reduction <maximumf>, %65, %cst_29 [1] : vector<8x8xf32> to vector<8xf32>
    %67 = vector.shape_cast %66 : vector<8xf32> to vector<8x1xf32>
    %68 = vector.broadcast %67 : vector<8x1xf32> to vector<8x8xf32>
    %69 = arith.subf %65, %68 : vector<8x8xf32>
    %70 = math.exp %69 : vector<8x8xf32>
    %cst_30 = arith.constant dense<0.000000e+00> : vector<8xf32>
    %71 = vector.multi_reduction <add>, %70, %cst_30 [1] : vector<8x8xf32> to vector<8xf32>
    %72 = vector.shape_cast %71 : vector<8xf32> to vector<8x1xf32>
    %73 = tpu.reciprocal %72 {approx = true} : vector<8x1xf32> -> vector<8x1xf32>
    %74 = vector.broadcast %73 : vector<8x1xf32> to vector<8x8xf32>
    %75 = arith.mulf %70, %74 : vector<8x8xf32>
    %cst_31 = arith.constant dense<0.000000e+00> : vector<8x32xf32>
    %76 = tpu.matmul %75, %60, %cst_31 {dimension_numbers = #tpu.dot_dimension_numbers<[1], [0], [0], [1], [0, 0, 1, 1], [], []>} : vector<8x8xf32>, vector<8x32xf32>, vector<8x32xf32> -> vector<8x32xf32>
    %77 = vector.extract_strided_slice %17 {offsets = [0, 96], sizes = [8, 32], strides = [1, 1]} : vector<16x128xf32> to vector<8x32xf32>
    %78 = vector.extract_strided_slice %18 {offsets = [0, 96], sizes = [8, 32], strides = [1, 1]} : vector<16x128xf32> to vector<8x32xf32>
    %79 = vector.extract_strided_slice %19 {offsets = [0, 96], sizes = [8, 32], strides = [1, 1]} : vector<16x128xf32> to vector<8x32xf32>
    %cst_32 = arith.constant dense<0.000000e+00> : vector<8x8xf32>
    %80 = tpu.matmul %77, %78, %cst_32 {dimension_numbers = #tpu.dot_dimension_numbers<[1], [1], [0], [0], [0, 0, 1, 0], [], []>} : vector<8x32xf32>, vector<8x32xf32>, vector<8x8xf32> -> vector<8x8xf32>
    %cst_33 = arith.constant 0.176776692 : f32
    %81 = vector.broadcast %cst_33 : f32 to vector<8x8xf32>
    %82 = arith.mulf %80, %81 : vector<8x8xf32>
    %cst_34 = arith.constant -1.000000e+09 : f32
    %83 = vector.broadcast %cst_34 : f32 to vector<8x8xf32>
    %84 = arith.select %9, %82, %83 : vector<8x8xi1>, vector<8x8xf32>
    %cst_35 = arith.constant dense<0xFF800000> : vector<8xf32>
    %85 = vector.multi_reduction <maximumf>, %84, %cst_35 [1] : vector<8x8xf32> to vector<8xf32>
    %86 = vector.shape_cast %85 : vector<8xf32> to vector<8x1xf32>
    %87 = vector.broadcast %86 : vector<8x1xf32> to vector<8x8xf32>
    %88 = arith.subf %84, %87 : vector<8x8xf32>
    %89 = math.exp %88 : vector<8x8xf32>
    %cst_36 = arith.constant dense<0.000000e+00> : vector<8xf32>
    %90 = vector.multi_reduction <add>, %89, %cst_36 [1] : vector<8x8xf32> to vector<8xf32>
    %91 = vector.shape_cast %90 : vector<8xf32> to vector<8x1xf32>
    %92 = tpu.reciprocal %91 {approx = true} : vector<8x1xf32> -> vector<8x1xf32>
    %93 = vector.broadcast %92 : vector<8x1xf32> to vector<8x8xf32>
    %94 = arith.mulf %89, %93 : vector<8x8xf32>
    %cst_37 = arith.constant dense<0.000000e+00> : vector<8x32xf32>
    %95 = tpu.matmul %94, %79, %cst_37 {dimension_numbers = #tpu.dot_dimension_numbers<[1], [0], [0], [1], [0, 0, 1, 1], [], []>} : vector<8x8xf32>, vector<8x32xf32>, vector<8x32xf32> -> vector<8x32xf32>
    %96 = tpu.concatenate %38, %57, %76, %95 in 1 : vector<8x32xf32>, vector<8x32xf32>, vector<8x32xf32>, vector<8x32xf32> -> vector<8x128xf32>
    %97 = vector.extract_strided_slice %17 {offsets = [8, 0], sizes = [8, 32], strides = [1, 1]} : vector<16x128xf32> to vector<8x32xf32>
    %98 = vector.extract_strided_slice %18 {offsets = [8, 0], sizes = [8, 32], strides = [1, 1]} : vector<16x128xf32> to vector<8x32xf32>
    %99 = vector.extract_strided_slice %19 {offsets = [8, 0], sizes = [8, 32], strides = [1, 1]} : vector<16x128xf32> to vector<8x32xf32>
    %cst_38 = arith.constant dense<0.000000e+00> : vector<8x8xf32>
    %100 = tpu.matmul %97, %98, %cst_38 {dimension_numbers = #tpu.dot_dimension_numbers<[1], [1], [0], [0], [0, 0, 1, 0], [], []>} : vector<8x32xf32>, vector<8x32xf32>, vector<8x8xf32> -> vector<8x8xf32>
    %cst_39 = arith.constant 0.176776692 : f32
    %101 = vector.broadcast %cst_39 : f32 to vector<8x8xf32>
    %102 = arith.mulf %100, %101 : vector<8x8xf32>
    %cst_40 = arith.constant -1.000000e+09 : f32
    %103 = vector.broadcast %cst_40 : f32 to vector<8x8xf32>
    %104 = arith.select %9, %102, %103 : vector<8x8xi1>, vector<8x8xf32>
    %cst_41 = arith.constant dense<0xFF800000> : vector<8xf32>
    %105 = vector.multi_reduction <maximumf>, %104, %cst_41 [1] : vector<8x8xf32> to vector<8xf32>
    %106 = vector.shape_cast %105 : vector<8xf32> to vector<8x1xf32>
    %107 = vector.broadcast %106 : vector<8x1xf32> to vector<8x8xf32>
    %108 = arith.subf %104, %107 : vector<8x8xf32>
    %109 = math.exp %108 : vector<8x8xf32>
    %cst_42 = arith.constant dense<0.000000e+00> : vector<8xf32>
    %110 = vector.multi_reduction <add>, %109, %cst_42 [1] : vector<8x8xf32> to vector<8xf32>
    %111 = vector.shape_cast %110 : vector<8xf32> to vector<8x1xf32>
    %112 = tpu.reciprocal %111 {approx = true} : vector<8x1xf32> -> vector<8x1xf32>
    %113 = vector.broadcast %112 : vector<8x1xf32> to vector<8x8xf32>
    %114 = arith.mulf %109, %113 : vector<8x8xf32>
    %cst_43 = arith.constant dense<0.000000e+00> : vector<8x32xf32>
    %115 = tpu.matmul %114, %99, %cst_43 {dimension_numbers = #tpu.dot_dimension_numbers<[1], [0], [0], [1], [0, 0, 1, 1], [], []>} : vector<8x8xf32>, vector<8x32xf32>, vector<8x32xf32> -> vector<8x32xf32>
    %116 = vector.extract_strided_slice %17 {offsets = [8, 32], sizes = [8, 32], strides = [1, 1]} : vector<16x128xf32> to vector<8x32xf32>
    %117 = vector.extract_strided_slice %18 {offsets = [8, 32], sizes = [8, 32], strides = [1, 1]} : vector<16x128xf32> to vector<8x32xf32>
    %118 = vector.extract_strided_slice %19 {offsets = [8, 32], sizes = [8, 32], strides = [1, 1]} : vector<16x128xf32> to vector<8x32xf32>
    %cst_44 = arith.constant dense<0.000000e+00> : vector<8x8xf32>
    %119 = tpu.matmul %116, %117, %cst_44 {dimension_numbers = #tpu.dot_dimension_numbers<[1], [1], [0], [0], [0, 0, 1, 0], [], []>} : vector<8x32xf32>, vector<8x32xf32>, vector<8x8xf32> -> vector<8x8xf32>
    %cst_45 = arith.constant 0.176776692 : f32
    %120 = vector.broadcast %cst_45 : f32 to vector<8x8xf32>
    %121 = arith.mulf %119, %120 : vector<8x8xf32>
    %cst_46 = arith.constant -1.000000e+09 : f32
    %122 = vector.broadcast %cst_46 : f32 to vector<8x8xf32>
    %123 = arith.select %9, %121, %122 : vector<8x8xi1>, vector<8x8xf32>
    %cst_47 = arith.constant dense<0xFF800000> : vector<8xf32>
    %124 = vector.multi_reduction <maximumf>, %123, %cst_47 [1] : vector<8x8xf32> to vector<8xf32>
    %125 = vector.shape_cast %124 : vector<8xf32> to vector<8x1xf32>
    %126 = vector.broadcast %125 : vector<8x1xf32> to vector<8x8xf32>
    %127 = arith.subf %123, %126 : vector<8x8xf32>
    %128 = math.exp %127 : vector<8x8xf32>
    %cst_48 = arith.constant dense<0.000000e+00> : vector<8xf32>
    %129 = vector.multi_reduction <add>, %128, %cst_48 [1] : vector<8x8xf32> to vector<8xf32>
    %130 = vector.shape_cast %129 : vector<8xf32> to vector<8x1xf32>
    %131 = tpu.reciprocal %130 {approx = true} : vector<8x1xf32> -> vector<8x1xf32>
    %132 = vector.broadcast %131 : vector<8x1xf32> to vector<8x8xf32>
    %133 = arith.mulf %128, %132 : vector<8x8xf32>
    %cst_49 = arith.constant dense<0.000000e+00> : vector<8x32xf32>
    %134 = tpu.matmul %133, %118, %cst_49 {dimension_numbers = #tpu.dot_dimension_numbers<[1], [0], [0], [1], [0, 0, 1, 1], [], []>} : vector<8x8xf32>, vector<8x32xf32>, vector<8x32xf32> -> vector<8x32xf32>
    %135 = vector.extract_strided_slice %17 {offsets = [8, 64], sizes = [8, 32], strides = [1, 1]} : vector<16x128xf32> to vector<8x32xf32>
    %136 = vector.extract_strided_slice %18 {offsets = [8, 64], sizes = [8, 32], strides = [1, 1]} : vector<16x128xf32> to vector<8x32xf32>
    %137 = vector.extract_strided_slice %19 {offsets = [8, 64], sizes = [8, 32], strides = [1, 1]} : vector<16x128xf32> to vector<8x32xf32>
    %cst_50 = arith.constant dense<0.000000e+00> : vector<8x8xf32>
    %138 = tpu.matmul %135, %136, %cst_50 {dimension_numbers = #tpu.dot_dimension_numbers<[1], [1], [0], [0], [0, 0, 1, 0], [], []>} : vector<8x32xf32>, vector<8x32xf32>, vector<8x8xf32> -> vector<8x8xf32>
    %cst_51 = arith.constant 0.176776692 : f32
    %139 = vector.broadcast %cst_51 : f32 to vector<8x8xf32>
    %140 = arith.mulf %138, %139 : vector<8x8xf32>
    %cst_52 = arith.constant -1.000000e+09 : f32
    %141 = vector.broadcast %cst_52 : f32 to vector<8x8xf32>
    %142 = arith.select %9, %140, %141 : vector<8x8xi1>, vector<8x8xf32>
    %cst_53 = arith.constant dense<0xFF800000> : vector<8xf32>
    %143 = vector.multi_reduction <maximumf>, %142, %cst_53 [1] : vector<8x8xf32> to vector<8xf32>
    %144 = vector.shape_cast %143 : vector<8xf32> to vector<8x1xf32>
    %145 = vector.broadcast %144 : vector<8x1xf32> to vector<8x8xf32>
    %146 = arith.subf %142, %145 : vector<8x8xf32>
    %147 = math.exp %146 : vector<8x8xf32>
    %cst_54 = arith.constant dense<0.000000e+00> : vector<8xf32>
    %148 = vector.multi_reduction <add>, %147, %cst_54 [1] : vector<8x8xf32> to vector<8xf32>
    %149 = vector.shape_cast %148 : vector<8xf32> to vector<8x1xf32>
    %150 = tpu.reciprocal %149 {approx = true} : vector<8x1xf32> -> vector<8x1xf32>
    %151 = vector.broadcast %150 : vector<8x1xf32> to vector<8x8xf32>
    %152 = arith.mulf %147, %151 : vector<8x8xf32>
    %cst_55 = arith.constant dense<0.000000e+00> : vector<8x32xf32>
    %153 = tpu.matmul %152, %137, %cst_55 {dimension_numbers = #tpu.dot_dimension_numbers<[1], [0], [0], [1], [0, 0, 1, 1], [], []>} : vector<8x8xf32>, vector<8x32xf32>, vector<8x32xf32> -> vector<8x32xf32>
    %154 = vector.extract_strided_slice %17 {offsets = [8, 96], sizes = [8, 32], strides = [1, 1]} : vector<16x128xf32> to vector<8x32xf32>
    %155 = vector.extract_strided_slice %18 {offsets = [8, 96], sizes = [8, 32], strides = [1, 1]} : vector<16x128xf32> to vector<8x32xf32>
    %156 = vector.extract_strided_slice %19 {offsets = [8, 96], sizes = [8, 32], strides = [1, 1]} : vector<16x128xf32> to vector<8x32xf32>
    %cst_56 = arith.constant dense<0.000000e+00> : vector<8x8xf32>
    %157 = tpu.matmul %154, %155, %cst_56 {dimension_numbers = #tpu.dot_dimension_numbers<[1], [1], [0], [0], [0, 0, 1, 0], [], []>} : vector<8x32xf32>, vector<8x32xf32>, vector<8x8xf32> -> vector<8x8xf32>
    %cst_57 = arith.constant 0.176776692 : f32
    %158 = vector.broadcast %cst_57 : f32 to vector<8x8xf32>
    %159 = arith.mulf %157, %158 : vector<8x8xf32>
    %cst_58 = arith.constant -1.000000e+09 : f32
    %160 = vector.broadcast %cst_58 : f32 to vector<8x8xf32>
    %161 = arith.select %9, %159, %160 : vector<8x8xi1>, vector<8x8xf32>
    %cst_59 = arith.constant dense<0xFF800000> : vector<8xf32>
    %162 = vector.multi_reduction <maximumf>, %161, %cst_59 [1] : vector<8x8xf32> to vector<8xf32>
    %163 = vector.shape_cast %162 : vector<8xf32> to vector<8x1xf32>
    %164 = vector.broadcast %163 : vector<8x1xf32> to vector<8x8xf32>
    %165 = arith.subf %161, %164 : vector<8x8xf32>
    %166 = math.exp %165 : vector<8x8xf32>
    %cst_60 = arith.constant dense<0.000000e+00> : vector<8xf32>
    %167 = vector.multi_reduction <add>, %166, %cst_60 [1] : vector<8x8xf32> to vector<8xf32>
    %168 = vector.shape_cast %167 : vector<8xf32> to vector<8x1xf32>
    %169 = tpu.reciprocal %168 {approx = true} : vector<8x1xf32> -> vector<8x1xf32>
    %170 = vector.broadcast %169 : vector<8x1xf32> to vector<8x8xf32>
    %171 = arith.mulf %166, %170 : vector<8x8xf32>
    %cst_61 = arith.constant dense<0.000000e+00> : vector<8x32xf32>
    %172 = tpu.matmul %171, %156, %cst_61 {dimension_numbers = #tpu.dot_dimension_numbers<[1], [0], [0], [1], [0, 0, 1, 1], [], []>} : vector<8x8xf32>, vector<8x32xf32>, vector<8x32xf32> -> vector<8x32xf32>
    %173 = tpu.concatenate %115, %134, %153, %172 in 1 : vector<8x32xf32>, vector<8x32xf32>, vector<8x32xf32>, vector<8x32xf32> -> vector<8x128xf32>
    %174 = tpu.concatenate %96, %173 in 0 : vector<8x128xf32>, vector<8x128xf32> -> vector<16x128xf32>
    %c0_62 = arith.constant 0 : index
    %c0_63 = arith.constant 0 : index
    %c0_64 = arith.constant 0 : index
    %175 = vector.load %arg6[%c0_62, %c0_63, %c0_64] : memref<2x128x128xf32, #tpu.memory_space<vmem>>, vector<1x128x128xf32>
    %176 = vector.shape_cast %175 : vector<1x128x128xf32> to vector<128x128xf32>
    %cst_65 = arith.constant dense<0.000000e+00> : vector<16x128xf32>
    %177 = tpu.matmul %174, %176, %cst_65 {dimension_numbers = #tpu.dot_dimension_numbers<[1], [0], [0], [1], [0, 0, 1, 1], [], []>} : vector<16x128xf32>, vector<128x128xf32>, vector<16x128xf32> -> vector<16x128xf32>
    %c0_66 = arith.constant 0 : index
    %c0_67 = arith.constant 0 : index
    %c0_68 = arith.constant 0 : index
    %178 = vector.load %arg7[%c0_66, %c0_67, %c0_68] : memref<2x1x128xf32, #tpu.memory_space<vmem>>, vector<1x1x128xf32>
    %179 = vector.shape_cast %178 : vector<1x1x128xf32> to vector<1x128xf32>
    %180 = vector.broadcast %179 : vector<1x128xf32> to vector<16x128xf32>
    %181 = arith.addf %177, %180 : vector<16x128xf32>
    %182 = arith.addf %4, %181 : vector<16x128xf32>
    %c0_69 = arith.constant 0 : index
    %c0_70 = arith.constant 0 : index
    %c0_71 = arith.constant 0 : index
    %183 = vector.load %arg18[%c0_69, %c0_70, %c0_71] : memref<2x1x128xf32, #tpu.memory_space<vmem>>, vector<1x1x128xf32>
    %184 = vector.shape_cast %183 : vector<1x1x128xf32> to vector<1x128xf32>
    %c0_72 = arith.constant 0 : index
    %c0_73 = arith.constant 0 : index
    %c0_74 = arith.constant 0 : index
    %185 = vector.load %arg19[%c0_72, %c0_73, %c0_74] : memref<2x1x128xf32, #tpu.memory_space<vmem>>, vector<1x1x128xf32>
    %186 = vector.shape_cast %185 : vector<1x1x128xf32> to vector<1x128xf32>
    %cst_75 = arith.constant dense<0.000000e+00> : vector<16xf32>
    %187 = vector.multi_reduction <add>, %182, %cst_75 [1] : vector<16x128xf32> to vector<16xf32>
    %188 = vector.shape_cast %187 : vector<16xf32> to vector<16x1xf32>
    %cst_76 = arith.constant 1.280000e+02 : f32
    %189 = vector.broadcast %cst_76 : f32 to vector<16x1xf32>
    %190 = arith.divf %188, %189 : vector<16x1xf32>
    %191 = vector.broadcast %190 : vector<16x1xf32> to vector<16x128xf32>
    %192 = arith.subf %182, %191 : vector<16x128xf32>
    %193 = arith.mulf %192, %192 : vector<16x128xf32>
    %cst_77 = arith.constant dense<0.000000e+00> : vector<16xf32>
    %194 = vector.multi_reduction <add>, %193, %cst_77 [1] : vector<16x128xf32> to vector<16xf32>
    %195 = vector.shape_cast %194 : vector<16xf32> to vector<16x1xf32>
    %cst_78 = arith.constant 1.280000e+02 : f32
    %196 = vector.broadcast %cst_78 : f32 to vector<16x1xf32>
    %197 = arith.divf %195, %196 : vector<16x1xf32>
    %198 = vector.broadcast %190 : vector<16x1xf32> to vector<16x128xf32>
    %199 = arith.subf %182, %198 : vector<16x128xf32>
    %cst_79 = arith.constant 9.99999974E-6 : f32
    %200 = vector.broadcast %cst_79 : f32 to vector<16x1xf32>
    %201 = arith.addf %197, %200 : vector<16x1xf32>
    %202 = math.rsqrt %201 : vector<16x1xf32>
    %203 = vector.broadcast %202 : vector<16x1xf32> to vector<16x128xf32>
    %204 = arith.mulf %199, %203 : vector<16x128xf32>
    %205 = vector.broadcast %184 : vector<1x128xf32> to vector<16x128xf32>
    %206 = arith.mulf %204, %205 : vector<16x128xf32>
    %207 = vector.broadcast %186 : vector<1x128xf32> to vector<16x128xf32>
    %208 = arith.addf %206, %207 : vector<16x128xf32>
    %c0_80 = arith.constant 0 : index
    %c0_81 = arith.constant 0 : index
    %c0_82 = arith.constant 0 : index
    %209 = vector.load %arg8[%c0_80, %c0_81, %c0_82] : memref<2x128x128xf32, #tpu.memory_space<vmem>>, vector<1x128x128xf32>
    %210 = vector.shape_cast %209 : vector<1x128x128xf32> to vector<128x128xf32>
    %cst_83 = arith.constant dense<0.000000e+00> : vector<16x128xf32>
    %211 = tpu.matmul %208, %210, %cst_83 {dimension_numbers = #tpu.dot_dimension_numbers<[1], [0], [0], [1], [0, 0, 1, 1], [], []>} : vector<16x128xf32>, vector<128x128xf32>, vector<16x128xf32> -> vector<16x128xf32>
    %c0_84 = arith.constant 0 : index
    %c0_85 = arith.constant 0 : index
    %c0_86 = arith.constant 0 : index
    %212 = vector.load %arg9[%c0_84, %c0_85, %c0_86] : memref<2x1x128xf32, #tpu.memory_space<vmem>>, vector<1x1x128xf32>
    %213 = vector.shape_cast %212 : vector<1x1x128xf32> to vector<1x128xf32>
    %214 = vector.broadcast %213 : vector<1x128xf32> to vector<16x128xf32>
    %215 = arith.addf %211, %214 : vector<16x128xf32>
    %c0_87 = arith.constant 0 : index
    %c0_88 = arith.constant 0 : index
    %c0_89 = arith.constant 0 : index
    %216 = vector.load %arg10[%c0_87, %c0_88, %c0_89] : memref<2x128x256xf32, #tpu.memory_space<vmem>>, vector<1x128x256xf32>
    %217 = vector.shape_cast %216 : vector<1x128x256xf32> to vector<128x256xf32>
    %cst_90 = arith.constant dense<0.000000e+00> : vector<32x256xf32>
    %218 = tpu.matmul %5, %217, %cst_90 {dimension_numbers = #tpu.dot_dimension_numbers<[1], [0], [0], [1], [0, 0, 1, 1], [], []>} : vector<32x128xf32>, vector<128x256xf32>, vector<32x256xf32> -> vector<32x256xf32>
    %c0_91 = arith.constant 0 : index
    %c0_92 = arith.constant 0 : index
    %c0_93 = arith.constant 0 : index
    %219 = vector.load %arg11[%c0_91, %c0_92, %c0_93] : memref<2x1x256xf32, #tpu.memory_space<vmem>>, vector<1x1x256xf32>
    %220 = vector.shape_cast %219 : vector<1x1x256xf32> to vector<1x256xf32>
    %221 = vector.broadcast %220 : vector<1x256xf32> to vector<32x256xf32>
    %222 = arith.addf %218, %221 : vector<32x256xf32>
    %223 = vector.extract_strided_slice %222 {offsets = [0, 0], sizes = [32, 128], strides = [1, 1]} : vector<32x256xf32> to vector<32x128xf32>
    %224 = vector.extract_strided_slice %222 {offsets = [0, 128], sizes = [32, 128], strides = [1, 1]} : vector<32x256xf32> to vector<32x128xf32>
    %225 = vector.extract_strided_slice %6 {offsets = [0, 0], sizes = [1, 16], strides = [1, 1]} : vector<2x16xf32> to vector<1x16xf32>
    %cst_94 = arith.constant 0.000000e+00 : f32
    %226 = vector.broadcast %cst_94 : f32 to vector<1x16xf32>
    %227 = arith.cmpf ogt, %225, %226 : vector<1x16xf32>
    %228 = vector.extract_strided_slice %215 {offsets = [0, 0], sizes = [8, 32], strides = [1, 1]} : vector<16x128xf32> to vector<8x32xf32>
    %229 = vector.extract_strided_slice %223 {offsets = [0, 0], sizes = [16, 32], strides = [1, 1]} : vector<32x128xf32> to vector<16x32xf32>
    %230 = vector.extract_strided_slice %224 {offsets = [0, 0], sizes = [16, 32], strides = [1, 1]} : vector<32x128xf32> to vector<16x32xf32>
    %cst_95 = arith.constant dense<0.000000e+00> : vector<8x16xf32>
    %231 = tpu.matmul %228, %229, %cst_95 {dimension_numbers = #tpu.dot_dimension_numbers<[1], [1], [0], [0], [0, 0, 1, 0], [], []>} : vector<8x32xf32>, vector<16x32xf32>, vector<8x16xf32> -> vector<8x16xf32>
    %cst_96 = arith.constant 0.176776692 : f32
    %232 = vector.broadcast %cst_96 : f32 to vector<8x16xf32>
    %233 = arith.mulf %231, %232 : vector<8x16xf32>
    %cst_97 = arith.constant -1.000000e+09 : f32
    %234 = vector.shape_cast %227 : vector<1x16xi1> to vector<1x16xi1>
    %235 = vector.broadcast %234 : vector<1x16xi1> to vector<8x16xi1>
    %236 = vector.broadcast %cst_97 : f32 to vector<8x16xf32>
    %237 = arith.select %235, %233, %236 : vector<8x16xi1>, vector<8x16xf32>
    %cst_98 = arith.constant dense<0xFF800000> : vector<8xf32>
    %238 = vector.multi_reduction <maximumf>, %237, %cst_98 [1] : vector<8x16xf32> to vector<8xf32>
    %239 = vector.shape_cast %238 : vector<8xf32> to vector<8x1xf32>
    %240 = vector.broadcast %239 : vector<8x1xf32> to vector<8x16xf32>
    %241 = arith.subf %237, %240 : vector<8x16xf32>
    %242 = math.exp %241 : vector<8x16xf32>
    %cst_99 = arith.constant dense<0.000000e+00> : vector<8xf32>
    %243 = vector.multi_reduction <add>, %242, %cst_99 [1] : vector<8x16xf32> to vector<8xf32>
    %244 = vector.shape_cast %243 : vector<8xf32> to vector<8x1xf32>
    %245 = tpu.reciprocal %244 {approx = true} : vector<8x1xf32> -> vector<8x1xf32>
    %246 = vector.broadcast %245 : vector<8x1xf32> to vector<8x16xf32>
    %247 = arith.mulf %242, %246 : vector<8x16xf32>
    %cst_100 = arith.constant dense<0.000000e+00> : vector<8x32xf32>
    %248 = tpu.matmul %247, %230, %cst_100 {dimension_numbers = #tpu.dot_dimension_numbers<[1], [0], [0], [1], [0, 0, 1, 1], [], []>} : vector<8x16xf32>, vector<16x32xf32>, vector<8x32xf32> -> vector<8x32xf32>
    %249 = vector.extract_strided_slice %215 {offsets = [0, 32], sizes = [8, 32], strides = [1, 1]} : vector<16x128xf32> to vector<8x32xf32>
    %250 = vector.extract_strided_slice %223 {offsets = [0, 32], sizes = [16, 32], strides = [1, 1]} : vector<32x128xf32> to vector<16x32xf32>
    %251 = vector.extract_strided_slice %224 {offsets = [0, 32], sizes = [16, 32], strides = [1, 1]} : vector<32x128xf32> to vector<16x32xf32>
    %cst_101 = arith.constant dense<0.000000e+00> : vector<8x16xf32>
    %252 = tpu.matmul %249, %250, %cst_101 {dimension_numbers = #tpu.dot_dimension_numbers<[1], [1], [0], [0], [0, 0, 1, 0], [], []>} : vector<8x32xf32>, vector<16x32xf32>, vector<8x16xf32> -> vector<8x16xf32>
    %cst_102 = arith.constant 0.176776692 : f32
    %253 = vector.broadcast %cst_102 : f32 to vector<8x16xf32>
    %254 = arith.mulf %252, %253 : vector<8x16xf32>
    %cst_103 = arith.constant -1.000000e+09 : f32
    %255 = vector.shape_cast %227 : vector<1x16xi1> to vector<1x16xi1>
    %256 = vector.broadcast %255 : vector<1x16xi1> to vector<8x16xi1>
    %257 = vector.broadcast %cst_103 : f32 to vector<8x16xf32>
    %258 = arith.select %256, %254, %257 : vector<8x16xi1>, vector<8x16xf32>
    %cst_104 = arith.constant dense<0xFF800000> : vector<8xf32>
    %259 = vector.multi_reduction <maximumf>, %258, %cst_104 [1] : vector<8x16xf32> to vector<8xf32>
    %260 = vector.shape_cast %259 : vector<8xf32> to vector<8x1xf32>
    %261 = vector.broadcast %260 : vector<8x1xf32> to vector<8x16xf32>
    %262 = arith.subf %258, %261 : vector<8x16xf32>
    %263 = math.exp %262 : vector<8x16xf32>
    %cst_105 = arith.constant dense<0.000000e+00> : vector<8xf32>
    %264 = vector.multi_reduction <add>, %263, %cst_105 [1] : vector<8x16xf32> to vector<8xf32>
    %265 = vector.shape_cast %264 : vector<8xf32> to vector<8x1xf32>
    %266 = tpu.reciprocal %265 {approx = true} : vector<8x1xf32> -> vector<8x1xf32>
    %267 = vector.broadcast %266 : vector<8x1xf32> to vector<8x16xf32>
    %268 = arith.mulf %263, %267 : vector<8x16xf32>
    %cst_106 = arith.constant dense<0.000000e+00> : vector<8x32xf32>
    %269 = tpu.matmul %268, %251, %cst_106 {dimension_numbers = #tpu.dot_dimension_numbers<[1], [0], [0], [1], [0, 0, 1, 1], [], []>} : vector<8x16xf32>, vector<16x32xf32>, vector<8x32xf32> -> vector<8x32xf32>
    %270 = vector.extract_strided_slice %215 {offsets = [0, 64], sizes = [8, 32], strides = [1, 1]} : vector<16x128xf32> to vector<8x32xf32>
    %271 = vector.extract_strided_slice %223 {offsets = [0, 64], sizes = [16, 32], strides = [1, 1]} : vector<32x128xf32> to vector<16x32xf32>
    %272 = vector.extract_strided_slice %224 {offsets = [0, 64], sizes = [16, 32], strides = [1, 1]} : vector<32x128xf32> to vector<16x32xf32>
    %cst_107 = arith.constant dense<0.000000e+00> : vector<8x16xf32>
    %273 = tpu.matmul %270, %271, %cst_107 {dimension_numbers = #tpu.dot_dimension_numbers<[1], [1], [0], [0], [0, 0, 1, 0], [], []>} : vector<8x32xf32>, vector<16x32xf32>, vector<8x16xf32> -> vector<8x16xf32>
    %cst_108 = arith.constant 0.176776692 : f32
    %274 = vector.broadcast %cst_108 : f32 to vector<8x16xf32>
    %275 = arith.mulf %273, %274 : vector<8x16xf32>
    %cst_109 = arith.constant -1.000000e+09 : f32
    %276 = vector.shape_cast %227 : vector<1x16xi1> to vector<1x16xi1>
    %277 = vector.broadcast %276 : vector<1x16xi1> to vector<8x16xi1>
    %278 = vector.broadcast %cst_109 : f32 to vector<8x16xf32>
    %279 = arith.select %277, %275, %278 : vector<8x16xi1>, vector<8x16xf32>
    %cst_110 = arith.constant dense<0xFF800000> : vector<8xf32>
    %280 = vector.multi_reduction <maximumf>, %279, %cst_110 [1] : vector<8x16xf32> to vector<8xf32>
    %281 = vector.shape_cast %280 : vector<8xf32> to vector<8x1xf32>
    %282 = vector.broadcast %281 : vector<8x1xf32> to vector<8x16xf32>
    %283 = arith.subf %279, %282 : vector<8x16xf32>
    %284 = math.exp %283 : vector<8x16xf32>
    %cst_111 = arith.constant dense<0.000000e+00> : vector<8xf32>
    %285 = vector.multi_reduction <add>, %284, %cst_111 [1] : vector<8x16xf32> to vector<8xf32>
    %286 = vector.shape_cast %285 : vector<8xf32> to vector<8x1xf32>
    %287 = tpu.reciprocal %286 {approx = true} : vector<8x1xf32> -> vector<8x1xf32>
    %288 = vector.broadcast %287 : vector<8x1xf32> to vector<8x16xf32>
    %289 = arith.mulf %284, %288 : vector<8x16xf32>
    %cst_112 = arith.constant dense<0.000000e+00> : vector<8x32xf32>
    %290 = tpu.matmul %289, %272, %cst_112 {dimension_numbers = #tpu.dot_dimension_numbers<[1], [0], [0], [1], [0, 0, 1, 1], [], []>} : vector<8x16xf32>, vector<16x32xf32>, vector<8x32xf32> -> vector<8x32xf32>
    %291 = vector.extract_strided_slice %215 {offsets = [0, 96], sizes = [8, 32], strides = [1, 1]} : vector<16x128xf32> to vector<8x32xf32>
    %292 = vector.extract_strided_slice %223 {offsets = [0, 96], sizes = [16, 32], strides = [1, 1]} : vector<32x128xf32> to vector<16x32xf32>
    %293 = vector.extract_strided_slice %224 {offsets = [0, 96], sizes = [16, 32], strides = [1, 1]} : vector<32x128xf32> to vector<16x32xf32>
    %cst_113 = arith.constant dense<0.000000e+00> : vector<8x16xf32>
    %294 = tpu.matmul %291, %292, %cst_113 {dimension_numbers = #tpu.dot_dimension_numbers<[1], [1], [0], [0], [0, 0, 1, 0], [], []>} : vector<8x32xf32>, vector<16x32xf32>, vector<8x16xf32> -> vector<8x16xf32>
    %cst_114 = arith.constant 0.176776692 : f32
    %295 = vector.broadcast %cst_114 : f32 to vector<8x16xf32>
    %296 = arith.mulf %294, %295 : vector<8x16xf32>
    %cst_115 = arith.constant -1.000000e+09 : f32
    %297 = vector.shape_cast %227 : vector<1x16xi1> to vector<1x16xi1>
    %298 = vector.broadcast %297 : vector<1x16xi1> to vector<8x16xi1>
    %299 = vector.broadcast %cst_115 : f32 to vector<8x16xf32>
    %300 = arith.select %298, %296, %299 : vector<8x16xi1>, vector<8x16xf32>
    %cst_116 = arith.constant dense<0xFF800000> : vector<8xf32>
    %301 = vector.multi_reduction <maximumf>, %300, %cst_116 [1] : vector<8x16xf32> to vector<8xf32>
    %302 = vector.shape_cast %301 : vector<8xf32> to vector<8x1xf32>
    %303 = vector.broadcast %302 : vector<8x1xf32> to vector<8x16xf32>
    %304 = arith.subf %300, %303 : vector<8x16xf32>
    %305 = math.exp %304 : vector<8x16xf32>
    %cst_117 = arith.constant dense<0.000000e+00> : vector<8xf32>
    %306 = vector.multi_reduction <add>, %305, %cst_117 [1] : vector<8x16xf32> to vector<8xf32>
    %307 = vector.shape_cast %306 : vector<8xf32> to vector<8x1xf32>
    %308 = tpu.reciprocal %307 {approx = true} : vector<8x1xf32> -> vector<8x1xf32>
    %309 = vector.broadcast %308 : vector<8x1xf32> to vector<8x16xf32>
    %310 = arith.mulf %305, %309 : vector<8x16xf32>
    %cst_118 = arith.constant dense<0.000000e+00> : vector<8x32xf32>
    %311 = tpu.matmul %310, %293, %cst_118 {dimension_numbers = #tpu.dot_dimension_numbers<[1], [0], [0], [1], [0, 0, 1, 1], [], []>} : vector<8x16xf32>, vector<16x32xf32>, vector<8x32xf32> -> vector<8x32xf32>
    %312 = tpu.concatenate %248, %269, %290, %311 in 1 : vector<8x32xf32>, vector<8x32xf32>, vector<8x32xf32>, vector<8x32xf32> -> vector<8x128xf32>
    %313 = vector.extract_strided_slice %6 {offsets = [1, 0], sizes = [1, 16], strides = [1, 1]} : vector<2x16xf32> to vector<1x16xf32>
    %cst_119 = arith.constant 0.000000e+00 : f32
    %314 = vector.broadcast %cst_119 : f32 to vector<1x16xf32>
    %315 = arith.cmpf ogt, %313, %314 : vector<1x16xf32>
    %316 = vector.extract_strided_slice %215 {offsets = [8, 0], sizes = [8, 32], strides = [1, 1]} : vector<16x128xf32> to vector<8x32xf32>
    %317 = vector.extract_strided_slice %223 {offsets = [16, 0], sizes = [16, 32], strides = [1, 1]} : vector<32x128xf32> to vector<16x32xf32>
    %318 = vector.extract_strided_slice %224 {offsets = [16, 0], sizes = [16, 32], strides = [1, 1]} : vector<32x128xf32> to vector<16x32xf32>
    %cst_120 = arith.constant dense<0.000000e+00> : vector<8x16xf32>
    %319 = tpu.matmul %316, %317, %cst_120 {dimension_numbers = #tpu.dot_dimension_numbers<[1], [1], [0], [0], [0, 0, 1, 0], [], []>} : vector<8x32xf32>, vector<16x32xf32>, vector<8x16xf32> -> vector<8x16xf32>
    %cst_121 = arith.constant 0.176776692 : f32
    %320 = vector.broadcast %cst_121 : f32 to vector<8x16xf32>
    %321 = arith.mulf %319, %320 : vector<8x16xf32>
    %cst_122 = arith.constant -1.000000e+09 : f32
    %322 = vector.shape_cast %315 : vector<1x16xi1> to vector<1x16xi1>
    %323 = vector.broadcast %322 : vector<1x16xi1> to vector<8x16xi1>
    %324 = vector.broadcast %cst_122 : f32 to vector<8x16xf32>
    %325 = arith.select %323, %321, %324 : vector<8x16xi1>, vector<8x16xf32>
    %cst_123 = arith.constant dense<0xFF800000> : vector<8xf32>
    %326 = vector.multi_reduction <maximumf>, %325, %cst_123 [1] : vector<8x16xf32> to vector<8xf32>
    %327 = vector.shape_cast %326 : vector<8xf32> to vector<8x1xf32>
    %328 = vector.broadcast %327 : vector<8x1xf32> to vector<8x16xf32>
    %329 = arith.subf %325, %328 : vector<8x16xf32>
    %330 = math.exp %329 : vector<8x16xf32>
    %cst_124 = arith.constant dense<0.000000e+00> : vector<8xf32>
    %331 = vector.multi_reduction <add>, %330, %cst_124 [1] : vector<8x16xf32> to vector<8xf32>
    %332 = vector.shape_cast %331 : vector<8xf32> to vector<8x1xf32>
    %333 = tpu.reciprocal %332 {approx = true} : vector<8x1xf32> -> vector<8x1xf32>
    %334 = vector.broadcast %333 : vector<8x1xf32> to vector<8x16xf32>
    %335 = arith.mulf %330, %334 : vector<8x16xf32>
    %cst_125 = arith.constant dense<0.000000e+00> : vector<8x32xf32>
    %336 = tpu.matmul %335, %318, %cst_125 {dimension_numbers = #tpu.dot_dimension_numbers<[1], [0], [0], [1], [0, 0, 1, 1], [], []>} : vector<8x16xf32>, vector<16x32xf32>, vector<8x32xf32> -> vector<8x32xf32>
    %337 = vector.extract_strided_slice %215 {offsets = [8, 32], sizes = [8, 32], strides = [1, 1]} : vector<16x128xf32> to vector<8x32xf32>
    %338 = vector.extract_strided_slice %223 {offsets = [16, 32], sizes = [16, 32], strides = [1, 1]} : vector<32x128xf32> to vector<16x32xf32>
    %339 = vector.extract_strided_slice %224 {offsets = [16, 32], sizes = [16, 32], strides = [1, 1]} : vector<32x128xf32> to vector<16x32xf32>
    %cst_126 = arith.constant dense<0.000000e+00> : vector<8x16xf32>
    %340 = tpu.matmul %337, %338, %cst_126 {dimension_numbers = #tpu.dot_dimension_numbers<[1], [1], [0], [0], [0, 0, 1, 0], [], []>} : vector<8x32xf32>, vector<16x32xf32>, vector<8x16xf32> -> vector<8x16xf32>
    %cst_127 = arith.constant 0.176776692 : f32
    %341 = vector.broadcast %cst_127 : f32 to vector<8x16xf32>
    %342 = arith.mulf %340, %341 : vector<8x16xf32>
    %cst_128 = arith.constant -1.000000e+09 : f32
    %343 = vector.shape_cast %315 : vector<1x16xi1> to vector<1x16xi1>
    %344 = vector.broadcast %343 : vector<1x16xi1> to vector<8x16xi1>
    %345 = vector.broadcast %cst_128 : f32 to vector<8x16xf32>
    %346 = arith.select %344, %342, %345 : vector<8x16xi1>, vector<8x16xf32>
    %cst_129 = arith.constant dense<0xFF800000> : vector<8xf32>
    %347 = vector.multi_reduction <maximumf>, %346, %cst_129 [1] : vector<8x16xf32> to vector<8xf32>
    %348 = vector.shape_cast %347 : vector<8xf32> to vector<8x1xf32>
    %349 = vector.broadcast %348 : vector<8x1xf32> to vector<8x16xf32>
    %350 = arith.subf %346, %349 : vector<8x16xf32>
    %351 = math.exp %350 : vector<8x16xf32>
    %cst_130 = arith.constant dense<0.000000e+00> : vector<8xf32>
    %352 = vector.multi_reduction <add>, %351, %cst_130 [1] : vector<8x16xf32> to vector<8xf32>
    %353 = vector.shape_cast %352 : vector<8xf32> to vector<8x1xf32>
    %354 = tpu.reciprocal %353 {approx = true} : vector<8x1xf32> -> vector<8x1xf32>
    %355 = vector.broadcast %354 : vector<8x1xf32> to vector<8x16xf32>
    %356 = arith.mulf %351, %355 : vector<8x16xf32>
    %cst_131 = arith.constant dense<0.000000e+00> : vector<8x32xf32>
    %357 = tpu.matmul %356, %339, %cst_131 {dimension_numbers = #tpu.dot_dimension_numbers<[1], [0], [0], [1], [0, 0, 1, 1], [], []>} : vector<8x16xf32>, vector<16x32xf32>, vector<8x32xf32> -> vector<8x32xf32>
    %358 = vector.extract_strided_slice %215 {offsets = [8, 64], sizes = [8, 32], strides = [1, 1]} : vector<16x128xf32> to vector<8x32xf32>
    %359 = vector.extract_strided_slice %223 {offsets = [16, 64], sizes = [16, 32], strides = [1, 1]} : vector<32x128xf32> to vector<16x32xf32>
    %360 = vector.extract_strided_slice %224 {offsets = [16, 64], sizes = [16, 32], strides = [1, 1]} : vector<32x128xf32> to vector<16x32xf32>
    %cst_132 = arith.constant dense<0.000000e+00> : vector<8x16xf32>
    %361 = tpu.matmul %358, %359, %cst_132 {dimension_numbers = #tpu.dot_dimension_numbers<[1], [1], [0], [0], [0, 0, 1, 0], [], []>} : vector<8x32xf32>, vector<16x32xf32>, vector<8x16xf32> -> vector<8x16xf32>
    %cst_133 = arith.constant 0.176776692 : f32
    %362 = vector.broadcast %cst_133 : f32 to vector<8x16xf32>
    %363 = arith.mulf %361, %362 : vector<8x16xf32>
    %cst_134 = arith.constant -1.000000e+09 : f32
    %364 = vector.shape_cast %315 : vector<1x16xi1> to vector<1x16xi1>
    %365 = vector.broadcast %364 : vector<1x16xi1> to vector<8x16xi1>
    %366 = vector.broadcast %cst_134 : f32 to vector<8x16xf32>
    %367 = arith.select %365, %363, %366 : vector<8x16xi1>, vector<8x16xf32>
    %cst_135 = arith.constant dense<0xFF800000> : vector<8xf32>
    %368 = vector.multi_reduction <maximumf>, %367, %cst_135 [1] : vector<8x16xf32> to vector<8xf32>
    %369 = vector.shape_cast %368 : vector<8xf32> to vector<8x1xf32>
    %370 = vector.broadcast %369 : vector<8x1xf32> to vector<8x16xf32>
    %371 = arith.subf %367, %370 : vector<8x16xf32>
    %372 = math.exp %371 : vector<8x16xf32>
    %cst_136 = arith.constant dense<0.000000e+00> : vector<8xf32>
    %373 = vector.multi_reduction <add>, %372, %cst_136 [1] : vector<8x16xf32> to vector<8xf32>
    %374 = vector.shape_cast %373 : vector<8xf32> to vector<8x1xf32>
    %375 = tpu.reciprocal %374 {approx = true} : vector<8x1xf32> -> vector<8x1xf32>
    %376 = vector.broadcast %375 : vector<8x1xf32> to vector<8x16xf32>
    %377 = arith.mulf %372, %376 : vector<8x16xf32>
    %cst_137 = arith.constant dense<0.000000e+00> : vector<8x32xf32>
    %378 = tpu.matmul %377, %360, %cst_137 {dimension_numbers = #tpu.dot_dimension_numbers<[1], [0], [0], [1], [0, 0, 1, 1], [], []>} : vector<8x16xf32>, vector<16x32xf32>, vector<8x32xf32> -> vector<8x32xf32>
    %379 = vector.extract_strided_slice %215 {offsets = [8, 96], sizes = [8, 32], strides = [1, 1]} : vector<16x128xf32> to vector<8x32xf32>
    %380 = vector.extract_strided_slice %223 {offsets = [16, 96], sizes = [16, 32], strides = [1, 1]} : vector<32x128xf32> to vector<16x32xf32>
    %381 = vector.extract_strided_slice %224 {offsets = [16, 96], sizes = [16, 32], strides = [1, 1]} : vector<32x128xf32> to vector<16x32xf32>
    %cst_138 = arith.constant dense<0.000000e+00> : vector<8x16xf32>
    %382 = tpu.matmul %379, %380, %cst_138 {dimension_numbers = #tpu.dot_dimension_numbers<[1], [1], [0], [0], [0, 0, 1, 0], [], []>} : vector<8x32xf32>, vector<16x32xf32>, vector<8x16xf32> -> vector<8x16xf32>
    %cst_139 = arith.constant 0.176776692 : f32
    %383 = vector.broadcast %cst_139 : f32 to vector<8x16xf32>
    %384 = arith.mulf %382, %383 : vector<8x16xf32>
    %cst_140 = arith.constant -1.000000e+09 : f32
    %385 = vector.shape_cast %315 : vector<1x16xi1> to vector<1x16xi1>
    %386 = vector.broadcast %385 : vector<1x16xi1> to vector<8x16xi1>
    %387 = vector.broadcast %cst_140 : f32 to vector<8x16xf32>
    %388 = arith.select %386, %384, %387 : vector<8x16xi1>, vector<8x16xf32>
    %cst_141 = arith.constant dense<0xFF800000> : vector<8xf32>
    %389 = vector.multi_reduction <maximumf>, %388, %cst_141 [1] : vector<8x16xf32> to vector<8xf32>
    %390 = vector.shape_cast %389 : vector<8xf32> to vector<8x1xf32>
    %391 = vector.broadcast %390 : vector<8x1xf32> to vector<8x16xf32>
    %392 = arith.subf %388, %391 : vector<8x16xf32>
    %393 = math.exp %392 : vector<8x16xf32>
    %cst_142 = arith.constant dense<0.000000e+00> : vector<8xf32>
    %394 = vector.multi_reduction <add>, %393, %cst_142 [1] : vector<8x16xf32> to vector<8xf32>
    %395 = vector.shape_cast %394 : vector<8xf32> to vector<8x1xf32>
    %396 = tpu.reciprocal %395 {approx = true} : vector<8x1xf32> -> vector<8x1xf32>
    %397 = vector.broadcast %396 : vector<8x1xf32> to vector<8x16xf32>
    %398 = arith.mulf %393, %397 : vector<8x16xf32>
    %cst_143 = arith.constant dense<0.000000e+00> : vector<8x32xf32>
    %399 = tpu.matmul %398, %381, %cst_143 {dimension_numbers = #tpu.dot_dimension_numbers<[1], [0], [0], [1], [0, 0, 1, 1], [], []>} : vector<8x16xf32>, vector<16x32xf32>, vector<8x32xf32> -> vector<8x32xf32>
    %400 = tpu.concatenate %336, %357, %378, %399 in 1 : vector<8x32xf32>, vector<8x32xf32>, vector<8x32xf32>, vector<8x32xf32> -> vector<8x128xf32>
    %401 = tpu.concatenate %312, %400 in 0 : vector<8x128xf32>, vector<8x128xf32> -> vector<16x128xf32>
    %c0_144 = arith.constant 0 : index
    %c0_145 = arith.constant 0 : index
    %c0_146 = arith.constant 0 : index
    %402 = vector.load %arg12[%c0_144, %c0_145, %c0_146] : memref<2x128x128xf32, #tpu.memory_space<vmem>>, vector<1x128x128xf32>
    %403 = vector.shape_cast %402 : vector<1x128x128xf32> to vector<128x128xf32>
    %cst_147 = arith.constant dense<0.000000e+00> : vector<16x128xf32>
    %404 = tpu.matmul %401, %403, %cst_147 {dimension_numbers = #tpu.dot_dimension_numbers<[1], [0], [0], [1], [0, 0, 1, 1], [], []>} : vector<16x128xf32>, vector<128x128xf32>, vector<16x128xf32> -> vector<16x128xf32>
    %c0_148 = arith.constant 0 : index
    %c0_149 = arith.constant 0 : index
    %c0_150 = arith.constant 0 : index
    %405 = vector.load %arg13[%c0_148, %c0_149, %c0_150] : memref<2x1x128xf32, #tpu.memory_space<vmem>>, vector<1x1x128xf32>
    %406 = vector.shape_cast %405 : vector<1x1x128xf32> to vector<1x128xf32>
    %407 = vector.broadcast %406 : vector<1x128xf32> to vector<16x128xf32>
    %408 = arith.addf %404, %407 : vector<16x128xf32>
    %409 = arith.addf %208, %408 : vector<16x128xf32>
    %c0_151 = arith.constant 0 : index
    %c0_152 = arith.constant 0 : index
    %c0_153 = arith.constant 0 : index
    %410 = vector.load %arg20[%c0_151, %c0_152, %c0_153] : memref<2x1x128xf32, #tpu.memory_space<vmem>>, vector<1x1x128xf32>
    %411 = vector.shape_cast %410 : vector<1x1x128xf32> to vector<1x128xf32>
    %c0_154 = arith.constant 0 : index
    %c0_155 = arith.constant 0 : index
    %c0_156 = arith.constant 0 : index
    %412 = vector.load %arg21[%c0_154, %c0_155, %c0_156] : memref<2x1x128xf32, #tpu.memory_space<vmem>>, vector<1x1x128xf32>
    %413 = vector.shape_cast %412 : vector<1x1x128xf32> to vector<1x128xf32>
    %cst_157 = arith.constant dense<0.000000e+00> : vector<16xf32>
    %414 = vector.multi_reduction <add>, %409, %cst_157 [1] : vector<16x128xf32> to vector<16xf32>
    %415 = vector.shape_cast %414 : vector<16xf32> to vector<16x1xf32>
    %cst_158 = arith.constant 1.280000e+02 : f32
    %416 = vector.broadcast %cst_158 : f32 to vector<16x1xf32>
    %417 = arith.divf %415, %416 : vector<16x1xf32>
    %418 = vector.broadcast %417 : vector<16x1xf32> to vector<16x128xf32>
    %419 = arith.subf %409, %418 : vector<16x128xf32>
    %420 = arith.mulf %419, %419 : vector<16x128xf32>
    %cst_159 = arith.constant dense<0.000000e+00> : vector<16xf32>
    %421 = vector.multi_reduction <add>, %420, %cst_159 [1] : vector<16x128xf32> to vector<16xf32>
    %422 = vector.shape_cast %421 : vector<16xf32> to vector<16x1xf32>
    %cst_160 = arith.constant 1.280000e+02 : f32
    %423 = vector.broadcast %cst_160 : f32 to vector<16x1xf32>
    %424 = arith.divf %422, %423 : vector<16x1xf32>
    %425 = vector.broadcast %417 : vector<16x1xf32> to vector<16x128xf32>
    %426 = arith.subf %409, %425 : vector<16x128xf32>
    %cst_161 = arith.constant 9.99999974E-6 : f32
    %427 = vector.broadcast %cst_161 : f32 to vector<16x1xf32>
    %428 = arith.addf %424, %427 : vector<16x1xf32>
    %429 = math.rsqrt %428 : vector<16x1xf32>
    %430 = vector.broadcast %429 : vector<16x1xf32> to vector<16x128xf32>
    %431 = arith.mulf %426, %430 : vector<16x128xf32>
    %432 = vector.broadcast %411 : vector<1x128xf32> to vector<16x128xf32>
    %433 = arith.mulf %431, %432 : vector<16x128xf32>
    %434 = vector.broadcast %413 : vector<1x128xf32> to vector<16x128xf32>
    %435 = arith.addf %433, %434 : vector<16x128xf32>
    %c0_162 = arith.constant 0 : index
    %c0_163 = arith.constant 0 : index
    %c0_164 = arith.constant 0 : index
    %436 = vector.load %arg14[%c0_162, %c0_163, %c0_164] : memref<2x128x256xf32, #tpu.memory_space<vmem>>, vector<1x128x256xf32>
    %437 = vector.shape_cast %436 : vector<1x128x256xf32> to vector<128x256xf32>
    %cst_165 = arith.constant dense<0.000000e+00> : vector<16x256xf32>
    %438 = tpu.matmul %435, %437, %cst_165 {dimension_numbers = #tpu.dot_dimension_numbers<[1], [0], [0], [1], [0, 0, 1, 1], [], []>} : vector<16x128xf32>, vector<128x256xf32>, vector<16x256xf32> -> vector<16x256xf32>
    %c0_166 = arith.constant 0 : index
    %c0_167 = arith.constant 0 : index
    %c0_168 = arith.constant 0 : index
    %439 = vector.load %arg15[%c0_166, %c0_167, %c0_168] : memref<2x1x256xf32, #tpu.memory_space<vmem>>, vector<1x1x256xf32>
    %440 = vector.shape_cast %439 : vector<1x1x256xf32> to vector<1x256xf32>
    %441 = vector.broadcast %440 : vector<1x256xf32> to vector<16x256xf32>
    %442 = arith.addf %438, %441 : vector<16x256xf32>
    %cst_169 = arith.constant 0.000000e+00 : f32
    %443 = vector.broadcast %cst_169 : f32 to vector<16x256xf32>
    %444 = arith.maximumf %442, %443 : vector<16x256xf32>
    %c0_170 = arith.constant 0 : index
    %c0_171 = arith.constant 0 : index
    %c0_172 = arith.constant 0 : index
    %445 = vector.load %arg16[%c0_170, %c0_171, %c0_172] : memref<2x256x128xf32, #tpu.memory_space<vmem>>, vector<1x256x128xf32>
    %446 = vector.shape_cast %445 : vector<1x256x128xf32> to vector<256x128xf32>
    %cst_173 = arith.constant dense<0.000000e+00> : vector<16x128xf32>
    %447 = tpu.matmul %444, %446, %cst_173 {dimension_numbers = #tpu.dot_dimension_numbers<[1], [0], [0], [1], [0, 0, 1, 1], [], []>} : vector<16x256xf32>, vector<256x128xf32>, vector<16x128xf32> -> vector<16x128xf32>
    %c0_174 = arith.constant 0 : index
    %c0_175 = arith.constant 0 : index
    %c0_176 = arith.constant 0 : index
    %448 = vector.load %arg17[%c0_174, %c0_175, %c0_176] : memref<2x1x128xf32, #tpu.memory_space<vmem>>, vector<1x1x128xf32>
    %449 = vector.shape_cast %448 : vector<1x1x128xf32> to vector<1x128xf32>
    %450 = vector.broadcast %449 : vector<1x128xf32> to vector<16x128xf32>
    %451 = arith.addf %447, %450 : vector<16x128xf32>
    %452 = arith.addf %435, %451 : vector<16x128xf32>
    %c0_177 = arith.constant 0 : index
    %c0_178 = arith.constant 0 : index
    %c0_179 = arith.constant 0 : index
    %453 = vector.load %arg22[%c0_177, %c0_178, %c0_179] : memref<2x1x128xf32, #tpu.memory_space<vmem>>, vector<1x1x128xf32>
    %454 = vector.shape_cast %453 : vector<1x1x128xf32> to vector<1x128xf32>
    %c0_180 = arith.constant 0 : index
    %c0_181 = arith.constant 0 : index
    %c0_182 = arith.constant 0 : index
    %455 = vector.load %arg23[%c0_180, %c0_181, %c0_182] : memref<2x1x128xf32, #tpu.memory_space<vmem>>, vector<1x1x128xf32>
    %456 = vector.shape_cast %455 : vector<1x1x128xf32> to vector<1x128xf32>
    %cst_183 = arith.constant dense<0.000000e+00> : vector<16xf32>
    %457 = vector.multi_reduction <add>, %452, %cst_183 [1] : vector<16x128xf32> to vector<16xf32>
    %458 = vector.shape_cast %457 : vector<16xf32> to vector<16x1xf32>
    %cst_184 = arith.constant 1.280000e+02 : f32
    %459 = vector.broadcast %cst_184 : f32 to vector<16x1xf32>
    %460 = arith.divf %458, %459 : vector<16x1xf32>
    %461 = vector.broadcast %460 : vector<16x1xf32> to vector<16x128xf32>
    %462 = arith.subf %452, %461 : vector<16x128xf32>
    %463 = arith.mulf %462, %462 : vector<16x128xf32>
    %cst_185 = arith.constant dense<0.000000e+00> : vector<16xf32>
    %464 = vector.multi_reduction <add>, %463, %cst_185 [1] : vector<16x128xf32> to vector<16xf32>
    %465 = vector.shape_cast %464 : vector<16xf32> to vector<16x1xf32>
    %cst_186 = arith.constant 1.280000e+02 : f32
    %466 = vector.broadcast %cst_186 : f32 to vector<16x1xf32>
    %467 = arith.divf %465, %466 : vector<16x1xf32>
    %468 = vector.broadcast %460 : vector<16x1xf32> to vector<16x128xf32>
    %469 = arith.subf %452, %468 : vector<16x128xf32>
    %cst_187 = arith.constant 9.99999974E-6 : f32
    %470 = vector.broadcast %cst_187 : f32 to vector<16x1xf32>
    %471 = arith.addf %467, %470 : vector<16x1xf32>
    %472 = math.rsqrt %471 : vector<16x1xf32>
    %473 = vector.broadcast %472 : vector<16x1xf32> to vector<16x128xf32>
    %474 = arith.mulf %469, %473 : vector<16x128xf32>
    %475 = vector.broadcast %454 : vector<1x128xf32> to vector<16x128xf32>
    %476 = arith.mulf %474, %475 : vector<16x128xf32>
    %477 = vector.broadcast %456 : vector<1x128xf32> to vector<16x128xf32>
    %478 = arith.addf %476, %477 : vector<16x128xf32>
    %c1 = arith.constant 1 : index
    %c0_188 = arith.constant 0 : index
    %c0_189 = arith.constant 0 : index
    %479 = vector.load %arg4[%c1, %c0_188, %c0_189] : memref<2x128x384xf32, #tpu.memory_space<vmem>>, vector<1x128x384xf32>
    %480 = vector.shape_cast %479 : vector<1x128x384xf32> to vector<128x384xf32>
    %cst_190 = arith.constant dense<0.000000e+00> : vector<16x384xf32>
    %481 = tpu.matmul %478, %480, %cst_190 {dimension_numbers = #tpu.dot_dimension_numbers<[1], [0], [0], [1], [0, 0, 1, 1], [], []>} : vector<16x128xf32>, vector<128x384xf32>, vector<16x384xf32> -> vector<16x384xf32>
    %c1_191 = arith.constant 1 : index
    %c0_192 = arith.constant 0 : index
    %c0_193 = arith.constant 0 : index
    %482 = vector.load %arg5[%c1_191, %c0_192, %c0_193] : memref<2x1x384xf32, #tpu.memory_space<vmem>>, vector<1x1x384xf32>
    %483 = vector.shape_cast %482 : vector<1x1x384xf32> to vector<1x384xf32>
    %484 = vector.broadcast %483 : vector<1x384xf32> to vector<16x384xf32>
    %485 = arith.addf %481, %484 : vector<16x384xf32>
    %486 = vector.extract_strided_slice %485 {offsets = [0, 0], sizes = [16, 128], strides = [1, 1]} : vector<16x384xf32> to vector<16x128xf32>
    %487 = vector.extract_strided_slice %485 {offsets = [0, 128], sizes = [16, 128], strides = [1, 1]} : vector<16x384xf32> to vector<16x128xf32>
    %488 = vector.extract_strided_slice %485 {offsets = [0, 256], sizes = [16, 128], strides = [1, 1]} : vector<16x384xf32> to vector<16x128xf32>
    %489 = vector.extract_strided_slice %486 {offsets = [0, 0], sizes = [8, 32], strides = [1, 1]} : vector<16x128xf32> to vector<8x32xf32>
    %490 = vector.extract_strided_slice %487 {offsets = [0, 0], sizes = [8, 32], strides = [1, 1]} : vector<16x128xf32> to vector<8x32xf32>
    %491 = vector.extract_strided_slice %488 {offsets = [0, 0], sizes = [8, 32], strides = [1, 1]} : vector<16x128xf32> to vector<8x32xf32>
    %cst_194 = arith.constant dense<0.000000e+00> : vector<8x8xf32>
    %492 = tpu.matmul %489, %490, %cst_194 {dimension_numbers = #tpu.dot_dimension_numbers<[1], [1], [0], [0], [0, 0, 1, 0], [], []>} : vector<8x32xf32>, vector<8x32xf32>, vector<8x8xf32> -> vector<8x8xf32>
    %cst_195 = arith.constant 0.176776692 : f32
    %493 = vector.broadcast %cst_195 : f32 to vector<8x8xf32>
    %494 = arith.mulf %492, %493 : vector<8x8xf32>
    %cst_196 = arith.constant -1.000000e+09 : f32
    %495 = vector.broadcast %cst_196 : f32 to vector<8x8xf32>
    %496 = arith.select %9, %494, %495 : vector<8x8xi1>, vector<8x8xf32>
    %cst_197 = arith.constant dense<0xFF800000> : vector<8xf32>
    %497 = vector.multi_reduction <maximumf>, %496, %cst_197 [1] : vector<8x8xf32> to vector<8xf32>
    %498 = vector.shape_cast %497 : vector<8xf32> to vector<8x1xf32>
    %499 = vector.broadcast %498 : vector<8x1xf32> to vector<8x8xf32>
    %500 = arith.subf %496, %499 : vector<8x8xf32>
    %501 = math.exp %500 : vector<8x8xf32>
    %cst_198 = arith.constant dense<0.000000e+00> : vector<8xf32>
    %502 = vector.multi_reduction <add>, %501, %cst_198 [1] : vector<8x8xf32> to vector<8xf32>
    %503 = vector.shape_cast %502 : vector<8xf32> to vector<8x1xf32>
    %504 = tpu.reciprocal %503 {approx = true} : vector<8x1xf32> -> vector<8x1xf32>
    %505 = vector.broadcast %504 : vector<8x1xf32> to vector<8x8xf32>
    %506 = arith.mulf %501, %505 : vector<8x8xf32>
    %cst_199 = arith.constant dense<0.000000e+00> : vector<8x32xf32>
    %507 = tpu.matmul %506, %491, %cst_199 {dimension_numbers = #tpu.dot_dimension_numbers<[1], [0], [0], [1], [0, 0, 1, 1], [], []>} : vector<8x8xf32>, vector<8x32xf32>, vector<8x32xf32> -> vector<8x32xf32>
    %c0_200 = arith.constant 0 : index
    %c0_201 = arith.constant 0 : index
    %c0_202 = arith.constant 0 : index
    %508 = vector.load %arg27[%c0_200, %c0_201, %c0_202] : memref<8x8x8xf32, #tpu.memory_space<vmem>>, vector<1x8x8xf32>
    %509 = vector.shape_cast %508 : vector<1x8x8xf32> to vector<8x8xf32>
    %510 = vector.shape_cast %506 : vector<8x8xf32> to vector<1x8x8xf32>
    tpu.vector_store %arg27[%c0_200, %c0_201, %c0_202], %510 {strides = array<i32>} : memref<8x8x8xf32, #tpu.memory_space<vmem>>, vector<1x8x8xf32>,
    %511 = vector.extract_strided_slice %486 {offsets = [0, 32], sizes = [8, 32], strides = [1, 1]} : vector<16x128xf32> to vector<8x32xf32>
    %512 = vector.extract_strided_slice %487 {offsets = [0, 32], sizes = [8, 32], strides = [1, 1]} : vector<16x128xf32> to vector<8x32xf32>
    %513 = vector.extract_strided_slice %488 {offsets = [0, 32], sizes = [8, 32], strides = [1, 1]} : vector<16x128xf32> to vector<8x32xf32>
    %cst_203 = arith.constant dense<0.000000e+00> : vector<8x8xf32>
    %514 = tpu.matmul %511, %512, %cst_203 {dimension_numbers = #tpu.dot_dimension_numbers<[1], [1], [0], [0], [0, 0, 1, 0], [], []>} : vector<8x32xf32>, vector<8x32xf32>, vector<8x8xf32> -> vector<8x8xf32>
    %cst_204 = arith.constant 0.176776692 : f32
    %515 = vector.broadcast %cst_204 : f32 to vector<8x8xf32>
    %516 = arith.mulf %514, %515 : vector<8x8xf32>
    %cst_205 = arith.constant -1.000000e+09 : f32
    %517 = vector.broadcast %cst_205 : f32 to vector<8x8xf32>
    %518 = arith.select %9, %516, %517 : vector<8x8xi1>, vector<8x8xf32>
    %cst_206 = arith.constant dense<0xFF800000> : vector<8xf32>
    %519 = vector.multi_reduction <maximumf>, %518, %cst_206 [1] : vector<8x8xf32> to vector<8xf32>
    %520 = vector.shape_cast %519 : vector<8xf32> to vector<8x1xf32>
    %521 = vector.broadcast %520 : vector<8x1xf32> to vector<8x8xf32>
    %522 = arith.subf %518, %521 : vector<8x8xf32>
    %523 = math.exp %522 : vector<8x8xf32>
    %cst_207 = arith.constant dense<0.000000e+00> : vector<8xf32>
    %524 = vector.multi_reduction <add>, %523, %cst_207 [1] : vector<8x8xf32> to vector<8xf32>
    %525 = vector.shape_cast %524 : vector<8xf32> to vector<8x1xf32>
    %526 = tpu.reciprocal %525 {approx = true} : vector<8x1xf32> -> vector<8x1xf32>
    %527 = vector.broadcast %526 : vector<8x1xf32> to vector<8x8xf32>
    %528 = arith.mulf %523, %527 : vector<8x8xf32>
    %cst_208 = arith.constant dense<0.000000e+00> : vector<8x32xf32>
    %529 = tpu.matmul %528, %513, %cst_208 {dimension_numbers = #tpu.dot_dimension_numbers<[1], [0], [0], [1], [0, 0, 1, 1], [], []>} : vector<8x8xf32>, vector<8x32xf32>, vector<8x32xf32> -> vector<8x32xf32>
    %c1_209 = arith.constant 1 : index
    %c0_210 = arith.constant 0 : index
    %c0_211 = arith.constant 0 : index
    %530 = vector.load %arg27[%c1_209, %c0_210, %c0_211] : memref<8x8x8xf32, #tpu.memory_space<vmem>>, vector<1x8x8xf32>
    %531 = vector.shape_cast %530 : vector<1x8x8xf32> to vector<8x8xf32>
    %532 = vector.shape_cast %528 : vector<8x8xf32> to vector<1x8x8xf32>
    tpu.vector_store %arg27[%c1_209, %c0_210, %c0_211], %532 {strides = array<i32>} : memref<8x8x8xf32, #tpu.memory_space<vmem>>, vector<1x8x8xf32>,
    %533 = vector.extract_strided_slice %486 {offsets = [0, 64], sizes = [8, 32], strides = [1, 1]} : vector<16x128xf32> to vector<8x32xf32>
    %534 = vector.extract_strided_slice %487 {offsets = [0, 64], sizes = [8, 32], strides = [1, 1]} : vector<16x128xf32> to vector<8x32xf32>
    %535 = vector.extract_strided_slice %488 {offsets = [0, 64], sizes = [8, 32], strides = [1, 1]} : vector<16x128xf32> to vector<8x32xf32>
    %cst_212 = arith.constant dense<0.000000e+00> : vector<8x8xf32>
    %536 = tpu.matmul %533, %534, %cst_212 {dimension_numbers = #tpu.dot_dimension_numbers<[1], [1], [0], [0], [0, 0, 1, 0], [], []>} : vector<8x32xf32>, vector<8x32xf32>, vector<8x8xf32> -> vector<8x8xf32>
    %cst_213 = arith.constant 0.176776692 : f32
    %537 = vector.broadcast %cst_213 : f32 to vector<8x8xf32>
    %538 = arith.mulf %536, %537 : vector<8x8xf32>
    %cst_214 = arith.constant -1.000000e+09 : f32
    %539 = vector.broadcast %cst_214 : f32 to vector<8x8xf32>
    %540 = arith.select %9, %538, %539 : vector<8x8xi1>, vector<8x8xf32>
    %cst_215 = arith.constant dense<0xFF800000> : vector<8xf32>
    %541 = vector.multi_reduction <maximumf>, %540, %cst_215 [1] : vector<8x8xf32> to vector<8xf32>
    %542 = vector.shape_cast %541 : vector<8xf32> to vector<8x1xf32>
    %543 = vector.broadcast %542 : vector<8x1xf32> to vector<8x8xf32>
    %544 = arith.subf %540, %543 : vector<8x8xf32>
    %545 = math.exp %544 : vector<8x8xf32>
    %cst_216 = arith.constant dense<0.000000e+00> : vector<8xf32>
    %546 = vector.multi_reduction <add>, %545, %cst_216 [1] : vector<8x8xf32> to vector<8xf32>
    %547 = vector.shape_cast %546 : vector<8xf32> to vector<8x1xf32>
    %548 = tpu.reciprocal %547 {approx = true} : vector<8x1xf32> -> vector<8x1xf32>
    %549 = vector.broadcast %548 : vector<8x1xf32> to vector<8x8xf32>
    %550 = arith.mulf %545, %549 : vector<8x8xf32>
    %cst_217 = arith.constant dense<0.000000e+00> : vector<8x32xf32>
    %551 = tpu.matmul %550, %535, %cst_217 {dimension_numbers = #tpu.dot_dimension_numbers<[1], [0], [0], [1], [0, 0, 1, 1], [], []>} : vector<8x8xf32>, vector<8x32xf32>, vector<8x32xf32> -> vector<8x32xf32>
    %c2 = arith.constant 2 : index
    %c0_218 = arith.constant 0 : index
    %c0_219 = arith.constant 0 : index
    %552 = vector.load %arg27[%c2, %c0_218, %c0_219] : memref<8x8x8xf32, #tpu.memory_space<vmem>>, vector<1x8x8xf32>
    %553 = vector.shape_cast %552 : vector<1x8x8xf32> to vector<8x8xf32>
    %554 = vector.shape_cast %550 : vector<8x8xf32> to vector<1x8x8xf32>
    tpu.vector_store %arg27[%c2, %c0_218, %c0_219], %554 {strides = array<i32>} : memref<8x8x8xf32, #tpu.memory_space<vmem>>, vector<1x8x8xf32>,
    %555 = vector.extract_strided_slice %486 {offsets = [0, 96], sizes = [8, 32], strides = [1, 1]} : vector<16x128xf32> to vector<8x32xf32>
    %556 = vector.extract_strided_slice %487 {offsets = [0, 96], sizes = [8, 32], strides = [1, 1]} : vector<16x128xf32> to vector<8x32xf32>
    %557 = vector.extract_strided_slice %488 {offsets = [0, 96], sizes = [8, 32], strides = [1, 1]} : vector<16x128xf32> to vector<8x32xf32>
    %cst_220 = arith.constant dense<0.000000e+00> : vector<8x8xf32>
    %558 = tpu.matmul %555, %556, %cst_220 {dimension_numbers = #tpu.dot_dimension_numbers<[1], [1], [0], [0], [0, 0, 1, 0], [], []>} : vector<8x32xf32>, vector<8x32xf32>, vector<8x8xf32> -> vector<8x8xf32>
    %cst_221 = arith.constant 0.176776692 : f32
    %559 = vector.broadcast %cst_221 : f32 to vector<8x8xf32>
    %560 = arith.mulf %558, %559 : vector<8x8xf32>
    %cst_222 = arith.constant -1.000000e+09 : f32
    %561 = vector.broadcast %cst_222 : f32 to vector<8x8xf32>
    %562 = arith.select %9, %560, %561 : vector<8x8xi1>, vector<8x8xf32>
    %cst_223 = arith.constant dense<0xFF800000> : vector<8xf32>
    %563 = vector.multi_reduction <maximumf>, %562, %cst_223 [1] : vector<8x8xf32> to vector<8xf32>
    %564 = vector.shape_cast %563 : vector<8xf32> to vector<8x1xf32>
    %565 = vector.broadcast %564 : vector<8x1xf32> to vector<8x8xf32>
    %566 = arith.subf %562, %565 : vector<8x8xf32>
    %567 = math.exp %566 : vector<8x8xf32>
    %cst_224 = arith.constant dense<0.000000e+00> : vector<8xf32>
    %568 = vector.multi_reduction <add>, %567, %cst_224 [1] : vector<8x8xf32> to vector<8xf32>
    %569 = vector.shape_cast %568 : vector<8xf32> to vector<8x1xf32>
    %570 = tpu.reciprocal %569 {approx = true} : vector<8x1xf32> -> vector<8x1xf32>
    %571 = vector.broadcast %570 : vector<8x1xf32> to vector<8x8xf32>
    %572 = arith.mulf %567, %571 : vector<8x8xf32>
    %cst_225 = arith.constant dense<0.000000e+00> : vector<8x32xf32>
    %573 = tpu.matmul %572, %557, %cst_225 {dimension_numbers = #tpu.dot_dimension_numbers<[1], [0], [0], [1], [0, 0, 1, 1], [], []>} : vector<8x8xf32>, vector<8x32xf32>, vector<8x32xf32> -> vector<8x32xf32>
    %c3 = arith.constant 3 : index
    %c0_226 = arith.constant 0 : index
    %c0_227 = arith.constant 0 : index
    %574 = vector.load %arg27[%c3, %c0_226, %c0_227] : memref<8x8x8xf32, #tpu.memory_space<vmem>>, vector<1x8x8xf32>
    %575 = vector.shape_cast %574 : vector<1x8x8xf32> to vector<8x8xf32>
    %576 = vector.shape_cast %572 : vector<8x8xf32> to vector<1x8x8xf32>
    tpu.vector_store %arg27[%c3, %c0_226, %c0_227], %576 {strides = array<i32>} : memref<8x8x8xf32, #tpu.memory_space<vmem>>, vector<1x8x8xf32>,
    %577 = tpu.concatenate %507, %529, %551, %573 in 1 : vector<8x32xf32>, vector<8x32xf32>, vector<8x32xf32>, vector<8x32xf32> -> vector<8x128xf32>
    %578 = vector.extract_strided_slice %486 {offsets = [8, 0], sizes = [8, 32], strides = [1, 1]} : vector<16x128xf32> to vector<8x32xf32>
    %579 = vector.extract_strided_slice %487 {offsets = [8, 0], sizes = [8, 32], strides = [1, 1]} : vector<16x128xf32> to vector<8x32xf32>
    %580 = vector.extract_strided_slice %488 {offsets = [8, 0], sizes = [8, 32], strides = [1, 1]} : vector<16x128xf32> to vector<8x32xf32>
    %cst_228 = arith.constant dense<0.000000e+00> : vector<8x8xf32>
    %581 = tpu.matmul %578, %579, %cst_228 {dimension_numbers = #tpu.dot_dimension_numbers<[1], [1], [0], [0], [0, 0, 1, 0], [], []>} : vector<8x32xf32>, vector<8x32xf32>, vector<8x8xf32> -> vector<8x8xf32>
    %cst_229 = arith.constant 0.176776692 : f32
    %582 = vector.broadcast %cst_229 : f32 to vector<8x8xf32>
    %583 = arith.mulf %581, %582 : vector<8x8xf32>
    %cst_230 = arith.constant -1.000000e+09 : f32
    %584 = vector.broadcast %cst_230 : f32 to vector<8x8xf32>
    %585 = arith.select %9, %583, %584 : vector<8x8xi1>, vector<8x8xf32>
    %cst_231 = arith.constant dense<0xFF800000> : vector<8xf32>
    %586 = vector.multi_reduction <maximumf>, %585, %cst_231 [1] : vector<8x8xf32> to vector<8xf32>
    %587 = vector.shape_cast %586 : vector<8xf32> to vector<8x1xf32>
    %588 = vector.broadcast %587 : vector<8x1xf32> to vector<8x8xf32>
    %589 = arith.subf %585, %588 : vector<8x8xf32>
    %590 = math.exp %589 : vector<8x8xf32>
    %cst_232 = arith.constant dense<0.000000e+00> : vector<8xf32>
    %591 = vector.multi_reduction <add>, %590, %cst_232 [1] : vector<8x8xf32> to vector<8xf32>
    %592 = vector.shape_cast %591 : vector<8xf32> to vector<8x1xf32>
    %593 = tpu.reciprocal %592 {approx = true} : vector<8x1xf32> -> vector<8x1xf32>
    %594 = vector.broadcast %593 : vector<8x1xf32> to vector<8x8xf32>
    %595 = arith.mulf %590, %594 : vector<8x8xf32>
    %cst_233 = arith.constant dense<0.000000e+00> : vector<8x32xf32>
    %596 = tpu.matmul %595, %580, %cst_233 {dimension_numbers = #tpu.dot_dimension_numbers<[1], [0], [0], [1], [0, 0, 1, 1], [], []>} : vector<8x8xf32>, vector<8x32xf32>, vector<8x32xf32> -> vector<8x32xf32>
    %c4 = arith.constant 4 : index
    %c0_234 = arith.constant 0 : index
    %c0_235 = arith.constant 0 : index
    %597 = vector.load %arg27[%c4, %c0_234, %c0_235] : memref<8x8x8xf32, #tpu.memory_space<vmem>>, vector<1x8x8xf32>
    %598 = vector.shape_cast %597 : vector<1x8x8xf32> to vector<8x8xf32>
    %599 = vector.shape_cast %595 : vector<8x8xf32> to vector<1x8x8xf32>
    tpu.vector_store %arg27[%c4, %c0_234, %c0_235], %599 {strides = array<i32>} : memref<8x8x8xf32, #tpu.memory_space<vmem>>, vector<1x8x8xf32>,
    %600 = vector.extract_strided_slice %486 {offsets = [8, 32], sizes = [8, 32], strides = [1, 1]} : vector<16x128xf32> to vector<8x32xf32>
    %601 = vector.extract_strided_slice %487 {offsets = [8, 32], sizes = [8, 32], strides = [1, 1]} : vector<16x128xf32> to vector<8x32xf32>
    %602 = vector.extract_strided_slice %488 {offsets = [8, 32], sizes = [8, 32], strides = [1, 1]} : vector<16x128xf32> to vector<8x32xf32>
    %cst_236 = arith.constant dense<0.000000e+00> : vector<8x8xf32>
    %603 = tpu.matmul %600, %601, %cst_236 {dimension_numbers = #tpu.dot_dimension_numbers<[1], [1], [0], [0], [0, 0, 1, 0], [], []>} : vector<8x32xf32>, vector<8x32xf32>, vector<8x8xf32> -> vector<8x8xf32>
    %cst_237 = arith.constant 0.176776692 : f32
    %604 = vector.broadcast %cst_237 : f32 to vector<8x8xf32>
    %605 = arith.mulf %603, %604 : vector<8x8xf32>
    %cst_238 = arith.constant -1.000000e+09 : f32
    %606 = vector.broadcast %cst_238 : f32 to vector<8x8xf32>
    %607 = arith.select %9, %605, %606 : vector<8x8xi1>, vector<8x8xf32>
    %cst_239 = arith.constant dense<0xFF800000> : vector<8xf32>
    %608 = vector.multi_reduction <maximumf>, %607, %cst_239 [1] : vector<8x8xf32> to vector<8xf32>
    %609 = vector.shape_cast %608 : vector<8xf32> to vector<8x1xf32>
    %610 = vector.broadcast %609 : vector<8x1xf32> to vector<8x8xf32>
    %611 = arith.subf %607, %610 : vector<8x8xf32>
    %612 = math.exp %611 : vector<8x8xf32>
    %cst_240 = arith.constant dense<0.000000e+00> : vector<8xf32>
    %613 = vector.multi_reduction <add>, %612, %cst_240 [1] : vector<8x8xf32> to vector<8xf32>
    %614 = vector.shape_cast %613 : vector<8xf32> to vector<8x1xf32>
    %615 = tpu.reciprocal %614 {approx = true} : vector<8x1xf32> -> vector<8x1xf32>
    %616 = vector.broadcast %615 : vector<8x1xf32> to vector<8x8xf32>
    %617 = arith.mulf %612, %616 : vector<8x8xf32>
    %cst_241 = arith.constant dense<0.000000e+00> : vector<8x32xf32>
    %618 = tpu.matmul %617, %602, %cst_241 {dimension_numbers = #tpu.dot_dimension_numbers<[1], [0], [0], [1], [0, 0, 1, 1], [], []>} : vector<8x8xf32>, vector<8x32xf32>, vector<8x32xf32> -> vector<8x32xf32>
    %c5 = arith.constant 5 : index
    %c0_242 = arith.constant 0 : index
    %c0_243 = arith.constant 0 : index
    %619 = vector.load %arg27[%c5, %c0_242, %c0_243] : memref<8x8x8xf32, #tpu.memory_space<vmem>>, vector<1x8x8xf32>
    %620 = vector.shape_cast %619 : vector<1x8x8xf32> to vector<8x8xf32>
    %621 = vector.shape_cast %617 : vector<8x8xf32> to vector<1x8x8xf32>
    tpu.vector_store %arg27[%c5, %c0_242, %c0_243], %621 {strides = array<i32>} : memref<8x8x8xf32, #tpu.memory_space<vmem>>, vector<1x8x8xf32>,
    %622 = vector.extract_strided_slice %486 {offsets = [8, 64], sizes = [8, 32], strides = [1, 1]} : vector<16x128xf32> to vector<8x32xf32>
    %623 = vector.extract_strided_slice %487 {offsets = [8, 64], sizes = [8, 32], strides = [1, 1]} : vector<16x128xf32> to vector<8x32xf32>
    %624 = vector.extract_strided_slice %488 {offsets = [8, 64], sizes = [8, 32], strides = [1, 1]} : vector<16x128xf32> to vector<8x32xf32>
    %cst_244 = arith.constant dense<0.000000e+00> : vector<8x8xf32>
    %625 = tpu.matmul %622, %623, %cst_244 {dimension_numbers = #tpu.dot_dimension_numbers<[1], [1], [0], [0], [0, 0, 1, 0], [], []>} : vector<8x32xf32>, vector<8x32xf32>, vector<8x8xf32> -> vector<8x8xf32>
    %cst_245 = arith.constant 0.176776692 : f32
    %626 = vector.broadcast %cst_245 : f32 to vector<8x8xf32>
    %627 = arith.mulf %625, %626 : vector<8x8xf32>
    %cst_246 = arith.constant -1.000000e+09 : f32
    %628 = vector.broadcast %cst_246 : f32 to vector<8x8xf32>
    %629 = arith.select %9, %627, %628 : vector<8x8xi1>, vector<8x8xf32>
    %cst_247 = arith.constant dense<0xFF800000> : vector<8xf32>
    %630 = vector.multi_reduction <maximumf>, %629, %cst_247 [1] : vector<8x8xf32> to vector<8xf32>
    %631 = vector.shape_cast %630 : vector<8xf32> to vector<8x1xf32>
    %632 = vector.broadcast %631 : vector<8x1xf32> to vector<8x8xf32>
    %633 = arith.subf %629, %632 : vector<8x8xf32>
    %634 = math.exp %633 : vector<8x8xf32>
    %cst_248 = arith.constant dense<0.000000e+00> : vector<8xf32>
    %635 = vector.multi_reduction <add>, %634, %cst_248 [1] : vector<8x8xf32> to vector<8xf32>
    %636 = vector.shape_cast %635 : vector<8xf32> to vector<8x1xf32>
    %637 = tpu.reciprocal %636 {approx = true} : vector<8x1xf32> -> vector<8x1xf32>
    %638 = vector.broadcast %637 : vector<8x1xf32> to vector<8x8xf32>
    %639 = arith.mulf %634, %638 : vector<8x8xf32>
    %cst_249 = arith.constant dense<0.000000e+00> : vector<8x32xf32>
    %640 = tpu.matmul %639, %624, %cst_249 {dimension_numbers = #tpu.dot_dimension_numbers<[1], [0], [0], [1], [0, 0, 1, 1], [], []>} : vector<8x8xf32>, vector<8x32xf32>, vector<8x32xf32> -> vector<8x32xf32>
    %c6 = arith.constant 6 : index
    %c0_250 = arith.constant 0 : index
    %c0_251 = arith.constant 0 : index
    %641 = vector.load %arg27[%c6, %c0_250, %c0_251] : memref<8x8x8xf32, #tpu.memory_space<vmem>>, vector<1x8x8xf32>
    %642 = vector.shape_cast %641 : vector<1x8x8xf32> to vector<8x8xf32>
    %643 = vector.shape_cast %639 : vector<8x8xf32> to vector<1x8x8xf32>
    tpu.vector_store %arg27[%c6, %c0_250, %c0_251], %643 {strides = array<i32>} : memref<8x8x8xf32, #tpu.memory_space<vmem>>, vector<1x8x8xf32>,
    %644 = vector.extract_strided_slice %486 {offsets = [8, 96], sizes = [8, 32], strides = [1, 1]} : vector<16x128xf32> to vector<8x32xf32>
    %645 = vector.extract_strided_slice %487 {offsets = [8, 96], sizes = [8, 32], strides = [1, 1]} : vector<16x128xf32> to vector<8x32xf32>
    %646 = vector.extract_strided_slice %488 {offsets = [8, 96], sizes = [8, 32], strides = [1, 1]} : vector<16x128xf32> to vector<8x32xf32>
    %cst_252 = arith.constant dense<0.000000e+00> : vector<8x8xf32>
    %647 = tpu.matmul %644, %645, %cst_252 {dimension_numbers = #tpu.dot_dimension_numbers<[1], [1], [0], [0], [0, 0, 1, 0], [], []>} : vector<8x32xf32>, vector<8x32xf32>, vector<8x8xf32> -> vector<8x8xf32>
    %cst_253 = arith.constant 0.176776692 : f32
    %648 = vector.broadcast %cst_253 : f32 to vector<8x8xf32>
    %649 = arith.mulf %647, %648 : vector<8x8xf32>
    %cst_254 = arith.constant -1.000000e+09 : f32
    %650 = vector.broadcast %cst_254 : f32 to vector<8x8xf32>
    %651 = arith.select %9, %649, %650 : vector<8x8xi1>, vector<8x8xf32>
    %cst_255 = arith.constant dense<0xFF800000> : vector<8xf32>
    %652 = vector.multi_reduction <maximumf>, %651, %cst_255 [1] : vector<8x8xf32> to vector<8xf32>
    %653 = vector.shape_cast %652 : vector<8xf32> to vector<8x1xf32>
    %654 = vector.broadcast %653 : vector<8x1xf32> to vector<8x8xf32>
    %655 = arith.subf %651, %654 : vector<8x8xf32>
    %656 = math.exp %655 : vector<8x8xf32>
    %cst_256 = arith.constant dense<0.000000e+00> : vector<8xf32>
    %657 = vector.multi_reduction <add>, %656, %cst_256 [1] : vector<8x8xf32> to vector<8xf32>
    %658 = vector.shape_cast %657 : vector<8xf32> to vector<8x1xf32>
    %659 = tpu.reciprocal %658 {approx = true} : vector<8x1xf32> -> vector<8x1xf32>
    %660 = vector.broadcast %659 : vector<8x1xf32> to vector<8x8xf32>
    %661 = arith.mulf %656, %660 : vector<8x8xf32>
    %cst_257 = arith.constant dense<0.000000e+00> : vector<8x32xf32>
    %662 = tpu.matmul %661, %646, %cst_257 {dimension_numbers = #tpu.dot_dimension_numbers<[1], [0], [0], [1], [0, 0, 1, 1], [], []>} : vector<8x8xf32>, vector<8x32xf32>, vector<8x32xf32> -> vector<8x32xf32>
    %c7 = arith.constant 7 : index
    %c0_258 = arith.constant 0 : index
    %c0_259 = arith.constant 0 : index
    %663 = vector.load %arg27[%c7, %c0_258, %c0_259] : memref<8x8x8xf32, #tpu.memory_space<vmem>>, vector<1x8x8xf32>
    %664 = vector.shape_cast %663 : vector<1x8x8xf32> to vector<8x8xf32>
    %665 = vector.shape_cast %661 : vector<8x8xf32> to vector<1x8x8xf32>
    tpu.vector_store %arg27[%c7, %c0_258, %c0_259], %665 {strides = array<i32>} : memref<8x8x8xf32, #tpu.memory_space<vmem>>, vector<1x8x8xf32>,
    %666 = tpu.concatenate %596, %618, %640, %662 in 1 : vector<8x32xf32>, vector<8x32xf32>, vector<8x32xf32>, vector<8x32xf32> -> vector<8x128xf32>
    %667 = tpu.concatenate %577, %666 in 0 : vector<8x128xf32>, vector<8x128xf32> -> vector<16x128xf32>
    %c1_260 = arith.constant 1 : index
    %c0_261 = arith.constant 0 : index
    %c0_262 = arith.constant 0 : index
    %668 = vector.load %arg6[%c1_260, %c0_261, %c0_262] : memref<2x128x128xf32, #tpu.memory_space<vmem>>, vector<1x128x128xf32>
    %669 = vector.shape_cast %668 : vector<1x128x128xf32> to vector<128x128xf32>
    %cst_263 = arith.constant dense<0.000000e+00> : vector<16x128xf32>
    %670 = tpu.matmul %667, %669, %cst_263 {dimension_numbers = #tpu.dot_dimension_numbers<[1], [0], [0], [1], [0, 0, 1, 1], [], []>} : vector<16x128xf32>, vector<128x128xf32>, vector<16x128xf32> -> vector<16x128xf32>
    %c1_264 = arith.constant 1 : index
    %c0_265 = arith.constant 0 : index
    %c0_266 = arith.constant 0 : index
    %671 = vector.load %arg7[%c1_264, %c0_265, %c0_266] : memref<2x1x128xf32, #tpu.memory_space<vmem>>, vector<1x1x128xf32>
    %672 = vector.shape_cast %671 : vector<1x1x128xf32> to vector<1x128xf32>
    %673 = vector.broadcast %672 : vector<1x128xf32> to vector<16x128xf32>
    %674 = arith.addf %670, %673 : vector<16x128xf32>
    %675 = arith.addf %478, %674 : vector<16x128xf32>
    %c1_267 = arith.constant 1 : index
    %c0_268 = arith.constant 0 : index
    %c0_269 = arith.constant 0 : index
    %676 = vector.load %arg18[%c1_267, %c0_268, %c0_269] : memref<2x1x128xf32, #tpu.memory_space<vmem>>, vector<1x1x128xf32>
    %677 = vector.shape_cast %676 : vector<1x1x128xf32> to vector<1x128xf32>
    %c1_270 = arith.constant 1 : index
    %c0_271 = arith.constant 0 : index
    %c0_272 = arith.constant 0 : index
    %678 = vector.load %arg19[%c1_270, %c0_271, %c0_272] : memref<2x1x128xf32, #tpu.memory_space<vmem>>, vector<1x1x128xf32>
    %679 = vector.shape_cast %678 : vector<1x1x128xf32> to vector<1x128xf32>
    %cst_273 = arith.constant dense<0.000000e+00> : vector<16xf32>
    %680 = vector.multi_reduction <add>, %675, %cst_273 [1] : vector<16x128xf32> to vector<16xf32>
    %681 = vector.shape_cast %680 : vector<16xf32> to vector<16x1xf32>
    %cst_274 = arith.constant 1.280000e+02 : f32
    %682 = vector.broadcast %cst_274 : f32 to vector<16x1xf32>
    %683 = arith.divf %681, %682 : vector<16x1xf32>
    %684 = vector.broadcast %683 : vector<16x1xf32> to vector<16x128xf32>
    %685 = arith.subf %675, %684 : vector<16x128xf32>
    %686 = arith.mulf %685, %685 : vector<16x128xf32>
    %cst_275 = arith.constant dense<0.000000e+00> : vector<16xf32>
    %687 = vector.multi_reduction <add>, %686, %cst_275 [1] : vector<16x128xf32> to vector<16xf32>
    %688 = vector.shape_cast %687 : vector<16xf32> to vector<16x1xf32>
    %cst_276 = arith.constant 1.280000e+02 : f32
    %689 = vector.broadcast %cst_276 : f32 to vector<16x1xf32>
    %690 = arith.divf %688, %689 : vector<16x1xf32>
    %691 = vector.broadcast %683 : vector<16x1xf32> to vector<16x128xf32>
    %692 = arith.subf %675, %691 : vector<16x128xf32>
    %cst_277 = arith.constant 9.99999974E-6 : f32
    %693 = vector.broadcast %cst_277 : f32 to vector<16x1xf32>
    %694 = arith.addf %690, %693 : vector<16x1xf32>
    %695 = math.rsqrt %694 : vector<16x1xf32>
    %696 = vector.broadcast %695 : vector<16x1xf32> to vector<16x128xf32>
    %697 = arith.mulf %692, %696 : vector<16x128xf32>
    %698 = vector.broadcast %677 : vector<1x128xf32> to vector<16x128xf32>
    %699 = arith.mulf %697, %698 : vector<16x128xf32>
    %700 = vector.broadcast %679 : vector<1x128xf32> to vector<16x128xf32>
    %701 = arith.addf %699, %700 : vector<16x128xf32>
    %c1_278 = arith.constant 1 : index
    %c0_279 = arith.constant 0 : index
    %c0_280 = arith.constant 0 : index
    %702 = vector.load %arg8[%c1_278, %c0_279, %c0_280] : memref<2x128x128xf32, #tpu.memory_space<vmem>>, vector<1x128x128xf32>
    %703 = vector.shape_cast %702 : vector<1x128x128xf32> to vector<128x128xf32>
    %cst_281 = arith.constant dense<0.000000e+00> : vector<16x128xf32>
    %704 = tpu.matmul %701, %703, %cst_281 {dimension_numbers = #tpu.dot_dimension_numbers<[1], [0], [0], [1], [0, 0, 1, 1], [], []>} : vector<16x128xf32>, vector<128x128xf32>, vector<16x128xf32> -> vector<16x128xf32>
    %c1_282 = arith.constant 1 : index
    %c0_283 = arith.constant 0 : index
    %c0_284 = arith.constant 0 : index
    %705 = vector.load %arg9[%c1_282, %c0_283, %c0_284] : memref<2x1x128xf32, #tpu.memory_space<vmem>>, vector<1x1x128xf32>
    %706 = vector.shape_cast %705 : vector<1x1x128xf32> to vector<1x128xf32>
    %707 = vector.broadcast %706 : vector<1x128xf32> to vector<16x128xf32>
    %708 = arith.addf %704, %707 : vector<16x128xf32>
    %c1_285 = arith.constant 1 : index
    %c0_286 = arith.constant 0 : index
    %c0_287 = arith.constant 0 : index
    %709 = vector.load %arg10[%c1_285, %c0_286, %c0_287] : memref<2x128x256xf32, #tpu.memory_space<vmem>>, vector<1x128x256xf32>
    %710 = vector.shape_cast %709 : vector<1x128x256xf32> to vector<128x256xf32>
    %cst_288 = arith.constant dense<0.000000e+00> : vector<32x256xf32>
    %711 = tpu.matmul %5, %710, %cst_288 {dimension_numbers = #tpu.dot_dimension_numbers<[1], [0], [0], [1], [0, 0, 1, 1], [], []>} : vector<32x128xf32>, vector<128x256xf32>, vector<32x256xf32> -> vector<32x256xf32>
    %c1_289 = arith.constant 1 : index
    %c0_290 = arith.constant 0 : index
    %c0_291 = arith.constant 0 : index
    %712 = vector.load %arg11[%c1_289, %c0_290, %c0_291] : memref<2x1x256xf32, #tpu.memory_space<vmem>>, vector<1x1x256xf32>
    %713 = vector.shape_cast %712 : vector<1x1x256xf32> to vector<1x256xf32>
    %714 = vector.broadcast %713 : vector<1x256xf32> to vector<32x256xf32>
    %715 = arith.addf %711, %714 : vector<32x256xf32>
    %716 = vector.extract_strided_slice %715 {offsets = [0, 0], sizes = [32, 128], strides = [1, 1]} : vector<32x256xf32> to vector<32x128xf32>
    %717 = vector.extract_strided_slice %715 {offsets = [0, 128], sizes = [32, 128], strides = [1, 1]} : vector<32x256xf32> to vector<32x128xf32>
    %718 = vector.extract_strided_slice %6 {offsets = [0, 0], sizes = [1, 16], strides = [1, 1]} : vector<2x16xf32> to vector<1x16xf32>
    %cst_292 = arith.constant 0.000000e+00 : f32
    %719 = vector.broadcast %cst_292 : f32 to vector<1x16xf32>
    %720 = arith.cmpf ogt, %718, %719 : vector<1x16xf32>
    %721 = vector.extract_strided_slice %708 {offsets = [0, 0], sizes = [8, 32], strides = [1, 1]} : vector<16x128xf32> to vector<8x32xf32>
    %722 = vector.extract_strided_slice %716 {offsets = [0, 0], sizes = [16, 32], strides = [1, 1]} : vector<32x128xf32> to vector<16x32xf32>
    %723 = vector.extract_strided_slice %717 {offsets = [0, 0], sizes = [16, 32], strides = [1, 1]} : vector<32x128xf32> to vector<16x32xf32>
    %cst_293 = arith.constant dense<0.000000e+00> : vector<8x16xf32>
    %724 = tpu.matmul %721, %722, %cst_293 {dimension_numbers = #tpu.dot_dimension_numbers<[1], [1], [0], [0], [0, 0, 1, 0], [], []>} : vector<8x32xf32>, vector<16x32xf32>, vector<8x16xf32> -> vector<8x16xf32>
    %cst_294 = arith.constant 0.176776692 : f32
    %725 = vector.broadcast %cst_294 : f32 to vector<8x16xf32>
    %726 = arith.mulf %724, %725 : vector<8x16xf32>
    %cst_295 = arith.constant -1.000000e+09 : f32
    %727 = vector.shape_cast %720 : vector<1x16xi1> to vector<1x16xi1>
    %728 = vector.broadcast %727 : vector<1x16xi1> to vector<8x16xi1>
    %729 = vector.broadcast %cst_295 : f32 to vector<8x16xf32>
    %730 = arith.select %728, %726, %729 : vector<8x16xi1>, vector<8x16xf32>
    %cst_296 = arith.constant dense<0xFF800000> : vector<8xf32>
    %731 = vector.multi_reduction <maximumf>, %730, %cst_296 [1] : vector<8x16xf32> to vector<8xf32>
    %732 = vector.shape_cast %731 : vector<8xf32> to vector<8x1xf32>
    %733 = vector.broadcast %732 : vector<8x1xf32> to vector<8x16xf32>
    %734 = arith.subf %730, %733 : vector<8x16xf32>
    %735 = math.exp %734 : vector<8x16xf32>
    %cst_297 = arith.constant dense<0.000000e+00> : vector<8xf32>
    %736 = vector.multi_reduction <add>, %735, %cst_297 [1] : vector<8x16xf32> to vector<8xf32>
    %737 = vector.shape_cast %736 : vector<8xf32> to vector<8x1xf32>
    %738 = tpu.reciprocal %737 {approx = true} : vector<8x1xf32> -> vector<8x1xf32>
    %739 = vector.broadcast %738 : vector<8x1xf32> to vector<8x16xf32>
    %740 = arith.mulf %735, %739 : vector<8x16xf32>
    %cst_298 = arith.constant dense<0.000000e+00> : vector<8x32xf32>
    %741 = tpu.matmul %740, %723, %cst_298 {dimension_numbers = #tpu.dot_dimension_numbers<[1], [0], [0], [1], [0, 0, 1, 1], [], []>} : vector<8x16xf32>, vector<16x32xf32>, vector<8x32xf32> -> vector<8x32xf32>
    %c0_299 = arith.constant 0 : index
    %c0_300 = arith.constant 0 : index
    %c0_301 = arith.constant 0 : index
    %742 = vector.load %arg28[%c0_299, %c0_300, %c0_301] : memref<8x8x16xf32, #tpu.memory_space<vmem>>, vector<1x8x16xf32>
    %743 = vector.shape_cast %742 : vector<1x8x16xf32> to vector<8x16xf32>
    %744 = vector.shape_cast %740 : vector<8x16xf32> to vector<1x8x16xf32>
    tpu.vector_store %arg28[%c0_299, %c0_300, %c0_301], %744 {strides = array<i32>} : memref<8x8x16xf32, #tpu.memory_space<vmem>>, vector<1x8x16xf32>,
    %745 = vector.extract_strided_slice %708 {offsets = [0, 32], sizes = [8, 32], strides = [1, 1]} : vector<16x128xf32> to vector<8x32xf32>
    %746 = vector.extract_strided_slice %716 {offsets = [0, 32], sizes = [16, 32], strides = [1, 1]} : vector<32x128xf32> to vector<16x32xf32>
    %747 = vector.extract_strided_slice %717 {offsets = [0, 32], sizes = [16, 32], strides = [1, 1]} : vector<32x128xf32> to vector<16x32xf32>
    %cst_302 = arith.constant dense<0.000000e+00> : vector<8x16xf32>
    %748 = tpu.matmul %745, %746, %cst_302 {dimension_numbers = #tpu.dot_dimension_numbers<[1], [1], [0], [0], [0, 0, 1, 0], [], []>} : vector<8x32xf32>, vector<16x32xf32>, vector<8x16xf32> -> vector<8x16xf32>
    %cst_303 = arith.constant 0.176776692 : f32
    %749 = vector.broadcast %cst_303 : f32 to vector<8x16xf32>
    %750 = arith.mulf %748, %749 : vector<8x16xf32>
    %cst_304 = arith.constant -1.000000e+09 : f32
    %751 = vector.shape_cast %720 : vector<1x16xi1> to vector<1x16xi1>
    %752 = vector.broadcast %751 : vector<1x16xi1> to vector<8x16xi1>
    %753 = vector.broadcast %cst_304 : f32 to vector<8x16xf32>
    %754 = arith.select %752, %750, %753 : vector<8x16xi1>, vector<8x16xf32>
    %cst_305 = arith.constant dense<0xFF800000> : vector<8xf32>
    %755 = vector.multi_reduction <maximumf>, %754, %cst_305 [1] : vector<8x16xf32> to vector<8xf32>
    %756 = vector.shape_cast %755 : vector<8xf32> to vector<8x1xf32>
    %757 = vector.broadcast %756 : vector<8x1xf32> to vector<8x16xf32>
    %758 = arith.subf %754, %757 : vector<8x16xf32>
    %759 = math.exp %758 : vector<8x16xf32>
    %cst_306 = arith.constant dense<0.000000e+00> : vector<8xf32>
    %760 = vector.multi_reduction <add>, %759, %cst_306 [1] : vector<8x16xf32> to vector<8xf32>
    %761 = vector.shape_cast %760 : vector<8xf32> to vector<8x1xf32>
    %762 = tpu.reciprocal %761 {approx = true} : vector<8x1xf32> -> vector<8x1xf32>
    %763 = vector.broadcast %762 : vector<8x1xf32> to vector<8x16xf32>
    %764 = arith.mulf %759, %763 : vector<8x16xf32>
    %cst_307 = arith.constant dense<0.000000e+00> : vector<8x32xf32>
    %765 = tpu.matmul %764, %747, %cst_307 {dimension_numbers = #tpu.dot_dimension_numbers<[1], [0], [0], [1], [0, 0, 1, 1], [], []>} : vector<8x16xf32>, vector<16x32xf32>, vector<8x32xf32> -> vector<8x32xf32>
    %c1_308 = arith.constant 1 : index
    %c0_309 = arith.constant 0 : index
    %c0_310 = arith.constant 0 : index
    %766 = vector.load %arg28[%c1_308, %c0_309, %c0_310] : memref<8x8x16xf32, #tpu.memory_space<vmem>>, vector<1x8x16xf32>
    %767 = vector.shape_cast %766 : vector<1x8x16xf32> to vector<8x16xf32>
    %768 = vector.shape_cast %764 : vector<8x16xf32> to vector<1x8x16xf32>
    tpu.vector_store %arg28[%c1_308, %c0_309, %c0_310], %768 {strides = array<i32>} : memref<8x8x16xf32, #tpu.memory_space<vmem>>, vector<1x8x16xf32>,
    %769 = vector.extract_strided_slice %708 {offsets = [0, 64], sizes = [8, 32], strides = [1, 1]} : vector<16x128xf32> to vector<8x32xf32>
    %770 = vector.extract_strided_slice %716 {offsets = [0, 64], sizes = [16, 32], strides = [1, 1]} : vector<32x128xf32> to vector<16x32xf32>
    %771 = vector.extract_strided_slice %717 {offsets = [0, 64], sizes = [16, 32], strides = [1, 1]} : vector<32x128xf32> to vector<16x32xf32>
    %cst_311 = arith.constant dense<0.000000e+00> : vector<8x16xf32>
    %772 = tpu.matmul %769, %770, %cst_311 {dimension_numbers = #tpu.dot_dimension_numbers<[1], [1], [0], [0], [0, 0, 1, 0], [], []>} : vector<8x32xf32>, vector<16x32xf32>, vector<8x16xf32> -> vector<8x16xf32>
    %cst_312 = arith.constant 0.176776692 : f32
    %773 = vector.broadcast %cst_312 : f32 to vector<8x16xf32>
    %774 = arith.mulf %772, %773 : vector<8x16xf32>
    %cst_313 = arith.constant -1.000000e+09 : f32
    %775 = vector.shape_cast %720 : vector<1x16xi1> to vector<1x16xi1>
    %776 = vector.broadcast %775 : vector<1x16xi1> to vector<8x16xi1>
    %777 = vector.broadcast %cst_313 : f32 to vector<8x16xf32>
    %778 = arith.select %776, %774, %777 : vector<8x16xi1>, vector<8x16xf32>
    %cst_314 = arith.constant dense<0xFF800000> : vector<8xf32>
    %779 = vector.multi_reduction <maximumf>, %778, %cst_314 [1] : vector<8x16xf32> to vector<8xf32>
    %780 = vector.shape_cast %779 : vector<8xf32> to vector<8x1xf32>
    %781 = vector.broadcast %780 : vector<8x1xf32> to vector<8x16xf32>
    %782 = arith.subf %778, %781 : vector<8x16xf32>
    %783 = math.exp %782 : vector<8x16xf32>
    %cst_315 = arith.constant dense<0.000000e+00> : vector<8xf32>
    %784 = vector.multi_reduction <add>, %783, %cst_315 [1] : vector<8x16xf32> to vector<8xf32>
    %785 = vector.shape_cast %784 : vector<8xf32> to vector<8x1xf32>
    %786 = tpu.reciprocal %785 {approx = true} : vector<8x1xf32> -> vector<8x1xf32>
    %787 = vector.broadcast %786 : vector<8x1xf32> to vector<8x16xf32>
    %788 = arith.mulf %783, %787 : vector<8x16xf32>
    %cst_316 = arith.constant dense<0.000000e+00> : vector<8x32xf32>
    %789 = tpu.matmul %788, %771, %cst_316 {dimension_numbers = #tpu.dot_dimension_numbers<[1], [0], [0], [1], [0, 0, 1, 1], [], []>} : vector<8x16xf32>, vector<16x32xf32>, vector<8x32xf32> -> vector<8x32xf32>
    %c2_317 = arith.constant 2 : index
    %c0_318 = arith.constant 0 : index
    %c0_319 = arith.constant 0 : index
    %790 = vector.load %arg28[%c2_317, %c0_318, %c0_319] : memref<8x8x16xf32, #tpu.memory_space<vmem>>, vector<1x8x16xf32>
    %791 = vector.shape_cast %790 : vector<1x8x16xf32> to vector<8x16xf32>
    %792 = vector.shape_cast %788 : vector<8x16xf32> to vector<1x8x16xf32>
    tpu.vector_store %arg28[%c2_317, %c0_318, %c0_319], %792 {strides = array<i32>} : memref<8x8x16xf32, #tpu.memory_space<vmem>>, vector<1x8x16xf32>,
    %793 = vector.extract_strided_slice %708 {offsets = [0, 96], sizes = [8, 32], strides = [1, 1]} : vector<16x128xf32> to vector<8x32xf32>
    %794 = vector.extract_strided_slice %716 {offsets = [0, 96], sizes = [16, 32], strides = [1, 1]} : vector<32x128xf32> to vector<16x32xf32>
    %795 = vector.extract_strided_slice %717 {offsets = [0, 96], sizes = [16, 32], strides = [1, 1]} : vector<32x128xf32> to vector<16x32xf32>
    %cst_320 = arith.constant dense<0.000000e+00> : vector<8x16xf32>
    %796 = tpu.matmul %793, %794, %cst_320 {dimension_numbers = #tpu.dot_dimension_numbers<[1], [1], [0], [0], [0, 0, 1, 0], [], []>} : vector<8x32xf32>, vector<16x32xf32>, vector<8x16xf32> -> vector<8x16xf32>
    %cst_321 = arith.constant 0.176776692 : f32
    %797 = vector.broadcast %cst_321 : f32 to vector<8x16xf32>
    %798 = arith.mulf %796, %797 : vector<8x16xf32>
    %cst_322 = arith.constant -1.000000e+09 : f32
    %799 = vector.shape_cast %720 : vector<1x16xi1> to vector<1x16xi1>
    %800 = vector.broadcast %799 : vector<1x16xi1> to vector<8x16xi1>
    %801 = vector.broadcast %cst_322 : f32 to vector<8x16xf32>
    %802 = arith.select %800, %798, %801 : vector<8x16xi1>, vector<8x16xf32>
    %cst_323 = arith.constant dense<0xFF800000> : vector<8xf32>
    %803 = vector.multi_reduction <maximumf>, %802, %cst_323 [1] : vector<8x16xf32> to vector<8xf32>
    %804 = vector.shape_cast %803 : vector<8xf32> to vector<8x1xf32>
    %805 = vector.broadcast %804 : vector<8x1xf32> to vector<8x16xf32>
    %806 = arith.subf %802, %805 : vector<8x16xf32>
    %807 = math.exp %806 : vector<8x16xf32>
    %cst_324 = arith.constant dense<0.000000e+00> : vector<8xf32>
    %808 = vector.multi_reduction <add>, %807, %cst_324 [1] : vector<8x16xf32> to vector<8xf32>
    %809 = vector.shape_cast %808 : vector<8xf32> to vector<8x1xf32>
    %810 = tpu.reciprocal %809 {approx = true} : vector<8x1xf32> -> vector<8x1xf32>
    %811 = vector.broadcast %810 : vector<8x1xf32> to vector<8x16xf32>
    %812 = arith.mulf %807, %811 : vector<8x16xf32>
    %cst_325 = arith.constant dense<0.000000e+00> : vector<8x32xf32>
    %813 = tpu.matmul %812, %795, %cst_325 {dimension_numbers = #tpu.dot_dimension_numbers<[1], [0], [0], [1], [0, 0, 1, 1], [], []>} : vector<8x16xf32>, vector<16x32xf32>, vector<8x32xf32> -> vector<8x32xf32>
    %c3_326 = arith.constant 3 : index
    %c0_327 = arith.constant 0 : index
    %c0_328 = arith.constant 0 : index
    %814 = vector.load %arg28[%c3_326, %c0_327, %c0_328] : memref<8x8x16xf32, #tpu.memory_space<vmem>>, vector<1x8x16xf32>
    %815 = vector.shape_cast %814 : vector<1x8x16xf32> to vector<8x16xf32>
    %816 = vector.shape_cast %812 : vector<8x16xf32> to vector<1x8x16xf32>
    tpu.vector_store %arg28[%c3_326, %c0_327, %c0_328], %816 {strides = array<i32>} : memref<8x8x16xf32, #tpu.memory_space<vmem>>, vector<1x8x16xf32>,
    %817 = tpu.concatenate %741, %765, %789, %813 in 1 : vector<8x32xf32>, vector<8x32xf32>, vector<8x32xf32>, vector<8x32xf32> -> vector<8x128xf32>
    %818 = vector.extract_strided_slice %6 {offsets = [1, 0], sizes = [1, 16], strides = [1, 1]} : vector<2x16xf32> to vector<1x16xf32>
    %cst_329 = arith.constant 0.000000e+00 : f32
    %819 = vector.broadcast %cst_329 : f32 to vector<1x16xf32>
    %820 = arith.cmpf ogt, %818, %819 : vector<1x16xf32>
    %821 = vector.extract_strided_slice %708 {offsets = [8, 0], sizes = [8, 32], strides = [1, 1]} : vector<16x128xf32> to vector<8x32xf32>
    %822 = vector.extract_strided_slice %716 {offsets = [16, 0], sizes = [16, 32], strides = [1, 1]} : vector<32x128xf32> to vector<16x32xf32>
    %823 = vector.extract_strided_slice %717 {offsets = [16, 0], sizes = [16, 32], strides = [1, 1]} : vector<32x128xf32> to vector<16x32xf32>
    %cst_330 = arith.constant dense<0.000000e+00> : vector<8x16xf32>
    %824 = tpu.matmul %821, %822, %cst_330 {dimension_numbers = #tpu.dot_dimension_numbers<[1], [1], [0], [0], [0, 0, 1, 0], [], []>} : vector<8x32xf32>, vector<16x32xf32>, vector<8x16xf32> -> vector<8x16xf32>
    %cst_331 = arith.constant 0.176776692 : f32
    %825 = vector.broadcast %cst_331 : f32 to vector<8x16xf32>
    %826 = arith.mulf %824, %825 : vector<8x16xf32>
    %cst_332 = arith.constant -1.000000e+09 : f32
    %827 = vector.shape_cast %820 : vector<1x16xi1> to vector<1x16xi1>
    %828 = vector.broadcast %827 : vector<1x16xi1> to vector<8x16xi1>
    %829 = vector.broadcast %cst_332 : f32 to vector<8x16xf32>
    %830 = arith.select %828, %826, %829 : vector<8x16xi1>, vector<8x16xf32>
    %cst_333 = arith.constant dense<0xFF800000> : vector<8xf32>
    %831 = vector.multi_reduction <maximumf>, %830, %cst_333 [1] : vector<8x16xf32> to vector<8xf32>
    %832 = vector.shape_cast %831 : vector<8xf32> to vector<8x1xf32>
    %833 = vector.broadcast %832 : vector<8x1xf32> to vector<8x16xf32>
    %834 = arith.subf %830, %833 : vector<8x16xf32>
    %835 = math.exp %834 : vector<8x16xf32>
    %cst_334 = arith.constant dense<0.000000e+00> : vector<8xf32>
    %836 = vector.multi_reduction <add>, %835, %cst_334 [1] : vector<8x16xf32> to vector<8xf32>
    %837 = vector.shape_cast %836 : vector<8xf32> to vector<8x1xf32>
    %838 = tpu.reciprocal %837 {approx = true} : vector<8x1xf32> -> vector<8x1xf32>
    %839 = vector.broadcast %838 : vector<8x1xf32> to vector<8x16xf32>
    %840 = arith.mulf %835, %839 : vector<8x16xf32>
    %cst_335 = arith.constant dense<0.000000e+00> : vector<8x32xf32>
    %841 = tpu.matmul %840, %823, %cst_335 {dimension_numbers = #tpu.dot_dimension_numbers<[1], [0], [0], [1], [0, 0, 1, 1], [], []>} : vector<8x16xf32>, vector<16x32xf32>, vector<8x32xf32> -> vector<8x32xf32>
    %c4_336 = arith.constant 4 : index
    %c0_337 = arith.constant 0 : index
    %c0_338 = arith.constant 0 : index
    %842 = vector.load %arg28[%c4_336, %c0_337, %c0_338] : memref<8x8x16xf32, #tpu.memory_space<vmem>>, vector<1x8x16xf32>
    %843 = vector.shape_cast %842 : vector<1x8x16xf32> to vector<8x16xf32>
    %844 = vector.shape_cast %840 : vector<8x16xf32> to vector<1x8x16xf32>
    tpu.vector_store %arg28[%c4_336, %c0_337, %c0_338], %844 {strides = array<i32>} : memref<8x8x16xf32, #tpu.memory_space<vmem>>, vector<1x8x16xf32>,
    %845 = vector.extract_strided_slice %708 {offsets = [8, 32], sizes = [8, 32], strides = [1, 1]} : vector<16x128xf32> to vector<8x32xf32>
    %846 = vector.extract_strided_slice %716 {offsets = [16, 32], sizes = [16, 32], strides = [1, 1]} : vector<32x128xf32> to vector<16x32xf32>
    %847 = vector.extract_strided_slice %717 {offsets = [16, 32], sizes = [16, 32], strides = [1, 1]} : vector<32x128xf32> to vector<16x32xf32>
    %cst_339 = arith.constant dense<0.000000e+00> : vector<8x16xf32>
    %848 = tpu.matmul %845, %846, %cst_339 {dimension_numbers = #tpu.dot_dimension_numbers<[1], [1], [0], [0], [0, 0, 1, 0], [], []>} : vector<8x32xf32>, vector<16x32xf32>, vector<8x16xf32> -> vector<8x16xf32>
    %cst_340 = arith.constant 0.176776692 : f32
    %849 = vector.broadcast %cst_340 : f32 to vector<8x16xf32>
    %850 = arith.mulf %848, %849 : vector<8x16xf32>
    %cst_341 = arith.constant -1.000000e+09 : f32
    %851 = vector.shape_cast %820 : vector<1x16xi1> to vector<1x16xi1>
    %852 = vector.broadcast %851 : vector<1x16xi1> to vector<8x16xi1>
    %853 = vector.broadcast %cst_341 : f32 to vector<8x16xf32>
    %854 = arith.select %852, %850, %853 : vector<8x16xi1>, vector<8x16xf32>
    %cst_342 = arith.constant dense<0xFF800000> : vector<8xf32>
    %855 = vector.multi_reduction <maximumf>, %854, %cst_342 [1] : vector<8x16xf32> to vector<8xf32>
    %856 = vector.shape_cast %855 : vector<8xf32> to vector<8x1xf32>
    %857 = vector.broadcast %856 : vector<8x1xf32> to vector<8x16xf32>
    %858 = arith.subf %854, %857 : vector<8x16xf32>
    %859 = math.exp %858 : vector<8x16xf32>
    %cst_343 = arith.constant dense<0.000000e+00> : vector<8xf32>
    %860 = vector.multi_reduction <add>, %859, %cst_343 [1] : vector<8x16xf32> to vector<8xf32>
    %861 = vector.shape_cast %860 : vector<8xf32> to vector<8x1xf32>
    %862 = tpu.reciprocal %861 {approx = true} : vector<8x1xf32> -> vector<8x1xf32>
    %863 = vector.broadcast %862 : vector<8x1xf32> to vector<8x16xf32>
    %864 = arith.mulf %859, %863 : vector<8x16xf32>
    %cst_344 = arith.constant dense<0.000000e+00> : vector<8x32xf32>
    %865 = tpu.matmul %864, %847, %cst_344 {dimension_numbers = #tpu.dot_dimension_numbers<[1], [0], [0], [1], [0, 0, 1, 1], [], []>} : vector<8x16xf32>, vector<16x32xf32>, vector<8x32xf32> -> vector<8x32xf32>
    %c5_345 = arith.constant 5 : index
    %c0_346 = arith.constant 0 : index
    %c0_347 = arith.constant 0 : index
    %866 = vector.load %arg28[%c5_345, %c0_346, %c0_347] : memref<8x8x16xf32, #tpu.memory_space<vmem>>, vector<1x8x16xf32>
    %867 = vector.shape_cast %866 : vector<1x8x16xf32> to vector<8x16xf32>
    %868 = vector.shape_cast %864 : vector<8x16xf32> to vector<1x8x16xf32>
    tpu.vector_store %arg28[%c5_345, %c0_346, %c0_347], %868 {strides = array<i32>} : memref<8x8x16xf32, #tpu.memory_space<vmem>>, vector<1x8x16xf32>,
    %869 = vector.extract_strided_slice %708 {offsets = [8, 64], sizes = [8, 32], strides = [1, 1]} : vector<16x128xf32> to vector<8x32xf32>
    %870 = vector.extract_strided_slice %716 {offsets = [16, 64], sizes = [16, 32], strides = [1, 1]} : vector<32x128xf32> to vector<16x32xf32>
    %871 = vector.extract_strided_slice %717 {offsets = [16, 64], sizes = [16, 32], strides = [1, 1]} : vector<32x128xf32> to vector<16x32xf32>
    %cst_348 = arith.constant dense<0.000000e+00> : vector<8x16xf32>
    %872 = tpu.matmul %869, %870, %cst_348 {dimension_numbers = #tpu.dot_dimension_numbers<[1], [1], [0], [0], [0, 0, 1, 0], [], []>} : vector<8x32xf32>, vector<16x32xf32>, vector<8x16xf32> -> vector<8x16xf32>
    %cst_349 = arith.constant 0.176776692 : f32
    %873 = vector.broadcast %cst_349 : f32 to vector<8x16xf32>
    %874 = arith.mulf %872, %873 : vector<8x16xf32>
    %cst_350 = arith.constant -1.000000e+09 : f32
    %875 = vector.shape_cast %820 : vector<1x16xi1> to vector<1x16xi1>
    %876 = vector.broadcast %875 : vector<1x16xi1> to vector<8x16xi1>
    %877 = vector.broadcast %cst_350 : f32 to vector<8x16xf32>
    %878 = arith.select %876, %874, %877 : vector<8x16xi1>, vector<8x16xf32>
    %cst_351 = arith.constant dense<0xFF800000> : vector<8xf32>
    %879 = vector.multi_reduction <maximumf>, %878, %cst_351 [1] : vector<8x16xf32> to vector<8xf32>
    %880 = vector.shape_cast %879 : vector<8xf32> to vector<8x1xf32>
    %881 = vector.broadcast %880 : vector<8x1xf32> to vector<8x16xf32>
    %882 = arith.subf %878, %881 : vector<8x16xf32>
    %883 = math.exp %882 : vector<8x16xf32>
    %cst_352 = arith.constant dense<0.000000e+00> : vector<8xf32>
    %884 = vector.multi_reduction <add>, %883, %cst_352 [1] : vector<8x16xf32> to vector<8xf32>
    %885 = vector.shape_cast %884 : vector<8xf32> to vector<8x1xf32>
    %886 = tpu.reciprocal %885 {approx = true} : vector<8x1xf32> -> vector<8x1xf32>
    %887 = vector.broadcast %886 : vector<8x1xf32> to vector<8x16xf32>
    %888 = arith.mulf %883, %887 : vector<8x16xf32>
    %cst_353 = arith.constant dense<0.000000e+00> : vector<8x32xf32>
    %889 = tpu.matmul %888, %871, %cst_353 {dimension_numbers = #tpu.dot_dimension_numbers<[1], [0], [0], [1], [0, 0, 1, 1], [], []>} : vector<8x16xf32>, vector<16x32xf32>, vector<8x32xf32> -> vector<8x32xf32>
    %c6_354 = arith.constant 6 : index
    %c0_355 = arith.constant 0 : index
    %c0_356 = arith.constant 0 : index
    %890 = vector.load %arg28[%c6_354, %c0_355, %c0_356] : memref<8x8x16xf32, #tpu.memory_space<vmem>>, vector<1x8x16xf32>
    %891 = vector.shape_cast %890 : vector<1x8x16xf32> to vector<8x16xf32>
    %892 = vector.shape_cast %888 : vector<8x16xf32> to vector<1x8x16xf32>
    tpu.vector_store %arg28[%c6_354, %c0_355, %c0_356], %892 {strides = array<i32>} : memref<8x8x16xf32, #tpu.memory_space<vmem>>, vector<1x8x16xf32>,
    %893 = vector.extract_strided_slice %708 {offsets = [8, 96], sizes = [8, 32], strides = [1, 1]} : vector<16x128xf32> to vector<8x32xf32>
    %894 = vector.extract_strided_slice %716 {offsets = [16, 96], sizes = [16, 32], strides = [1, 1]} : vector<32x128xf32> to vector<16x32xf32>
    %895 = vector.extract_strided_slice %717 {offsets = [16, 96], sizes = [16, 32], strides = [1, 1]} : vector<32x128xf32> to vector<16x32xf32>
    %cst_357 = arith.constant dense<0.000000e+00> : vector<8x16xf32>
    %896 = tpu.matmul %893, %894, %cst_357 {dimension_numbers = #tpu.dot_dimension_numbers<[1], [1], [0], [0], [0, 0, 1, 0], [], []>} : vector<8x32xf32>, vector<16x32xf32>, vector<8x16xf32> -> vector<8x16xf32>
    %cst_358 = arith.constant 0.176776692 : f32
    %897 = vector.broadcast %cst_358 : f32 to vector<8x16xf32>
    %898 = arith.mulf %896, %897 : vector<8x16xf32>
    %cst_359 = arith.constant -1.000000e+09 : f32
    %899 = vector.shape_cast %820 : vector<1x16xi1> to vector<1x16xi1>
    %900 = vector.broadcast %899 : vector<1x16xi1> to vector<8x16xi1>
    %901 = vector.broadcast %cst_359 : f32 to vector<8x16xf32>
    %902 = arith.select %900, %898, %901 : vector<8x16xi1>, vector<8x16xf32>
    %cst_360 = arith.constant dense<0xFF800000> : vector<8xf32>
    %903 = vector.multi_reduction <maximumf>, %902, %cst_360 [1] : vector<8x16xf32> to vector<8xf32>
    %904 = vector.shape_cast %903 : vector<8xf32> to vector<8x1xf32>
    %905 = vector.broadcast %904 : vector<8x1xf32> to vector<8x16xf32>
    %906 = arith.subf %902, %905 : vector<8x16xf32>
    %907 = math.exp %906 : vector<8x16xf32>
    %cst_361 = arith.constant dense<0.000000e+00> : vector<8xf32>
    %908 = vector.multi_reduction <add>, %907, %cst_361 [1] : vector<8x16xf32> to vector<8xf32>
    %909 = vector.shape_cast %908 : vector<8xf32> to vector<8x1xf32>
    %910 = tpu.reciprocal %909 {approx = true} : vector<8x1xf32> -> vector<8x1xf32>
    %911 = vector.broadcast %910 : vector<8x1xf32> to vector<8x16xf32>
    %912 = arith.mulf %907, %911 : vector<8x16xf32>
    %cst_362 = arith.constant dense<0.000000e+00> : vector<8x32xf32>
    %913 = tpu.matmul %912, %895, %cst_362 {dimension_numbers = #tpu.dot_dimension_numbers<[1], [0], [0], [1], [0, 0, 1, 1], [], []>} : vector<8x16xf32>, vector<16x32xf32>, vector<8x32xf32> -> vector<8x32xf32>
    %c7_363 = arith.constant 7 : index
    %c0_364 = arith.constant 0 : index
    %c0_365 = arith.constant 0 : index
    %914 = vector.load %arg28[%c7_363, %c0_364, %c0_365] : memref<8x8x16xf32, #tpu.memory_space<vmem>>, vector<1x8x16xf32>
    %915 = vector.shape_cast %914 : vector<1x8x16xf32> to vector<8x16xf32>
    %916 = vector.shape_cast %912 : vector<8x16xf32> to vector<1x8x16xf32>
    tpu.vector_store %arg28[%c7_363, %c0_364, %c0_365], %916 {strides = array<i32>} : memref<8x8x16xf32, #tpu.memory_space<vmem>>, vector<1x8x16xf32>,
    %917 = tpu.concatenate %841, %865, %889, %913 in 1 : vector<8x32xf32>, vector<8x32xf32>, vector<8x32xf32>, vector<8x32xf32> -> vector<8x128xf32>
    %918 = tpu.concatenate %817, %917 in 0 : vector<8x128xf32>, vector<8x128xf32> -> vector<16x128xf32>
    %c1_366 = arith.constant 1 : index
    %c0_367 = arith.constant 0 : index
    %c0_368 = arith.constant 0 : index
    %919 = vector.load %arg12[%c1_366, %c0_367, %c0_368] : memref<2x128x128xf32, #tpu.memory_space<vmem>>, vector<1x128x128xf32>
    %920 = vector.shape_cast %919 : vector<1x128x128xf32> to vector<128x128xf32>
    %cst_369 = arith.constant dense<0.000000e+00> : vector<16x128xf32>
    %921 = tpu.matmul %918, %920, %cst_369 {dimension_numbers = #tpu.dot_dimension_numbers<[1], [0], [0], [1], [0, 0, 1, 1], [], []>} : vector<16x128xf32>, vector<128x128xf32>, vector<16x128xf32> -> vector<16x128xf32>
    %c1_370 = arith.constant 1 : index
    %c0_371 = arith.constant 0 : index
    %c0_372 = arith.constant 0 : index
    %922 = vector.load %arg13[%c1_370, %c0_371, %c0_372] : memref<2x1x128xf32, #tpu.memory_space<vmem>>, vector<1x1x128xf32>
    %923 = vector.shape_cast %922 : vector<1x1x128xf32> to vector<1x128xf32>
    %924 = vector.broadcast %923 : vector<1x128xf32> to vector<16x128xf32>
    %925 = arith.addf %921, %924 : vector<16x128xf32>
    %926 = arith.addf %701, %925 : vector<16x128xf32>
    %c1_373 = arith.constant 1 : index
    %c0_374 = arith.constant 0 : index
    %c0_375 = arith.constant 0 : index
    %927 = vector.load %arg20[%c1_373, %c0_374, %c0_375] : memref<2x1x128xf32, #tpu.memory_space<vmem>>, vector<1x1x128xf32>
    %928 = vector.shape_cast %927 : vector<1x1x128xf32> to vector<1x128xf32>
    %c1_376 = arith.constant 1 : index
    %c0_377 = arith.constant 0 : index
    %c0_378 = arith.constant 0 : index
    %929 = vector.load %arg21[%c1_376, %c0_377, %c0_378] : memref<2x1x128xf32, #tpu.memory_space<vmem>>, vector<1x1x128xf32>
    %930 = vector.shape_cast %929 : vector<1x1x128xf32> to vector<1x128xf32>
    %cst_379 = arith.constant dense<0.000000e+00> : vector<16xf32>
    %931 = vector.multi_reduction <add>, %926, %cst_379 [1] : vector<16x128xf32> to vector<16xf32>
    %932 = vector.shape_cast %931 : vector<16xf32> to vector<16x1xf32>
    %cst_380 = arith.constant 1.280000e+02 : f32
    %933 = vector.broadcast %cst_380 : f32 to vector<16x1xf32>
    %934 = arith.divf %932, %933 : vector<16x1xf32>
    %935 = vector.broadcast %934 : vector<16x1xf32> to vector<16x128xf32>
    %936 = arith.subf %926, %935 : vector<16x128xf32>
    %937 = arith.mulf %936, %936 : vector<16x128xf32>
    %cst_381 = arith.constant dense<0.000000e+00> : vector<16xf32>
    %938 = vector.multi_reduction <add>, %937, %cst_381 [1] : vector<16x128xf32> to vector<16xf32>
    %939 = vector.shape_cast %938 : vector<16xf32> to vector<16x1xf32>
    %cst_382 = arith.constant 1.280000e+02 : f32
    %940 = vector.broadcast %cst_382 : f32 to vector<16x1xf32>
    %941 = arith.divf %939, %940 : vector<16x1xf32>
    %942 = vector.broadcast %934 : vector<16x1xf32> to vector<16x128xf32>
    %943 = arith.subf %926, %942 : vector<16x128xf32>
    %cst_383 = arith.constant 9.99999974E-6 : f32
    %944 = vector.broadcast %cst_383 : f32 to vector<16x1xf32>
    %945 = arith.addf %941, %944 : vector<16x1xf32>
    %946 = math.rsqrt %945 : vector<16x1xf32>
    %947 = vector.broadcast %946 : vector<16x1xf32> to vector<16x128xf32>
    %948 = arith.mulf %943, %947 : vector<16x128xf32>
    %949 = vector.broadcast %928 : vector<1x128xf32> to vector<16x128xf32>
    %950 = arith.mulf %948, %949 : vector<16x128xf32>
    %951 = vector.broadcast %930 : vector<1x128xf32> to vector<16x128xf32>
    %952 = arith.addf %950, %951 : vector<16x128xf32>
    %c1_384 = arith.constant 1 : index
    %c0_385 = arith.constant 0 : index
    %c0_386 = arith.constant 0 : index
    %953 = vector.load %arg14[%c1_384, %c0_385, %c0_386] : memref<2x128x256xf32, #tpu.memory_space<vmem>>, vector<1x128x256xf32>
    %954 = vector.shape_cast %953 : vector<1x128x256xf32> to vector<128x256xf32>
    %cst_387 = arith.constant dense<0.000000e+00> : vector<16x256xf32>
    %955 = tpu.matmul %952, %954, %cst_387 {dimension_numbers = #tpu.dot_dimension_numbers<[1], [0], [0], [1], [0, 0, 1, 1], [], []>} : vector<16x128xf32>, vector<128x256xf32>, vector<16x256xf32> -> vector<16x256xf32>
    %c1_388 = arith.constant 1 : index
    %c0_389 = arith.constant 0 : index
    %c0_390 = arith.constant 0 : index
    %956 = vector.load %arg15[%c1_388, %c0_389, %c0_390] : memref<2x1x256xf32, #tpu.memory_space<vmem>>, vector<1x1x256xf32>
    %957 = vector.shape_cast %956 : vector<1x1x256xf32> to vector<1x256xf32>
    %958 = vector.broadcast %957 : vector<1x256xf32> to vector<16x256xf32>
    %959 = arith.addf %955, %958 : vector<16x256xf32>
    %cst_391 = arith.constant 0.000000e+00 : f32
    %960 = vector.broadcast %cst_391 : f32 to vector<16x256xf32>
    %961 = arith.maximumf %959, %960 : vector<16x256xf32>
    %c1_392 = arith.constant 1 : index
    %c0_393 = arith.constant 0 : index
    %c0_394 = arith.constant 0 : index
    %962 = vector.load %arg16[%c1_392, %c0_393, %c0_394] : memref<2x256x128xf32, #tpu.memory_space<vmem>>, vector<1x256x128xf32>
    %963 = vector.shape_cast %962 : vector<1x256x128xf32> to vector<256x128xf32>
    %cst_395 = arith.constant dense<0.000000e+00> : vector<16x128xf32>
    %964 = tpu.matmul %961, %963, %cst_395 {dimension_numbers = #tpu.dot_dimension_numbers<[1], [0], [0], [1], [0, 0, 1, 1], [], []>} : vector<16x256xf32>, vector<256x128xf32>, vector<16x128xf32> -> vector<16x128xf32>
    %c1_396 = arith.constant 1 : index
    %c0_397 = arith.constant 0 : index
    %c0_398 = arith.constant 0 : index
    %965 = vector.load %arg17[%c1_396, %c0_397, %c0_398] : memref<2x1x128xf32, #tpu.memory_space<vmem>>, vector<1x1x128xf32>
    %966 = vector.shape_cast %965 : vector<1x1x128xf32> to vector<1x128xf32>
    %967 = vector.broadcast %966 : vector<1x128xf32> to vector<16x128xf32>
    %968 = arith.addf %964, %967 : vector<16x128xf32>
    %969 = arith.addf %952, %968 : vector<16x128xf32>
    %c1_399 = arith.constant 1 : index
    %c0_400 = arith.constant 0 : index
    %c0_401 = arith.constant 0 : index
    %970 = vector.load %arg22[%c1_399, %c0_400, %c0_401] : memref<2x1x128xf32, #tpu.memory_space<vmem>>, vector<1x1x128xf32>
    %971 = vector.shape_cast %970 : vector<1x1x128xf32> to vector<1x128xf32>
    %c1_402 = arith.constant 1 : index
    %c0_403 = arith.constant 0 : index
    %c0_404 = arith.constant 0 : index
    %972 = vector.load %arg23[%c1_402, %c0_403, %c0_404] : memref<2x1x128xf32, #tpu.memory_space<vmem>>, vector<1x1x128xf32>
    %973 = vector.shape_cast %972 : vector<1x1x128xf32> to vector<1x128xf32>
    %cst_405 = arith.constant dense<0.000000e+00> : vector<16xf32>
    %974 = vector.multi_reduction <add>, %969, %cst_405 [1] : vector<16x128xf32> to vector<16xf32>
    %975 = vector.shape_cast %974 : vector<16xf32> to vector<16x1xf32>
    %cst_406 = arith.constant 1.280000e+02 : f32
    %976 = vector.broadcast %cst_406 : f32 to vector<16x1xf32>
    %977 = arith.divf %975, %976 : vector<16x1xf32>
    %978 = vector.broadcast %977 : vector<16x1xf32> to vector<16x128xf32>
    %979 = arith.subf %969, %978 : vector<16x128xf32>
    %980 = arith.mulf %979, %979 : vector<16x128xf32>
    %cst_407 = arith.constant dense<0.000000e+00> : vector<16xf32>
    %981 = vector.multi_reduction <add>, %980, %cst_407 [1] : vector<16x128xf32> to vector<16xf32>
    %982 = vector.shape_cast %981 : vector<16xf32> to vector<16x1xf32>
    %cst_408 = arith.constant 1.280000e+02 : f32
    %983 = vector.broadcast %cst_408 : f32 to vector<16x1xf32>
    %984 = arith.divf %982, %983 : vector<16x1xf32>
    %985 = vector.broadcast %977 : vector<16x1xf32> to vector<16x128xf32>
    %986 = arith.subf %969, %985 : vector<16x128xf32>
    %cst_409 = arith.constant 9.99999974E-6 : f32
    %987 = vector.broadcast %cst_409 : f32 to vector<16x1xf32>
    %988 = arith.addf %984, %987 : vector<16x1xf32>
    %989 = math.rsqrt %988 : vector<16x1xf32>
    %990 = vector.broadcast %989 : vector<16x1xf32> to vector<16x128xf32>
    %991 = arith.mulf %986, %990 : vector<16x128xf32>
    %992 = vector.broadcast %971 : vector<1x128xf32> to vector<16x128xf32>
    %993 = arith.mulf %991, %992 : vector<16x128xf32>
    %994 = vector.broadcast %973 : vector<1x128xf32> to vector<16x128xf32>
    %995 = arith.addf %993, %994 : vector<16x128xf32>
    %c0_410 = arith.constant 0 : index
    %c0_411 = arith.constant 0 : index
    %996 = vector.load %arg24[%c0_410, %c0_411] : memref<128x128xf32, #tpu.memory_space<vmem>>, vector<128x128xf32>
    %cst_412 = arith.constant dense<0.000000e+00> : vector<16x128xf32>
    %997 = tpu.matmul %995, %996, %cst_412 {dimension_numbers = #tpu.dot_dimension_numbers<[1], [0], [0], [1], [0, 0, 1, 1], [], []>} : vector<16x128xf32>, vector<128x128xf32>, vector<16x128xf32> -> vector<16x128xf32>
    %c0_413 = arith.constant 0 : index
    %c0_414 = arith.constant 0 : index
    %998 = vector.load %arg25[%c0_413, %c0_414] : memref<1x128xf32, #tpu.memory_space<vmem>>, vector<1x128xf32>
    %999 = vector.broadcast %998 : vector<1x128xf32> to vector<16x128xf32>
    %1000 = arith.addf %997, %999 : vector<16x128xf32>
    %c0_415 = arith.constant 0 : index
    %c0_416 = arith.constant 0 : index
    %1001 = vector.load %arg26[%c0_415, %c0_416] : memref<16x128xf32, #tpu.memory_space<vmem>>, vector<16x128xf32>
    tpu.vector_store %arg26[%c0_415, %c0_416], %1000 {strides = array<i32>} : memref<16x128xf32, #tpu.memory_space<vmem>>, vector<16x128xf32>,
    return
  }
}

</mosaic_0001>

<llo_original>
// kernel: transformer_decoder.1
$region0: #{transformer_decoder.1}
  #allocation0 [shape = 'u32[]', space=smem, size = 0x4, offset = 0x4, fixed_abs, tag = 'smem constant byte address 0x4 - core index']
  #allocation1 [shape = 'u32[144,128]{1,0:T(1,128)}', space=vmem, size = 0x12000, scoped, tag = 'internal scratch']
  %s0 = inlined_call_operand.vmem [shape: f32[16,128], index: 0, kind: input, shape index: {}]
  %s1 = inlined_call_operand.vmem [shape: f32[16,128], index: 1, kind: input, shape index: {}]
  %s2 = inlined_call_operand.vmem [shape: f32[32,128], index: 2, kind: input, shape index: {}]
  %s3 = inlined_call_operand.vmem [shape: f32[2,16], index: 3, kind: input, shape index: {}]
  %s4 = inlined_call_operand.hbm [shape: f32[2,128,384], index: 4, kind: input, shape index: {}]
  %s5 = inlined_call_operand.vmem [shape: f32[2,1,384], index: 5, kind: input, shape index: {}]
  %s6 = inlined_call_operand.hbm [shape: f32[2,128,128], index: 6, kind: input, shape index: {}]
  %s7 = inlined_call_operand.vmem [shape: f32[2,1,128], index: 7, kind: input, shape index: {}]
  %s8 = inlined_call_operand.hbm [shape: f32[2,128,128], index: 8, kind: input, shape index: {}]
  %s9 = inlined_call_operand.vmem [shape: f32[2,1,128], index: 9, kind: input, shape index: {}]
  %s10 = inlined_call_operand.vmem [shape: f32[2,128,256], index: 10, kind: input, shape index: {}]
  %s11 = inlined_call_operand.vmem [shape: f32[2,1,256], index: 11, kind: input, shape index: {}]
  %s12 = inlined_call_operand.hbm [shape: f32[2,128,128], index: 12, kind: input, shape index: {}]
  %s13 = inlined_call_operand.vmem [shape: f32[2,1,128], index: 13, kind: input, shape index: {}]
  %s14 = inlined_call_operand.hbm [shape: f32[2,128,256], index: 14, kind: input, shape index: {}]
  %s15 = inlined_call_operand.vmem [shape: f32[2,1,256], index: 15, kind: input, shape index: {}]
  %s16 = inlined_call_operand.hbm [shape: f32[2,256,128], index: 16, kind: input, shape index: {}]
  %s17 = inlined_call_operand.vmem [shape: f32[2,1,128], index: 17, kind: input, shape index: {}]
  %s18 = inlined_call_operand.hbm [shape: f32[2,1,128], index: 18, kind: input, shape index: {}]
  %s19 = inlined_call_operand.hbm [shape: f32[2,1,128], index: 19, kind: input, shape index: {}]
  %s20 = inlined_call_operand.hbm [shape: f32[2,1,128], index: 20, kind: input, shape index: {}]
  %s21 = inlined_call_operand.hbm [shape: f32[2,1,128], index: 21, kind: input, shape index: {}]
  %s22 = inlined_call_operand.hbm [shape: f32[2,1,128], index: 22, kind: input, shape index: {}]
  %s23 = inlined_call_operand.hbm [shape: f32[2,1,128], index: 23, kind: input, shape index: {}]
  %s24 = inlined_call_operand.vmem [shape: f32[128,128], index: 24, kind: input, shape index: {}]
  %s25 = inlined_call_operand.vmem [shape: f32[1,128], index: 25, kind: input, shape index: {}]
  %s26 = inlined_call_operand.hbm [shape: f32[16,128], index: 26, kind: output, shape index: {0}]
  %s27 = inlined_call_operand.hbm [shape: f32[8,8,8], index: 27, kind: output, shape index: {1}]
  %s28 = inlined_call_operand.hbm [shape: f32[8,8,16], index: 28, kind: output, shape index: {2}]
  %29 = xla_tuple %s26, %s27, %s28
  %s30 = sld [smem:[#allocation0]]
  $region178: #{transformer_decoder.1} parent=0
    _
  %s32 = ssub.s32 1, %s30
  %s33 = scalar_select 0, %s32, %s30
  $region1: #{transformer_decoder.1} parent=0
    #allocation2 [shape = 'u8[393216]{0}', space=vmem, size = 0x60000, scoped, tag = 'input window, operand 4, single buffered']
    #allocation3 [shape = 's32[1]{0}', space=sflag, size = 0x4, scoped, tag = 'scoped memory for transformer_decoder.1']
    #allocation4 [shape = 's32[1]{0}', space=sflag, size = 0x4, scoped, tag = 'scoped memory for transformer_decoder.1']
    #allocation5 [shape = 'u8[131072]{0}', space=vmem, size = 0x20000, scoped, tag = 'input window, operand 6, single buffered']
    #allocation6 [shape = 's32[1]{0}', space=sflag, size = 0x4, scoped, tag = 'scoped memory for transformer_decoder.1']
    #allocation7 [shape = 'u8[131072]{0}', space=vmem, size = 0x20000, scoped, tag = 'input window, operand 8, single buffered']
    #allocation8 [shape = 'u8[131072]{0}', space=vmem, size = 0x20000, scoped, tag = 'input window, operand 12, single buffered']
    #allocation9 [shape = 's32[1]{0}', space=sflag, size = 0x4, scoped, tag = 'scoped memory for transformer_decoder.1']
    #allocation10 [shape = 'u8[262144]{0}', space=vmem, size = 0x40000, scoped, tag = 'input window, operand 14, single buffered']
    #allocation11 [shape = 'u8[262144]{0}', space=vmem, size = 0x40000, scoped, tag = 'input window, operand 16, single buffered']
    #allocation12 [shape = 's32[1]{0}', space=sflag, size = 0x4, scoped, tag = 'scoped memory for transformer_decoder.1']
    #allocation13 [shape = 'u8[1024]{0}', space=vmem, size = 0x400, scoped, tag = 'input window, operand 18, single buffered']
    #allocation14 [shape = 'u8[1024]{0}', space=vmem, size = 0x400, scoped, tag = 'input window, operand 19, single buffered']
    #allocation15 [shape = 's32[1]{0}', space=sflag, size = 0x4, scoped, tag = 'scoped memory for transformer_decoder.1']
    #allocation16 [shape = 'u8[1024]{0}', space=vmem, size = 0x400, scoped, tag = 'input window, operand 20, single buffered']
    #allocation17 [shape = 'u8[1024]{0}', space=vmem, size = 0x400, scoped, tag = 'input window, operand 21, single buffered']
    #allocation18 [shape = 's32[1]{0}', space=sflag, size = 0x4, scoped, tag = 'scoped memory for transformer_decoder.1']
    #allocation19 [shape = 'u8[1024]{0}', space=vmem, size = 0x400, scoped, tag = 'input window, operand 22, single buffered']
    #allocation20 [shape = 'u8[1024]{0}', space=vmem, size = 0x400, scoped, tag = 'input window, operand 23, single buffered']
    #allocation21 [shape = 's32[1]{0}', space=sflag, size = 0x4, scoped, tag = 'scoped memory for transformer_decoder.1']
    #allocation22 [shape = 'u8[8192]{0}', space=vmem, size = 0x2000, scoped, tag = 'output window, operand 0, single buffered']
    #allocation23 [shape = 'u8[32768]{0}', space=vmem, size = 0x8000, scoped, tag = 'output window, operand 1, single buffered']
    #allocation24 [shape = 's32[1]{0}', space=sflag, size = 0x4, scoped, tag = 'scoped memory for transformer_decoder.1']
    #allocation25 [shape = 'u8[32768]{0}', space=vmem, size = 0x8000, scoped, tag = 'output window, operand 2, single buffered']
    %34 = vsyncpa [#allocation3], 0
    %35 = vsyncpa [#allocation6], 0
    %36 = vsyncpa [#allocation9], 0
    %37 = vsyncpa [#allocation12], 0
    %38 = vsyncpa [#allocation15], 0
    %39 = vsyncpa [#allocation18], 0
    %40 = vsyncpa [#allocation21], 0
    %41 = vsyncpa [#allocation4], 0
    %42 = vsyncpa [#allocation24], 0
    // Predicated region
    $region2: #{transformer_decoder.1} parent=1 // pred_check
      _
    $region3: #{transformer_decoder.1} parent=1 // pred_check_branch
      %44 = sbr.rel (0) target = $region5
    $region4: #{transformer_decoder.1} parent=1 // pred_region
      _
    $region5: #{transformer_decoder.1} parent=1 // pred_fallthru
      _
    // Predicated region
    $region6: #{transformer_decoder.1} parent=1 // pred_check
      _
    $region7: #{transformer_decoder.1} parent=1 // pred_check_branch
      %46 = sbr.rel (0) target = $region9
    $region8: #{transformer_decoder.1} parent=1 // pred_region
      _
    $region9: #{transformer_decoder.1} parent=1 // pred_fallthru
      _
    // Predicated region
    $region10: #{transformer_decoder.1} parent=1 // pred_check
      _
    $region11: #{transformer_decoder.1} parent=1 // pred_check_branch
      %48 = sbr.rel (0) target = $region13
    $region12: #{transformer_decoder.1} parent=1 // pred_region
      _
    $region13: #{transformer_decoder.1} parent=1 // pred_fallthru
      _
    // Predicated region
    $region14: #{transformer_decoder.1} parent=1 // pred_check
      _
    $region15: #{transformer_decoder.1} parent=1 // pred_check_branch
      %50 = sbr.rel (0) target = $region17
    $region16: #{transformer_decoder.1} parent=1 // pred_region
      _
    $region17: #{transformer_decoder.1} parent=1 // pred_fallthru
      _
    // Predicated region
    $region18: #{transformer_decoder.1} parent=1 // pred_check
      _
    $region19: #{transformer_decoder.1} parent=1 // pred_check_branch
      %52 = sbr.rel (0) target = $region21
    $region20: #{transformer_decoder.1} parent=1 // pred_region
      %s54 = ssub.s32 12288, 12288
      %55 = vsyncadd [#allocation3], %s54
      %s56 = sshll.u32 [#allocation2], 4
      %s57 = int_to_ptr.vmem [resolvable:$true] %s56
      %62 = dma.hbm_to_vmem [thread:$0]  %s4, 12288, %s57, [#allocation3], 384, 384, 24
    $region21: #{transformer_decoder.1} parent=1 // pred_fallthru
      _
    // Predicated region
    $region22: #{transformer_decoder.1} parent=1 // pred_check
      _
    $region23: #{transformer_decoder.1} parent=1 // pred_check_branch
      %64 = sbr.rel (0) target = $region25
    $region24: #{transformer_decoder.1} parent=1 // pred_region
      _
    $region25: #{transformer_decoder.1} parent=1 // pred_fallthru
      _
    // Predicated region
    $region26: #{transformer_decoder.1} parent=1 // pred_check
      _
    $region27: #{transformer_decoder.1} parent=1 // pred_check_branch
      %66 = sbr.rel (0) target = $region29
    $region28: #{transformer_decoder.1} parent=1 // pred_region
      %s68 = ssub.s32 4096, 4096
      %69 = vsyncadd [#allocation6], %s68
      %s70 = sshll.u32 [#allocation5], 4
      %s71 = int_to_ptr.vmem [resolvable:$true] %s70
      %76 = dma.hbm_to_vmem [thread:$0]  %s6, 4096, %s71, [#allocation6], 128, 128, 8
    $region29: #{transformer_decoder.1} parent=1 // pred_fallthru
      _
    // Predicated region
    $region30: #{transformer_decoder.1} parent=1 // pred_check
      _
    $region31: #{transformer_decoder.1} parent=1 // pred_check_branch
      %78 = sbr.rel (0) target = $region33
    $region32: #{transformer_decoder.1} parent=1 // pred_region
      _
    $region33: #{transformer_decoder.1} parent=1 // pred_fallthru
      _
    // Predicated region
    $region34: #{transformer_decoder.1} parent=1 // pred_check
      _
    $region35: #{transformer_decoder.1} parent=1 // pred_check_branch
      %80 = sbr.rel (0) target = $region37
    $region36: #{transformer_decoder.1} parent=1 // pred_region
      %s82 = ssub.s32 4096, 4096
      %83 = vsyncadd [#allocation6], %s82
      %s84 = sshll.u32 [#allocation7], 4
      %s85 = int_to_ptr.vmem [resolvable:$true] %s84
      %90 = dma.hbm_to_vmem [thread:$0]  %s8, 4096, %s85, [#allocation6], 128, 128, 8
    $region37: #{transformer_decoder.1} parent=1 // pred_fallthru
      _
    // Predicated region
    $region38: #{transformer_decoder.1} parent=1 // pred_check
      _
    $region39: #{transformer_decoder.1} parent=1 // pred_check_branch
      %92 = sbr.rel (0) target = $region41
    $region40: #{transformer_decoder.1} parent=1 // pred_region
      _
    $region41: #{transformer_decoder.1} parent=1 // pred_fallthru
      _
    // Predicated region
    $region42: #{transformer_decoder.1} parent=1 // pred_check
      _
    $region43: #{transformer_decoder.1} parent=1 // pred_check_branch
      %94 = sbr.rel (0) target = $region45
    $region44: #{transformer_decoder.1} parent=1 // pred_region
      _
    $region45: #{transformer_decoder.1} parent=1 // pred_fallthru
      _
    // Predicated region
    $region46: #{transformer_decoder.1} parent=1 // pred_check
      _
    $region47: #{transformer_decoder.1} parent=1 // pred_check_branch
      %96 = sbr.rel (0) target = $region49
    $region48: #{transformer_decoder.1} parent=1 // pred_region
      _
    $region49: #{transformer_decoder.1} parent=1 // pred_fallthru
      _
    // Predicated region
    $region50: #{transformer_decoder.1} parent=1 // pred_check
      _
    $region51: #{transformer_decoder.1} parent=1 // pred_check_branch
      %98 = sbr.rel (0) target = $region53
    $region52: #{transformer_decoder.1} parent=1 // pred_region
      %s100 = ssub.s32 4096, 4096
      %101 = vsyncadd [#allocation9], %s100
      %s102 = sshll.u32 [#allocation8], 4
      %s103 = int_to_ptr.vmem [resolvable:$true] %s102
      %108 = dma.hbm_to_vmem [thread:$0]  %s12, 4096, %s103, [#allocation9], 128, 128, 8
    $region53: #{transformer_decoder.1} parent=1 // pred_fallthru
      _
    // Predicated region
    $region54: #{transformer_decoder.1} parent=1 // pred_check
      _
    $region55: #{transformer_decoder.1} parent=1 // pred_check_branch
      %110 = sbr.rel (0) target = $region57
    $region56: #{transformer_decoder.1} parent=1 // pred_region
      _
    $region57: #{transformer_decoder.1} parent=1 // pred_fallthru
      _
    // Predicated region
    $region58: #{transformer_decoder.1} parent=1 // pred_check
      _
    $region59: #{transformer_decoder.1} parent=1 // pred_check_branch
      %112 = sbr.rel (0) target = $region61
    $region60: #{transformer_decoder.1} parent=1 // pred_region
      %s114 = ssub.s32 8192, 8192
      %115 = vsyncadd [#allocation9], %s114
      %s116 = sshll.u32 [#allocation10], 4
      %s117 = int_to_ptr.vmem [resolvable:$true] %s116
      %122 = dma.hbm_to_vmem [thread:$0]  %s14, 8192, %s117, [#allocation9], 256, 256, 16
    $region61: #{transformer_decoder.1} parent=1 // pred_fallthru
      _
    // Predicated region
    $region62: #{transformer_decoder.1} parent=1 // pred_check
      _
    $region63: #{transformer_decoder.1} parent=1 // pred_check_branch
      %124 = sbr.rel (0) target = $region65
    $region64: #{transformer_decoder.1} parent=1 // pred_region
      _
    $region65: #{transformer_decoder.1} parent=1 // pred_fallthru
      _
    // Predicated region
    $region66: #{transformer_decoder.1} parent=1 // pred_check
      _
    $region67: #{transformer_decoder.1} parent=1 // pred_check_branch
      %126 = sbr.rel (0) target = $region69
    $region68: #{transformer_decoder.1} parent=1 // pred_region
      %s128 = ssub.s32 8192, 8192
      %129 = vsyncadd [#allocation12], %s128
      %s130 = sshll.u32 [#allocation11], 4
      %s131 = int_to_ptr.vmem [resolvable:$true] %s130
      %136 = dma.hbm_to_vmem [thread:$0]  %s16, 8192, %s131, [#allocation12], 128, 128, 8
    $region69: #{transformer_decoder.1} parent=1 // pred_fallthru
      _
    // Predicated region
    $region70: #{transformer_decoder.1} parent=1 // pred_check
      _
    $region71: #{transformer_decoder.1} parent=1 // pred_check_branch
      %138 = sbr.rel (0) target = $region73
    $region72: #{transformer_decoder.1} parent=1 // pred_region
      _
    $region73: #{transformer_decoder.1} parent=1 // pred_fallthru
      _
    // Predicated region
    $region74: #{transformer_decoder.1} parent=1 // pred_check
      _
    $region75: #{transformer_decoder.1} parent=1 // pred_check_branch
      %140 = sbr.rel (0) target = $region77
    $region76: #{transformer_decoder.1} parent=1 // pred_region
      %s142 = ssub.s32 32, 32
      %143 = vsyncadd [#allocation12], %s142
      %s144 = sshll.u32 [#allocation13], 4
      %s145 = int_to_ptr.vmem [resolvable:$true] %s144
      %150 = dma.hbm_to_vmem [thread:$0]  %s18, 32, %s145, [#allocation12], 16, 16, 1
    $region77: #{transformer_decoder.1} parent=1 // pred_fallthru
      _
    // Predicated region
    $region78: #{transformer_decoder.1} parent=1 // pred_check
      _
    $region79: #{transformer_decoder.1} parent=1 // pred_check_branch
      %152 = sbr.rel (0) target = $region81
    $region80: #{transformer_decoder.1} parent=1 // pred_region
      %s154 = ssub.s32 32, 32
      %155 = vsyncadd [#allocation15], %s154
      %s156 = sshll.u32 [#allocation14], 4
      %s157 = int_to_ptr.vmem [resolvable:$true] %s156
      %162 = dma.hbm_to_vmem [thread:$0]  %s19, 32, %s157, [#allocation15], 16, 16, 1
    $region81: #{transformer_decoder.1} parent=1 // pred_fallthru
      _
    // Predicated region
    $region82: #{transformer_decoder.1} parent=1 // pred_check
      _
    $region83: #{transformer_decoder.1} parent=1 // pred_check_branch
      %164 = sbr.rel (0) target = $region85
    $region84: #{transformer_decoder.1} parent=1 // pred_region
      %s166 = ssub.s32 32, 32
      %167 = vsyncadd [#allocation15], %s166
      %s168 = sshll.u32 [#allocation16], 4
      %s169 = int_to_ptr.vmem [resolvable:$true] %s168
      %174 = dma.hbm_to_vmem [thread:$0]  %s20, 32, %s169, [#allocation15], 16, 16, 1
    $region85: #{transformer_decoder.1} parent=1 // pred_fallthru
      _
    // Predicated region
    $region86: #{transformer_decoder.1} parent=1 // pred_check
      _
    $region87: #{transformer_decoder.1} parent=1 // pred_check_branch
      %176 = sbr.rel (0) target = $region89
    $region88: #{transformer_decoder.1} parent=1 // pred_region
      %s178 = ssub.s32 32, 32
      %179 = vsyncadd [#allocation18], %s178
      %s180 = sshll.u32 [#allocation17], 4
      %s181 = int_to_ptr.vmem [resolvable:$true] %s180
      %186 = dma.hbm_to_vmem [thread:$0]  %s21, 32, %s181, [#allocation18], 16, 16, 1
    $region89: #{transformer_decoder.1} parent=1 // pred_fallthru
      _
    // Predicated region
    $region90: #{transformer_decoder.1} parent=1 // pred_check
      _
    $region91: #{transformer_decoder.1} parent=1 // pred_check_branch
      %188 = sbr.rel (0) target = $region93
    $region92: #{transformer_decoder.1} parent=1 // pred_region
      %s190 = ssub.s32 32, 32
      %191 = vsyncadd [#allocation18], %s190
      %s192 = sshll.u32 [#allocation19], 4
      %s193 = int_to_ptr.vmem [resolvable:$true] %s192
      %198 = dma.hbm_to_vmem [thread:$0]  %s22, 32, %s193, [#allocation18], 16, 16, 1
    $region93: #{transformer_decoder.1} parent=1 // pred_fallthru
      _
    // Predicated region
    $region94: #{transformer_decoder.1} parent=1 // pred_check
      _
    $region95: #{transformer_decoder.1} parent=1 // pred_check_branch
      %200 = sbr.rel (0) target = $region97
    $region96: #{transformer_decoder.1} parent=1 // pred_region
      %s202 = ssub.s32 32, 32
      %203 = vsyncadd [#allocation21], %s202
      %s204 = sshll.u32 [#allocation20], 4
      %s205 = int_to_ptr.vmem [resolvable:$true] %s204
      %210 = dma.hbm_to_vmem [thread:$0]  %s23, 32, %s205, [#allocation21], 16, 16, 1
    $region97: #{transformer_decoder.1} parent=1 // pred_fallthru
      _
    // Predicated region
    $region98: #{transformer_decoder.1} parent=1 // pred_check
      _
    $region99: #{transformer_decoder.1} parent=1 // pred_check_branch
      %212 = sbr.rel (0) target = $region101
    $region100: #{transformer_decoder.1} parent=1 // pred_region
      _
    $region101: #{transformer_decoder.1} parent=1 // pred_fallthru
      _
    // Predicated region
    $region102: #{transformer_decoder.1} parent=1 // pred_check
      _
    $region103: #{transformer_decoder.1} parent=1 // pred_check_branch
      %214 = sbr.rel (0) target = $region105
    $region104: #{transformer_decoder.1} parent=1 // pred_region
      _
    $region105: #{transformer_decoder.1} parent=1 // pred_fallthru
      _
    // Predicated region
    $region106: #{transformer_decoder.1} parent=1 // pred_check
      _
    $region107: #{transformer_decoder.1} parent=1 // pred_check_branch
      %216 = sbr.rel (0) target = $region109
    $region108: #{transformer_decoder.1} parent=1 // pred_region
      %217 = dma.done [#allocation3], 12288
    $region109: #{transformer_decoder.1} parent=1 // pred_fallthru
      _
    // Predicated region
    $region110: #{transformer_decoder.1} parent=1 // pred_check
      _
    $region111: #{transformer_decoder.1} parent=1 // pred_check_branch
      %219 = sbr.rel (0) target = $region113
    $region112: #{transformer_decoder.1} parent=1 // pred_region
      %220 = dma.done [#allocation6], 4096
    $region113: #{transformer_decoder.1} parent=1 // pred_fallthru
      _
    // Predicated region
    $region114: #{transformer_decoder.1} parent=1 // pred_check
      _
    $region115: #{transformer_decoder.1} parent=1 // pred_check_branch
      %222 = sbr.rel (0) target = $region117
    $region116: #{transformer_decoder.1} parent=1 // pred_region
      %223 = dma.done [#allocation6], 4096
    $region117: #{transformer_decoder.1} parent=1 // pred_fallthru
      _
    // Predicated region
    $region118: #{transformer_decoder.1} parent=1 // pred_check
      _
    $region119: #{transformer_decoder.1} parent=1 // pred_check_branch
      %225 = sbr.rel (0) target = $region121
    $region120: #{transformer_decoder.1} parent=1 // pred_region
      %226 = dma.done [#allocation9], 4096
    $region121: #{transformer_decoder.1} parent=1 // pred_fallthru
      _
    // Predicated region
    $region122: #{transformer_decoder.1} parent=1 // pred_check
      _
    $region123: #{transformer_decoder.1} parent=1 // pred_check_branch
      %228 = sbr.rel (0) target = $region125
    $region124: #{transformer_decoder.1} parent=1 // pred_region
      %229 = dma.done [#allocation9], 8192
    $region125: #{transformer_decoder.1} parent=1 // pred_fallthru
      _
    // Predicated region
    $region126: #{transformer_decoder.1} parent=1 // pred_check
      _
    $region127: #{transformer_decoder.1} parent=1 // pred_check_branch
      %231 = sbr.rel (0) target = $region129
    $region128: #{transformer_decoder.1} parent=1 // pred_region
      %232 = dma.done [#allocation12], 8192
    $region129: #{transformer_decoder.1} parent=1 // pred_fallthru
      _
    // Predicated region
    $region130: #{transformer_decoder.1} parent=1 // pred_check
      _
    $region131: #{transformer_decoder.1} parent=1 // pred_check_branch
      %234 = sbr.rel (0) target = $region133
    $region132: #{transformer_decoder.1} parent=1 // pred_region
      %235 = dma.done [#allocation12], 32
    $region133: #{transformer_decoder.1} parent=1 // pred_fallthru
      _
    // Predicated region
    $region134: #{transformer_decoder.1} parent=1 // pred_check
      _
    $region135: #{transformer_decoder.1} parent=1 // pred_check_branch
      %237 = sbr.rel (0) target = $region137
    $region136: #{transformer_decoder.1} parent=1 // pred_region
      %238 = dma.done [#allocation15], 32
    $region137: #{transformer_decoder.1} parent=1 // pred_fallthru
      _
    // Predicated region
    $region138: #{transformer_decoder.1} parent=1 // pred_check
      _
    $region139: #{transformer_decoder.1} parent=1 // pred_check_branch
      %240 = sbr.rel (0) target = $region141
    $region140: #{transformer_decoder.1} parent=1 // pred_region
      %241 = dma.done [#allocation15], 32
    $region141: #{transformer_decoder.1} parent=1 // pred_fallthru
      _
    // Predicated region
    $region142: #{transformer_decoder.1} parent=1 // pred_check
      _
    $region143: #{transformer_decoder.1} parent=1 // pred_check_branch
      %243 = sbr.rel (0) target = $region145
    $region144: #{transformer_decoder.1} parent=1 // pred_region
      %244 = dma.done [#allocation18], 32
    $region145: #{transformer_decoder.1} parent=1 // pred_fallthru
      _
    // Predicated region
    $region146: #{transformer_decoder.1} parent=1 // pred_check
      _
    $region147: #{transformer_decoder.1} parent=1 // pred_check_branch
      %246 = sbr.rel (0) target = $region149
    $region148: #{transformer_decoder.1} parent=1 // pred_region
      %247 = dma.done [#allocation18], 32
    $region149: #{transformer_decoder.1} parent=1 // pred_fallthru
      _
    // Predicated region
    $region150: #{transformer_decoder.1} parent=1 // pred_check
      _
    $region151: #{transformer_decoder.1} parent=1 // pred_check_branch
      %249 = sbr.rel (0) target = $region153
    $region152: #{transformer_decoder.1} parent=1 // pred_region
      %250 = dma.done [#allocation21], 32
    $region153: #{transformer_decoder.1} parent=1 // pred_fallthru
      _
    %v251 = vld [vmem:[%s0] sm:$0xff]
    %v252 = vld [vmem:[%s0 + $0x8] sm:$0xff]
    %v253 = vmul.f32 %v251, 11.313708
    %v254 = vmul.f32 %v252, 11.313708
    %v255 = vld [vmem:[%s1] sm:$0xff]
    %v256 = vld [vmem:[%s1 + $0x8] sm:$0xff]
    %v257 = vadd.f32 %v253, %v255
    %v258 = vadd.f32 %v254, %v256
    %v259 = vld [vmem:[%s2] sm:$0xff]
    %v260 = vld [vmem:[%s2 + $0x8] sm:$0xff]
    %v261 = vld [vmem:[%s2 + $0x10] sm:$0xff]
    %v262 = vld [vmem:[%s2 + $0x18] sm:$0xff]
    %v263 = vld [vmem:[%s3] sm:$0x3]
    %v264 = vlaneseq
    %v265 = vshrl.u32 %v264, 7
    %v266 = vlaneseq
    %v267 = vand.u32 %v266, 127
    %vm268 = vcmp.le.s32.totalorder %v267, %v265
    %v269 = vld [vmem:[#allocation2] sm:$0xff]
    %v270 = vld [vmem:[#allocation2 + $0x8] sm:$0xff]
    %v271 = vld [vmem:[#allocation2 + $0x10] sm:$0xff]
    %v272 = vld [vmem:[#allocation2 + $0x18] sm:$0xff]
    %v273 = vld [vmem:[#allocation2 + $0x20] sm:$0xff]
    %v274 = vld [vmem:[#allocation2 + $0x28] sm:$0xff]
    %v275 = vld [vmem:[#allocation2 + $0x30] sm:$0xff]
    %v276 = vld [vmem:[#allocation2 + $0x38] sm:$0xff]
    %v277 = vld [vmem:[#allocation2 + $0x40] sm:$0xff]
    %v278 = vld [vmem:[#allocation2 + $0x48] sm:$0xff]
    %v279 = vld [vmem:[#allocation2 + $0x50] sm:$0xff]
    %v280 = vld [vmem:[#allocation2 + $0x58] sm:$0xff]
    %v281 = vld [vmem:[#allocation2 + $0x60] sm:$0xff]
    %v282 = vld [vmem:[#allocation2 + $0x68] sm:$0xff]
    %v283 = vld [vmem:[#allocation2 + $0x70] sm:$0xff]
    %v284 = vld [vmem:[#allocation2 + $0x78] sm:$0xff]
    %v285 = vld [vmem:[#allocation2 + $0x80] sm:$0xff]
    %v286 = vld [vmem:[#allocation2 + $0x88] sm:$0xff]
    %v287 = vld [vmem:[#allocation2 + $0x90] sm:$0xff]
    %v288 = vld [vmem:[#allocation2 + $0x98] sm:$0xff]
    %v289 = vld [vmem:[#allocation2 + $0xa0] sm:$0xff]
    %v290 = vld [vmem:[#allocation2 + $0xa8] sm:$0xff]
    %v291 = vld [vmem:[#allocation2 + $0xb0] sm:$0xff]
    %v292 = vld [vmem:[#allocation2 + $0xb8] sm:$0xff]
    %v293 = vld [vmem:[#allocation2 + $0xc0] sm:$0xff]
    %v294 = vld [vmem:[#allocation2 + $0xc8] sm:$0xff]
    %v295 = vld [vmem:[#allocation2 + $0xd0] sm:$0xff]
    %v296 = vld [vmem:[#allocation2 + $0xd8] sm:$0xff]
    %v297 = vld [vmem:[#allocation2 + $0xe0] sm:$0xff]
    %v298 = vld [vmem:[#allocation2 + $0xe8] sm:$0xff]
    %v299 = vld [vmem:[#allocation2 + $0xf0] sm:$0xff]
    %v300 = vld [vmem:[#allocation2 + $0xf8] sm:$0xff]
    %v301 = vld [vmem:[#allocation2 + $0x100] sm:$0xff]
    %v302 = vld [vmem:[#allocation2 + $0x108] sm:$0xff]
    %v303 = vld [vmem:[#allocation2 + $0x110] sm:$0xff]
    %v304 = vld [vmem:[#allocation2 + $0x118] sm:$0xff]
    %v305 = vld [vmem:[#allocation2 + $0x120] sm:$0xff]
    %v306 = vld [vmem:[#allocation2 + $0x128] sm:$0xff]
    %v307 = vld [vmem:[#allocation2 + $0x130] sm:$0xff]
    %v308 = vld [vmem:[#allocation2 + $0x138] sm:$0xff]
    %v309 = vld [vmem:[#allocation2 + $0x140] sm:$0xff]
    %v310 = vld [vmem:[#allocation2 + $0x148] sm:$0xff]
    %v311 = vld [vmem:[#allocation2 + $0x150] sm:$0xff]
    %v312 = vld [vmem:[#allocation2 + $0x158] sm:$0xff]
    %v313 = vld [vmem:[#allocation2 + $0x160] sm:$0xff]
    %v314 = vld [vmem:[#allocation2 + $0x168] sm:$0xff]
    %v315 = vld [vmem:[#allocation2 + $0x170] sm:$0xff]
    %v316 = vld [vmem:[#allocation2 + $0x178] sm:$0xff]
    %v317 = vld [vmem:[%s5] sm:$0x7]
    %v319 = vlaneseq
    %v320 = vshrl.u32 %v319, 7
    %v321 = vsub.s32 0, %v320
    %v322 = vrot.slane %v317, %v321
    %v323 = vlaneseq
    %v324 = vshrl.u32 %v323, 7
    %v325 = vsub.s32 1, %v324
    %v326 = vrot.slane %v317, %v325
    %v327 = vlaneseq
    %v328 = vshrl.u32 %v327, 7
    %v329 = vsub.s32 2, %v328
    %v330 = vrot.slane %v317, %v329
    %334 = vmatprep.subr.mxu0 %v270
    %335 = vmatpush1.msra.mxu0 %v269
    %336 = vmatprep.subr.mxu0 %v273
    %337 = vmatpush1.msra.mxu0 %v272
    %338 = vmatprep.subr.mxu0 %v276
    %339 = vmatpush1.msra.mxu0 %v275
    %340 = vmatprep.subr.mxu0 %v279
    %341 = vmatpush1.msra.mxu0 %v278
    %342 = vmatprep.subr.mxu0 %v282
    %343 = vmatpush1.msra.mxu0 %v281
    %344 = vmatprep.subr.mxu0 %v285
    %345 = vmatpush1.msra.mxu0 %v284
    %346 = vmatprep.subr.mxu0 %v288
    %347 = vmatpush1.msra.mxu0 %v287
    %348 = vmatprep.subr.mxu0 %v291
    %349 = vmatpush1.msra.mxu0 %v290
    %350 = vmatprep.subr.mxu0 %v294
    %351 = vmatpush1.msra.mxu0 %v293
    %352 = vmatprep.subr.mxu0 %v297
    %353 = vmatpush1.msra.mxu0 %v296
    %354 = vmatprep.subr.mxu0 %v300
    %355 = vmatpush1.msra.mxu0 %v299
    %356 = vmatprep.subr.mxu0 %v303
    %357 = vmatpush1.msra.mxu0 %v302
    %358 = vmatprep.subr.mxu0 %v306
    %359 = vmatpush1.msra.mxu0 %v305
    %360 = vmatprep.subr.mxu0 %v309
    %361 = vmatpush1.msra.mxu0 %v308
    %362 = vmatprep.subr.mxu0 %v312
    %363 = vmatpush1.msra.mxu0 %v311
    %364 = vmatprep.subr.mxu0 %v315
    %365 = vmatpush1.msra.mxu0 %v314
    %366 = vmatprep.subr.mxu0 0.0
    %367 = vmatpush1.msra.mxu0 0.0
    %368 = vmatprep.subr.mxu0 0.0
    %369 = vmatpush1.msra.mxu0 0.0
    %370 = vmatprep.subr.mxu0 0.0
    %371 = vmatpush1.msra.mxu0 0.0
    %372 = vmatprep.subr.mxu0 0.0
    %373 = vmatpush1.msra.mxu0 0.0
    %374 = vmatprep.subr.mxu0 0.0
    %375 = vmatpush1.msra.mxu0 0.0
    %376 = vmatprep.subr.mxu0 0.0
    %377 = vmatpush1.msra.mxu0 0.0
    %378 = vmatprep.subr.mxu0 0.0
    %379 = vmatpush1.msra.mxu0 0.0
    %380 = vmatprep.subr.mxu0 0.0
    %381 = vmatpush1.msra.mxu0 0.0
    %382 = vmatprep.subr.mxu0 0.0
    %383 = vmatpush1.msra.mxu0 0.0
    %384 = vmatprep.subr.mxu0 0.0
    %385 = vmatpush1.msra.mxu0 0.0
    %386 = vmatprep.subr.mxu0 0.0
    %387 = vmatpush1.msra.mxu0 0.0
    %388 = vmatprep.subr.mxu0 0.0
    %389 = vmatpush1.msra.mxu0 0.0
    %390 = vmatprep.subr.mxu0 0.0
    %391 = vmatpush1.msra.mxu0 0.0
    %392 = vmatprep.subr.mxu0 0.0
    %393 = vmatpush1.msra.mxu0 0.0
    %394 = vmatprep.subr.mxu0 0.0
    %395 = vmatpush1.msra.mxu0 0.0
    %396 = vmatprep.subr.mxu0 0.0
    %397 = vmatpush1.msra.mxu0 0.0
    %398 = vmatprep.mubr.f32.mxu0 0.0
    %399 = vmatmul.mubr.f32.gmra.mrb[0].mxu0 %v257
    %v400 = vpop.f32.mrb[0].mxu0
    %v401 = vadd.f32 %v322, %v400
    %v402 = vpop.f32.mrb[0].mxu0
    %v403 = vadd.f32 %v326, %v402
    %404 = vmatprep.mubr.f32.mxu0 0.0
    %405 = vmatmul.mubr.f32.gmra.mrb[0].mxu0 %v258
    %v406 = vpop.f32.mrb[0].mxu0
    %v407 = vadd.f32 %v322, %v406
    %v408 = vpop.f32.mrb[0].mxu0
    %v409 = vadd.f32 %v326, %v408
    %410 = vdwg.mxu0
    %411 = vmatprep.subr.mxu0 0.0
    %412 = vmatpush1.msra.mxu0 %v271
    %413 = vmatprep.subr.mxu0 0.0
    %414 = vmatpush1.msra.mxu0 %v274
    %415 = vmatprep.subr.mxu0 0.0
    %416 = vmatpush1.msra.mxu0 %v277
    %417 = vmatprep.subr.mxu0 0.0
    %418 = vmatpush1.msra.mxu0 %v280
    %419 = vmatprep.subr.mxu0 0.0
    %420 = vmatpush1.msra.mxu0 %v283
    %421 = vmatprep.subr.mxu0 0.0
    %422 = vmatpush1.msra.mxu0 %v286
    %423 = vmatprep.subr.mxu0 0.0
    %424 = vmatpush1.msra.mxu0 %v289
    %425 = vmatprep.subr.mxu0 0.0
    %426 = vmatpush1.msra.mxu0 %v292
    %427 = vmatprep.subr.mxu0 0.0
    %428 = vmatpush1.msra.mxu0 %v295
    %429 = vmatprep.subr.mxu0 0.0
    %430 = vmatpush1.msra.mxu0 %v298
    %431 = vmatprep.subr.mxu0 0.0
    %432 = vmatpush1.msra.mxu0 %v301
    %433 = vmatprep.subr.mxu0 0.0
    %434 = vmatpush1.msra.mxu0 %v304
    %435 = vmatprep.subr.mxu0 0.0
    %436 = vmatpush1.msra.mxu0 %v307
    %437 = vmatprep.subr.mxu0 0.0
    %438 = vmatpush1.msra.mxu0 %v310
    %439 = vmatprep.subr.mxu0 0.0
    %440 = vmatpush1.msra.mxu0 %v313
    %441 = vmatprep.subr.mxu0 0.0
    %442 = vmatpush1.msra.mxu0 %v316
    %443 = vmatprep.subr.mxu0 0.0
    %444 = vmatpush1.msra.mxu0 0.0
    %445 = vmatprep.subr.mxu0 0.0
    %446 = vmatpush1.msra.mxu0 0.0
    %447 = vmatprep.subr.mxu0 0.0
    %448 = vmatpush1.msra.mxu0 0.0
    %449 = vmatprep.subr.mxu0 0.0
    %450 = vmatpush1.msra.mxu0 0.0
    %451 = vmatprep.subr.mxu0 0.0
    %452 = vmatpush1.msra.mxu0 0.0
    %453 = vmatprep.subr.mxu0 0.0
    %454 = vmatpush1.msra.mxu0 0.0
    %455 = vmatprep.subr.mxu0 0.0
    %456 = vmatpush1.msra.mxu0 0.0
    %457 = vmatprep.subr.mxu0 0.0
    %458 = vmatpush1.msra.mxu0 0.0
    %459 = vmatprep.subr.mxu0 0.0
    %460 = vmatpush1.msra.mxu0 0.0
    %461 = vmatprep.subr.mxu0 0.0
    %462 = vmatpush1.msra.mxu0 0.0
    %463 = vmatprep.subr.mxu0 0.0
    %464 = vmatpush1.msra.mxu0 0.0
    %465 = vmatprep.subr.mxu0 0.0
    %466 = vmatpush1.msra.mxu0 0.0
    %467 = vmatprep.subr.mxu0 0.0
    %468 = vmatpush1.msra.mxu0 0.0
    %469 = vmatprep.subr.mxu0 0.0
    %470 = vmatpush1.msra.mxu0 0.0
    %471 = vmatprep.subr.mxu0 0.0
    %472 = vmatpush1.msra.mxu0 0.0
    %473 = vmatprep.subr.mxu0 0.0
    %474 = vmatpush1.msra.mxu0 0.0
    %475 = vmatprep.mubr.f32.mxu0 0.0
    %476 = vmatmul.mubr.f32.gmra.mrb[0].mxu0 %v257
    %v477 = vpop.f32.mrb[0].mxu0
    %v478 = vadd.f32 %v330, %v477
    %v479 = vpop.f32.mrb[0].mxu0
    %480 = vmatprep.mubr.f32.mxu0 0.0
    %481 = vmatmul.mubr.f32.gmra.mrb[0].mxu0 %v258
    %v482 = vpop.f32.mrb[0].mxu0
    %v483 = vadd.f32 %v330, %v482
    %v484 = vpop.f32.mrb[0].mxu0
    %485 = vdwg.mxu0
    %vm486 = vcmask 261120
    %v488 = vsel %vm486, %v401, 0
    %v491 = vsel %vm486, %v403, 0
    %493 = vmatprep.subr.mxu0 0.0
    %494 = vmatpush1.xpose.msra.mxu0 %v491
    %495 = vmatprep.subr.mxu0 0.0
    %496 = vmatpush1.xpose.msra.mxu0 0.0
    %497 = vmatprep.subr.mxu0 0.0
    %498 = vmatpush1.xpose.msra.mxu0 0.0
    %499 = vmatprep.subr.mxu0 0.0
    %500 = vmatpush1.xpose.msra.mxu0 0.0
    %501 = vmatprep.subr.mxu0 0.0
    %502 = vmatpush1.xpose.msra.mxu0 0.0
    %503 = vmatprep.subr.mxu0 0.0
    %504 = vmatpush1.xpose.msra.mxu0 0.0
    %505 = vmatprep.subr.mxu0 0.0
    %506 = vmatpush1.xpose.msra.mxu0 0.0
    %507 = vmatprep.subr.mxu0 0.0
    %508 = vmatpush1.xpose.msra.mxu0 0.0
    %509 = vmatprep.subr.mxu0 0.0
    %510 = vmatpush1.xpose.msra.mxu0 0.0
    %511 = vmatprep.subr.mxu0 0.0
    %512 = vmatpush1.xpose.msra.mxu0 0.0
    %513 = vmatprep.subr.mxu0 0.0
    %514 = vmatpush1.xpose.msra.mxu0 0.0
    %515 = vmatprep.subr.mxu0 0.0
    %516 = vmatpush1.xpose.msra.mxu0 0.0
    %517 = vmatprep.subr.mxu0 0.0
    %518 = vmatpush1.xpose.msra.mxu0 0.0
    %519 = vmatprep.subr.mxu0 0.0
    %520 = vmatpush1.xpose.msra.mxu0 0.0
    %521 = vmatprep.subr.mxu0 0.0
    %522 = vmatpush1.xpose.msra.mxu0 0.0
    %523 = vmatprep.subr.mxu0 0.0
    %524 = vmatpush1.xpose.msra.mxu0 0.0
    %525 = vmatprep.subr.mxu0 0.0
    %526 = vmatpush1.xpose.msra.mxu0 0.0
    %527 = vmatprep.subr.mxu0 0.0
    %528 = vmatpush1.xpose.msra.mxu0 0.0
    %529 = vmatprep.subr.mxu0 0.0
    %530 = vmatpush1.xpose.msra.mxu0 0.0
    %531 = vmatprep.subr.mxu0 0.0
    %532 = vmatpush1.xpose.msra.mxu0 0.0
    %533 = vmatprep.subr.mxu0 0.0
    %534 = vmatpush1.xpose.msra.mxu0 0.0
    %535 = vmatprep.subr.mxu0 0.0
    %536 = vmatpush1.xpose.msra.mxu0 0.0
    %537 = vmatprep.subr.mxu0 0.0
    %538 = vmatpush1.xpose.msra.mxu0 0.0
    %539 = vmatprep.subr.mxu0 0.0
    %540 = vmatpush1.xpose.msra.mxu0 0.0
    %541 = vmatprep.subr.mxu0 0.0
    %542 = vmatpush1.xpose.msra.mxu0 0.0
    %543 = vmatprep.subr.mxu0 0.0
    %544 = vmatpush1.xpose.msra.mxu0 0.0
    %545 = vmatprep.subr.mxu0 0.0
    %546 = vmatpush1.xpose.msra.mxu0 0.0
    %547 = vmatprep.subr.mxu0 0.0
    %548 = vmatpush1.xpose.msra.mxu0 0.0
    %549 = vmatprep.subr.mxu0 0.0
    %550 = vmatpush1.xpose.msra.mxu0 0.0
    %551 = vmatprep.subr.mxu0 0.0
    %552 = vmatpush1.xpose.msra.mxu0 0.0
    %553 = vmatprep.subr.mxu0 0.0
    %554 = vmatpush1.xpose.msra.mxu0 0.0
    %555 = vmatprep.subr.mxu0 0.0
    %556 = vmatpush1.xpose.msra.mxu0 0.0
    %557 = vmatprep.mubr.f32.mxu0 0.0
    %558 = vmatmul.mubr.f32.gmra.mrb[0].mxu0 %v488
    %v559 = vpop.f32.mrb[0].mxu0
    %v560 = vadd.f32 0.0, %v559
    %v561 = vpop.f32.mrb[0].mxu0
    %562 = vdwg.mxu0
    %v563 = vmul.f32 %v560, 0.17677669
    %v564 = vsel %vm268, %v563, -1e+09
    %vm565 = vcmask 64512
    %v566 = vsel %vm565, %v564, -inf
    %567 = vmax.xlane.f32.xlu0 %v566
    %v568 = vpop.xlane.xlu0 %567
    %v569 = vsub.f32 %v564, %v568
    %v570 = vmul.f32 %v569, 1.442695
    %v571 = vpow.pop %v570
    %v572 = vsel %vm565, %v571, 0.0
    %573 = vadd.xlane.f32.xlu0 %v572
    %v574 = vpop.xlane.xlu0 %573
    %v575 = vrcp.pop %v574
    %v576 = vmul.f32 %v571, %v575
    %v578 = vsel %vm565, %v576, 0
    %580 = vmatprep.subr.mxu0 0.0
    %581 = vmatpush1.msra.mxu0 %v478
    %582 = vmatprep.subr.mxu0 0.0
    %583 = vmatpush1.msra.mxu0 0.0
    %584 = vmatprep.subr.mxu0 0.0
    %585 = vmatpush1.msra.mxu0 0.0
    %586 = vmatprep.subr.mxu0 0.0
    %587 = vmatpush1.msra.mxu0 0.0
    %588 = vmatprep.subr.mxu0 0.0
    %589 = vmatpush1.msra.mxu0 0.0
    %590 = vmatprep.subr.mxu0 0.0
    %591 = vmatpush1.msra.mxu0 0.0
    %592 = vmatprep.subr.mxu0 0.0
    %593 = vmatpush1.msra.mxu0 0.0
    %594 = vmatprep.subr.mxu0 0.0
    %595 = vmatpush1.msra.mxu0 0.0
    %596 = vmatprep.subr.mxu0 0.0
    %597 = vmatpush1.msra.mxu0 0.0
    %598 = vmatprep.subr.mxu0 0.0
    %599 = vmatpush1.msra.mxu0 0.0
    %600 = vmatprep.subr.mxu0 0.0
    %601 = vmatpush1.msra.mxu0 0.0
    %602 = vmatprep.subr.mxu0 0.0
    %603 = vmatpush1.msra.mxu0 0.0
    %604 = vmatprep.subr.mxu0 0.0
    %605 = vmatpush1.msra.mxu0 0.0
    %606 = vmatprep.subr.mxu0 0.0
    %607 = vmatpush1.msra.mxu0 0.0
    %608 = vmatprep.subr.mxu0 0.0
    %609 = vmatpush1.msra.mxu0 0.0
    %610 = vmatprep.subr.mxu0 0.0
    %611 = vmatpush1.msra.mxu0 0.0
    %612 = vmatprep.subr.mxu0 0.0
    %613 = vmatpush1.msra.mxu0 0.0
    %614 = vmatprep.subr.mxu0 0.0
    %615 = vmatpush1.msra.mxu0 0.0
    %616 = vmatprep.subr.mxu0 0.0
    %617 = vmatpush1.msra.mxu0 0.0
    %618 = vmatprep.subr.mxu0 0.0
    %619 = vmatpush1.msra.mxu0 0.0
    %620 = vmatprep.subr.mxu0 0.0
    %621 = vmatpush1.msra.mxu0 0.0
    %622 = vmatprep.subr.mxu0 0.0
    %623 = vmatpush1.msra.mxu0 0.0
    %624 = vmatprep.subr.mxu0 0.0
    %625 = vmatpush1.msra.mxu0 0.0
    %626 = vmatprep.subr.mxu0 0.0
    %627 = vmatpush1.msra.mxu0 0.0
    %628 = vmatprep.subr.mxu0 0.0
    %629 = vmatpush1.msra.mxu0 0.0
    %630 = vmatprep.subr.mxu0 0.0
    %631 = vmatpush1.msra.mxu0 0.0
    %632 = vmatprep.subr.mxu0 0.0
    %633 = vmatpush1.msra.mxu0 0.0
    %634 = vmatprep.subr.mxu0 0.0
    %635 = vmatpush1.msra.mxu0 0.0
    %636 = vmatprep.subr.mxu0 0.0
    %637 = vmatpush1.msra.mxu0 0.0
    %638 = vmatprep.subr.mxu0 0.0
    %639 = vmatpush1.msra.mxu0 0.0
    %640 = vmatprep.subr.mxu0 0.0
    %641 = vmatpush1.msra.mxu0 0.0
    %642 = vmatprep.subr.mxu0 0.0
    %643 = vmatpush1.msra.mxu0 0.0
    %644 = vmatprep.mubr.f32.mxu0 0.0
    %645 = vmatmul.mubr.f32.gmra.mrb[0].mxu0 %v578
    %v646 = vpop.f32.mrb[0].mxu0
    %v647 = vadd.f32 0.0, %v646
    %v648 = vpop.f32.mrb[0].mxu0
    %649 = vdwg.mxu0
    %650 = vrot.lane.b32.xlu0 %v401, 96
    %v651 = vpop.permute.xlu0 %650
    %652 = vrot.lane.b32.xlu0 %v403, 96
    %v653 = vpop.permute.xlu0 %652
    %v654 = vsel %vm486, %v651, 0
    %v656 = vsel %vm486, %v653, 0
    %658 = vmatprep.subr.mxu0 0.0
    %659 = vmatpush1.xpose.msra.mxu0 %v656
    %660 = vmatprep.subr.mxu0 0.0
    %661 = vmatpush1.xpose.msra.mxu0 0.0
    %662 = vmatprep.subr.mxu0 0.0
    %663 = vmatpush1.xpose.msra.mxu0 0.0
    %664 = vmatprep.subr.mxu0 0.0
    %665 = vmatpush1.xpose.msra.mxu0 0.0
    %666 = vmatprep.subr.mxu0 0.0
    %667 = vmatpush1.xpose.msra.mxu0 0.0
    %668 = vmatprep.subr.mxu0 0.0
    %669 = vmatpush1.xpose.msra.mxu0 0.0
    %670 = vmatprep.subr.mxu0 0.0
    %671 = vmatpush1.xpose.msra.mxu0 0.0
    %672 = vmatprep.subr.mxu0 0.0
    %673 = vmatpush1.xpose.msra.mxu0 0.0
    %674 = vmatprep.subr.mxu0 0.0
    %675 = vmatpush1.xpose.msra.mxu0 0.0
    %676 = vmatprep.subr.mxu0 0.0
    %677 = vmatpush1.xpose.msra.mxu0 0.0
    %678 = vmatprep.subr.mxu0 0.0
    %679 = vmatpush1.xpose.msra.mxu0 0.0
    %680 = vmatprep.subr.mxu0 0.0
    %681 = vmatpush1.xpose.msra.mxu0 0.0
    %682 = vmatprep.subr.mxu0 0.0
    %683 = vmatpush1.xpose.msra.mxu0 0.0
    %684 = vmatprep.subr.mxu0 0.0
    %685 = vmatpush1.xpose.msra.mxu0 0.0
    %686 = vmatprep.subr.mxu0 0.0
    %687 = vmatpush1.xpose.msra.mxu0 0.0
    %688 = vmatprep.subr.mxu0 0.0
    %689 = vmatpush1.xpose.msra.mxu0 0.0
    %690 = vmatprep.subr.mxu0 0.0
    %691 = vmatpush1.xpose.msra.mxu0 0.0
    %692 = vmatprep.subr.mxu0 0.0
    %693 = vmatpush1.xpose.msra.mxu0 0.0
    %694 = vmatprep.subr.mxu0 0.0
    %695 = vmatpush1.xpose.msra.mxu0 0.0
    %696 = vmatprep.subr.mxu0 0.0
    %697 = vmatpush1.xpose.msra.mxu0 0.0
    %698 = vmatprep.subr.mxu0 0.0
    %699 = vmatpush1.xpose.msra.mxu0 0.0
    %700 = vmatprep.subr.mxu0 0.0
    %701 = vmatpush1.xpose.msra.mxu0 0.0
    %702 = vmatprep.subr.mxu0 0.0
    %703 = vmatpush1.xpose.msra.mxu0 0.0
    %704 = vmatprep.subr.mxu0 0.0
    %705 = vmatpush1.xpose.msra.mxu0 0.0
    %706 = vmatprep.subr.mxu0 0.0
    %707 = vmatpush1.xpose.msra.mxu0 0.0
    %708 = vmatprep.subr.mxu0 0.0
    %709 = vmatpush1.xpose.msra.mxu0 0.0
    %710 = vmatprep.subr.mxu0 0.0
    %711 = vmatpush1.xpose.msra.mxu0 0.0
    %712 = vmatprep.subr.mxu0 0.0
    %713 = vmatpush1.xpose.msra.mxu0 0.0
    %714 = vmatprep.subr.mxu0 0.0
    %715 = vmatpush1.xpose.msra.mxu0 0.0
    %716 = vmatprep.subr.mxu0 0.0
    %717 = vmatpush1.xpose.msra.mxu0 0.0
    %718 = vmatprep.subr.mxu0 0.0
    %719 = vmatpush1.xpose.msra.mxu0 0.0
    %720 = vmatprep.subr.mxu0 0.0
    %721 = vmatpush1.xpose.msra.mxu0 0.0
    %722 = vmatprep.mubr.f32.mxu0 0.0
    %723 = vmatmul.mubr.f32.gmra.mrb[0].mxu0 %v654
    %v724 = vpop.f32.mrb[0].mxu0
    %v725 = vadd.f32 0.0, %v724
    %v726 = vpop.f32.mrb[0].mxu0
    %727 = vdwg.mxu0
    %v728 = vmul.f32 %v725, 0.17677669
    %v729 = vsel %vm268, %v728, -1e+09
    %v730 = vsel %vm565, %v729, -inf
    %731 = vmax.xlane.f32.xlu0 %v730
    %v732 = vpop.xlane.xlu0 %731
    %v733 = vsub.f32 %v729, %v732
    %v734 = vmul.f32 %v733, 1.442695
    %v735 = vpow.pop %v734
    %v736 = vsel %vm565, %v735, 0.0
    %737 = vadd.xlane.f32.xlu0 %v736
    %v738 = vpop.xlane.xlu0 %737
    %v739 = vrcp.pop %v738
    %v740 = vmul.f32 %v735, %v739
    %742 = vrot.lane.b32.xlu0 %v478, 96
    %v743 = vpop.permute.xlu0 %742
    %v746 = vsel %vm565, %v740, 0
    %748 = vmatprep.subr.mxu0 0.0
    %749 = vmatpush1.msra.mxu0 %v743
    %750 = vmatprep.subr.mxu0 0.0
    %751 = vmatpush1.msra.mxu0 0.0
    %752 = vmatprep.subr.mxu0 0.0
    %753 = vmatpush1.msra.mxu0 0.0
    %754 = vmatprep.subr.mxu0 0.0
    %755 = vmatpush1.msra.mxu0 0.0
    %756 = vmatprep.subr.mxu0 0.0
    %757 = vmatpush1.msra.mxu0 0.0
    %758 = vmatprep.subr.mxu0 0.0
    %759 = vmatpush1.msra.mxu0 0.0
    %760 = vmatprep.subr.mxu0 0.0
    %761 = vmatpush1.msra.mxu0 0.0
    %762 = vmatprep.subr.mxu0 0.0
    %763 = vmatpush1.msra.mxu0 0.0
    %764 = vmatprep.subr.mxu0 0.0
    %765 = vmatpush1.msra.mxu0 0.0
    %766 = vmatprep.subr.mxu0 0.0
    %767 = vmatpush1.msra.mxu0 0.0
    %768 = vmatprep.subr.mxu0 0.0
    %769 = vmatpush1.msra.mxu0 0.0
    %770 = vmatprep.subr.mxu0 0.0
    %771 = vmatpush1.msra.mxu0 0.0
    %772 = vmatprep.subr.mxu0 0.0
    %773 = vmatpush1.msra.mxu0 0.0
    %774 = vmatprep.subr.mxu0 0.0
    %775 = vmatpush1.msra.mxu0 0.0
    %776 = vmatprep.subr.mxu0 0.0
    %777 = vmatpush1.msra.mxu0 0.0
    %778 = vmatprep.subr.mxu0 0.0
    %779 = vmatpush1.msra.mxu0 0.0
    %780 = vmatprep.subr.mxu0 0.0
    %781 = vmatpush1.msra.mxu0 0.0
    %782 = vmatprep.subr.mxu0 0.0
    %783 = vmatpush1.msra.mxu0 0.0
    %784 = vmatprep.subr.mxu0 0.0
    %785 = vmatpush1.msra.mxu0 0.0
    %786 = vmatprep.subr.mxu0 0.0
    %787 = vmatpush1.msra.mxu0 0.0
    %788 = vmatprep.subr.mxu0 0.0
    %789 = vmatpush1.msra.mxu0 0.0
    %790 = vmatprep.subr.mxu0 0.0
    %791 = vmatpush1.msra.mxu0 0.0
    %792 = vmatprep.subr.mxu0 0.0
    %793 = vmatpush1.msra.mxu0 0.0
    %794 = vmatprep.subr.mxu0 0.0
    %795 = vmatpush1.msra.mxu0 0.0
    %796 = vmatprep.subr.mxu0 0.0
    %797 = vmatpush1.msra.mxu0 0.0
    %798 = vmatprep.subr.mxu0 0.0
    %799 = vmatpush1.msra.mxu0 0.0
    %800 = vmatprep.subr.mxu0 0.0
    %801 = vmatpush1.msra.mxu0 0.0
    %802 = vmatprep.subr.mxu0 0.0
    %803 = vmatpush1.msra.mxu0 0.0
    %804 = vmatprep.subr.mxu0 0.0
    %805 = vmatpush1.msra.mxu0 0.0
    %806 = vmatprep.subr.mxu0 0.0
    %807 = vmatpush1.msra.mxu0 0.0
    %808 = vmatprep.subr.mxu0 0.0
    %809 = vmatpush1.msra.mxu0 0.0
    %810 = vmatprep.subr.mxu0 0.0
    %811 = vmatpush1.msra.mxu0 0.0
    %812 = vmatprep.mubr.f32.mxu0 0.0
    %813 = vmatmul.mubr.f32.gmra.mrb[0].mxu0 %v746
    %v814 = vpop.f32.mrb[0].mxu0
    %v815 = vadd.f32 0.0, %v814
    %v816 = vpop.f32.mrb[0].mxu0
    %817 = vdwg.mxu0
    %818 = vrot.lane.b32.xlu0 %v401, 64
    %v819 = vpop.permute.xlu0 %818
    %820 = vrot.lane.b32.xlu0 %v403, 64
    %v821 = vpop.permute.xlu0 %820
    %v822 = vsel %vm486, %v819, 0
    %v824 = vsel %vm486, %v821, 0
    %826 = vmatprep.subr.mxu0 0.0
    %827 = vmatpush1.xpose.msra.mxu0 %v824
    %828 = vmatprep.subr.mxu0 0.0
    %829 = vmatpush1.xpose.msra.mxu0 0.0
    %830 = vmatprep.subr.mxu0 0.0
    %831 = vmatpush1.xpose.msra.mxu0 0.0
    %832 = vmatprep.subr.mxu0 0.0
    %833 = vmatpush1.xpose.msra.mxu0 0.0
    %834 = vmatprep.subr.mxu0 0.0
    %835 = vmatpush1.xpose.msra.mxu0 0.0
    %836 = vmatprep.subr.mxu0 0.0
    %837 = vmatpush1.xpose.msra.mxu0 0.0
    %838 = vmatprep.subr.mxu0 0.0
    %839 = vmatpush1.xpose.msra.mxu0 0.0
    %840 = vmatprep.subr.mxu0 0.0
    %841 = vmatpush1.xpose.msra.mxu0 0.0
    %842 = vmatprep.subr.mxu0 0.0
    %843 = vmatpush1.xpose.msra.mxu0 0.0
    %844 = vmatprep.subr.mxu0 0.0
    %845 = vmatpush1.xpose.msra.mxu0 0.0
    %846 = vmatprep.subr.mxu0 0.0
    %847 = vmatpush1.xpose.msra.mxu0 0.0
    %848 = vmatprep.subr.mxu0 0.0
    %849 = vmatpush1.xpose.msra.mxu0 0.0
    %850 = vmatprep.subr.mxu0 0.0
    %851 = vmatpush1.xpose.msra.mxu0 0.0
    %852 = vmatprep.subr.mxu0 0.0
    %853 = vmatpush1.xpose.msra.mxu0 0.0
    %854 = vmatprep.subr.mxu0 0.0
    %855 = vmatpush1.xpose.msra.mxu0 0.0
    %856 = vmatprep.subr.mxu0 0.0
    %857 = vmatpush1.xpose.msra.mxu0 0.0
    %858 = vmatprep.subr.mxu0 0.0
    %859 = vmatpush1.xpose.msra.mxu0 0.0
    %860 = vmatprep.subr.mxu0 0.0
    %861 = vmatpush1.xpose.msra.mxu0 0.0
    %862 = vmatprep.subr.mxu0 0.0
    %863 = vmatpush1.xpose.msra.mxu0 0.0
    %864 = vmatprep.subr.mxu0 0.0
    %865 = vmatpush1.xpose.msra.mxu0 0.0
    %866 = vmatprep.subr.mxu0 0.0
    %867 = vmatpush1.xpose.msra.mxu0 0.0
    %868 = vmatprep.subr.mxu0 0.0
    %869 = vmatpush1.xpose.msra.mxu0 0.0
    %870 = vmatprep.subr.mxu0 0.0
    %871 = vmatpush1.xpose.msra.mxu0 0.0
    %872 = vmatprep.subr.mxu0 0.0
    %873 = vmatpush1.xpose.msra.mxu0 0.0
    %874 = vmatprep.subr.mxu0 0.0
    %875 = vmatpush1.xpose.msra.mxu0 0.0
    %876 = vmatprep.subr.mxu0 0.0
    %877 = vmatpush1.xpose.msra.mxu0 0.0
    %878 = vmatprep.subr.mxu0 0.0
    %879 = vmatpush1.xpose.msra.mxu0 0.0
    %880 = vmatprep.subr.mxu0 0.0
    %881 = vmatpush1.xpose.msra.mxu0 0.0
    %882 = vmatprep.subr.mxu0 0.0
    %883 = vmatpush1.xpose.msra.mxu0 0.0
    %884 = vmatprep.subr.mxu0 0.0
    %885 = vmatpush1.xpose.msra.mxu0 0.0
    %886 = vmatprep.subr.mxu0 0.0
    %887 = vmatpush1.xpose.msra.mxu0 0.0
    %888 = vmatprep.subr.mxu0 0.0
    %889 = vmatpush1.xpose.msra.mxu0 0.0
    %890 = vmatprep.mubr.f32.mxu0 0.0
    %891 = vmatmul.mubr.f32.gmra.mrb[0].mxu0 %v822
    %v892 = vpop.f32.mrb[0].mxu0
    %v893 = vadd.f32 0.0, %v892
    %v894 = vpop.f32.mrb[0].mxu0
    %895 = vdwg.mxu0
    %v896 = vmul.f32 %v893, 0.17677669
    %v897 = vsel %vm268, %v896, -1e+09
    %v898 = vsel %vm565, %v897, -inf
    %899 = vmax.xlane.f32.xlu0 %v898
    %v900 = vpop.xlane.xlu0 %899
    %v901 = vsub.f32 %v897, %v900
    %v902 = vmul.f32 %v901, 1.442695
    %v903 = vpow.pop %v902
    %v904 = vsel %vm565, %v903, 0.0
    %905 = vadd.xlane.f32.xlu0 %v904
    %v906 = vpop.xlane.xlu0 %905
    %v907 = vrcp.pop %v906
    %v908 = vmul.f32 %v903, %v907
    %909 = vrot.lane.b32.xlu0 %v478, 64
    %v910 = vpop.permute.xlu0 %909
    %v913 = vsel %vm565, %v908, 0
    %915 = vmatprep.subr.mxu0 0.0
    %916 = vmatpush1.msra.mxu0 %v910
    %917 = vmatprep.subr.mxu0 0.0
    %918 = vmatpush1.msra.mxu0 0.0
    %919 = vmatprep.subr.mxu0 0.0
    %920 = vmatpush1.msra.mxu0 0.0
    %921 = vmatprep.subr.mxu0 0.0
    %922 = vmatpush1.msra.mxu0 0.0
    %923 = vmatprep.subr.mxu0 0.0
    %924 = vmatpush1.msra.mxu0 0.0
    %925 = vmatprep.subr.mxu0 0.0
    %926 = vmatpush1.msra.mxu0 0.0
    %927 = vmatprep.subr.mxu0 0.0
    %928 = vmatpush1.msra.mxu0 0.0
    %929 = vmatprep.subr.mxu0 0.0
    %930 = vmatpush1.msra.mxu0 0.0
    %931 = vmatprep.subr.mxu0 0.0
    %932 = vmatpush1.msra.mxu0 0.0
    %933 = vmatprep.subr.mxu0 0.0
    %934 = vmatpush1.msra.mxu0 0.0
    %935 = vmatprep.subr.mxu0 0.0
    %936 = vmatpush1.msra.mxu0 0.0
    %937 = vmatprep.subr.mxu0 0.0
    %938 = vmatpush1.msra.mxu0 0.0
    %939 = vmatprep.subr.mxu0 0.0
    %940 = vmatpush1.msra.mxu0 0.0
    %941 = vmatprep.subr.mxu0 0.0
    %942 = vmatpush1.msra.mxu0 0.0
    %943 = vmatprep.subr.mxu0 0.0
    %944 = vmatpush1.msra.mxu0 0.0
    %945 = vmatprep.subr.mxu0 0.0
    %946 = vmatpush1.msra.mxu0 0.0
    %947 = vmatprep.subr.mxu0 0.0
    %948 = vmatpush1.msra.mxu0 0.0
    %949 = vmatprep.subr.mxu0 0.0
    %950 = vmatpush1.msra.mxu0 0.0
    %951 = vmatprep.subr.mxu0 0.0
    %952 = vmatpush1.msra.mxu0 0.0
    %953 = vmatprep.subr.mxu0 0.0
    %954 = vmatpush1.msra.mxu0 0.0
    %955 = vmatprep.subr.mxu0 0.0
    %956 = vmatpush1.msra.mxu0 0.0
    %957 = vmatprep.subr.mxu0 0.0
    %958 = vmatpush1.msra.mxu0 0.0
    %959 = vmatprep.subr.mxu0 0.0
    %960 = vmatpush1.msra.mxu0 0.0
    %961 = vmatprep.subr.mxu0 0.0
    %962 = vmatpush1.msra.mxu0 0.0
    %963 = vmatprep.subr.mxu0 0.0
    %964 = vmatpush1.msra.mxu0 0.0
    %965 = vmatprep.subr.mxu0 0.0
    %966 = vmatpush1.msra.mxu0 0.0
    %967 = vmatprep.subr.mxu0 0.0
    %968 = vmatpush1.msra.mxu0 0.0
    %969 = vmatprep.subr.mxu0 0.0
    %970 = vmatpush1.msra.mxu0 0.0
    %971 = vmatprep.subr.mxu0 0.0
    %972 = vmatpush1.msra.mxu0 0.0
    %973 = vmatprep.subr.mxu0 0.0
    %974 = vmatpush1.msra.mxu0 0.0
    %975 = vmatprep.subr.mxu0 0.0
    %976 = vmatpush1.msra.mxu0 0.0
    %977 = vmatprep.subr.mxu0 0.0
    %978 = vmatpush1.msra.mxu0 0.0
    %979 = vmatprep.mubr.f32.mxu0 0.0
    %980 = vmatmul.mubr.f32.gmra.mrb[0].mxu0 %v913
    %v981 = vpop.f32.mrb[0].mxu0
    %v982 = vadd.f32 0.0, %v981
    %v983 = vpop.f32.mrb[0].mxu0
    %984 = vdwg.mxu0
    %985 = vrot.lane.b32.xlu0 %v401, 32
    %v986 = vpop.permute.xlu0 %985
    %987 = vrot.lane.b32.xlu0 %v403, 32
    %v988 = vpop.permute.xlu0 %987
    %v989 = vsel %vm486, %v986, 0
    %v991 = vsel %vm486, %v988, 0
    %993 = vmatprep.subr.mxu0 0.0
    %994 = vmatpush1.xpose.msra.mxu0 %v991
    %995 = vmatprep.subr.mxu0 0.0
    %996 = vmatpush1.xpose.msra.mxu0 0.0
    %997 = vmatprep.subr.mxu0 0.0
    %998 = vmatpush1.xpose.msra.mxu0 0.0
    %999 = vmatprep.subr.mxu0 0.0
    %1000 = vmatpush1.xpose.msra.mxu0 0.0
    %1001 = vmatprep.subr.mxu0 0.0
    %1002 = vmatpush1.xpose.msra.mxu0 0.0
    %1003 = vmatprep.subr.mxu0 0.0
    %1004 = vmatpush1.xpose.msra.mxu0 0.0
    %1005 = vmatprep.subr.mxu0 0.0
    %1006 = vmatpush1.xpose.msra.mxu0 0.0
    %1007 = vmatprep.subr.mxu0 0.0
    %1008 = vmatpush1.xpose.msra.mxu0 0.0
    %1009 = vmatprep.subr.mxu0 0.0
    %1010 = vmatpush1.xpose.msra.mxu0 0.0
    %1011 = vmatprep.subr.mxu0 0.0
    %1012 = vmatpush1.xpose.msra.mxu0 0.0
    %1013 = vmatprep.subr.mxu0 0.0
    %1014 = vmatpush1.xpose.msra.mxu0 0.0
    %1015 = vmatprep.subr.mxu0 0.0
    %1016 = vmatpush1.xpose.msra.mxu0 0.0
    %1017 = vmatprep.subr.mxu0 0.0
    %1018 = vmatpush1.xpose.msra.mxu0 0.0
    %1019 = vmatprep.subr.mxu0 0.0
    %1020 = vmatpush1.xpose.msra.mxu0 0.0
    %1021 = vmatprep.subr.mxu0 0.0
    %1022 = vmatpush1.xpose.msra.mxu0 0.0
    %1023 = vmatprep.subr.mxu0 0.0
    %1024 = vmatpush1.xpose.msra.mxu0 0.0
    %1025 = vmatprep.subr.mxu0 0.0
    %1026 = vmatpush1.xpose.msra.mxu0 0.0
    %1027 = vmatprep.subr.mxu0 0.0
    %1028 = vmatpush1.xpose.msra.mxu0 0.0
    %1029 = vmatprep.subr.mxu0 0.0
    %1030 = vmatpush1.xpose.msra.mxu0 0.0
    %1031 = vmatprep.subr.mxu0 0.0
    %1032 = vmatpush1.xpose.msra.mxu0 0.0
    %1033 = vmatprep.subr.mxu0 0.0
    %1034 = vmatpush1.xpose.msra.mxu0 0.0
    %1035 = vmatprep.subr.mxu0 0.0
    %1036 = vmatpush1.xpose.msra.mxu0 0.0
    %1037 = vmatprep.subr.mxu0 0.0
    %1038 = vmatpush1.xpose.msra.mxu0 0.0
    %1039 = vmatprep.subr.mxu0 0.0
    %1040 = vmatpush1.xpose.msra.mxu0 0.0
    %1041 = vmatprep.subr.mxu0 0.0
    %1042 = vmatpush1.xpose.msra.mxu0 0.0
    %1043 = vmatprep.subr.mxu0 0.0
    %1044 = vmatpush1.xpose.msra.mxu0 0.0
    %1045 = vmatprep.subr.mxu0 0.0
    %1046 = vmatpush1.xpose.msra.mxu0 0.0
    %1047 = vmatprep.subr.mxu0 0.0
    %1048 = vmatpush1.xpose.msra.mxu0 0.0
    %1049 = vmatprep.subr.mxu0 0.0
    %1050 = vmatpush1.xpose.msra.mxu0 0.0
    %1051 = vmatprep.subr.mxu0 0.0
    %1052 = vmatpush1.xpose.msra.mxu0 0.0
    %1053 = vmatprep.subr.mxu0 0.0
    %1054 = vmatpush1.xpose.msra.mxu0 0.0
    %1055 = vmatprep.subr.mxu0 0.0
    %1056 = vmatpush1.xpose.msra.mxu0 0.0
    %1057 = vmatprep.mubr.f32.mxu0 0.0
    %1058 = vmatmul.mubr.f32.gmra.mrb[0].mxu0 %v989
    %v1059 = vpop.f32.mrb[0].mxu0
    %v1060 = vadd.f32 0.0, %v1059
    %v1061 = vpop.f32.mrb[0].mxu0
    %1062 = vdwg.mxu0
    %v1063 = vmul.f32 %v1060, 0.17677669
    %v1064 = vsel %vm268, %v1063, -1e+09
    %v1065 = vsel %vm565, %v1064, -inf
    %1066 = vmax.xlane.f32.xlu0 %v1065
    %v1067 = vpop.xlane.xlu0 %1066
    %v1068 = vsub.f32 %v1064, %v1067
    %v1069 = vmul.f32 %v1068, 1.442695
    %v1070 = vpow.pop %v1069
    %v1071 = vsel %vm565, %v1070, 0.0
    %1072 = vadd.xlane.f32.xlu0 %v1071
    %v1073 = vpop.xlane.xlu0 %1072
    %v1074 = vrcp.pop %v1073
    %v1075 = vmul.f32 %v1070, %v1074
    %1076 = vrot.lane.b32.xlu0 %v478, 32
    %v1077 = vpop.permute.xlu0 %1076
    %v1080 = vsel %vm565, %v1075, 0
    %1082 = vmatprep.subr.mxu0 0.0
    %1083 = vmatpush1.msra.mxu0 %v1077
    %1084 = vmatprep.subr.mxu0 0.0
    %1085 = vmatpush1.msra.mxu0 0.0
    %1086 = vmatprep.subr.mxu0 0.0
    %1087 = vmatpush1.msra.mxu0 0.0
    %1088 = vmatprep.subr.mxu0 0.0
    %1089 = vmatpush1.msra.mxu0 0.0
    %1090 = vmatprep.subr.mxu0 0.0
    %1091 = vmatpush1.msra.mxu0 0.0
    %1092 = vmatprep.subr.mxu0 0.0
    %1093 = vmatpush1.msra.mxu0 0.0
    %1094 = vmatprep.subr.mxu0 0.0
    %1095 = vmatpush1.msra.mxu0 0.0
    %1096 = vmatprep.subr.mxu0 0.0
    %1097 = vmatpush1.msra.mxu0 0.0
    %1098 = vmatprep.subr.mxu0 0.0
    %1099 = vmatpush1.msra.mxu0 0.0
    %1100 = vmatprep.subr.mxu0 0.0
    %1101 = vmatpush1.msra.mxu0 0.0
    %1102 = vmatprep.subr.mxu0 0.0
    %1103 = vmatpush1.msra.mxu0 0.0
    %1104 = vmatprep.subr.mxu0 0.0
    %1105 = vmatpush1.msra.mxu0 0.0
    %1106 = vmatprep.subr.mxu0 0.0
    %1107 = vmatpush1.msra.mxu0 0.0
    %1108 = vmatprep.subr.mxu0 0.0
    %1109 = vmatpush1.msra.mxu0 0.0
    %1110 = vmatprep.subr.mxu0 0.0
    %1111 = vmatpush1.msra.mxu0 0.0
    %1112 = vmatprep.subr.mxu0 0.0
    %1113 = vmatpush1.msra.mxu0 0.0
    %1114 = vmatprep.subr.mxu0 0.0
    %1115 = vmatpush1.msra.mxu0 0.0
    %1116 = vmatprep.subr.mxu0 0.0
    %1117 = vmatpush1.msra.mxu0 0.0
    %1118 = vmatprep.subr.mxu0 0.0
    %1119 = vmatpush1.msra.mxu0 0.0
    %1120 = vmatprep.subr.mxu0 0.0
    %1121 = vmatpush1.msra.mxu0 0.0
    %1122 = vmatprep.subr.mxu0 0.0
    %1123 = vmatpush1.msra.mxu0 0.0
    %1124 = vmatprep.subr.mxu0 0.0
    %1125 = vmatpush1.msra.mxu0 0.0
    %1126 = vmatprep.subr.mxu0 0.0
    %1127 = vmatpush1.msra.mxu0 0.0
    %1128 = vmatprep.subr.mxu0 0.0
    %1129 = vmatpush1.msra.mxu0 0.0
    %1130 = vmatprep.subr.mxu0 0.0
    %1131 = vmatpush1.msra.mxu0 0.0
    %1132 = vmatprep.subr.mxu0 0.0
    %1133 = vmatpush1.msra.mxu0 0.0
    %1134 = vmatprep.subr.mxu0 0.0
    %1135 = vmatpush1.msra.mxu0 0.0
    %1136 = vmatprep.subr.mxu0 0.0
    %1137 = vmatpush1.msra.mxu0 0.0
    %1138 = vmatprep.subr.mxu0 0.0
    %1139 = vmatpush1.msra.mxu0 0.0
    %1140 = vmatprep.subr.mxu0 0.0
    %1141 = vmatpush1.msra.mxu0 0.0
    %1142 = vmatprep.subr.mxu0 0.0
    %1143 = vmatpush1.msra.mxu0 0.0
    %1144 = vmatprep.subr.mxu0 0.0
    %1145 = vmatpush1.msra.mxu0 0.0
    %1146 = vmatprep.mubr.f32.mxu0 0.0
    %1147 = vmatmul.mubr.f32.gmra.mrb[0].mxu0 %v1080
    %v1148 = vpop.f32.mrb[0].mxu0
    %v1149 = vadd.f32 0.0, %v1148
    %v1150 = vpop.f32.mrb[0].mxu0
    %1151 = vdwg.mxu0
    %1153 = vrot.lane.b32.xlu0 %v815, 32
    %v1154 = vpop.permute.xlu0 %1153
    %1157 = vrot.lane.b32.xlu0 %v982, 64
    %v1158 = vpop.permute.xlu0 %1157
    %1161 = vrot.lane.b32.xlu0 %v1149, 96
    %v1162 = vpop.permute.xlu0 %1161
    %v1164 = vsel %vm486, %v647, %v1154
    %vm1165 = vcmask 523264
    %v1166 = vsel %vm1165, %v1164, %v1158
    %vm1167 = vcmask 785408
    %v1168 = vsel %vm1167, %v1166, %v1162
    %v1170 = vsel %vm486, %v407, 0
    %v1173 = vsel %vm486, %v409, 0
    %1175 = vmatprep.subr.mxu0 0.0
    %1176 = vmatpush1.xpose.msra.mxu0 %v1173
    %1177 = vmatprep.subr.mxu0 0.0
    %1178 = vmatpush1.xpose.msra.mxu0 0.0
    %1179 = vmatprep.subr.mxu0 0.0
    %1180 = vmatpush1.xpose.msra.mxu0 0.0
    %1181 = vmatprep.subr.mxu0 0.0
    %1182 = vmatpush1.xpose.msra.mxu0 0.0
    %1183 = vmatprep.subr.mxu0 0.0
    %1184 = vmatpush1.xpose.msra.mxu0 0.0
    %1185 = vmatprep.subr.mxu0 0.0
    %1186 = vmatpush1.xpose.msra.mxu0 0.0
    %1187 = vmatprep.subr.mxu0 0.0
    %1188 = vmatpush1.xpose.msra.mxu0 0.0
    %1189 = vmatprep.subr.mxu0 0.0
    %1190 = vmatpush1.xpose.msra.mxu0 0.0
    %1191 = vmatprep.subr.mxu0 0.0
    %1192 = vmatpush1.xpose.msra.mxu0 0.0
    %1193 = vmatprep.subr.mxu0 0.0
    %1194 = vmatpush1.xpose.msra.mxu0 0.0
    %1195 = vmatprep.subr.mxu0 0.0
    %1196 = vmatpush1.xpose.msra.mxu0 0.0
    %1197 = vmatprep.subr.mxu0 0.0
    %1198 = vmatpush1.xpose.msra.mxu0 0.0
    %1199 = vmatprep.subr.mxu0 0.0
    %1200 = vmatpush1.xpose.msra.mxu0 0.0
    %1201 = vmatprep.subr.mxu0 0.0
    %1202 = vmatpush1.xpose.msra.mxu0 0.0
    %1203 = vmatprep.subr.mxu0 0.0
    %1204 = vmatpush1.xpose.msra.mxu0 0.0
    %1205 = vmatprep.subr.mxu0 0.0
    %1206 = vmatpush1.xpose.msra.mxu0 0.0
    %1207 = vmatprep.subr.mxu0 0.0
    %1208 = vmatpush1.xpose.msra.mxu0 0.0
    %1209 = vmatprep.subr.mxu0 0.0
    %1210 = vmatpush1.xpose.msra.mxu0 0.0
    %1211 = vmatprep.subr.mxu0 0.0
    %1212 = vmatpush1.xpose.msra.mxu0 0.0
    %1213 = vmatprep.subr.mxu0 0.0
    %1214 = vmatpush1.xpose.msra.mxu0 0.0
    %1215 = vmatprep.subr.mxu0 0.0
    %1216 = vmatpush1.xpose.msra.mxu0 0.0
    %1217 = vmatprep.subr.mxu0 0.0
    %1218 = vmatpush1.xpose.msra.mxu0 0.0
    %1219 = vmatprep.subr.mxu0 0.0
    %1220 = vmatpush1.xpose.msra.mxu0 0.0
    %1221 = vmatprep.subr.mxu0 0.0
    %1222 = vmatpush1.xpose.msra.mxu0 0.0
    %1223 = vmatprep.subr.mxu0 0.0
    %1224 = vmatpush1.xpose.msra.mxu0 0.0
    %1225 = vmatprep.subr.mxu0 0.0
    %1226 = vmatpush1.xpose.msra.mxu0 0.0
    %1227 = vmatprep.subr.mxu0 0.0
    %1228 = vmatpush1.xpose.msra.mxu0 0.0
    %1229 = vmatprep.subr.mxu0 0.0
    %1230 = vmatpush1.xpose.msra.mxu0 0.0
    %1231 = vmatprep.subr.mxu0 0.0
    %1232 = vmatpush1.xpose.msra.mxu0 0.0
    %1233 = vmatprep.subr.mxu0 0.0
    %1234 = vmatpush1.xpose.msra.mxu0 0.0
    %1235 = vmatprep.subr.mxu0 0.0
    %1236 = vmatpush1.xpose.msra.mxu0 0.0
    %1237 = vmatprep.subr.mxu0 0.0
    %1238 = vmatpush1.xpose.msra.mxu0 0.0
    %1239 = vmatprep.mubr.f32.mxu0 0.0
    %1240 = vmatmul.mubr.f32.gmra.mrb[0].mxu0 %v1170
    %v1241 = vpop.f32.mrb[0].mxu0
    %v1242 = vadd.f32 0.0, %v1241
    %v1243 = vpop.f32.mrb[0].mxu0
    %1244 = vdwg.mxu0
    %v1245 = vmul.f32 %v1242, 0.17677669
    %v1246 = vsel %vm268, %v1245, -1e+09
    %v1247 = vsel %vm565, %v1246, -inf
    %1248 = vmax.xlane.f32.xlu0 %v1247
    %v1249 = vpop.xlane.xlu0 %1248
    %v1250 = vsub.f32 %v1246, %v1249
    %v1251 = vmul.f32 %v1250, 1.442695
    %v1252 = vpow.pop %v1251
    %v1253 = vsel %vm565, %v1252, 0.0
    %1254 = vadd.xlane.f32.xlu0 %v1253
    %v1255 = vpop.xlane.xlu0 %1254
    %v1256 = vrcp.pop %v1255
    %v1257 = vmul.f32 %v1252, %v1256
    %v1259 = vsel %vm565, %v1257, 0
    %1261 = vmatprep.subr.mxu0 0.0
    %1262 = vmatpush1.msra.mxu0 %v483
    %1263 = vmatprep.subr.mxu0 0.0
    %1264 = vmatpush1.msra.mxu0 0.0
    %1265 = vmatprep.subr.mxu0 0.0
    %1266 = vmatpush1.msra.mxu0 0.0
    %1267 = vmatprep.subr.mxu0 0.0
    %1268 = vmatpush1.msra.mxu0 0.0
    %1269 = vmatprep.subr.mxu0 0.0
    %1270 = vmatpush1.msra.mxu0 0.0
    %1271 = vmatprep.subr.mxu0 0.0
    %1272 = vmatpush1.msra.mxu0 0.0
    %1273 = vmatprep.subr.mxu0 0.0
    %1274 = vmatpush1.msra.mxu0 0.0
    %1275 = vmatprep.subr.mxu0 0.0
    %1276 = vmatpush1.msra.mxu0 0.0
    %1277 = vmatprep.subr.mxu0 0.0
    %1278 = vmatpush1.msra.mxu0 0.0
    %1279 = vmatprep.subr.mxu0 0.0
    %1280 = vmatpush1.msra.mxu0 0.0
    %1281 = vmatprep.subr.mxu0 0.0
    %1282 = vmatpush1.msra.mxu0 0.0
    %1283 = vmatprep.subr.mxu0 0.0
    %1284 = vmatpush1.msra.mxu0 0.0
    %1285 = vmatprep.subr.mxu0 0.0
    %1286 = vmatpush1.msra.mxu0 0.0
    %1287 = vmatprep.subr.mxu0 0.0
    %1288 = vmatpush1.msra.mxu0 0.0
    %1289 = vmatprep.subr.mxu0 0.0
    %1290 = vmatpush1.msra.mxu0 0.0
    %1291 = vmatprep.subr.mxu0 0.0
    %1292 = vmatpush1.msra.mxu0 0.0
    %1293 = vmatprep.subr.mxu0 0.0
    %1294 = vmatpush1.msra.mxu0 0.0
    %1295 = vmatprep.subr.mxu0 0.0
    %1296 = vmatpush1.msra.mxu0 0.0
    %1297 = vmatprep.subr.mxu0 0.0
    %1298 = vmatpush1.msra.mxu0 0.0
    %1299 = vmatprep.subr.mxu0 0.0
    %1300 = vmatpush1.msra.mxu0 0.0
    %1301 = vmatprep.subr.mxu0 0.0
    %1302 = vmatpush1.msra.mxu0 0.0
    %1303 = vmatprep.subr.mxu0 0.0
    %1304 = vmatpush1.msra.mxu0 0.0
    %1305 = vmatprep.subr.mxu0 0.0
    %1306 = vmatpush1.msra.mxu0 0.0
    %1307 = vmatprep.subr.mxu0 0.0
    %1308 = vmatpush1.msra.mxu0 0.0
    %1309 = vmatprep.subr.mxu0 0.0
    %1310 = vmatpush1.msra.mxu0 0.0
    %1311 = vmatprep.subr.mxu0 0.0
    %1312 = vmatpush1.msra.mxu0 0.0
    %1313 = vmatprep.subr.mxu0 0.0
    %1314 = vmatpush1.msra.mxu0 0.0
    %1315 = vmatprep.subr.mxu0 0.0
    %1316 = vmatpush1.msra.mxu0 0.0
    %1317 = vmatprep.subr.mxu0 0.0
    %1318 = vmatpush1.msra.mxu0 0.0
    %1319 = vmatprep.subr.mxu0 0.0
    %1320 = vmatpush1.msra.mxu0 0.0
    %1321 = vmatprep.subr.mxu0 0.0
    %1322 = vmatpush1.msra.mxu0 0.0
    %1323 = vmatprep.subr.mxu0 0.0
    %1324 = vmatpush1.msra.mxu0 0.0
    %1325 = vmatprep.mubr.f32.mxu0 0.0
    %1326 = vmatmul.mubr.f32.gmra.mrb[0].mxu0 %v1259
    %v1327 = vpop.f32.mrb[0].mxu0
    %v1328 = vadd.f32 0.0, %v1327
    %v1329 = vpop.f32.mrb[0].mxu0
    %1330 = vdwg.mxu0
    %1331 = vrot.lane.b32.xlu0 %v407, 96
    %v1332 = vpop.permute.xlu0 %1331
    %1333 = vrot.lane.b32.xlu0 %v409, 96
    %v1334 = vpop.permute.xlu0 %1333
    %v1335 = vsel %vm486, %v1332, 0
    %v1337 = vsel %vm486, %v1334, 0
    %1339 = vmatprep.subr.mxu0 0.0
    %1340 = vmatpush1.xpose.msra.mxu0 %v1337
    %1341 = vmatprep.subr.mxu0 0.0
    %1342 = vmatpush1.xpose.msra.mxu0 0.0
    %1343 = vmatprep.subr.mxu0 0.0
    %1344 = vmatpush1.xpose.msra.mxu0 0.0
    %1345 = vmatprep.subr.mxu0 0.0
    %1346 = vmatpush1.xpose.msra.mxu0 0.0
    %1347 = vmatprep.subr.mxu0 0.0
    %1348 = vmatpush1.xpose.msra.mxu0 0.0
    %1349 = vmatprep.subr.mxu0 0.0
    %1350 = vmatpush1.xpose.msra.mxu0 0.0
    %1351 = vmatprep.subr.mxu0 0.0
    %1352 = vmatpush1.xpose.msra.mxu0 0.0
    %1353 = vmatprep.subr.mxu0 0.0
    %1354 = vmatpush1.xpose.msra.mxu0 0.0
    %1355 = vmatprep.subr.mxu0 0.0
    %1356 = vmatpush1.xpose.msra.mxu0 0.0
    %1357 = vmatprep.subr.mxu0 0.0
    %1358 = vmatpush1.xpose.msra.mxu0 0.0
    %1359 = vmatprep.subr.mxu0 0.0
    %1360 = vmatpush1.xpose.msra.mxu0 0.0
    %1361 = vmatprep.subr.mxu0 0.0
    %1362 = vmatpush1.xpose.msra.mxu0 0.0
    %1363 = vmatprep.subr.mxu0 0.0
    %1364 = vmatpush1.xpose.msra.mxu0 0.0
    %1365 = vmatprep.subr.mxu0 0.0
    %1366 = vmatpush1.xpose.msra.mxu0 0.0
    %1367 = vmatprep.subr.mxu0 0.0
    %1368 = vmatpush1.xpose.msra.mxu0 0.0
    %1369 = vmatprep.subr.mxu0 0.0
    %1370 = vmatpush1.xpose.msra.mxu0 0.0
    %1371 = vmatprep.subr.mxu0 0.0
    %1372 = vmatpush1.xpose.msra.mxu0 0.0
    %1373 = vmatprep.subr.mxu0 0.0
    %1374 = vmatpush1.xpose.msra.mxu0 0.0
    %1375 = vmatprep.subr.mxu0 0.0
    %1376 = vmatpush1.xpose.msra.mxu0 0.0
    %1377 = vmatprep.subr.mxu0 0.0
    %1378 = vmatpush1.xpose.msra.mxu0 0.0
    %1379 = vmatprep.subr.mxu0 0.0
    %1380 = vmatpush1.xpose.msra.mxu0 0.0
    %1381 = vmatprep.subr.mxu0 0.0
    %1382 = vmatpush1.xpose.msra.mxu0 0.0
    %1383 = vmatprep.subr.mxu0 0.0
    %1384 = vmatpush1.xpose.msra.mxu0 0.0
    %1385 = vmatprep.subr.mxu0 0.0
    %1386 = vmatpush1.xpose.msra.mxu0 0.0
    %1387 = vmatprep.subr.mxu0 0.0
    %1388 = vmatpush1.xpose.msra.mxu0 0.0
    %1389 = vmatprep.subr.mxu0 0.0
    %1390 = vmatpush1.xpose.msra.mxu0 0.0
    %1391 = vmatprep.subr.mxu0 0.0
    %1392 = vmatpush1.xpose.msra.mxu0 0.0
    %1393 = vmatprep.subr.mxu0 0.0
    %1394 = vmatpush1.xpose.msra.mxu0 0.0
    %1395 = vmatprep.subr.mxu0 0.0
    %1396 = vmatpush1.xpose.msra.mxu0 0.0
    %1397 = vmatprep.subr.mxu0 0.0
    %1398 = vmatpush1.xpose.msra.mxu0 0.0
    %1399 = vmatprep.subr.mxu0 0.0
    %1400 = vmatpush1.xpose.msra.mxu0 0.0
    %1401 = vmatprep.subr.mxu0 0.0
    %1402 = vmatpush1.xpose.msra.mxu0 0.0
    %1403 = vmatprep.mubr.f32.mxu0 0.0
    %1404 = vmatmul.mubr.f32.gmra.mrb[0].mxu0 %v1335
    %v1405 = vpop.f32.mrb[0].mxu0
    %v1406 = vadd.f32 0.0, %v1405
    %v1407 = vpop.f32.mrb[0].mxu0
    %1408 = vdwg.mxu0
    %v1409 = vmul.f32 %v1406, 0.17677669
    %v1410 = vsel %vm268, %v1409, -1e+09
    %v1411 = vsel %vm565, %v1410, -inf
    %1412 = vmax.xlane.f32.xlu0 %v1411
    %v1413 = vpop.xlane.xlu0 %1412
    %v1414 = vsub.f32 %v1410, %v1413
    %v1415 = vmul.f32 %v1414, 1.442695
    %v1416 = vpow.pop %v1415
    %v1417 = vsel %vm565, %v1416, 0.0
    %1418 = vadd.xlane.f32.xlu0 %v1417
    %v1419 = vpop.xlane.xlu0 %1418
    %v1420 = vrcp.pop %v1419
    %v1421 = vmul.f32 %v1416, %v1420
    %1423 = vrot.lane.b32.xlu0 %v483, 96
    %v1424 = vpop.permute.xlu0 %1423
    %v1427 = vsel %vm565, %v1421, 0
    %1429 = vmatprep.subr.mxu0 0.0
    %1430 = vmatpush1.msra.mxu0 %v1424
    %1431 = vmatprep.subr.mxu0 0.0
    %1432 = vmatpush1.msra.mxu0 0.0
    %1433 = vmatprep.subr.mxu0 0.0
    %1434 = vmatpush1.msra.mxu0 0.0
    %1435 = vmatprep.subr.mxu0 0.0
    %1436 = vmatpush1.msra.mxu0 0.0
    %1437 = vmatprep.subr.mxu0 0.0
    %1438 = vmatpush1.msra.mxu0 0.0
    %1439 = vmatprep.subr.mxu0 0.0
    %1440 = vmatpush1.msra.mxu0 0.0
    %1441 = vmatprep.subr.mxu0 0.0
    %1442 = vmatpush1.msra.mxu0 0.0
    %1443 = vmatprep.subr.mxu0 0.0
    %1444 = vmatpush1.msra.mxu0 0.0
    %1445 = vmatprep.subr.mxu0 0.0
    %1446 = vmatpush1.msra.mxu0 0.0
    %1447 = vmatprep.subr.mxu0 0.0
    %1448 = vmatpush1.msra.mxu0 0.0
    %1449 = vmatprep.subr.mxu0 0.0
    %1450 = vmatpush1.msra.mxu0 0.0
    %1451 = vmatprep.subr.mxu0 0.0
    %1452 = vmatpush1.msra.mxu0 0.0
    %1453 = vmatprep.subr.mxu0 0.0
    %1454 = vmatpush1.msra.mxu0 0.0
    %1455 = vmatprep.subr.mxu0 0.0
    %1456 = vmatpush1.msra.mxu0 0.0
    %1457 = vmatprep.subr.mxu0 0.0
    %1458 = vmatpush1.msra.mxu0 0.0
    %1459 = vmatprep.subr.mxu0 0.0
    %1460 = vmatpush1.msra.mxu0 0.0
    %1461 = vmatprep.subr.mxu0 0.0
    %1462 = vmatpush1.msra.mxu0 0.0
    %1463 = vmatprep.subr.mxu0 0.0
    %1464 = vmatpush1.msra.mxu0 0.0
    %1465 = vmatprep.subr.mxu0 0.0
    %1466 = vmatpush1.msra.mxu0 0.0
    %1467 = vmatprep.subr.mxu0 0.0
    %1468 = vmatpush1.msra.mxu0 0.0
    %1469 = vmatprep.subr.mxu0 0.0
    %1470 = vmatpush1.msra.mxu0 0.0
    %1471 = vmatprep.subr.mxu0 0.0
    %1472 = vmatpush1.msra.mxu0 0.0
    %1473 = vmatprep.subr.mxu0 0.0
    %1474 = vmatpush1.msra.mxu0 0.0
    %1475 = vmatprep.subr.mxu0 0.0
    %1476 = vmatpush1.msra.mxu0 0.0
    %1477 = vmatprep.subr.mxu0 0.0
    %1478 = vmatpush1.msra.mxu0 0.0
    %1479 = vmatprep.subr.mxu0 0.0
    %1480 = vmatpush1.msra.mxu0 0.0
    %1481 = vmatprep.subr.mxu0 0.0
    %1482 = vmatpush1.msra.mxu0 0.0
    %1483 = vmatprep.subr.mxu0 0.0
    %1484 = vmatpush1.msra.mxu0 0.0
    %1485 = vmatprep.subr.mxu0 0.0
    %1486 = vmatpush1.msra.mxu0 0.0
    %1487 = vmatprep.subr.mxu0 0.0
    %1488 = vmatpush1.msra.mxu0 0.0
    %1489 = vmatprep.subr.mxu0 0.0
    %1490 = vmatpush1.msra.mxu0 0.0
    %1491 = vmatprep.subr.mxu0 0.0
    %1492 = vmatpush1.msra.mxu0 0.0
    %1493 = vmatprep.mubr.f32.mxu0 0.0
    %1494 = vmatmul.mubr.f32.gmra.mrb[0].mxu0 %v1427
    %v1495 = vpop.f32.mrb[0].mxu0
    %v1496 = vadd.f32 0.0, %v1495
    %v1497 = vpop.f32.mrb[0].mxu0
    %1498 = vdwg.mxu0
    %1499 = vrot.lane.b32.xlu0 %v407, 64
    %v1500 = vpop.permute.xlu0 %1499
    %1501 = vrot.lane.b32.xlu0 %v409, 64
    %v1502 = vpop.permute.xlu0 %1501
    %v1503 = vsel %vm486, %v1500, 0
    %v1505 = vsel %vm486, %v1502, 0
    %1507 = vmatprep.subr.mxu0 0.0
    %1508 = vmatpush1.xpose.msra.mxu0 %v1505
    %1509 = vmatprep.subr.mxu0 0.0
    %1510 = vmatpush1.xpose.msra.mxu0 0.0
    %1511 = vmatprep.subr.mxu0 0.0
    %1512 = vmatpush1.xpose.msra.mxu0 0.0
    %1513 = vmatprep.subr.mxu0 0.0
    %1514 = vmatpush1.xpose.msra.mxu0 0.0
    %1515 = vmatprep.subr.mxu0 0.0
    %1516 = vmatpush1.xpose.msra.mxu0 0.0
    %1517 = vmatprep.subr.mxu0 0.0
    %1518 = vmatpush1.xpose.msra.mxu0 0.0
    %1519 = vmatprep.subr.mxu0 0.0
    %1520 = vmatpush1.xpose.msra.mxu0 0.0
    %1521 = vmatprep.subr.mxu0 0.0
    %1522 = vmatpush1.xpose.msra.mxu0 0.0
    %1523 = vmatprep.subr.mxu0 0.0
    %1524 = vmatpush1.xpose.msra.mxu0 0.0
    %1525 = vmatprep.subr.mxu0 0.0
    %1526 = vmatpush1.xpose.msra.mxu0 0.0
    %1527 = vmatprep.subr.mxu0 0.0
    %1528 = vmatpush1.xpose.msra.mxu0 0.0
    %1529 = vmatprep.subr.mxu0 0.0
    %1530 = vmatpush1.xpose.msra.mxu0 0.0
    %1531 = vmatprep.subr.mxu0 0.0
    %1532 = vmatpush1.xpose.msra.mxu0 0.0
    %1533 = vmatprep.subr.mxu0 0.0
    %1534 = vmatpush1.xpose.msra.mxu0 0.0
    %1535 = vmatprep.subr.mxu0 0.0
    %1536 = vmatpush1.xpose.msra.mxu0 0.0
    %1537 = vmatprep.subr.mxu0 0.0
    %1538 = vmatpush1.xpose.msra.mxu0 0.0
    %1539 = vmatprep.subr.mxu0 0.0
    %1540 = vmatpush1.xpose.msra.mxu0 0.0
    %1541 = vmatprep.subr.mxu0 0.0
    %1542 = vmatpush1.xpose.msra.mxu0 0.0
    %1543 = vmatprep.subr.mxu0 0.0
    %1544 = vmatpush1.xpose.msra.mxu0 0.0
    %1545 = vmatprep.subr.mxu0 0.0
    %1546 = vmatpush1.xpose.msra.mxu0 0.0
    %1547 = vmatprep.subr.mxu0 0.0
    %1548 = vmatpush1.xpose.msra.mxu0 0.0
    %1549 = vmatprep.subr.mxu0 0.0
    %1550 = vmatpush1.xpose.msra.mxu0 0.0
    %1551 = vmatprep.subr.mxu0 0.0
    %1552 = vmatpush1.xpose.msra.mxu0 0.0
    %1553 = vmatprep.subr.mxu0 0.0
    %1554 = vmatpush1.xpose.msra.mxu0 0.0
    %1555 = vmatprep.subr.mxu0 0.0
    %1556 = vmatpush1.xpose.msra.mxu0 0.0
    %1557 = vmatprep.subr.mxu0 0.0
    %1558 = vmatpush1.xpose.msra.mxu0 0.0
    %1559 = vmatprep.subr.mxu0 0.0
    %1560 = vmatpush1.xpose.msra.mxu0 0.0
    %1561 = vmatprep.subr.mxu0 0.0
    %1562 = vmatpush1.xpose.msra.mxu0 0.0
    %1563 = vmatprep.subr.mxu0 0.0
    %1564 = vmatpush1.xpose.msra.mxu0 0.0
    %1565 = vmatprep.subr.mxu0 0.0
    %1566 = vmatpush1.xpose.msra.mxu0 0.0
    %1567 = vmatprep.subr.mxu0 0.0
    %1568 = vmatpush1.xpose.msra.mxu0 0.0
    %1569 = vmatprep.subr.mxu0 0.0
    %1570 = vmatpush1.xpose.msra.mxu0 0.0
    %1571 = vmatprep.mubr.f32.mxu0 0.0
    %1572 = vmatmul.mubr.f32.gmra.mrb[0].mxu0 %v1503
    %v1573 = vpop.f32.mrb[0].mxu0
    %v1574 = vadd.f32 0.0, %v1573
    %v1575 = vpop.f32.mrb[0].mxu0
    %1576 = vdwg.mxu0
    %v1577 = vmul.f32 %v1574, 0.17677669
    %v1578 = vsel %vm268, %v1577, -1e+09
    %v1579 = vsel %vm565, %v1578, -inf
    %1580 = vmax.xlane.f32.xlu0 %v1579
    %v1581 = vpop.xlane.xlu0 %1580
    %v1582 = vsub.f32 %v1578, %v1581
    %v1583 = vmul.f32 %v1582, 1.442695
    %v1584 = vpow.pop %v1583
    %v1585 = vsel %vm565, %v1584, 0.0
    %1586 = vadd.xlane.f32.xlu0 %v1585
    %v1587 = vpop.xlane.xlu0 %1586
    %v1588 = vrcp.pop %v1587
    %v1589 = vmul.f32 %v1584, %v1588
    %1590 = vrot.lane.b32.xlu0 %v483, 64
    %v1591 = vpop.permute.xlu0 %1590
    %v1594 = vsel %vm565, %v1589, 0
    %1596 = vmatprep.subr.mxu0 0.0
    %1597 = vmatpush1.msra.mxu0 %v1591
    %1598 = vmatprep.subr.mxu0 0.0
    %1599 = vmatpush1.msra.mxu0 0.0
    %1600 = vmatprep.subr.mxu0 0.0
    %1601 = vmatpush1.msra.mxu0 0.0
    %1602 = vmatprep.subr.mxu0 0.0
    %1603 = vmatpush1.msra.mxu0 0.0
    %1604 = vmatprep.subr.mxu0 0.0
    %1605 = vmatpush1.msra.mxu0 0.0
    %1606 = vmatprep.subr.mxu0 0.0
    %1607 = vmatpush1.msra.mxu0 0.0
    %1608 = vmatprep.subr.mxu0 0.0
    %1609 = vmatpush1.msra.mxu0 0.0
    %1610 = vmatprep.subr.mxu0 0.0
    %1611 = vmatpush1.msra.mxu0 0.0
    %1612 = vmatprep.subr.mxu0 0.0
    %1613 = vmatpush1.msra.mxu0 0.0
    %1614 = vmatprep.subr.mxu0 0.0
    %1615 = vmatpush1.msra.mxu0 0.0
    %1616 = vmatprep.subr.mxu0 0.0
    %1617 = vmatpush1.msra.mxu0 0.0
    %1618 = vmatprep.subr.mxu0 0.0
    %1619 = vmatpush1.msra.mxu0 0.0
    %1620 = vmatprep.subr.mxu0 0.0
    %1621 = vmatpush1.msra.mxu0 0.0
    %1622 = vmatprep.subr.mxu0 0.0
    %1623 = vmatpush1.msra.mxu0 0.0
    %1624 = vmatprep.subr.mxu0 0.0
    %1625 = vmatpush1.msra.mxu0 0.0
    %1626 = vmatprep.subr.mxu0 0.0
    %1627 = vmatpush1.msra.mxu0 0.0
    %1628 = vmatprep.subr.mxu0 0.0
    %1629 = vmatpush1.msra.mxu0 0.0
    %1630 = vmatprep.subr.mxu0 0.0
    %1631 = vmatpush1.msra.mxu0 0.0
    %1632 = vmatprep.subr.mxu0 0.0
    %1633 = vmatpush1.msra.mxu0 0.0
    %1634 = vmatprep.subr.mxu0 0.0
    %1635 = vmatpush1.msra.mxu0 0.0
    %1636 = vmatprep.subr.mxu0 0.0
    %1637 = vmatpush1.msra.mxu0 0.0
    %1638 = vmatprep.subr.mxu0 0.0
    %1639 = vmatpush1.msra.mxu0 0.0
    %1640 = vmatprep.subr.mxu0 0.0
    %1641 = vmatpush1.msra.mxu0 0.0
    %1642 = vmatprep.subr.mxu0 0.0
    %1643 = vmatpush1.msra.mxu0 0.0
    %1644 = vmatprep.subr.mxu0 0.0
    %1645 = vmatpush1.msra.mxu0 0.0
    %1646 = vmatprep.subr.mxu0 0.0
    %1647 = vmatpush1.msra.mxu0 0.0
    %1648 = vmatprep.subr.mxu0 0.0
    %1649 = vmatpush1.msra.mxu0 0.0
    %1650 = vmatprep.subr.mxu0 0.0
    %1651 = vmatpush1.msra.mxu0 0.0
    %1652 = vmatprep.subr.mxu0 0.0
    %1653 = vmatpush1.msra.mxu0 0.0
    %1654 = vmatprep.subr.mxu0 0.0
    %1655 = vmatpush1.msra.mxu0 0.0
    %1656 = vmatprep.subr.mxu0 0.0
    %1657 = vmatpush1.msra.mxu0 0.0
    %1658 = vmatprep.subr.mxu0 0.0
    %1659 = vmatpush1.msra.mxu0 0.0
    %1660 = vmatprep.mubr.f32.mxu0 0.0
    %1661 = vmatmul.mubr.f32.gmra.mrb[0].mxu0 %v1594
    %v1662 = vpop.f32.mrb[0].mxu0
    %v1663 = vadd.f32 0.0, %v1662
    %v1664 = vpop.f32.mrb[0].mxu0
    %1665 = vdwg.mxu0
    %1666 = vrot.lane.b32.xlu0 %v407, 32
    %v1667 = vpop.permute.xlu0 %1666
    %1668 = vrot.lane.b32.xlu0 %v409, 32
    %v1669 = vpop.permute.xlu0 %1668
    %v1670 = vsel %vm486, %v1667, 0
    %v1672 = vsel %vm486, %v1669, 0
    %1674 = vmatprep.subr.mxu0 0.0
    %1675 = vmatpush1.xpose.msra.mxu0 %v1672
    %1676 = vmatprep.subr.mxu0 0.0
    %1677 = vmatpush1.xpose.msra.mxu0 0.0
    %1678 = vmatprep.subr.mxu0 0.0
    %1679 = vmatpush1.xpose.msra.mxu0 0.0
    %1680 = vmatprep.subr.mxu0 0.0
    %1681 = vmatpush1.xpose.msra.mxu0 0.0
    %1682 = vmatprep.subr.mxu0 0.0
    %1683 = vmatpush1.xpose.msra.mxu0 0.0
    %1684 = vmatprep.subr.mxu0 0.0
    %1685 = vmatpush1.xpose.msra.mxu0 0.0
    %1686 = vmatprep.subr.mxu0 0.0
    %1687 = vmatpush1.xpose.msra.mxu0 0.0
    %1688 = vmatprep.subr.mxu0 0.0
    %1689 = vmatpush1.xpose.msra.mxu0 0.0
    %1690 = vmatprep.subr.mxu0 0.0
    %1691 = vmatpush1.xpose.msra.mxu0 0.0
    %1692 = vmatprep.subr.mxu0 0.0
    %1693 = vmatpush1.xpose.msra.mxu0 0.0
    %1694 = vmatprep.subr.mxu0 0.0
    %1695 = vmatpush1.xpose.msra.mxu0 0.0
    %1696 = vmatprep.subr.mxu0 0.0
    %1697 = vmatpush1.xpose.msra.mxu0 0.0
    %1698 = vmatprep.subr.mxu0 0.0
    %1699 = vmatpush1.xpose.msra.mxu0 0.0
    %1700 = vmatprep.subr.mxu0 0.0
    %1701 = vmatpush1.xpose.msra.mxu0 0.0
    %1702 = vmatprep.subr.mxu0 0.0
    %1703 = vmatpush1.xpose.msra.mxu0 0.0
    %1704 = vmatprep.subr.mxu0 0.0
    %1705 = vmatpush1.xpose.msra.mxu0 0.0
    %1706 = vmatprep.subr.mxu0 0.0
    %1707 = vmatpush1.xpose.msra.mxu0 0.0
    %1708 = vmatprep.subr.mxu0 0.0
    %1709 = vmatpush1.xpose.msra.mxu0 0.0
    %1710 = vmatprep.subr.mxu0 0.0
    %1711 = vmatpush1.xpose.msra.mxu0 0.0
    %1712 = vmatprep.subr.mxu0 0.0
    %1713 = vmatpush1.xpose.msra.mxu0 0.0
    %1714 = vmatprep.subr.mxu0 0.0
    %1715 = vmatpush1.xpose.msra.mxu0 0.0
    %1716 = vmatprep.subr.mxu0 0.0
    %1717 = vmatpush1.xpose.msra.mxu0 0.0
    %1718 = vmatprep.subr.mxu0 0.0
    %1719 = vmatpush1.xpose.msra.mxu0 0.0
    %1720 = vmatprep.subr.mxu0 0.0
    %1721 = vmatpush1.xpose.msra.mxu0 0.0
    %1722 = vmatprep.subr.mxu0 0.0
    %1723 = vmatpush1.xpose.msra.mxu0 0.0
    %1724 = vmatprep.subr.mxu0 0.0
    %1725 = vmatpush1.xpose.msra.mxu0 0.0
    %1726 = vmatprep.subr.mxu0 0.0
    %1727 = vmatpush1.xpose.msra.mxu0 0.0
    %1728 = vmatprep.subr.mxu0 0.0
    %1729 = vmatpush1.xpose.msra.mxu0 0.0
    %1730 = vmatprep.subr.mxu0 0.0
    %1731 = vmatpush1.xpose.msra.mxu0 0.0
    %1732 = vmatprep.subr.mxu0 0.0
    %1733 = vmatpush1.xpose.msra.mxu0 0.0
    %1734 = vmatprep.subr.mxu0 0.0
    %1735 = vmatpush1.xpose.msra.mxu0 0.0
    %1736 = vmatprep.subr.mxu0 0.0
    %1737 = vmatpush1.xpose.msra.mxu0 0.0
    %1738 = vmatprep.mubr.f32.mxu0 0.0
    %1739 = vmatmul.mubr.f32.gmra.mrb[0].mxu0 %v1670
    %v1740 = vpop.f32.mrb[0].mxu0
    %v1741 = vadd.f32 0.0, %v1740
    %v1742 = vpop.f32.mrb[0].mxu0
    %1743 = vdwg.mxu0
    %v1744 = vmul.f32 %v1741, 0.17677669
    %v1745 = vsel %vm268, %v1744, -1e+09
    %v1746 = vsel %vm565, %v1745, -inf
    %1747 = vmax.xlane.f32.xlu0 %v1746
    %v1748 = vpop.xlane.xlu0 %1747
    %v1749 = vsub.f32 %v1745, %v1748
    %v1750 = vmul.f32 %v1749, 1.442695
    %v1751 = vpow.pop %v1750
    %v1752 = vsel %vm565, %v1751, 0.0
    %1753 = vadd.xlane.f32.xlu0 %v1752
    %v1754 = vpop.xlane.xlu0 %1753
    %v1755 = vrcp.pop %v1754
    %v1756 = vmul.f32 %v1751, %v1755
    %1757 = vrot.lane.b32.xlu0 %v483, 32
    %v1758 = vpop.permute.xlu0 %1757
    %v1761 = vsel %vm565, %v1756, 0
    %1763 = vmatprep.subr.mxu0 0.0
    %1764 = vmatpush1.msra.mxu0 %v1758
    %1765 = vmatprep.subr.mxu0 0.0
    %1766 = vmatpush1.msra.mxu0 0.0
    %1767 = vmatprep.subr.mxu0 0.0
    %1768 = vmatpush1.msra.mxu0 0.0
    %1769 = vmatprep.subr.mxu0 0.0
    %1770 = vmatpush1.msra.mxu0 0.0
    %1771 = vmatprep.subr.mxu0 0.0
    %1772 = vmatpush1.msra.mxu0 0.0
    %1773 = vmatprep.subr.mxu0 0.0
    %1774 = vmatpush1.msra.mxu0 0.0
    %1775 = vmatprep.subr.mxu0 0.0
    %1776 = vmatpush1.msra.mxu0 0.0
    %1777 = vmatprep.subr.mxu0 0.0
    %1778 = vmatpush1.msra.mxu0 0.0
    %1779 = vmatprep.subr.mxu0 0.0
    %1780 = vmatpush1.msra.mxu0 0.0
    %1781 = vmatprep.subr.mxu0 0.0
    %1782 = vmatpush1.msra.mxu0 0.0
    %1783 = vmatprep.subr.mxu0 0.0
    %1784 = vmatpush1.msra.mxu0 0.0
    %1785 = vmatprep.subr.mxu0 0.0
    %1786 = vmatpush1.msra.mxu0 0.0
    %1787 = vmatprep.subr.mxu0 0.0
    %1788 = vmatpush1.msra.mxu0 0.0
    %1789 = vmatprep.subr.mxu0 0.0
    %1790 = vmatpush1.msra.mxu0 0.0
    %1791 = vmatprep.subr.mxu0 0.0
    %1792 = vmatpush1.msra.mxu0 0.0
    %1793 = vmatprep.subr.mxu0 0.0
    %1794 = vmatpush1.msra.mxu0 0.0
    %1795 = vmatprep.subr.mxu0 0.0
    %1796 = vmatpush1.msra.mxu0 0.0
    %1797 = vmatprep.subr.mxu0 0.0
    %1798 = vmatpush1.msra.mxu0 0.0
    %1799 = vmatprep.subr.mxu0 0.0
    %1800 = vmatpush1.msra.mxu0 0.0
    %1801 = vmatprep.subr.mxu0 0.0
    %1802 = vmatpush1.msra.mxu0 0.0
    %1803 = vmatprep.subr.mxu0 0.0
    %1804 = vmatpush1.msra.mxu0 0.0
    %1805 = vmatprep.subr.mxu0 0.0
    %1806 = vmatpush1.msra.mxu0 0.0
    %1807 = vmatprep.subr.mxu0 0.0
    %1808 = vmatpush1.msra.mxu0 0.0
    %1809 = vmatprep.subr.mxu0 0.0
    %1810 = vmatpush1.msra.mxu0 0.0
    %1811 = vmatprep.subr.mxu0 0.0
    %1812 = vmatpush1.msra.mxu0 0.0
    %1813 = vmatprep.subr.mxu0 0.0
    %1814 = vmatpush1.msra.mxu0 0.0
    %1815 = vmatprep.subr.mxu0 0.0
    %1816 = vmatpush1.msra.mxu0 0.0
    %1817 = vmatprep.subr.mxu0 0.0
    %1818 = vmatpush1.msra.mxu0 0.0
    %1819 = vmatprep.subr.mxu0 0.0
    %1820 = vmatpush1.msra.mxu0 0.0
    %1821 = vmatprep.subr.mxu0 0.0
    %1822 = vmatpush1.msra.mxu0 0.0
    %1823 = vmatprep.subr.mxu0 0.0
    %1824 = vmatpush1.msra.mxu0 0.0
    %1825 = vmatprep.subr.mxu0 0.0
    %1826 = vmatpush1.msra.mxu0 0.0
    %1827 = vmatprep.mubr.f32.mxu0 0.0
    %1828 = vmatmul.mubr.f32.gmra.mrb[0].mxu0 %v1761
    %v1829 = vpop.f32.mrb[0].mxu0
    %v1830 = vadd.f32 0.0, %v1829
    %v1831 = vpop.f32.mrb[0].mxu0
    %1832 = vdwg.mxu0
    %1834 = vrot.lane.b32.xlu0 %v1496, 32
    %v1835 = vpop.permute.xlu0 %1834
    %1838 = vrot.lane.b32.xlu0 %v1663, 64
    %v1839 = vpop.permute.xlu0 %1838
    %1842 = vrot.lane.b32.xlu0 %v1830, 96
    %v1843 = vpop.permute.xlu0 %1842
    %v1845 = vsel %vm486, %v1328, %v1835
    %v1846 = vsel %vm1165, %v1845, %v1839
    %v1847 = vsel %vm1167, %v1846, %v1843
    %v1848 = vld [vmem:[#allocation5] sm:$0xff]
    %v1849 = vld [vmem:[#allocation5 + $0x8] sm:$0xff]
    %v1850 = vld [vmem:[#allocation5 + $0x10] sm:$0xff]
    %v1851 = vld [vmem:[#allocation5 + $0x18] sm:$0xff]
    %v1852 = vld [vmem:[#allocation5 + $0x20] sm:$0xff]
    %v1853 = vld [vmem:[#allocation5 + $0x28] sm:$0xff]
    %v1854 = vld [vmem:[#allocation5 + $0x30] sm:$0xff]
    %v1855 = vld [vmem:[#allocation5 + $0x38] sm:$0xff]
    %v1856 = vld [vmem:[#allocation5 + $0x40] sm:$0xff]
    %v1857 = vld [vmem:[#allocation5 + $0x48] sm:$0xff]
    %v1858 = vld [vmem:[#allocation5 + $0x50] sm:$0xff]
    %v1859 = vld [vmem:[#allocation5 + $0x58] sm:$0xff]
    %v1860 = vld [vmem:[#allocation5 + $0x60] sm:$0xff]
    %v1861 = vld [vmem:[#allocation5 + $0x68] sm:$0xff]
    %v1862 = vld [vmem:[#allocation5 + $0x70] sm:$0xff]
    %v1863 = vld [vmem:[#allocation5 + $0x78] sm:$0xff]
    %v1864 = vld [vmem:[%s7] sm:$0x1]
    %v1866 = vlaneseq
    %v1867 = vshrl.u32 %v1866, 7
    %v1868 = vsub.s32 0, %v1867
    %v1869 = vrot.slane %v1864, %v1868
    %1871 = vmatprep.subr.mxu0 0.0
    %1872 = vmatpush1.msra.mxu0 %v1848
    %1873 = vmatprep.subr.mxu0 0.0
    %1874 = vmatpush1.msra.mxu0 %v1849
    %1875 = vmatprep.subr.mxu0 0.0
    %1876 = vmatpush1.msra.mxu0 %v1850
    %1877 = vmatprep.subr.mxu0 0.0
    %1878 = vmatpush1.msra.mxu0 %v1851
    %1879 = vmatprep.subr.mxu0 0.0
    %1880 = vmatpush1.msra.mxu0 %v1852
    %1881 = vmatprep.subr.mxu0 0.0
    %1882 = vmatpush1.msra.mxu0 %v1853
    %1883 = vmatprep.subr.mxu0 0.0
    %1884 = vmatpush1.msra.mxu0 %v1854
    %1885 = vmatprep.subr.mxu0 0.0
    %1886 = vmatpush1.msra.mxu0 %v1855
    %1887 = vmatprep.subr.mxu0 0.0
    %1888 = vmatpush1.msra.mxu0 %v1856
    %1889 = vmatprep.subr.mxu0 0.0
    %1890 = vmatpush1.msra.mxu0 %v1857
    %1891 = vmatprep.subr.mxu0 0.0
    %1892 = vmatpush1.msra.mxu0 %v1858
    %1893 = vmatprep.subr.mxu0 0.0
    %1894 = vmatpush1.msra.mxu0 %v1859
    %1895 = vmatprep.subr.mxu0 0.0
    %1896 = vmatpush1.msra.mxu0 %v1860
    %1897 = vmatprep.subr.mxu0 0.0
    %1898 = vmatpush1.msra.mxu0 %v1861
    %1899 = vmatprep.subr.mxu0 0.0
    %1900 = vmatpush1.msra.mxu0 %v1862
    %1901 = vmatprep.subr.mxu0 0.0
    %1902 = vmatpush1.msra.mxu0 %v1863
    %1903 = vmatprep.subr.mxu0 0.0
    %1904 = vmatpush1.msra.mxu0 0.0
    %1905 = vmatprep.subr.mxu0 0.0
    %1906 = vmatpush1.msra.mxu0 0.0
    %1907 = vmatprep.subr.mxu0 0.0
    %1908 = vmatpush1.msra.mxu0 0.0
    %1909 = vmatprep.subr.mxu0 0.0
    %1910 = vmatpush1.msra.mxu0 0.0
    %1911 = vmatprep.subr.mxu0 0.0
    %1912 = vmatpush1.msra.mxu0 0.0
    %1913 = vmatprep.subr.mxu0 0.0
    %1914 = vmatpush1.msra.mxu0 0.0
    %1915 = vmatprep.subr.mxu0 0.0
    %1916 = vmatpush1.msra.mxu0 0.0
    %1917 = vmatprep.subr.mxu0 0.0
    %1918 = vmatpush1.msra.mxu0 0.0
    %1919 = vmatprep.subr.mxu0 0.0
    %1920 = vmatpush1.msra.mxu0 0.0
    %1921 = vmatprep.subr.mxu0 0.0
    %1922 = vmatpush1.msra.mxu0 0.0
    %1923 = vmatprep.subr.mxu0 0.0
    %1924 = vmatpush1.msra.mxu0 0.0
    %1925 = vmatprep.subr.mxu0 0.0
    %1926 = vmatpush1.msra.mxu0 0.0
    %1927 = vmatprep.subr.mxu0 0.0
    %1928 = vmatpush1.msra.mxu0 0.0
    %1929 = vmatprep.subr.mxu0 0.0
    %1930 = vmatpush1.msra.mxu0 0.0
    %1931 = vmatprep.subr.mxu0 0.0
    %1932 = vmatpush1.msra.mxu0 0.0
    %1933 = vmatprep.subr.mxu0 0.0
    %1934 = vmatpush1.msra.mxu0 0.0
    %1935 = vmatprep.mubr.f32.mxu0 0.0
    %1936 = vmatmul.mubr.f32.gmra.mrb[0].mxu0 %v1168
    %v1937 = vpop.f32.mrb[0].mxu0
    %v1938 = vadd.f32 %v1869, %v1937
    %v1939 = vpop.f32.mrb[0].mxu0
    %1940 = vmatprep.mubr.f32.mxu0 0.0
    %1941 = vmatmul.mubr.f32.gmra.mrb[0].mxu0 %v1847
    %v1942 = vpop.f32.mrb[0].mxu0
    %v1943 = vadd.f32 %v1869, %v1942
    %v1944 = vpop.f32.mrb[0].mxu0
    %1945 = vdwg.mxu0
    %v1946 = vadd.f32 %v257, %v1938
    %v1947 = vadd.f32 %v258, %v1943
    %v1948 = vld [vmem:[#allocation13] sm:$0x1]
    %v1949 = vld [vmem:[#allocation14] sm:$0x1]
    %1950 = vadd.xlane.f32.xlu0 %v1946
    %v1951 = vpop.xlane.xlu0 %1950
    %1952 = vadd.xlane.f32.xlu0 %v1947
    %v1953 = vpop.xlane.xlu0 %1952
    %v1954 = vrcp.pop 128.0
    %v1955 = vmul.f32 %v1951, %v1954
    %v1956 = vmul.f32 %v1953, %v1954
    %v1957 = vsub.f32 %v1946, %v1955
    %v1958 = vsub.f32 %v1947, %v1956
    %v1959 = vmul.f32 %v1957, %v1957
    %v1960 = vmul.f32 %v1958, %v1958
    %1961 = vadd.xlane.f32.xlu0 %v1959
    %v1962 = vpop.xlane.xlu0 %1961
    %1963 = vadd.xlane.f32.xlu0 %v1960
    %v1964 = vpop.xlane.xlu0 %1963
    %v1965 = vmul.f32 %v1962, %v1954
    %v1966 = vmul.f32 %v1964, %v1954
    %v1967 = vadd.f32 %v1965, 1e-05
    %v1968 = vadd.f32 %v1966, 1e-05
    %v1969 = vrsqrt.pop %v1967
    %v1970 = vrsqrt.pop %v1968
    %v1971 = vmul.f32 %v1957, %v1969
    %v1972 = vmul.f32 %v1958, %v1970
    %v1974 = vlaneseq
    %v1975 = vshrl.u32 %v1974, 7
    %v1976 = vsub.s32 0, %v1975
    %v1977 = vrot.slane %v1948, %v1976
    %v1979 = vmul.f32 %v1971, %v1977
    %v1980 = vmul.f32 %v1972, %v1977
    %v1982 = vlaneseq
    %v1983 = vshrl.u32 %v1982, 7
    %v1984 = vsub.s32 0, %v1983
    %v1985 = vrot.slane %v1949, %v1984
    %v1987 = vadd.f32 %v1979, %v1985
    %v1988 = vadd.f32 %v1980, %v1985
    %v1989 = vld [vmem:[#allocation7] sm:$0xff]
    %v1990 = vld [vmem:[#allocation7 + $0x8] sm:$0xff]
    %v1991 = vld [vmem:[#allocation7 + $0x10] sm:$0xff]
    %v1992 = vld [vmem:[#allocation7 + $0x18] sm:$0xff]
    %v1993 = vld [vmem:[#allocation7 + $0x20] sm:$0xff]
    %v1994 = vld [vmem:[#allocation7 + $0x28] sm:$0xff]
    %v1995 = vld [vmem:[#allocation7 + $0x30] sm:$0xff]
    %v1996 = vld [vmem:[#allocation7 + $0x38] sm:$0xff]
    %v1997 = vld [vmem:[#allocation7 + $0x40] sm:$0xff]
    %v1998 = vld [vmem:[#allocation7 + $0x48] sm:$0xff]
    %v1999 = vld [vmem:[#allocation7 + $0x50] sm:$0xff]
    %v2000 = vld [vmem:[#allocation7 + $0x58] sm:$0xff]
    %v2001 = vld [vmem:[#allocation7 + $0x60] sm:$0xff]
    %v2002 = vld [vmem:[#allocation7 + $0x68] sm:$0xff]
    %v2003 = vld [vmem:[#allocation7 + $0x70] sm:$0xff]
    %v2004 = vld [vmem:[#allocation7 + $0x78] sm:$0xff]
    %v2005 = vld [vmem:[%s9] sm:$0x1]
    %v2007 = vlaneseq
    %v2008 = vshrl.u32 %v2007, 7
    %v2009 = vsub.s32 0, %v2008
    %v2010 = vrot.slane %v2005, %v2009
    %2012 = vmatprep.subr.mxu0 0.0
    %2013 = vmatpush1.msra.mxu0 %v1989
    %2014 = vmatprep.subr.mxu0 0.0
    %2015 = vmatpush1.msra.mxu0 %v1990
    %2016 = vmatprep.subr.mxu0 0.0
    %2017 = vmatpush1.msra.mxu0 %v1991
    %2018 = vmatprep.subr.mxu0 0.0
    %2019 = vmatpush1.msra.mxu0 %v1992
    %2020 = vmatprep.subr.mxu0 0.0
    %2021 = vmatpush1.msra.mxu0 %v1993
    %2022 = vmatprep.subr.mxu0 0.0
    %2023 = vmatpush1.msra.mxu0 %v1994
    %2024 = vmatprep.subr.mxu0 0.0
    %2025 = vmatpush1.msra.mxu0 %v1995
    %2026 = vmatprep.subr.mxu0 0.0
    %2027 = vmatpush1.msra.mxu0 %v1996
    %2028 = vmatprep.subr.mxu0 0.0
    %2029 = vmatpush1.msra.mxu0 %v1997
    %2030 = vmatprep.subr.mxu0 0.0
    %2031 = vmatpush1.msra.mxu0 %v1998
    %2032 = vmatprep.subr.mxu0 0.0
    %2033 = vmatpush1.msra.mxu0 %v1999
    %2034 = vmatprep.subr.mxu0 0.0
    %2035 = vmatpush1.msra.mxu0 %v2000
    %2036 = vmatprep.subr.mxu0 0.0
    %2037 = vmatpush1.msra.mxu0 %v2001
    %2038 = vmatprep.subr.mxu0 0.0
    %2039 = vmatpush1.msra.mxu0 %v2002
    %2040 = vmatprep.subr.mxu0 0.0
    %2041 = vmatpush1.msra.mxu0 %v2003
    %2042 = vmatprep.subr.mxu0 0.0
    %2043 = vmatpush1.msra.mxu0 %v2004
    %2044 = vmatprep.subr.mxu0 0.0
    %2045 = vmatpush1.msra.mxu0 0.0
    %2046 = vmatprep.subr.mxu0 0.0
    %2047 = vmatpush1.msra.mxu0 0.0
    %2048 = vmatprep.subr.mxu0 0.0
    %2049 = vmatpush1.msra.mxu0 0.0
    %2050 = vmatprep.subr.mxu0 0.0
    %2051 = vmatpush1.msra.mxu0 0.0
    %2052 = vmatprep.subr.mxu0 0.0
    %2053 = vmatpush1.msra.mxu0 0.0
    %2054 = vmatprep.subr.mxu0 0.0
    %2055 = vmatpush1.msra.mxu0 0.0
    %2056 = vmatprep.subr.mxu0 0.0
    %2057 = vmatpush1.msra.mxu0 0.0
    %2058 = vmatprep.subr.mxu0 0.0
    %2059 = vmatpush1.msra.mxu0 0.0
    %2060 = vmatprep.subr.mxu0 0.0
    %2061 = vmatpush1.msra.mxu0 0.0
    %2062 = vmatprep.subr.mxu0 0.0
    %2063 = vmatpush1.msra.mxu0 0.0
    %2064 = vmatprep.subr.mxu0 0.0
    %2065 = vmatpush1.msra.mxu0 0.0
    %2066 = vmatprep.subr.mxu0 0.0
    %2067 = vmatpush1.msra.mxu0 0.0
    %2068 = vmatprep.subr.mxu0 0.0
    %2069 = vmatpush1.msra.mxu0 0.0
    %2070 = vmatprep.subr.mxu0 0.0
    %2071 = vmatpush1.msra.mxu0 0.0
    %2072 = vmatprep.subr.mxu0 0.0
    %2073 = vmatpush1.msra.mxu0 0.0
    %2074 = vmatprep.subr.mxu0 0.0
    %2075 = vmatpush1.msra.mxu0 0.0
    %2076 = vmatprep.mubr.f32.mxu0 0.0
    %2077 = vmatmul.mubr.f32.gmra.mrb[0].mxu0 %v1987
    %v2078 = vpop.f32.mrb[0].mxu0
    %v2079 = vadd.f32 %v2010, %v2078
    %v2080 = vpop.f32.mrb[0].mxu0
    %2081 = vmatprep.mubr.f32.mxu0 0.0
    %2082 = vmatmul.mubr.f32.gmra.mrb[0].mxu0 %v1988
    %v2083 = vpop.f32.mrb[0].mxu0
    %v2084 = vadd.f32 %v2010, %v2083
    %v2085 = vpop.f32.mrb[0].mxu0
    %2086 = vdwg.mxu0
    %v2087 = vld [vmem:[%s10] sm:$0xff]
    %v2088 = vld [vmem:[%s10 + $0x8] sm:$0xff]
    %v2089 = vld [vmem:[%s10 + $0x10] sm:$0xff]
    %v2090 = vld [vmem:[%s10 + $0x18] sm:$0xff]
    %v2091 = vld [vmem:[%s10 + $0x20] sm:$0xff]
    %v2092 = vld [vmem:[%s10 + $0x28] sm:$0xff]
    %v2093 = vld [vmem:[%s10 + $0x30] sm:$0xff]
    %v2094 = vld [vmem:[%s10 + $0x38] sm:$0xff]
    %v2095 = vld [vmem:[%s10 + $0x40] sm:$0xff]
    %v2096 = vld [vmem:[%s10 + $0x48] sm:$0xff]
    %v2097 = vld [vmem:[%s10 + $0x50] sm:$0xff]
    %v2098 = vld [vmem:[%s10 + $0x58] sm:$0xff]
    %v2099 = vld [vmem:[%s10 + $0x60] sm:$0xff]
    %v2100 = vld [vmem:[%s10 + $0x68] sm:$0xff]
    %v2101 = vld [vmem:[%s10 + $0x70] sm:$0xff]
    %v2102 = vld [vmem:[%s10 + $0x78] sm:$0xff]
    %v2103 = vld [vmem:[%s10 + $0x80] sm:$0xff]
    %v2104 = vld [vmem:[%s10 + $0x88] sm:$0xff]
    %v2105 = vld [vmem:[%s10 + $0x90] sm:$0xff]
    %v2106 = vld [vmem:[%s10 + $0x98] sm:$0xff]
    %v2107 = vld [vmem:[%s10 + $0xa0] sm:$0xff]
    %v2108 = vld [vmem:[%s10 + $0xa8] sm:$0xff]
    %v2109 = vld [vmem:[%s10 + $0xb0] sm:$0xff]
    %v2110 = vld [vmem:[%s10 + $0xb8] sm:$0xff]
    %v2111 = vld [vmem:[%s10 + $0xc0] sm:$0xff]
    %v2112 = vld [vmem:[%s10 + $0xc8] sm:$0xff]
    %v2113 = vld [vmem:[%s10 + $0xd0] sm:$0xff]
    %v2114 = vld [vmem:[%s10 + $0xd8] sm:$0xff]
    %v2115 = vld [vmem:[%s10 + $0xe0] sm:$0xff]
    %v2116 = vld [vmem:[%s10 + $0xe8] sm:$0xff]
    %v2117 = vld [vmem:[%s10 + $0xf0] sm:$0xff]
    %v2118 = vld [vmem:[%s10 + $0xf8] sm:$0xff]
    %v2119 = vld [vmem:[%s11] sm:$0x3]
    %v2121 = vlaneseq
    %v2122 = vshrl.u32 %v2121, 7
    %v2123 = vsub.s32 0, %v2122
    %v2124 = vrot.slane %v2119, %v2123
    %v2125 = vlaneseq
    %v2126 = vshrl.u32 %v2125, 7
    %v2127 = vsub.s32 1, %v2126
    %v2128 = vrot.slane %v2119, %v2127
    %2131 = vmatprep.subr.mxu0 %v2088
    %2132 = vmatpush1.msra.mxu0 %v2087
    %2133 = vmatprep.subr.mxu0 %v2090
    %2134 = vmatpush1.msra.mxu0 %v2089
    %2135 = vmatprep.subr.mxu0 %v2092
    %2136 = vmatpush1.msra.mxu0 %v2091
    %2137 = vmatprep.subr.mxu0 %v2094
    %2138 = vmatpush1.msra.mxu0 %v2093
    %2139 = vmatprep.subr.mxu0 %v2096
    %2140 = vmatpush1.msra.mxu0 %v2095
    %2141 = vmatprep.subr.mxu0 %v2098
    %2142 = vmatpush1.msra.mxu0 %v2097
    %2143 = vmatprep.subr.mxu0 %v2100
    %2144 = vmatpush1.msra.mxu0 %v2099
    %2145 = vmatprep.subr.mxu0 %v2102
    %2146 = vmatpush1.msra.mxu0 %v2101
    %2147 = vmatprep.subr.mxu0 %v2104
    %2148 = vmatpush1.msra.mxu0 %v2103
    %2149 = vmatprep.subr.mxu0 %v2106
    %2150 = vmatpush1.msra.mxu0 %v2105
    %2151 = vmatprep.subr.mxu0 %v2108
    %2152 = vmatpush1.msra.mxu0 %v2107
    %2153 = vmatprep.subr.mxu0 %v2110
    %2154 = vmatpush1.msra.mxu0 %v2109
    %2155 = vmatprep.subr.mxu0 %v2112
    %2156 = vmatpush1.msra.mxu0 %v2111
    %2157 = vmatprep.subr.mxu0 %v2114
    %2158 = vmatpush1.msra.mxu0 %v2113
    %2159 = vmatprep.subr.mxu0 %v2116
    %2160 = vmatpush1.msra.mxu0 %v2115
    %2161 = vmatprep.subr.mxu0 %v2118
    %2162 = vmatpush1.msra.mxu0 %v2117
    %2163 = vmatprep.subr.mxu0 0.0
    %2164 = vmatpush1.msra.mxu0 0.0
    %2165 = vmatprep.subr.mxu0 0.0
    %2166 = vmatpush1.msra.mxu0 0.0
    %2167 = vmatprep.subr.mxu0 0.0
    %2168 = vmatpush1.msra.mxu0 0.0
    %2169 = vmatprep.subr.mxu0 0.0
    %2170 = vmatpush1.msra.mxu0 0.0
    %2171 = vmatprep.subr.mxu0 0.0
    %2172 = vmatpush1.msra.mxu0 0.0
    %2173 = vmatprep.subr.mxu0 0.0
    %2174 = vmatpush1.msra.mxu0 0.0
    %2175 = vmatprep.subr.mxu0 0.0
    %2176 = vmatpush1.msra.mxu0 0.0
    %2177 = vmatprep.subr.mxu0 0.0
    %2178 = vmatpush1.msra.mxu0 0.0
    %2179 = vmatprep.subr.mxu0 0.0
    %2180 = vmatpush1.msra.mxu0 0.0
    %2181 = vmatprep.subr.mxu0 0.0
    %2182 = vmatpush1.msra.mxu0 0.0
    %2183 = vmatprep.subr.mxu0 0.0
    %2184 = vmatpush1.msra.mxu0 0.0
    %2185 = vmatprep.subr.mxu0 0.0
    %2186 = vmatpush1.msra.mxu0 0.0
    %2187 = vmatprep.subr.mxu0 0.0
    %2188 = vmatpush1.msra.mxu0 0.0
    %2189 = vmatprep.subr.mxu0 0.0
    %2190 = vmatpush1.msra.mxu0 0.0
    %2191 = vmatprep.subr.mxu0 0.0
    %2192 = vmatpush1.msra.mxu0 0.0
    %2193 = vmatprep.subr.mxu0 0.0
    %2194 = vmatpush1.msra.mxu0 0.0
    %2195 = vmatprep.mubr.f32.mxu0 0.0
    %2196 = vmatmul.mubr.f32.gmra.mrb[0].mxu0 %v259
    %v2197 = vpop.f32.mrb[0].mxu0
    %v2198 = vadd.f32 %v2124, %v2197
    %v2199 = vpop.f32.mrb[0].mxu0
    %v2200 = vadd.f32 %v2128, %v2199
    %2201 = vmatprep.mubr.f32.mxu0 0.0
    %2202 = vmatmul.mubr.f32.gmra.mrb[0].mxu0 %v260
    %v2203 = vpop.f32.mrb[0].mxu0
    %v2204 = vadd.f32 %v2124, %v2203
    %v2205 = vpop.f32.mrb[0].mxu0
    %v2206 = vadd.f32 %v2128, %v2205
    %2207 = vmatprep.mubr.f32.mxu0 0.0
    %2208 = vmatmul.mubr.f32.gmra.mrb[0].mxu0 %v261
    %v2209 = vpop.f32.mrb[0].mxu0
    %v2210 = vadd.f32 %v2124, %v2209
    %v2211 = vpop.f32.mrb[0].mxu0
    %v2212 = vadd.f32 %v2128, %v2211
    %2213 = vmatprep.mubr.f32.mxu0 0.0
    %2214 = vmatmul.mubr.f32.gmra.mrb[0].mxu0 %v262
    %v2215 = vpop.f32.mrb[0].mxu0
    %v2216 = vadd.f32 %v2124, %v2215
    %v2217 = vpop.f32.mrb[0].mxu0
    %v2218 = vadd.f32 %v2128, %v2217
    %2219 = vdwg.mxu0
    %vm2220 = vcmp.gt.f32.partialorder %v263, 0.0
    %v2222 = vsel %vm486, %v2079, 0
    %v2225 = vsel %vm486, %v2198, 0
    %v2228 = vsel %vm486, %v2204, 0
    %2230 = vmatprep.subr.mxu0 0.0
    %2231 = vmatpush1.xpose.msra.mxu0 %v2225
    %2232 = vmatprep.subr.mxu0 0.0
    %2233 = vmatpush1.xpose.msra.mxu0 %v2228
    %2234 = vmatprep.subr.mxu0 0.0
    %2235 = vmatpush1.xpose.msra.mxu0 0.0
    %2236 = vmatprep.subr.mxu0 0.0
    %2237 = vmatpush1.xpose.msra.mxu0 0.0
    %2238 = vmatprep.subr.mxu0 0.0
    %2239 = vmatpush1.xpose.msra.mxu0 0.0
    %2240 = vmatprep.subr.mxu0 0.0
    %2241 = vmatpush1.xpose.msra.mxu0 0.0
    %2242 = vmatprep.subr.mxu0 0.0
    %2243 = vmatpush1.xpose.msra.mxu0 0.0
    %2244 = vmatprep.subr.mxu0 0.0
    %2245 = vmatpush1.xpose.msra.mxu0 0.0
    %2246 = vmatprep.subr.mxu0 0.0
    %2247 = vmatpush1.xpose.msra.mxu0 0.0
    %2248 = vmatprep.subr.mxu0 0.0
    %2249 = vmatpush1.xpose.msra.mxu0 0.0
    %2250 = vmatprep.subr.mxu0 0.0
    %2251 = vmatpush1.xpose.msra.mxu0 0.0
    %2252 = vmatprep.subr.mxu0 0.0
    %2253 = vmatpush1.xpose.msra.mxu0 0.0
    %2254 = vmatprep.subr.mxu0 0.0
    %2255 = vmatpush1.xpose.msra.mxu0 0.0
    %2256 = vmatprep.subr.mxu0 0.0
    %2257 = vmatpush1.xpose.msra.mxu0 0.0
    %2258 = vmatprep.subr.mxu0 0.0
    %2259 = vmatpush1.xpose.msra.mxu0 0.0
    %2260 = vmatprep.subr.mxu0 0.0
    %2261 = vmatpush1.xpose.msra.mxu0 0.0
    %2262 = vmatprep.subr.mxu0 0.0
    %2263 = vmatpush1.xpose.msra.mxu0 0.0
    %2264 = vmatprep.subr.mxu0 0.0
    %2265 = vmatpush1.xpose.msra.mxu0 0.0
    %2266 = vmatprep.subr.mxu0 0.0
    %2267 = vmatpush1.xpose.msra.mxu0 0.0
    %2268 = vmatprep.subr.mxu0 0.0
    %2269 = vmatpush1.xpose.msra.mxu0 0.0
    %2270 = vmatprep.subr.mxu0 0.0
    %2271 = vmatpush1.xpose.msra.mxu0 0.0
    %2272 = vmatprep.subr.mxu0 0.0
    %2273 = vmatpush1.xpose.msra.mxu0 0.0
    %2274 = vmatprep.subr.mxu0 0.0
    %2275 = vmatpush1.xpose.msra.mxu0 0.0
    %2276 = vmatprep.subr.mxu0 0.0
    %2277 = vmatpush1.xpose.msra.mxu0 0.0
    %2278 = vmatprep.subr.mxu0 0.0
    %2279 = vmatpush1.xpose.msra.mxu0 0.0
    %2280 = vmatprep.subr.mxu0 0.0
    %2281 = vmatpush1.xpose.msra.mxu0 0.0
    %2282 = vmatprep.subr.mxu0 0.0
    %2283 = vmatpush1.xpose.msra.mxu0 0.0
    %2284 = vmatprep.subr.mxu0 0.0
    %2285 = vmatpush1.xpose.msra.mxu0 0.0
    %2286 = vmatprep.subr.mxu0 0.0
    %2287 = vmatpush1.xpose.msra.mxu0 0.0
    %2288 = vmatprep.subr.mxu0 0.0
    %2289 = vmatpush1.xpose.msra.mxu0 0.0
    %2290 = vmatprep.subr.mxu0 0.0
    %2291 = vmatpush1.xpose.msra.mxu0 0.0
    %2292 = vmatprep.subr.mxu0 0.0
    %2293 = vmatpush1.xpose.msra.mxu0 0.0
    %2294 = vmatprep.mubr.f32.mxu0 0.0
    %2295 = vmatmul.mubr.f32.gmra.mrb[0].mxu0 %v2222
    %v2296 = vpop.f32.mrb[0].mxu0
    %v2297 = vadd.f32 0.0, %v2296
    %v2298 = vpop.f32.mrb[0].mxu0
    %2299 = vdwg.mxu0
    %v2300 = vmul.f32 %v2297, 0.17677669
    %v2301 = vsel %vm2220, 1, 0
    %v2302 = vlaneseq
    %v2303 = vshrl.u32 %v2302, 7
    %v2304 = vsub.s32 0, %v2303
    %v2305 = vrot.slane %v2301, %v2304
    %vm2306 = vcmp.eq.s32.totalorder %v2305, 1
    %v2307 = vsel %vm2306, %v2300, -1e+09
    %vm2308 = vcmask 130048
    %v2309 = vsel %vm2308, %v2307, -inf
    %2310 = vmax.xlane.f32.xlu0 %v2309
    %v2311 = vpop.xlane.xlu0 %2310
    %v2312 = vsub.f32 %v2307, %v2311
    %v2313 = vmul.f32 %v2312, 1.442695
    %v2314 = vpow.pop %v2313
    %v2315 = vsel %vm2308, %v2314, 0.0
    %2316 = vadd.xlane.f32.xlu0 %v2315
    %v2317 = vpop.xlane.xlu0 %2316
    %v2318 = vrcp.pop %v2317
    %v2319 = vmul.f32 %v2314, %v2318
    %v2321 = vsel %vm2308, %v2319, 0
    %2323 = vmatprep.subr.mxu0 0.0
    %2324 = vmatpush1.msra.mxu0 %v2200
    %2325 = vmatprep.subr.mxu0 0.0
    %2326 = vmatpush1.msra.mxu0 %v2206
    %2327 = vmatprep.subr.mxu0 0.0
    %2328 = vmatpush1.msra.mxu0 0.0
    %2329 = vmatprep.subr.mxu0 0.0
    %2330 = vmatpush1.msra.mxu0 0.0
    %2331 = vmatprep.subr.mxu0 0.0
    %2332 = vmatpush1.msra.mxu0 0.0
    %2333 = vmatprep.subr.mxu0 0.0
    %2334 = vmatpush1.msra.mxu0 0.0
    %2335 = vmatprep.subr.mxu0 0.0
    %2336 = vmatpush1.msra.mxu0 0.0
    %2337 = vmatprep.subr.mxu0 0.0
    %2338 = vmatpush1.msra.mxu0 0.0
    %2339 = vmatprep.subr.mxu0 0.0
    %2340 = vmatpush1.msra.mxu0 0.0
    %2341 = vmatprep.subr.mxu0 0.0
    %2342 = vmatpush1.msra.mxu0 0.0
    %2343 = vmatprep.subr.mxu0 0.0
    %2344 = vmatpush1.msra.mxu0 0.0
    %2345 = vmatprep.subr.mxu0 0.0
    %2346 = vmatpush1.msra.mxu0 0.0
    %2347 = vmatprep.subr.mxu0 0.0
    %2348 = vmatpush1.msra.mxu0 0.0
    %2349 = vmatprep.subr.mxu0 0.0
    %2350 = vmatpush1.msra.mxu0 0.0
    %2351 = vmatprep.subr.mxu0 0.0
    %2352 = vmatpush1.msra.mxu0 0.0
    %2353 = vmatprep.subr.mxu0 0.0
    %2354 = vmatpush1.msra.mxu0 0.0
    %2355 = vmatprep.subr.mxu0 0.0
    %2356 = vmatpush1.msra.mxu0 0.0
    %2357 = vmatprep.subr.mxu0 0.0
    %2358 = vmatpush1.msra.mxu0 0.0
    %2359 = vmatprep.subr.mxu0 0.0
    %2360 = vmatpush1.msra.mxu0 0.0
    %2361 = vmatprep.subr.mxu0 0.0
    %2362 = vmatpush1.msra.mxu0 0.0
    %2363 = vmatprep.subr.mxu0 0.0
    %2364 = vmatpush1.msra.mxu0 0.0
    %2365 = vmatprep.subr.mxu0 0.0
    %2366 = vmatpush1.msra.mxu0 0.0
    %2367 = vmatprep.subr.mxu0 0.0
    %2368 = vmatpush1.msra.mxu0 0.0
    %2369 = vmatprep.subr.mxu0 0.0
    %2370 = vmatpush1.msra.mxu0 0.0
    %2371 = vmatprep.subr.mxu0 0.0
    %2372 = vmatpush1.msra.mxu0 0.0
    %2373 = vmatprep.subr.mxu0 0.0
    %2374 = vmatpush1.msra.mxu0 0.0
    %2375 = vmatprep.subr.mxu0 0.0
    %2376 = vmatpush1.msra.mxu0 0.0
    %2377 = vmatprep.subr.mxu0 0.0
    %2378 = vmatpush1.msra.mxu0 0.0
    %2379 = vmatprep.subr.mxu0 0.0
    %2380 = vmatpush1.msra.mxu0 0.0
    %2381 = vmatprep.subr.mxu0 0.0
    %2382 = vmatpush1.msra.mxu0 0.0
    %2383 = vmatprep.subr.mxu0 0.0
    %2384 = vmatpush1.msra.mxu0 0.0
    %2385 = vmatprep.subr.mxu0 0.0
    %2386 = vmatpush1.msra.mxu0 0.0
    %2387 = vmatprep.mubr.f32.mxu0 0.0
    %2388 = vmatmul.mubr.f32.gmra.mrb[0].mxu0 %v2321
    %v2389 = vpop.f32.mrb[0].mxu0
    %v2390 = vadd.f32 0.0, %v2389
    %v2391 = vpop.f32.mrb[0].mxu0
    %2392 = vdwg.mxu0
    %2393 = vrot.lane.b32.xlu0 %v2079, 96
    %v2394 = vpop.permute.xlu0 %2393
    %2395 = vrot.lane.b32.xlu0 %v2198, 96
    %v2396 = vpop.permute.xlu0 %2395
    %2397 = vrot.lane.b32.xlu0 %v2204, 96
    %v2398 = vpop.permute.xlu0 %2397
    %v2399 = vsel %vm486, %v2394, 0
    %v2401 = vsel %vm486, %v2396, 0
    %v2403 = vsel %vm486, %v2398, 0
    %2405 = vmatprep.subr.mxu0 0.0
    %2406 = vmatpush1.xpose.msra.mxu0 %v2401
    %2407 = vmatprep.subr.mxu0 0.0
    %2408 = vmatpush1.xpose.msra.mxu0 %v2403
    %2409 = vmatprep.subr.mxu0 0.0
    %2410 = vmatpush1.xpose.msra.mxu0 0.0
    %2411 = vmatprep.subr.mxu0 0.0
    %2412 = vmatpush1.xpose.msra.mxu0 0.0
    %2413 = vmatprep.subr.mxu0 0.0
    %2414 = vmatpush1.xpose.msra.mxu0 0.0
    %2415 = vmatprep.subr.mxu0 0.0
    %2416 = vmatpush1.xpose.msra.mxu0 0.0
    %2417 = vmatprep.subr.mxu0 0.0
    %2418 = vmatpush1.xpose.msra.mxu0 0.0
    %2419 = vmatprep.subr.mxu0 0.0
    %2420 = vmatpush1.xpose.msra.mxu0 0.0
    %2421 = vmatprep.subr.mxu0 0.0
    %2422 = vmatpush1.xpose.msra.mxu0 0.0
    %2423 = vmatprep.subr.mxu0 0.0
    %2424 = vmatpush1.xpose.msra.mxu0 0.0
    %2425 = vmatprep.subr.mxu0 0.0
    %2426 = vmatpush1.xpose.msra.mxu0 0.0
    %2427 = vmatprep.subr.mxu0 0.0
    %2428 = vmatpush1.xpose.msra.mxu0 0.0
    %2429 = vmatprep.subr.mxu0 0.0
    %2430 = vmatpush1.xpose.msra.mxu0 0.0
    %2431 = vmatprep.subr.mxu0 0.0
    %2432 = vmatpush1.xpose.msra.mxu0 0.0
    %2433 = vmatprep.subr.mxu0 0.0
    %2434 = vmatpush1.xpose.msra.mxu0 0.0
    %2435 = vmatprep.subr.mxu0 0.0
    %2436 = vmatpush1.xpose.msra.mxu0 0.0
    %2437 = vmatprep.subr.mxu0 0.0
    %2438 = vmatpush1.xpose.msra.mxu0 0.0
    %2439 = vmatprep.subr.mxu0 0.0
    %2440 = vmatpush1.xpose.msra.mxu0 0.0
    %2441 = vmatprep.subr.mxu0 0.0
    %2442 = vmatpush1.xpose.msra.mxu0 0.0
    %2443 = vmatprep.subr.mxu0 0.0
    %2444 = vmatpush1.xpose.msra.mxu0 0.0
    %2445 = vmatprep.subr.mxu0 0.0
    %2446 = vmatpush1.xpose.msra.mxu0 0.0
    %2447 = vmatprep.subr.mxu0 0.0
    %2448 = vmatpush1.xpose.msra.mxu0 0.0
    %2449 = vmatprep.subr.mxu0 0.0
    %2450 = vmatpush1.xpose.msra.mxu0 0.0
    %2451 = vmatprep.subr.mxu0 0.0
    %2452 = vmatpush1.xpose.msra.mxu0 0.0
    %2453 = vmatprep.subr.mxu0 0.0
    %2454 = vmatpush1.xpose.msra.mxu0 0.0
    %2455 = vmatprep.subr.mxu0 0.0
    %2456 = vmatpush1.xpose.msra.mxu0 0.0
    %2457 = vmatprep.subr.mxu0 0.0
    %2458 = vmatpush1.xpose.msra.mxu0 0.0
    %2459 = vmatprep.subr.mxu0 0.0
    %2460 = vmatpush1.xpose.msra.mxu0 0.0
    %2461 = vmatprep.subr.mxu0 0.0
    %2462 = vmatpush1.xpose.msra.mxu0 0.0
    %2463 = vmatprep.subr.mxu0 0.0
    %2464 = vmatpush1.xpose.msra.mxu0 0.0
    %2465 = vmatprep.subr.mxu0 0.0
    %2466 = vmatpush1.xpose.msra.mxu0 0.0
    %2467 = vmatprep.subr.mxu0 0.0
    %2468 = vmatpush1.xpose.msra.mxu0 0.0
    %2469 = vmatprep.mubr.f32.mxu0 0.0
    %2470 = vmatmul.mubr.f32.gmra.mrb[0].mxu0 %v2399
    %v2471 = vpop.f32.mrb[0].mxu0
    %v2472 = vadd.f32 0.0, %v2471
    %v2473 = vpop.f32.mrb[0].mxu0
    %2474 = vdwg.mxu0
    %v2475 = vmul.f32 %v2472, 0.17677669
    %v2476 = vsel %vm2306, %v2475, -1e+09
    %v2477 = vsel %vm2308, %v2476, -inf
    %2478 = vmax.xlane.f32.xlu0 %v2477
    %v2479 = vpop.xlane.xlu0 %2478
    %v2480 = vsub.f32 %v2476, %v2479
    %v2481 = vmul.f32 %v2480, 1.442695
    %v2482 = vpow.pop %v2481
    %v2483 = vsel %vm2308, %v2482, 0.0
    %2484 = vadd.xlane.f32.xlu0 %v2483
    %v2485 = vpop.xlane.xlu0 %2484
    %v2486 = vrcp.pop %v2485
    %v2487 = vmul.f32 %v2482, %v2486
    %2490 = vrot.lane.b32.xlu0 %v2200, 96
    %v2491 = vpop.permute.xlu0 %2490
    %2492 = vrot.lane.b32.xlu0 %v2206, 96
    %v2493 = vpop.permute.xlu0 %2492
    %v2497 = vsel %vm2308, %v2487, 0
    %2499 = vmatprep.subr.mxu0 0.0
    %2500 = vmatpush1.msra.mxu0 %v2491
    %2501 = vmatprep.subr.mxu0 0.0
    %2502 = vmatpush1.msra.mxu0 %v2493
    %2503 = vmatprep.subr.mxu0 0.0
    %2504 = vmatpush1.msra.mxu0 0.0
    %2505 = vmatprep.subr.mxu0 0.0
    %2506 = vmatpush1.msra.mxu0 0.0
    %2507 = vmatprep.subr.mxu0 0.0
    %2508 = vmatpush1.msra.mxu0 0.0
    %2509 = vmatprep.subr.mxu0 0.0
    %2510 = vmatpush1.msra.mxu0 0.0
    %2511 = vmatprep.subr.mxu0 0.0
    %2512 = vmatpush1.msra.mxu0 0.0
    %2513 = vmatprep.subr.mxu0 0.0
    %2514 = vmatpush1.msra.mxu0 0.0
    %2515 = vmatprep.subr.mxu0 0.0
    %2516 = vmatpush1.msra.mxu0 0.0
    %2517 = vmatprep.subr.mxu0 0.0
    %2518 = vmatpush1.msra.mxu0 0.0
    %2519 = vmatprep.subr.mxu0 0.0
    %2520 = vmatpush1.msra.mxu0 0.0
    %2521 = vmatprep.subr.mxu0 0.0
    %2522 = vmatpush1.msra.mxu0 0.0
    %2523 = vmatprep.subr.mxu0 0.0
    %2524 = vmatpush1.msra.mxu0 0.0
    %2525 = vmatprep.subr.mxu0 0.0
    %2526 = vmatpush1.msra.mxu0 0.0
    %2527 = vmatprep.subr.mxu0 0.0
    %2528 = vmatpush1.msra.mxu0 0.0
    %2529 = vmatprep.subr.mxu0 0.0
    %2530 = vmatpush1.msra.mxu0 0.0
    %2531 = vmatprep.subr.mxu0 0.0
    %2532 = vmatpush1.msra.mxu0 0.0
    %2533 = vmatprep.subr.mxu0 0.0
    %2534 = vmatpush1.msra.mxu0 0.0
    %2535 = vmatprep.subr.mxu0 0.0
    %2536 = vmatpush1.msra.mxu0 0.0
    %2537 = vmatprep.subr.mxu0 0.0
    %2538 = vmatpush1.msra.mxu0 0.0
    %2539 = vmatprep.subr.mxu0 0.0
    %2540 = vmatpush1.msra.mxu0 0.0
    %2541 = vmatprep.subr.mxu0 0.0
    %2542 = vmatpush1.msra.mxu0 0.0
    %2543 = vmatprep.subr.mxu0 0.0
    %2544 = vmatpush1.msra.mxu0 0.0
    %2545 = vmatprep.subr.mxu0 0.0
    %2546 = vmatpush1.msra.mxu0 0.0
    %2547 = vmatprep.subr.mxu0 0.0
    %2548 = vmatpush1.msra.mxu0 0.0
    %2549 = vmatprep.subr.mxu0 0.0
    %2550 = vmatpush1.msra.mxu0 0.0
    %2551 = vmatprep.subr.mxu0 0.0
    %2552 = vmatpush1.msra.mxu0 0.0
    %2553 = vmatprep.subr.mxu0 0.0
    %2554 = vmatpush1.msra.mxu0 0.0
    %2555 = vmatprep.subr.mxu0 0.0
    %2556 = vmatpush1.msra.mxu0 0.0
    %2557 = vmatprep.subr.mxu0 0.0
    %2558 = vmatpush1.msra.mxu0 0.0
    %2559 = vmatprep.subr.mxu0 0.0
    %2560 = vmatpush1.msra.mxu0 0.0
    %2561 = vmatprep.subr.mxu0 0.0
    %2562 = vmatpush1.msra.mxu0 0.0
    %2563 = vmatprep.mubr.f32.mxu0 0.0
    %2564 = vmatmul.mubr.f32.gmra.mrb[0].mxu0 %v2497
    %v2565 = vpop.f32.mrb[0].mxu0
    %v2566 = vadd.f32 0.0, %v2565
    %v2567 = vpop.f32.mrb[0].mxu0
    %2568 = vdwg.mxu0
    %2569 = vrot.lane.b32.xlu0 %v2079, 64
    %v2570 = vpop.permute.xlu0 %2569
    %2571 = vrot.lane.b32.xlu0 %v2198, 64
    %v2572 = vpop.permute.xlu0 %2571
    %2573 = vrot.lane.b32.xlu0 %v2204, 64
    %v2574 = vpop.permute.xlu0 %2573
    %v2575 = vsel %vm486, %v2570, 0
    %v2577 = vsel %vm486, %v2572, 0
    %v2579 = vsel %vm486, %v2574, 0
    %2581 = vmatprep.subr.mxu0 0.0
    %2582 = vmatpush1.xpose.msra.mxu0 %v2577
    %2583 = vmatprep.subr.mxu0 0.0
    %2584 = vmatpush1.xpose.msra.mxu0 %v2579
    %2585 = vmatprep.subr.mxu0 0.0
    %2586 = vmatpush1.xpose.msra.mxu0 0.0
    %2587 = vmatprep.subr.mxu0 0.0
    %2588 = vmatpush1.xpose.msra.mxu0 0.0
    %2589 = vmatprep.subr.mxu0 0.0
    %2590 = vmatpush1.xpose.msra.mxu0 0.0
    %2591 = vmatprep.subr.mxu0 0.0
    %2592 = vmatpush1.xpose.msra.mxu0 0.0
    %2593 = vmatprep.subr.mxu0 0.0
    %2594 = vmatpush1.xpose.msra.mxu0 0.0
    %2595 = vmatprep.subr.mxu0 0.0
    %2596 = vmatpush1.xpose.msra.mxu0 0.0
    %2597 = vmatprep.subr.mxu0 0.0
    %2598 = vmatpush1.xpose.msra.mxu0 0.0
    %2599 = vmatprep.subr.mxu0 0.0
    %2600 = vmatpush1.xpose.msra.mxu0 0.0
    %2601 = vmatprep.subr.mxu0 0.0
    %2602 = vmatpush1.xpose.msra.mxu0 0.0
    %2603 = vmatprep.subr.mxu0 0.0
    %2604 = vmatpush1.xpose.msra.mxu0 0.0
    %2605 = vmatprep.subr.mxu0 0.0
    %2606 = vmatpush1.xpose.msra.mxu0 0.0
    %2607 = vmatprep.subr.mxu0 0.0
    %2608 = vmatpush1.xpose.msra.mxu0 0.0
    %2609 = vmatprep.subr.mxu0 0.0
    %2610 = vmatpush1.xpose.msra.mxu0 0.0
    %2611 = vmatprep.subr.mxu0 0.0
    %2612 = vmatpush1.xpose.msra.mxu0 0.0
    %2613 = vmatprep.subr.mxu0 0.0
    %2614 = vmatpush1.xpose.msra.mxu0 0.0
    %2615 = vmatprep.subr.mxu0 0.0
    %2616 = vmatpush1.xpose.msra.mxu0 0.0
    %2617 = vmatprep.subr.mxu0 0.0
    %2618 = vmatpush1.xpose.msra.mxu0 0.0
    %2619 = vmatprep.subr.mxu0 0.0
    %2620 = vmatpush1.xpose.msra.mxu0 0.0
    %2621 = vmatprep.subr.mxu0 0.0
    %2622 = vmatpush1.xpose.msra.mxu0 0.0
    %2623 = vmatprep.subr.mxu0 0.0
    %2624 = vmatpush1.xpose.msra.mxu0 0.0
    %2625 = vmatprep.subr.mxu0 0.0
    %2626 = vmatpush1.xpose.msra.mxu0 0.0
    %2627 = vmatprep.subr.mxu0 0.0
    %2628 = vmatpush1.xpose.msra.mxu0 0.0
    %2629 = vmatprep.subr.mxu0 0.0
    %2630 = vmatpush1.xpose.msra.mxu0 0.0
    %2631 = vmatprep.subr.mxu0 0.0
    %2632 = vmatpush1.xpose.msra.mxu0 0.0
    %2633 = vmatprep.subr.mxu0 0.0
    %2634 = vmatpush1.xpose.msra.mxu0 0.0
    %2635 = vmatprep.subr.mxu0 0.0
    %2636 = vmatpush1.xpose.msra.mxu0 0.0
    %2637 = vmatprep.subr.mxu0 0.0
    %2638 = vmatpush1.xpose.msra.mxu0 0.0
    %2639 = vmatprep.subr.mxu0 0.0
    %2640 = vmatpush1.xpose.msra.mxu0 0.0
    %2641 = vmatprep.subr.mxu0 0.0
    %2642 = vmatpush1.xpose.msra.mxu0 0.0
    %2643 = vmatprep.subr.mxu0 0.0
    %2644 = vmatpush1.xpose.msra.mxu0 0.0
    %2645 = vmatprep.mubr.f32.mxu0 0.0
    %2646 = vmatmul.mubr.f32.gmra.mrb[0].mxu0 %v2575
    %v2647 = vpop.f32.mrb[0].mxu0
    %v2648 = vadd.f32 0.0, %v2647
    %v2649 = vpop.f32.mrb[0].mxu0
    %2650 = vdwg.mxu0
    %v2651 = vmul.f32 %v2648, 0.17677669
    %v2652 = vsel %vm2306, %v2651, -1e+09
    %v2653 = vsel %vm2308, %v2652, -inf
    %2654 = vmax.xlane.f32.xlu0 %v2653
    %v2655 = vpop.xlane.xlu0 %2654
    %v2656 = vsub.f32 %v2652, %v2655
    %v2657 = vmul.f32 %v2656, 1.442695
    %v2658 = vpow.pop %v2657
    %v2659 = vsel %vm2308, %v2658, 0.0
    %2660 = vadd.xlane.f32.xlu0 %v2659
    %v2661 = vpop.xlane.xlu0 %2660
    %v2662 = vrcp.pop %v2661
    %v2663 = vmul.f32 %v2658, %v2662
    %2664 = vrot.lane.b32.xlu0 %v2200, 64
    %v2665 = vpop.permute.xlu0 %2664
    %2666 = vrot.lane.b32.xlu0 %v2206, 64
    %v2667 = vpop.permute.xlu0 %2666
    %v2671 = vsel %vm2308, %v2663, 0
    %2673 = vmatprep.subr.mxu0 0.0
    %2674 = vmatpush1.msra.mxu0 %v2665
    %2675 = vmatprep.subr.mxu0 0.0
    %2676 = vmatpush1.msra.mxu0 %v2667
    %2677 = vmatprep.subr.mxu0 0.0
    %2678 = vmatpush1.msra.mxu0 0.0
    %2679 = vmatprep.subr.mxu0 0.0
    %2680 = vmatpush1.msra.mxu0 0.0
    %2681 = vmatprep.subr.mxu0 0.0
    %2682 = vmatpush1.msra.mxu0 0.0
    %2683 = vmatprep.subr.mxu0 0.0
    %2684 = vmatpush1.msra.mxu0 0.0
    %2685 = vmatprep.subr.mxu0 0.0
    %2686 = vmatpush1.msra.mxu0 0.0
    %2687 = vmatprep.subr.mxu0 0.0
    %2688 = vmatpush1.msra.mxu0 0.0
    %2689 = vmatprep.subr.mxu0 0.0
    %2690 = vmatpush1.msra.mxu0 0.0
    %2691 = vmatprep.subr.mxu0 0.0
    %2692 = vmatpush1.msra.mxu0 0.0
    %2693 = vmatprep.subr.mxu0 0.0
    %2694 = vmatpush1.msra.mxu0 0.0
    %2695 = vmatprep.subr.mxu0 0.0
    %2696 = vmatpush1.msra.mxu0 0.0
    %2697 = vmatprep.subr.mxu0 0.0
    %2698 = vmatpush1.msra.mxu0 0.0
    %2699 = vmatprep.subr.mxu0 0.0
    %2700 = vmatpush1.msra.mxu0 0.0
    %2701 = vmatprep.subr.mxu0 0.0
    %2702 = vmatpush1.msra.mxu0 0.0
    %2703 = vmatprep.subr.mxu0 0.0
    %2704 = vmatpush1.msra.mxu0 0.0
    %2705 = vmatprep.subr.mxu0 0.0
    %2706 = vmatpush1.msra.mxu0 0.0
    %2707 = vmatprep.subr.mxu0 0.0
    %2708 = vmatpush1.msra.mxu0 0.0
    %2709 = vmatprep.subr.mxu0 0.0
    %2710 = vmatpush1.msra.mxu0 0.0
    %2711 = vmatprep.subr.mxu0 0.0
    %2712 = vmatpush1.msra.mxu0 0.0
    %2713 = vmatprep.subr.mxu0 0.0
    %2714 = vmatpush1.msra.mxu0 0.0
    %2715 = vmatprep.subr.mxu0 0.0
    %2716 = vmatpush1.msra.mxu0 0.0
    %2717 = vmatprep.subr.mxu0 0.0
    %2718 = vmatpush1.msra.mxu0 0.0
    %2719 = vmatprep.subr.mxu0 0.0
    %2720 = vmatpush1.msra.mxu0 0.0
    %2721 = vmatprep.subr.mxu0 0.0
    %2722 = vmatpush1.msra.mxu0 0.0
    %2723 = vmatprep.subr.mxu0 0.0
    %2724 = vmatpush1.msra.mxu0 0.0
    %2725 = vmatprep.subr.mxu0 0.0
    %2726 = vmatpush1.msra.mxu0 0.0
    %2727 = vmatprep.subr.mxu0 0.0
    %2728 = vmatpush1.msra.mxu0 0.0
    %2729 = vmatprep.subr.mxu0 0.0
    %2730 = vmatpush1.msra.mxu0 0.0
    %2731 = vmatprep.subr.mxu0 0.0
    %2732 = vmatpush1.msra.mxu0 0.0
    %2733 = vmatprep.subr.mxu0 0.0
    %2734 = vmatpush1.msra.mxu0 0.0
    %2735 = vmatprep.subr.mxu0 0.0
    %2736 = vmatpush1.msra.mxu0 0.0
    %2737 = vmatprep.mubr.f32.mxu0 0.0
    %2738 = vmatmul.mubr.f32.gmra.mrb[0].mxu0 %v2671
    %v2739 = vpop.f32.mrb[0].mxu0
    %v2740 = vadd.f32 0.0, %v2739
    %v2741 = vpop.f32.mrb[0].mxu0
    %2742 = vdwg.mxu0
    %2743 = vrot.lane.b32.xlu0 %v2079, 32
    %v2744 = vpop.permute.xlu0 %2743
    %2745 = vrot.lane.b32.xlu0 %v2198, 32
    %v2746 = vpop.permute.xlu0 %2745
    %2747 = vrot.lane.b32.xlu0 %v2204, 32
    %v2748 = vpop.permute.xlu0 %2747
    %v2749 = vsel %vm486, %v2744, 0
    %v2751 = vsel %vm486, %v2746, 0
    %v2753 = vsel %vm486, %v2748, 0
    %2755 = vmatprep.subr.mxu0 0.0
    %2756 = vmatpush1.xpose.msra.mxu0 %v2751
    %2757 = vmatprep.subr.mxu0 0.0
    %2758 = vmatpush1.xpose.msra.mxu0 %v2753
    %2759 = vmatprep.subr.mxu0 0.0
    %2760 = vmatpush1.xpose.msra.mxu0 0.0
    %2761 = vmatprep.subr.mxu0 0.0
    %2762 = vmatpush1.xpose.msra.mxu0 0.0
    %2763 = vmatprep.subr.mxu0 0.0
    %2764 = vmatpush1.xpose.msra.mxu0 0.0
    %2765 = vmatprep.subr.mxu0 0.0
    %2766 = vmatpush1.xpose.msra.mxu0 0.0
    %2767 = vmatprep.subr.mxu0 0.0
    %2768 = vmatpush1.xpose.msra.mxu0 0.0
    %2769 = vmatprep.subr.mxu0 0.0
    %2770 = vmatpush1.xpose.msra.mxu0 0.0
    %2771 = vmatprep.subr.mxu0 0.0
    %2772 = vmatpush1.xpose.msra.mxu0 0.0
    %2773 = vmatprep.subr.mxu0 0.0
    %2774 = vmatpush1.xpose.msra.mxu0 0.0
    %2775 = vmatprep.subr.mxu0 0.0
    %2776 = vmatpush1.xpose.msra.mxu0 0.0
    %2777 = vmatprep.subr.mxu0 0.0
    %2778 = vmatpush1.xpose.msra.mxu0 0.0
    %2779 = vmatprep.subr.mxu0 0.0
    %2780 = vmatpush1.xpose.msra.mxu0 0.0
    %2781 = vmatprep.subr.mxu0 0.0
    %2782 = vmatpush1.xpose.msra.mxu0 0.0
    %2783 = vmatprep.subr.mxu0 0.0
    %2784 = vmatpush1.xpose.msra.mxu0 0.0
    %2785 = vmatprep.subr.mxu0 0.0
    %2786 = vmatpush1.xpose.msra.mxu0 0.0
    %2787 = vmatprep.subr.mxu0 0.0
    %2788 = vmatpush1.xpose.msra.mxu0 0.0
    %2789 = vmatprep.subr.mxu0 0.0
    %2790 = vmatpush1.xpose.msra.mxu0 0.0
    %2791 = vmatprep.subr.mxu0 0.0
    %2792 = vmatpush1.xpose.msra.mxu0 0.0
    %2793 = vmatprep.subr.mxu0 0.0
    %2794 = vmatpush1.xpose.msra.mxu0 0.0
    %2795 = vmatprep.subr.mxu0 0.0
    %2796 = vmatpush1.xpose.msra.mxu0 0.0
    %2797 = vmatprep.subr.mxu0 0.0
    %2798 = vmatpush1.xpose.msra.mxu0 0.0
    %2799 = vmatprep.subr.mxu0 0.0
    %2800 = vmatpush1.xpose.msra.mxu0 0.0
    %2801 = vmatprep.subr.mxu0 0.0
    %2802 = vmatpush1.xpose.msra.mxu0 0.0
    %2803 = vmatprep.subr.mxu0 0.0
    %2804 = vmatpush1.xpose.msra.mxu0 0.0
    %2805 = vmatprep.subr.mxu0 0.0
    %2806 = vmatpush1.xpose.msra.mxu0 0.0
    %2807 = vmatprep.subr.mxu0 0.0
    %2808 = vmatpush1.xpose.msra.mxu0 0.0
    %2809 = vmatprep.subr.mxu0 0.0
    %2810 = vmatpush1.xpose.msra.mxu0 0.0
    %2811 = vmatprep.subr.mxu0 0.0
    %2812 = vmatpush1.xpose.msra.mxu0 0.0
    %2813 = vmatprep.subr.mxu0 0.0
    %2814 = vmatpush1.xpose.msra.mxu0 0.0
    %2815 = vmatprep.subr.mxu0 0.0
    %2816 = vmatpush1.xpose.msra.mxu0 0.0
    %2817 = vmatprep.subr.mxu0 0.0
    %2818 = vmatpush1.xpose.msra.mxu0 0.0
    %2819 = vmatprep.mubr.f32.mxu0 0.0
    %2820 = vmatmul.mubr.f32.gmra.mrb[0].mxu0 %v2749
    %v2821 = vpop.f32.mrb[0].mxu0
    %v2822 = vadd.f32 0.0, %v2821
    %v2823 = vpop.f32.mrb[0].mxu0
    %2824 = vdwg.mxu0
    %v2825 = vmul.f32 %v2822, 0.17677669
    %v2826 = vsel %vm2306, %v2825, -1e+09
    %v2827 = vsel %vm2308, %v2826, -inf
    %2828 = vmax.xlane.f32.xlu0 %v2827
    %v2829 = vpop.xlane.xlu0 %2828
    %v2830 = vsub.f32 %v2826, %v2829
    %v2831 = vmul.f32 %v2830, 1.442695
    %v2832 = vpow.pop %v2831
    %v2833 = vsel %vm2308, %v2832, 0.0
    %2834 = vadd.xlane.f32.xlu0 %v2833
    %v2835 = vpop.xlane.xlu0 %2834
    %v2836 = vrcp.pop %v2835
    %v2837 = vmul.f32 %v2832, %v2836
    %2838 = vrot.lane.b32.xlu0 %v2200, 32
    %v2839 = vpop.permute.xlu0 %2838
    %2840 = vrot.lane.b32.xlu0 %v2206, 32
    %v2841 = vpop.permute.xlu0 %2840
    %v2845 = vsel %vm2308, %v2837, 0
    %2847 = vmatprep.subr.mxu0 0.0
    %2848 = vmatpush1.msra.mxu0 %v2839
    %2849 = vmatprep.subr.mxu0 0.0
    %2850 = vmatpush1.msra.mxu0 %v2841
    %2851 = vmatprep.subr.mxu0 0.0
    %2852 = vmatpush1.msra.mxu0 0.0
    %2853 = vmatprep.subr.mxu0 0.0
    %2854 = vmatpush1.msra.mxu0 0.0
    %2855 = vmatprep.subr.mxu0 0.0
    %2856 = vmatpush1.msra.mxu0 0.0
    %2857 = vmatprep.subr.mxu0 0.0
    %2858 = vmatpush1.msra.mxu0 0.0
    %2859 = vmatprep.subr.mxu0 0.0
    %2860 = vmatpush1.msra.mxu0 0.0
    %2861 = vmatprep.subr.mxu0 0.0
    %2862 = vmatpush1.msra.mxu0 0.0
    %2863 = vmatprep.subr.mxu0 0.0
    %2864 = vmatpush1.msra.mxu0 0.0
    %2865 = vmatprep.subr.mxu0 0.0
    %2866 = vmatpush1.msra.mxu0 0.0
    %2867 = vmatprep.subr.mxu0 0.0
    %2868 = vmatpush1.msra.mxu0 0.0
    %2869 = vmatprep.subr.mxu0 0.0
    %2870 = vmatpush1.msra.mxu0 0.0
    %2871 = vmatprep.subr.mxu0 0.0
    %2872 = vmatpush1.msra.mxu0 0.0
    %2873 = vmatprep.subr.mxu0 0.0
    %2874 = vmatpush1.msra.mxu0 0.0
    %2875 = vmatprep.subr.mxu0 0.0
    %2876 = vmatpush1.msra.mxu0 0.0
    %2877 = vmatprep.subr.mxu0 0.0
    %2878 = vmatpush1.msra.mxu0 0.0
    %2879 = vmatprep.subr.mxu0 0.0
    %2880 = vmatpush1.msra.mxu0 0.0
    %2881 = vmatprep.subr.mxu0 0.0
    %2882 = vmatpush1.msra.mxu0 0.0
    %2883 = vmatprep.subr.mxu0 0.0
    %2884 = vmatpush1.msra.mxu0 0.0
    %2885 = vmatprep.subr.mxu0 0.0
    %2886 = vmatpush1.msra.mxu0 0.0
    %2887 = vmatprep.subr.mxu0 0.0
    %2888 = vmatpush1.msra.mxu0 0.0
    %2889 = vmatprep.subr.mxu0 0.0
    %2890 = vmatpush1.msra.mxu0 0.0
    %2891 = vmatprep.subr.mxu0 0.0
    %2892 = vmatpush1.msra.mxu0 0.0
    %2893 = vmatprep.subr.mxu0 0.0
    %2894 = vmatpush1.msra.mxu0 0.0
    %2895 = vmatprep.subr.mxu0 0.0
    %2896 = vmatpush1.msra.mxu0 0.0
    %2897 = vmatprep.subr.mxu0 0.0
    %2898 = vmatpush1.msra.mxu0 0.0
    %2899 = vmatprep.subr.mxu0 0.0
    %2900 = vmatpush1.msra.mxu0 0.0
    %2901 = vmatprep.subr.mxu0 0.0
    %2902 = vmatpush1.msra.mxu0 0.0
    %2903 = vmatprep.subr.mxu0 0.0
    %2904 = vmatpush1.msra.mxu0 0.0
    %2905 = vmatprep.subr.mxu0 0.0
    %2906 = vmatpush1.msra.mxu0 0.0
    %2907 = vmatprep.subr.mxu0 0.0
    %2908 = vmatpush1.msra.mxu0 0.0
    %2909 = vmatprep.subr.mxu0 0.0
    %2910 = vmatpush1.msra.mxu0 0.0
    %2911 = vmatprep.mubr.f32.mxu0 0.0
    %2912 = vmatmul.mubr.f32.gmra.mrb[0].mxu0 %v2845
    %v2913 = vpop.f32.mrb[0].mxu0
    %v2914 = vadd.f32 0.0, %v2913
    %v2915 = vpop.f32.mrb[0].mxu0
    %2916 = vdwg.mxu0
    %2918 = vrot.lane.b32.xlu0 %v2566, 32
    %v2919 = vpop.permute.xlu0 %2918
    %2922 = vrot.lane.b32.xlu0 %v2740, 64
    %v2923 = vpop.permute.xlu0 %2922
    %2926 = vrot.lane.b32.xlu0 %v2914, 96
    %v2927 = vpop.permute.xlu0 %2926
    %v2929 = vsel %vm486, %v2390, %v2919
    %v2930 = vsel %vm1165, %v2929, %v2923
    %v2931 = vsel %vm1167, %v2930, %v2927
    %v2933 = vsel %vm486, %v2084, 0
    %v2936 = vsel %vm486, %v2210, 0
    %v2939 = vsel %vm486, %v2216, 0
    %2941 = vmatprep.subr.mxu0 0.0
    %2942 = vmatpush1.xpose.msra.mxu0 %v2936
    %2943 = vmatprep.subr.mxu0 0.0
    %2944 = vmatpush1.xpose.msra.mxu0 %v2939
    %2945 = vmatprep.subr.mxu0 0.0
    %2946 = vmatpush1.xpose.msra.mxu0 0.0
    %2947 = vmatprep.subr.mxu0 0.0
    %2948 = vmatpush1.xpose.msra.mxu0 0.0
    %2949 = vmatprep.subr.mxu0 0.0
    %2950 = vmatpush1.xpose.msra.mxu0 0.0
    %2951 = vmatprep.subr.mxu0 0.0
    %2952 = vmatpush1.xpose.msra.mxu0 0.0
    %2953 = vmatprep.subr.mxu0 0.0
    %2954 = vmatpush1.xpose.msra.mxu0 0.0
    %2955 = vmatprep.subr.mxu0 0.0
    %2956 = vmatpush1.xpose.msra.mxu0 0.0
    %2957 = vmatprep.subr.mxu0 0.0
    %2958 = vmatpush1.xpose.msra.mxu0 0.0
    %2959 = vmatprep.subr.mxu0 0.0
    %2960 = vmatpush1.xpose.msra.mxu0 0.0
    %2961 = vmatprep.subr.mxu0 0.0
    %2962 = vmatpush1.xpose.msra.mxu0 0.0
    %2963 = vmatprep.subr.mxu0 0.0
    %2964 = vmatpush1.xpose.msra.mxu0 0.0
    %2965 = vmatprep.subr.mxu0 0.0
    %2966 = vmatpush1.xpose.msra.mxu0 0.0
    %2967 = vmatprep.subr.mxu0 0.0
    %2968 = vmatpush1.xpose.msra.mxu0 0.0
    %2969 = vmatprep.subr.mxu0 0.0
    %2970 = vmatpush1.xpose.msra.mxu0 0.0
    %2971 = vmatprep.subr.mxu0 0.0
    %2972 = vmatpush1.xpose.msra.mxu0 0.0
    %2973 = vmatprep.subr.mxu0 0.0
    %2974 = vmatpush1.xpose.msra.mxu0 0.0
    %2975 = vmatprep.subr.mxu0 0.0
    %2976 = vmatpush1.xpose.msra.mxu0 0.0
    %2977 = vmatprep.subr.mxu0 0.0
    %2978 = vmatpush1.xpose.msra.mxu0 0.0
    %2979 = vmatprep.subr.mxu0 0.0
    %2980 = vmatpush1.xpose.msra.mxu0 0.0
    %2981 = vmatprep.subr.mxu0 0.0
    %2982 = vmatpush1.xpose.msra.mxu0 0.0
    %2983 = vmatprep.subr.mxu0 0.0
    %2984 = vmatpush1.xpose.msra.mxu0 0.0
    %2985 = vmatprep.subr.mxu0 0.0
    %2986 = vmatpush1.xpose.msra.mxu0 0.0
    %2987 = vmatprep.subr.mxu0 0.0
    %2988 = vmatpush1.xpose.msra.mxu0 0.0
    %2989 = vmatprep.subr.mxu0 0.0
    %2990 = vmatpush1.xpose.msra.mxu0 0.0
    %2991 = vmatprep.subr.mxu0 0.0
    %2992 = vmatpush1.xpose.msra.mxu0 0.0
    %2993 = vmatprep.subr.mxu0 0.0
    %2994 = vmatpush1.xpose.msra.mxu0 0.0
    %2995 = vmatprep.subr.mxu0 0.0
    %2996 = vmatpush1.xpose.msra.mxu0 0.0
    %2997 = vmatprep.subr.mxu0 0.0
    %2998 = vmatpush1.xpose.msra.mxu0 0.0
    %2999 = vmatprep.subr.mxu0 0.0
    %3000 = vmatpush1.xpose.msra.mxu0 0.0
    %3001 = vmatprep.subr.mxu0 0.0
    %3002 = vmatpush1.xpose.msra.mxu0 0.0
    %3003 = vmatprep.subr.mxu0 0.0
    %3004 = vmatpush1.xpose.msra.mxu0 0.0
    %3005 = vmatprep.mubr.f32.mxu0 0.0
    %3006 = vmatmul.mubr.f32.gmra.mrb[0].mxu0 %v2933
    %v3007 = vpop.f32.mrb[0].mxu0
    %v3008 = vadd.f32 0.0, %v3007
    %v3009 = vpop.f32.mrb[0].mxu0
    %3010 = vdwg.mxu0
    %v3011 = vmul.f32 %v3008, 0.17677669
    %v3012 = vlaneseq
    %v3013 = vshrl.u32 %v3012, 7
    %v3014 = vsub.s32 1, %v3013
    %v3015 = vrot.slane %v2301, %v3014
    %vm3016 = vcmp.eq.s32.totalorder %v3015, 1
    %v3017 = vsel %vm3016, %v3011, -1e+09
    %v3018 = vsel %vm2308, %v3017, -inf
    %3019 = vmax.xlane.f32.xlu0 %v3018
    %v3020 = vpop.xlane.xlu0 %3019
    %v3021 = vsub.f32 %v3017, %v3020
    %v3022 = vmul.f32 %v3021, 1.442695
    %v3023 = vpow.pop %v3022
    %v3024 = vsel %vm2308, %v3023, 0.0
    %3025 = vadd.xlane.f32.xlu0 %v3024
    %v3026 = vpop.xlane.xlu0 %3025
    %v3027 = vrcp.pop %v3026
    %v3028 = vmul.f32 %v3023, %v3027
    %v3030 = vsel %vm2308, %v3028, 0
    %3032 = vmatprep.subr.mxu0 0.0
    %3033 = vmatpush1.msra.mxu0 %v2212
    %3034 = vmatprep.subr.mxu0 0.0
    %3035 = vmatpush1.msra.mxu0 %v2218
    %3036 = vmatprep.subr.mxu0 0.0
    %3037 = vmatpush1.msra.mxu0 0.0
    %3038 = vmatprep.subr.mxu0 0.0
    %3039 = vmatpush1.msra.mxu0 0.0
    %3040 = vmatprep.subr.mxu0 0.0
    %3041 = vmatpush1.msra.mxu0 0.0
    %3042 = vmatprep.subr.mxu0 0.0
    %3043 = vmatpush1.msra.mxu0 0.0
    %3044 = vmatprep.subr.mxu0 0.0
    %3045 = vmatpush1.msra.mxu0 0.0
    %3046 = vmatprep.subr.mxu0 0.0
    %3047 = vmatpush1.msra.mxu0 0.0
    %3048 = vmatprep.subr.mxu0 0.0
    %3049 = vmatpush1.msra.mxu0 0.0
    %3050 = vmatprep.subr.mxu0 0.0
    %3051 = vmatpush1.msra.mxu0 0.0
    %3052 = vmatprep.subr.mxu0 0.0
    %3053 = vmatpush1.msra.mxu0 0.0
    %3054 = vmatprep.subr.mxu0 0.0
    %3055 = vmatpush1.msra.mxu0 0.0
    %3056 = vmatprep.subr.mxu0 0.0
    %3057 = vmatpush1.msra.mxu0 0.0
    %3058 = vmatprep.subr.mxu0 0.0
    %3059 = vmatpush1.msra.mxu0 0.0
    %3060 = vmatprep.subr.mxu0 0.0
    %3061 = vmatpush1.msra.mxu0 0.0
    %3062 = vmatprep.subr.mxu0 0.0
    %3063 = vmatpush1.msra.mxu0 0.0
    %3064 = vmatprep.subr.mxu0 0.0
    %3065 = vmatpush1.msra.mxu0 0.0
    %3066 = vmatprep.subr.mxu0 0.0
    %3067 = vmatpush1.msra.mxu0 0.0
    %3068 = vmatprep.subr.mxu0 0.0
    %3069 = vmatpush1.msra.mxu0 0.0
    %3070 = vmatprep.subr.mxu0 0.0
    %3071 = vmatpush1.msra.mxu0 0.0
    %3072 = vmatprep.subr.mxu0 0.0
    %3073 = vmatpush1.msra.mxu0 0.0
    %3074 = vmatprep.subr.mxu0 0.0
    %3075 = vmatpush1.msra.mxu0 0.0
    %3076 = vmatprep.subr.mxu0 0.0
    %3077 = vmatpush1.msra.mxu0 0.0
    %3078 = vmatprep.subr.mxu0 0.0
    %3079 = vmatpush1.msra.mxu0 0.0
    %3080 = vmatprep.subr.mxu0 0.0
    %3081 = vmatpush1.msra.mxu0 0.0
    %3082 = vmatprep.subr.mxu0 0.0
    %3083 = vmatpush1.msra.mxu0 0.0
    %3084 = vmatprep.subr.mxu0 0.0
    %3085 = vmatpush1.msra.mxu0 0.0
    %3086 = vmatprep.subr.mxu0 0.0
    %3087 = vmatpush1.msra.mxu0 0.0
    %3088 = vmatprep.subr.mxu0 0.0
    %3089 = vmatpush1.msra.mxu0 0.0
    %3090 = vmatprep.subr.mxu0 0.0
    %3091 = vmatpush1.msra.mxu0 0.0
    %3092 = vmatprep.subr.mxu0 0.0
    %3093 = vmatpush1.msra.mxu0 0.0
    %3094 = vmatprep.subr.mxu0 0.0
    %3095 = vmatpush1.msra.mxu0 0.0
    %3096 = vmatprep.mubr.f32.mxu0 0.0
    %3097 = vmatmul.mubr.f32.gmra.mrb[0].mxu0 %v3030
    %v3098 = vpop.f32.mrb[0].mxu0
    %v3099 = vadd.f32 0.0, %v3098
    %v3100 = vpop.f32.mrb[0].mxu0
    %3101 = vdwg.mxu0
    %3102 = vrot.lane.b32.xlu0 %v2084, 96
    %v3103 = vpop.permute.xlu0 %3102
    %3104 = vrot.lane.b32.xlu0 %v2210, 96
    %v3105 = vpop.permute.xlu0 %3104
    %3106 = vrot.lane.b32.xlu0 %v2216, 96
    %v3107 = vpop.permute.xlu0 %3106
    %v3108 = vsel %vm486, %v3103, 0
    %v3110 = vsel %vm486, %v3105, 0
    %v3112 = vsel %vm486, %v3107, 0
    %3114 = vmatprep.subr.mxu0 0.0
    %3115 = vmatpush1.xpose.msra.mxu0 %v3110
    %3116 = vmatprep.subr.mxu0 0.0
    %3117 = vmatpush1.xpose.msra.mxu0 %v3112
    %3118 = vmatprep.subr.mxu0 0.0
    %3119 = vmatpush1.xpose.msra.mxu0 0.0
    %3120 = vmatprep.subr.mxu0 0.0
    %3121 = vmatpush1.xpose.msra.mxu0 0.0
    %3122 = vmatprep.subr.mxu0 0.0
    %3123 = vmatpush1.xpose.msra.mxu0 0.0
    %3124 = vmatprep.subr.mxu0 0.0
    %3125 = vmatpush1.xpose.msra.mxu0 0.0
    %3126 = vmatprep.subr.mxu0 0.0
    %3127 = vmatpush1.xpose.msra.mxu0 0.0
    %3128 = vmatprep.subr.mxu0 0.0
    %3129 = vmatpush1.xpose.msra.mxu0 0.0
    %3130 = vmatprep.subr.mxu0 0.0
    %3131 = vmatpush1.xpose.msra.mxu0 0.0
    %3132 = vmatprep.subr.mxu0 0.0
    %3133 = vmatpush1.xpose.msra.mxu0 0.0
    %3134 = vmatprep.subr.mxu0 0.0
    %3135 = vmatpush1.xpose.msra.mxu0 0.0
    %3136 = vmatprep.subr.mxu0 0.0
    %3137 = vmatpush1.xpose.msra.mxu0 0.0
    %3138 = vmatprep.subr.mxu0 0.0
    %3139 = vmatpush1.xpose.msra.mxu0 0.0
    %3140 = vmatprep.subr.mxu0 0.0
    %3141 = vmatpush1.xpose.msra.mxu0 0.0
    %3142 = vmatprep.subr.mxu0 0.0
    %3143 = vmatpush1.xpose.msra.mxu0 0.0
    %3144 = vmatprep.subr.mxu0 0.0
    %3145 = vmatpush1.xpose.msra.mxu0 0.0
    %3146 = vmatprep.subr.mxu0 0.0
    %3147 = vmatpush1.xpose.msra.mxu0 0.0
    %3148 = vmatprep.subr.mxu0 0.0
    %3149 = vmatpush1.xpose.msra.mxu0 0.0
    %3150 = vmatprep.subr.mxu0 0.0
    %3151 = vmatpush1.xpose.msra.mxu0 0.0
    %3152 = vmatprep.subr.mxu0 0.0
    %3153 = vmatpush1.xpose.msra.mxu0 0.0
    %3154 = vmatprep.subr.mxu0 0.0
    %3155 = vmatpush1.xpose.msra.mxu0 0.0
    %3156 = vmatprep.subr.mxu0 0.0
    %3157 = vmatpush1.xpose.msra.mxu0 0.0
    %3158 = vmatprep.subr.mxu0 0.0
    %3159 = vmatpush1.xpose.msra.mxu0 0.0
    %3160 = vmatprep.subr.mxu0 0.0
    %3161 = vmatpush1.xpose.msra.mxu0 0.0
    %3162 = vmatprep.subr.mxu0 0.0
    %3163 = vmatpush1.xpose.msra.mxu0 0.0
    %3164 = vmatprep.subr.mxu0 0.0
    %3165 = vmatpush1.xpose.msra.mxu0 0.0
    %3166 = vmatprep.subr.mxu0 0.0
    %3167 = vmatpush1.xpose.msra.mxu0 0.0
    %3168 = vmatprep.subr.mxu0 0.0
    %3169 = vmatpush1.xpose.msra.mxu0 0.0
    %3170 = vmatprep.subr.mxu0 0.0
    %3171 = vmatpush1.xpose.msra.mxu0 0.0
    %3172 = vmatprep.subr.mxu0 0.0
    %3173 = vmatpush1.xpose.msra.mxu0 0.0
    %3174 = vmatprep.subr.mxu0 0.0
    %3175 = vmatpush1.xpose.msra.mxu0 0.0
    %3176 = vmatprep.subr.mxu0 0.0
    %3177 = vmatpush1.xpose.msra.mxu0 0.0
    %3178 = vmatprep.mubr.f32.mxu0 0.0
    %3179 = vmatmul.mubr.f32.gmra.mrb[0].mxu0 %v3108
    %v3180 = vpop.f32.mrb[0].mxu0
    %v3181 = vadd.f32 0.0, %v3180
    %v3182 = vpop.f32.mrb[0].mxu0
    %3183 = vdwg.mxu0
    %v3184 = vmul.f32 %v3181, 0.17677669
    %v3185 = vsel %vm3016, %v3184, -1e+09
    %v3186 = vsel %vm2308, %v3185, -inf
    %3187 = vmax.xlane.f32.xlu0 %v3186
    %v3188 = vpop.xlane.xlu0 %3187
    %v3189 = vsub.f32 %v3185, %v3188
    %v3190 = vmul.f32 %v3189, 1.442695
    %v3191 = vpow.pop %v3190
    %v3192 = vsel %vm2308, %v3191, 0.0
    %3193 = vadd.xlane.f32.xlu0 %v3192
    %v3194 = vpop.xlane.xlu0 %3193
    %v3195 = vrcp.pop %v3194
    %v3196 = vmul.f32 %v3191, %v3195
    %3199 = vrot.lane.b32.xlu0 %v2212, 96
    %v3200 = vpop.permute.xlu0 %3199
    %3201 = vrot.lane.b32.xlu0 %v2218, 96
    %v3202 = vpop.permute.xlu0 %3201
    %v3206 = vsel %vm2308, %v3196, 0
    %3208 = vmatprep.subr.mxu0 0.0
    %3209 = vmatpush1.msra.mxu0 %v3200
    %3210 = vmatprep.subr.mxu0 0.0
    %3211 = vmatpush1.msra.mxu0 %v3202
    %3212 = vmatprep.subr.mxu0 0.0
    %3213 = vmatpush1.msra.mxu0 0.0
    %3214 = vmatprep.subr.mxu0 0.0
    %3215 = vmatpush1.msra.mxu0 0.0
    %3216 = vmatprep.subr.mxu0 0.0
    %3217 = vmatpush1.msra.mxu0 0.0
    %3218 = vmatprep.subr.mxu0 0.0
    %3219 = vmatpush1.msra.mxu0 0.0
    %3220 = vmatprep.subr.mxu0 0.0
    %3221 = vmatpush1.msra.mxu0 0.0
    %3222 = vmatprep.subr.mxu0 0.0
    %3223 = vmatpush1.msra.mxu0 0.0
    %3224 = vmatprep.subr.mxu0 0.0
    %3225 = vmatpush1.msra.mxu0 0.0
    %3226 = vmatprep.subr.mxu0 0.0
    %3227 = vmatpush1.msra.mxu0 0.0
    %3228 = vmatprep.subr.mxu0 0.0
    %3229 = vmatpush1.msra.mxu0 0.0
    %3230 = vmatprep.subr.mxu0 0.0
    %3231 = vmatpush1.msra.mxu0 0.0
    %3232 = vmatprep.subr.mxu0 0.0
    %3233 = vmatpush1.msra.mxu0 0.0
    %3234 = vmatprep.subr.mxu0 0.0
    %3235 = vmatpush1.msra.mxu0 0.0
    %3236 = vmatprep.subr.mxu0 0.0
    %3237 = vmatpush1.msra.mxu0 0.0
    %3238 = vmatprep.subr.mxu0 0.0
    %3239 = vmatpush1.msra.mxu0 0.0
    %3240 = vmatprep.subr.mxu0 0.0
    %3241 = vmatpush1.msra.mxu0 0.0
    %3242 = vmatprep.subr.mxu0 0.0
    %3243 = vmatpush1.msra.mxu0 0.0
    %3244 = vmatprep.subr.mxu0 0.0
    %3245 = vmatpush1.msra.mxu0 0.0
    %3246 = vmatprep.subr.mxu0 0.0
    %3247 = vmatpush1.msra.mxu0 0.0
    %3248 = vmatprep.subr.mxu0 0.0
    %3249 = vmatpush1.msra.mxu0 0.0
    %3250 = vmatprep.subr.mxu0 0.0
    %3251 = vmatpush1.msra.mxu0 0.0
    %3252 = vmatprep.subr.mxu0 0.0
    %3253 = vmatpush1.msra.mxu0 0.0
    %3254 = vmatprep.subr.mxu0 0.0
    %3255 = vmatpush1.msra.mxu0 0.0
    %3256 = vmatprep.subr.mxu0 0.0
    %3257 = vmatpush1.msra.mxu0 0.0
    %3258 = vmatprep.subr.mxu0 0.0
    %3259 = vmatpush1.msra.mxu0 0.0
    %3260 = vmatprep.subr.mxu0 0.0
    %3261 = vmatpush1.msra.mxu0 0.0
    %3262 = vmatprep.subr.mxu0 0.0
    %3263 = vmatpush1.msra.mxu0 0.0
    %3264 = vmatprep.subr.mxu0 0.0
    %3265 = vmatpush1.msra.mxu0 0.0
    %3266 = vmatprep.subr.mxu0 0.0
    %3267 = vmatpush1.msra.mxu0 0.0
    %3268 = vmatprep.subr.mxu0 0.0
    %3269 = vmatpush1.msra.mxu0 0.0
    %3270 = vmatprep.subr.mxu0 0.0
    %3271 = vmatpush1.msra.mxu0 0.0
    %3272 = vmatprep.mubr.f32.mxu0 0.0
    %3273 = vmatmul.mubr.f32.gmra.mrb[0].mxu0 %v3206
    %v3274 = vpop.f32.mrb[0].mxu0
    %v3275 = vadd.f32 0.0, %v3274
    %v3276 = vpop.f32.mrb[0].mxu0
    %3277 = vdwg.mxu0
    %3278 = vrot.lane.b32.xlu0 %v2084, 64
    %v3279 = vpop.permute.xlu0 %3278
    %3280 = vrot.lane.b32.xlu0 %v2210, 64
    %v3281 = vpop.permute.xlu0 %3280
    %3282 = vrot.lane.b32.xlu0 %v2216, 64
    %v3283 = vpop.permute.xlu0 %3282
    %v3284 = vsel %vm486, %v3279, 0
    %v3286 = vsel %vm486, %v3281, 0
    %v3288 = vsel %vm486, %v3283, 0
    %3290 = vmatprep.subr.mxu0 0.0
    %3291 = vmatpush1.xpose.msra.mxu0 %v3286
    %3292 = vmatprep.subr.mxu0 0.0
    %3293 = vmatpush1.xpose.msra.mxu0 %v3288
    %3294 = vmatprep.subr.mxu0 0.0
    %3295 = vmatpush1.xpose.msra.mxu0 0.0
    %3296 = vmatprep.subr.mxu0 0.0
    %3297 = vmatpush1.xpose.msra.mxu0 0.0
    %3298 = vmatprep.subr.mxu0 0.0
    %3299 = vmatpush1.xpose.msra.mxu0 0.0
    %3300 = vmatprep.subr.mxu0 0.0
    %3301 = vmatpush1.xpose.msra.mxu0 0.0
    %3302 = vmatprep.subr.mxu0 0.0
    %3303 = vmatpush1.xpose.msra.mxu0 0.0
    %3304 = vmatprep.subr.mxu0 0.0
    %3305 = vmatpush1.xpose.msra.mxu0 0.0
    %3306 = vmatprep.subr.mxu0 0.0
    %3307 = vmatpush1.xpose.msra.mxu0 0.0
    %3308 = vmatprep.subr.mxu0 0.0
    %3309 = vmatpush1.xpose.msra.mxu0 0.0
    %3310 = vmatprep.subr.mxu0 0.0
    %3311 = vmatpush1.xpose.msra.mxu0 0.0
    %3312 = vmatprep.subr.mxu0 0.0
    %3313 = vmatpush1.xpose.msra.mxu0 0.0
    %3314 = vmatprep.subr.mxu0 0.0
    %3315 = vmatpush1.xpose.msra.mxu0 0.0
    %3316 = vmatprep.subr.mxu0 0.0
    %3317 = vmatpush1.xpose.msra.mxu0 0.0
    %3318 = vmatprep.subr.mxu0 0.0
    %3319 = vmatpush1.xpose.msra.mxu0 0.0
    %3320 = vmatprep.subr.mxu0 0.0
    %3321 = vmatpush1.xpose.msra.mxu0 0.0
    %3322 = vmatprep.subr.mxu0 0.0
    %3323 = vmatpush1.xpose.msra.mxu0 0.0
    %3324 = vmatprep.subr.mxu0 0.0
    %3325 = vmatpush1.xpose.msra.mxu0 0.0
    %3326 = vmatprep.subr.mxu0 0.0
    %3327 = vmatpush1.xpose.msra.mxu0 0.0
    %3328 = vmatprep.subr.mxu0 0.0
    %3329 = vmatpush1.xpose.msra.mxu0 0.0
    %3330 = vmatprep.subr.mxu0 0.0
    %3331 = vmatpush1.xpose.msra.mxu0 0.0
    %3332 = vmatprep.subr.mxu0 0.0
    %3333 = vmatpush1.xpose.msra.mxu0 0.0
    %3334 = vmatprep.subr.mxu0 0.0
    %3335 = vmatpush1.xpose.msra.mxu0 0.0
    %3336 = vmatprep.subr.mxu0 0.0
    %3337 = vmatpush1.xpose.msra.mxu0 0.0
    %3338 = vmatprep.subr.mxu0 0.0
    %3339 = vmatpush1.xpose.msra.mxu0 0.0
    %3340 = vmatprep.subr.mxu0 0.0
    %3341 = vmatpush1.xpose.msra.mxu0 0.0
    %3342 = vmatprep.subr.mxu0 0.0
    %3343 = vmatpush1.xpose.msra.mxu0 0.0
    %3344 = vmatprep.subr.mxu0 0.0
    %3345 = vmatpush1.xpose.msra.mxu0 0.0
    %3346 = vmatprep.subr.mxu0 0.0
    %3347 = vmatpush1.xpose.msra.mxu0 0.0
    %3348 = vmatprep.subr.mxu0 0.0
    %3349 = vmatpush1.xpose.msra.mxu0 0.0
    %3350 = vmatprep.subr.mxu0 0.0
    %3351 = vmatpush1.xpose.msra.mxu0 0.0
    %3352 = vmatprep.subr.mxu0 0.0
    %3353 = vmatpush1.xpose.msra.mxu0 0.0
    %3354 = vmatprep.mubr.f32.mxu0 0.0
    %3355 = vmatmul.mubr.f32.gmra.mrb[0].mxu0 %v3284
    %v3356 = vpop.f32.mrb[0].mxu0
    %v3357 = vadd.f32 0.0, %v3356
    %v3358 = vpop.f32.mrb[0].mxu0
    %3359 = vdwg.mxu0
    %v3360 = vmul.f32 %v3357, 0.17677669
    %v3361 = vsel %vm3016, %v3360, -1e+09
    %v3362 = vsel %vm2308, %v3361, -inf
    %3363 = vmax.xlane.f32.xlu0 %v3362
    %v3364 = vpop.xlane.xlu0 %3363
    %v3365 = vsub.f32 %v3361, %v3364
    %v3366 = vmul.f32 %v3365, 1.442695
    %v3367 = vpow.pop %v3366
    %v3368 = vsel %vm2308, %v3367, 0.0
    %3369 = vadd.xlane.f32.xlu0 %v3368
    %v3370 = vpop.xlane.xlu0 %3369
    %v3371 = vrcp.pop %v3370
    %v3372 = vmul.f32 %v3367, %v3371
    %3373 = vrot.lane.b32.xlu0 %v2212, 64
    %v3374 = vpop.permute.xlu0 %3373
    %3375 = vrot.lane.b32.xlu0 %v2218, 64
    %v3376 = vpop.permute.xlu0 %3375
    %v3380 = vsel %vm2308, %v3372, 0
    %3382 = vmatprep.subr.mxu0 0.0
    %3383 = vmatpush1.msra.mxu0 %v3374
    %3384 = vmatprep.subr.mxu0 0.0
    %3385 = vmatpush1.msra.mxu0 %v3376
    %3386 = vmatprep.subr.mxu0 0.0
    %3387 = vmatpush1.msra.mxu0 0.0
    %3388 = vmatprep.subr.mxu0 0.0
    %3389 = vmatpush1.msra.mxu0 0.0
    %3390 = vmatprep.subr.mxu0 0.0
    %3391 = vmatpush1.msra.mxu0 0.0
    %3392 = vmatprep.subr.mxu0 0.0
    %3393 = vmatpush1.msra.mxu0 0.0
    %3394 = vmatprep.subr.mxu0 0.0
    %3395 = vmatpush1.msra.mxu0 0.0
    %3396 = vmatprep.subr.mxu0 0.0
    %3397 = vmatpush1.msra.mxu0 0.0
    %3398 = vmatprep.subr.mxu0 0.0
    %3399 = vmatpush1.msra.mxu0 0.0
    %3400 = vmatprep.subr.mxu0 0.0
    %3401 = vmatpush1.msra.mxu0 0.0
    %3402 = vmatprep.subr.mxu0 0.0
    %3403 = vmatpush1.msra.mxu0 0.0
    %3404 = vmatprep.subr.mxu0 0.0
    %3405 = vmatpush1.msra.mxu0 0.0
    %3406 = vmatprep.subr.mxu0 0.0
    %3407 = vmatpush1.msra.mxu0 0.0
    %3408 = vmatprep.subr.mxu0 0.0
    %3409 = vmatpush1.msra.mxu0 0.0
    %3410 = vmatprep.subr.mxu0 0.0
    %3411 = vmatpush1.msra.mxu0 0.0
    %3412 = vmatprep.subr.mxu0 0.0
    %3413 = vmatpush1.msra.mxu0 0.0
    %3414 = vmatprep.subr.mxu0 0.0
    %3415 = vmatpush1.msra.mxu0 0.0
    %3416 = vmatprep.subr.mxu0 0.0
    %3417 = vmatpush1.msra.mxu0 0.0
    %3418 = vmatprep.subr.mxu0 0.0
    %3419 = vmatpush1.msra.mxu0 0.0
    %3420 = vmatprep.subr.mxu0 0.0
    %3421 = vmatpush1.msra.mxu0 0.0
    %3422 = vmatprep.subr.mxu0 0.0
    %3423 = vmatpush1.msra.mxu0 0.0
    %3424 = vmatprep.subr.mxu0 0.0
    %3425 = vmatpush1.msra.mxu0 0.0
    %3426 = vmatprep.subr.mxu0 0.0
    %3427 = vmatpush1.msra.mxu0 0.0
    %3428 = vmatprep.subr.mxu0 0.0
    %3429 = vmatpush1.msra.mxu0 0.0
    %3430 = vmatprep.subr.mxu0 0.0
    %3431 = vmatpush1.msra.mxu0 0.0
    %3432 = vmatprep.subr.mxu0 0.0
    %3433 = vmatpush1.msra.mxu0 0.0
    %3434 = vmatprep.subr.mxu0 0.0
    %3435 = vmatpush1.msra.mxu0 0.0
    %3436 = vmatprep.subr.mxu0 0.0
    %3437 = vmatpush1.msra.mxu0 0.0
    %3438 = vmatprep.subr.mxu0 0.0
    %3439 = vmatpush1.msra.mxu0 0.0
    %3440 = vmatprep.subr.mxu0 0.0
    %3441 = vmatpush1.msra.mxu0 0.0
    %3442 = vmatprep.subr.mxu0 0.0
    %3443 = vmatpush1.msra.mxu0 0.0
    %3444 = vmatprep.subr.mxu0 0.0
    %3445 = vmatpush1.msra.mxu0 0.0
    %3446 = vmatprep.mubr.f32.mxu0 0.0
    %3447 = vmatmul.mubr.f32.gmra.mrb[0].mxu0 %v3380
    %v3448 = vpop.f32.mrb[0].mxu0
    %v3449 = vadd.f32 0.0, %v3448
    %v3450 = vpop.f32.mrb[0].mxu0
    %3451 = vdwg.mxu0
    %3452 = vrot.lane.b32.xlu0 %v2084, 32
    %v3453 = vpop.permute.xlu0 %3452
    %3454 = vrot.lane.b32.xlu0 %v2210, 32
    %v3455 = vpop.permute.xlu0 %3454
    %3456 = vrot.lane.b32.xlu0 %v2216, 32
    %v3457 = vpop.permute.xlu0 %3456
    %v3458 = vsel %vm486, %v3453, 0
    %v3460 = vsel %vm486, %v3455, 0
    %v3462 = vsel %vm486, %v3457, 0
    %3464 = vmatprep.subr.mxu0 0.0
    %3465 = vmatpush1.xpose.msra.mxu0 %v3460
    %3466 = vmatprep.subr.mxu0 0.0
    %3467 = vmatpush1.xpose.msra.mxu0 %v3462
    %3468 = vmatprep.subr.mxu0 0.0
    %3469 = vmatpush1.xpose.msra.mxu0 0.0
    %3470 = vmatprep.subr.mxu0 0.0
    %3471 = vmatpush1.xpose.msra.mxu0 0.0
    %3472 = vmatprep.subr.mxu0 0.0
    %3473 = vmatpush1.xpose.msra.mxu0 0.0
    %3474 = vmatprep.subr.mxu0 0.0
    %3475 = vmatpush1.xpose.msra.mxu0 0.0
    %3476 = vmatprep.subr.mxu0 0.0
    %3477 = vmatpush1.xpose.msra.mxu0 0.0
    %3478 = vmatprep.subr.mxu0 0.0
    %3479 = vmatpush1.xpose.msra.mxu0 0.0
    %3480 = vmatprep.subr.mxu0 0.0
    %3481 = vmatpush1.xpose.msra.mxu0 0.0
    %3482 = vmatprep.subr.mxu0 0.0
    %3483 = vmatpush1.xpose.msra.mxu0 0.0
    %3484 = vmatprep.subr.mxu0 0.0
    %3485 = vmatpush1.xpose.msra.mxu0 0.0
    %3486 = vmatprep.subr.mxu0 0.0
    %3487 = vmatpush1.xpose.msra.mxu0 0.0
    %3488 = vmatprep.subr.mxu0 0.0
    %3489 = vmatpush1.xpose.msra.mxu0 0.0
    %3490 = vmatprep.subr.mxu0 0.0
    %3491 = vmatpush1.xpose.msra.mxu0 0.0
    %3492 = vmatprep.subr.mxu0 0.0
    %3493 = vmatpush1.xpose.msra.mxu0 0.0
    %3494 = vmatprep.subr.mxu0 0.0
    %3495 = vmatpush1.xpose.msra.mxu0 0.0
    %3496 = vmatprep.subr.mxu0 0.0
    %3497 = vmatpush1.xpose.msra.mxu0 0.0
    %3498 = vmatprep.subr.mxu0 0.0
    %3499 = vmatpush1.xpose.msra.mxu0 0.0
    %3500 = vmatprep.subr.mxu0 0.0
    %3501 = vmatpush1.xpose.msra.mxu0 0.0
    %3502 = vmatprep.subr.mxu0 0.0
    %3503 = vmatpush1.xpose.msra.mxu0 0.0
    %3504 = vmatprep.subr.mxu0 0.0
    %3505 = vmatpush1.xpose.msra.mxu0 0.0
    %3506 = vmatprep.subr.mxu0 0.0
    %3507 = vmatpush1.xpose.msra.mxu0 0.0
    %3508 = vmatprep.subr.mxu0 0.0
    %3509 = vmatpush1.xpose.msra.mxu0 0.0
    %3510 = vmatprep.subr.mxu0 0.0
    %3511 = vmatpush1.xpose.msra.mxu0 0.0
    %3512 = vmatprep.subr.mxu0 0.0
    %3513 = vmatpush1.xpose.msra.mxu0 0.0
    %3514 = vmatprep.subr.mxu0 0.0
    %3515 = vmatpush1.xpose.msra.mxu0 0.0
    %3516 = vmatprep.subr.mxu0 0.0
    %3517 = vmatpush1.xpose.msra.mxu0 0.0
    %3518 = vmatprep.subr.mxu0 0.0
    %3519 = vmatpush1.xpose.msra.mxu0 0.0
    %3520 = vmatprep.subr.mxu0 0.0
    %3521 = vmatpush1.xpose.msra.mxu0 0.0
    %3522 = vmatprep.subr.mxu0 0.0
    %3523 = vmatpush1.xpose.msra.mxu0 0.0
    %3524 = vmatprep.subr.mxu0 0.0
    %3525 = vmatpush1.xpose.msra.mxu0 0.0
    %3526 = vmatprep.subr.mxu0 0.0
    %3527 = vmatpush1.xpose.msra.mxu0 0.0
    %3528 = vmatprep.mubr.f32.mxu0 0.0
    %3529 = vmatmul.mubr.f32.gmra.mrb[0].mxu0 %v3458
    %v3530 = vpop.f32.mrb[0].mxu0
    %v3531 = vadd.f32 0.0, %v3530
    %v3532 = vpop.f32.mrb[0].mxu0
    %3533 = vdwg.mxu0
    %v3534 = vmul.f32 %v3531, 0.17677669
    %v3535 = vsel %vm3016, %v3534, -1e+09
    %v3536 = vsel %vm2308, %v3535, -inf
    %3537 = vmax.xlane.f32.xlu0 %v3536
    %v3538 = vpop.xlane.xlu0 %3537
    %v3539 = vsub.f32 %v3535, %v3538
    %v3540 = vmul.f32 %v3539, 1.442695
    %v3541 = vpow.pop %v3540
    %v3542 = vsel %vm2308, %v3541, 0.0
    %3543 = vadd.xlane.f32.xlu0 %v3542
    %v3544 = vpop.xlane.xlu0 %3543
    %v3545 = vrcp.pop %v3544
    %v3546 = vmul.f32 %v3541, %v3545
    %3547 = vrot.lane.b32.xlu0 %v2212, 32
    %v3548 = vpop.permute.xlu0 %3547
    %3549 = vrot.lane.b32.xlu0 %v2218, 32
    %v3550 = vpop.permute.xlu0 %3549
    %v3554 = vsel %vm2308, %v3546, 0
    %3556 = vmatprep.subr.mxu0 0.0
    %3557 = vmatpush1.msra.mxu0 %v3548
    %3558 = vmatprep.subr.mxu0 0.0
    %3559 = vmatpush1.msra.mxu0 %v3550
    %3560 = vmatprep.subr.mxu0 0.0
    %3561 = vmatpush1.msra.mxu0 0.0
    %3562 = vmatprep.subr.mxu0 0.0
    %3563 = vmatpush1.msra.mxu0 0.0
    %3564 = vmatprep.subr.mxu0 0.0
    %3565 = vmatpush1.msra.mxu0 0.0
    %3566 = vmatprep.subr.mxu0 0.0
    %3567 = vmatpush1.msra.mxu0 0.0
    %3568 = vmatprep.subr.mxu0 0.0
    %3569 = vmatpush1.msra.mxu0 0.0
    %3570 = vmatprep.subr.mxu0 0.0
    %3571 = vmatpush1.msra.mxu0 0.0
    %3572 = vmatprep.subr.mxu0 0.0
    %3573 = vmatpush1.msra.mxu0 0.0
    %3574 = vmatprep.subr.mxu0 0.0
    %3575 = vmatpush1.msra.mxu0 0.0
    %3576 = vmatprep.subr.mxu0 0.0
    %3577 = vmatpush1.msra.mxu0 0.0
    %3578 = vmatprep.subr.mxu0 0.0
    %3579 = vmatpush1.msra.mxu0 0.0
    %3580 = vmatprep.subr.mxu0 0.0
    %3581 = vmatpush1.msra.mxu0 0.0
    %3582 = vmatprep.subr.mxu0 0.0
    %3583 = vmatpush1.msra.mxu0 0.0
    %3584 = vmatprep.subr.mxu0 0.0
    %3585 = vmatpush1.msra.mxu0 0.0
    %3586 = vmatprep.subr.mxu0 0.0
    %3587 = vmatpush1.msra.mxu0 0.0
    %3588 = vmatprep.subr.mxu0 0.0
    %3589 = vmatpush1.msra.mxu0 0.0
    %3590 = vmatprep.subr.mxu0 0.0
    %3591 = vmatpush1.msra.mxu0 0.0
    %3592 = vmatprep.subr.mxu0 0.0
    %3593 = vmatpush1.msra.mxu0 0.0
    %3594 = vmatprep.subr.mxu0 0.0
    %3595 = vmatpush1.msra.mxu0 0.0
    %3596 = vmatprep.subr.mxu0 0.0
    %3597 = vmatpush1.msra.mxu0 0.0
    %3598 = vmatprep.subr.mxu0 0.0
    %3599 = vmatpush1.msra.mxu0 0.0
    %3600 = vmatprep.subr.mxu0 0.0
    %3601 = vmatpush1.msra.mxu0 0.0
    %3602 = vmatprep.subr.mxu0 0.0
    %3603 = vmatpush1.msra.mxu0 0.0
    %3604 = vmatprep.subr.mxu0 0.0
    %3605 = vmatpush1.msra.mxu0 0.0
    %3606 = vmatprep.subr.mxu0 0.0
    %3607 = vmatpush1.msra.mxu0 0.0
    %3608 = vmatprep.subr.mxu0 0.0
    %3609 = vmatpush1.msra.mxu0 0.0
    %3610 = vmatprep.subr.mxu0 0.0
    %3611 = vmatpush1.msra.mxu0 0.0
    %3612 = vmatprep.subr.mxu0 0.0
    %3613 = vmatpush1.msra.mxu0 0.0
    %3614 = vmatprep.subr.mxu0 0.0
    %3615 = vmatpush1.msra.mxu0 0.0
    %3616 = vmatprep.subr.mxu0 0.0
    %3617 = vmatpush1.msra.mxu0 0.0
    %3618 = vmatprep.subr.mxu0 0.0
    %3619 = vmatpush1.msra.mxu0 0.0
    %3620 = vmatprep.mubr.f32.mxu0 0.0
    %3621 = vmatmul.mubr.f32.gmra.mrb[0].mxu0 %v3554
    %v3622 = vpop.f32.mrb[0].mxu0
    %v3623 = vadd.f32 0.0, %v3622
    %v3624 = vpop.f32.mrb[0].mxu0
    %3625 = vdwg.mxu0
    %3627 = vrot.lane.b32.xlu0 %v3275, 32
    %v3628 = vpop.permute.xlu0 %3627
    %3631 = vrot.lane.b32.xlu0 %v3449, 64
    %v3632 = vpop.permute.xlu0 %3631
    %3635 = vrot.lane.b32.xlu0 %v3623, 96
    %v3636 = vpop.permute.xlu0 %3635
    %v3638 = vsel %vm486, %v3099, %v3628
    %v3639 = vsel %vm1165, %v3638, %v3632
    %v3640 = vsel %vm1167, %v3639, %v3636
    %v3641 = vld [vmem:[#allocation8] sm:$0xff]
    %v3642 = vld [vmem:[#allocation8 + $0x8] sm:$0xff]
    %v3643 = vld [vmem:[#allocation8 + $0x10] sm:$0xff]
    %v3644 = vld [vmem:[#allocation8 + $0x18] sm:$0xff]
    %v3645 = vld [vmem:[#allocation8 + $0x20] sm:$0xff]
    %v3646 = vld [vmem:[#allocation8 + $0x28] sm:$0xff]
    %v3647 = vld [vmem:[#allocation8 + $0x30] sm:$0xff]
    %v3648 = vld [vmem:[#allocation8 + $0x38] sm:$0xff]
    %v3649 = vld [vmem:[#allocation8 + $0x40] sm:$0xff]
    %v3650 = vld [vmem:[#allocation8 + $0x48] sm:$0xff]
    %v3651 = vld [vmem:[#allocation8 + $0x50] sm:$0xff]
    %v3652 = vld [vmem:[#allocation8 + $0x58] sm:$0xff]
    %v3653 = vld [vmem:[#allocation8 + $0x60] sm:$0xff]
    %v3654 = vld [vmem:[#allocation8 + $0x68] sm:$0xff]
    %v3655 = vld [vmem:[#allocation8 + $0x70] sm:$0xff]
    %v3656 = vld [vmem:[#allocation8 + $0x78] sm:$0xff]
    %v3657 = vld [vmem:[%s13] sm:$0x1]
    %v3659 = vlaneseq
    %v3660 = vshrl.u32 %v3659, 7
    %v3661 = vsub.s32 0, %v3660
    %v3662 = vrot.slane %v3657, %v3661
    %3664 = vmatprep.subr.mxu0 0.0
    %3665 = vmatpush1.msra.mxu0 %v3641
    %3666 = vmatprep.subr.mxu0 0.0
    %3667 = vmatpush1.msra.mxu0 %v3642
    %3668 = vmatprep.subr.mxu0 0.0
    %3669 = vmatpush1.msra.mxu0 %v3643
    %3670 = vmatprep.subr.mxu0 0.0
    %3671 = vmatpush1.msra.mxu0 %v3644
    %3672 = vmatprep.subr.mxu0 0.0
    %3673 = vmatpush1.msra.mxu0 %v3645
    %3674 = vmatprep.subr.mxu0 0.0
    %3675 = vmatpush1.msra.mxu0 %v3646
    %3676 = vmatprep.subr.mxu0 0.0
    %3677 = vmatpush1.msra.mxu0 %v3647
    %3678 = vmatprep.subr.mxu0 0.0
    %3679 = vmatpush1.msra.mxu0 %v3648
    %3680 = vmatprep.subr.mxu0 0.0
    %3681 = vmatpush1.msra.mxu0 %v3649
    %3682 = vmatprep.subr.mxu0 0.0
    %3683 = vmatpush1.msra.mxu0 %v3650
    %3684 = vmatprep.subr.mxu0 0.0
    %3685 = vmatpush1.msra.mxu0 %v3651
    %3686 = vmatprep.subr.mxu0 0.0
    %3687 = vmatpush1.msra.mxu0 %v3652
    %3688 = vmatprep.subr.mxu0 0.0
    %3689 = vmatpush1.msra.mxu0 %v3653
    %3690 = vmatprep.subr.mxu0 0.0
    %3691 = vmatpush1.msra.mxu0 %v3654
    %3692 = vmatprep.subr.mxu0 0.0
    %3693 = vmatpush1.msra.mxu0 %v3655
    %3694 = vmatprep.subr.mxu0 0.0
    %3695 = vmatpush1.msra.mxu0 %v3656
    %3696 = vmatprep.subr.mxu0 0.0
    %3697 = vmatpush1.msra.mxu0 0.0
    %3698 = vmatprep.subr.mxu0 0.0
    %3699 = vmatpush1.msra.mxu0 0.0
    %3700 = vmatprep.subr.mxu0 0.0
    %3701 = vmatpush1.msra.mxu0 0.0
    %3702 = vmatprep.subr.mxu0 0.0
    %3703 = vmatpush1.msra.mxu0 0.0
    %3704 = vmatprep.subr.mxu0 0.0
    %3705 = vmatpush1.msra.mxu0 0.0
    %3706 = vmatprep.subr.mxu0 0.0
    %3707 = vmatpush1.msra.mxu0 0.0
    %3708 = vmatprep.subr.mxu0 0.0
    %3709 = vmatpush1.msra.mxu0 0.0
    %3710 = vmatprep.subr.mxu0 0.0
    %3711 = vmatpush1.msra.mxu0 0.0
    %3712 = vmatprep.subr.mxu0 0.0
    %3713 = vmatpush1.msra.mxu0 0.0
    %3714 = vmatprep.subr.mxu0 0.0
    %3715 = vmatpush1.msra.mxu0 0.0
    %3716 = vmatprep.subr.mxu0 0.0
    %3717 = vmatpush1.msra.mxu0 0.0
    %3718 = vmatprep.subr.mxu0 0.0
    %3719 = vmatpush1.msra.mxu0 0.0
    %3720 = vmatprep.subr.mxu0 0.0
    %3721 = vmatpush1.msra.mxu0 0.0
    %3722 = vmatprep.subr.mxu0 0.0
    %3723 = vmatpush1.msra.mxu0 0.0
    %3724 = vmatprep.subr.mxu0 0.0
    %3725 = vmatpush1.msra.mxu0 0.0
    %3726 = vmatprep.subr.mxu0 0.0
    %3727 = vmatpush1.msra.mxu0 0.0
    %3728 = vmatprep.mubr.f32.mxu0 0.0
    %3729 = vmatmul.mubr.f32.gmra.mrb[0].mxu0 %v2931
    %v3730 = vpop.f32.mrb[0].mxu0
    %v3731 = vadd.f32 %v3662, %v3730
    %v3732 = vpop.f32.mrb[0].mxu0
    %3733 = vmatprep.mubr.f32.mxu0 0.0
    %3734 = vmatmul.mubr.f32.gmra.mrb[0].mxu0 %v3640
    %v3735 = vpop.f32.mrb[0].mxu0
    %v3736 = vadd.f32 %v3662, %v3735
    %v3737 = vpop.f32.mrb[0].mxu0
    %3738 = vdwg.mxu0
    %v3739 = vadd.f32 %v1987, %v3731
    %v3740 = vadd.f32 %v1988, %v3736
    %v3741 = vld [vmem:[#allocation16] sm:$0x1]
    %v3742 = vld [vmem:[#allocation17] sm:$0x1]
    %3743 = vadd.xlane.f32.xlu0 %v3739
    %v3744 = vpop.xlane.xlu0 %3743
    %3745 = vadd.xlane.f32.xlu0 %v3740
    %v3746 = vpop.xlane.xlu0 %3745
    %v3747 = vmul.f32 %v3744, %v1954
    %v3748 = vmul.f32 %v3746, %v1954
    %v3749 = vsub.f32 %v3739, %v3747
    %v3750 = vsub.f32 %v3740, %v3748
    %v3751 = vmul.f32 %v3749, %v3749
    %v3752 = vmul.f32 %v3750, %v3750
    %3753 = vadd.xlane.f32.xlu0 %v3751
    %v3754 = vpop.xlane.xlu0 %3753
    %3755 = vadd.xlane.f32.xlu0 %v3752
    %v3756 = vpop.xlane.xlu0 %3755
    %v3757 = vmul.f32 %v3754, %v1954
    %v3758 = vmul.f32 %v3756, %v1954
    %v3759 = vadd.f32 %v3757, 1e-05
    %v3760 = vadd.f32 %v3758, 1e-05
    %v3761 = vrsqrt.pop %v3759
    %v3762 = vrsqrt.pop %v3760
    %v3763 = vmul.f32 %v3749, %v3761
    %v3764 = vmul.f32 %v3750, %v3762
    %v3766 = vlaneseq
    %v3767 = vshrl.u32 %v3766, 7
    %v3768 = vsub.s32 0, %v3767
    %v3769 = vrot.slane %v3741, %v3768
    %v3771 = vmul.f32 %v3763, %v3769
    %v3772 = vmul.f32 %v3764, %v3769
    %v3774 = vlaneseq
    %v3775 = vshrl.u32 %v3774, 7
    %v3776 = vsub.s32 0, %v3775
    %v3777 = vrot.slane %v3742, %v3776
    %v3779 = vadd.f32 %v3771, %v3777
    %v3780 = vadd.f32 %v3772, %v3777
    %v3781 = vld [vmem:[#allocation10] sm:$0xff]
    %v3782 = vld [vmem:[#allocation10 + $0x8] sm:$0xff]
    %v3783 = vld [vmem:[#allocation10 + $0x10] sm:$0xff]
    %v3784 = vld [vmem:[#allocation10 + $0x18] sm:$0xff]
    %v3785 = vld [vmem:[#allocation10 + $0x20] sm:$0xff]
    %v3786 = vld [vmem:[#allocation10 + $0x28] sm:$0xff]
    %v3787 = vld [vmem:[#allocation10 + $0x30] sm:$0xff]
    %v3788 = vld [vmem:[#allocation10 + $0x38] sm:$0xff]
    %v3789 = vld [vmem:[#allocation10 + $0x40] sm:$0xff]
    %v3790 = vld [vmem:[#allocation10 + $0x48] sm:$0xff]
    %v3791 = vld [vmem:[#allocation10 + $0x50] sm:$0xff]
    %v3792 = vld [vmem:[#allocation10 + $0x58] sm:$0xff]
    %v3793 = vld [vmem:[#allocation10 + $0x60] sm:$0xff]
    %v3794 = vld [vmem:[#allocation10 + $0x68] sm:$0xff]
    %v3795 = vld [vmem:[#allocation10 + $0x70] sm:$0xff]
    %v3796 = vld [vmem:[#allocation10 + $0x78] sm:$0xff]
    %v3797 = vld [vmem:[#allocation10 + $0x80] sm:$0xff]
    %v3798 = vld [vmem:[#allocation10 + $0x88] sm:$0xff]
    %v3799 = vld [vmem:[#allocation10 + $0x90] sm:$0xff]
    %v3800 = vld [vmem:[#allocation10 + $0x98] sm:$0xff]
    %v3801 = vld [vmem:[#allocation10 + $0xa0] sm:$0xff]
    %v3802 = vld [vmem:[#allocation10 + $0xa8] sm:$0xff]
    %v3803 = vld [vmem:[#allocation10 + $0xb0] sm:$0xff]
    %v3804 = vld [vmem:[#allocation10 + $0xb8] sm:$0xff]
    %v3805 = vld [vmem:[#allocation10 + $0xc0] sm:$0xff]
    %v3806 = vld [vmem:[#allocation10 + $0xc8] sm:$0xff]
    %v3807 = vld [vmem:[#allocation10 + $0xd0] sm:$0xff]
    %v3808 = vld [vmem:[#allocation10 + $0xd8] sm:$0xff]
    %v3809 = vld [vmem:[#allocation10 + $0xe0] sm:$0xff]
    %v3810 = vld [vmem:[#allocation10 + $0xe8] sm:$0xff]
    %v3811 = vld [vmem:[#allocation10 + $0xf0] sm:$0xff]
    %v3812 = vld [vmem:[#allocation10 + $0xf8] sm:$0xff]
    %v3813 = vld [vmem:[%s15] sm:$0x3]
    %v3815 = vlaneseq
    %v3816 = vshrl.u32 %v3815, 7
    %v3817 = vsub.s32 0, %v3816
    %v3818 = vrot.slane %v3813, %v3817
    %v3819 = vlaneseq
    %v3820 = vshrl.u32 %v3819, 7
    %v3821 = vsub.s32 1, %v3820
    %v3822 = vrot.slane %v3813, %v3821
    %3825 = vmatprep.subr.mxu0 %v3782
    %3826 = vmatpush1.msra.mxu0 %v3781
    %3827 = vmatprep.subr.mxu0 %v3784
    %3828 = vmatpush1.msra.mxu0 %v3783
    %3829 = vmatprep.subr.mxu0 %v3786
    %3830 = vmatpush1.msra.mxu0 %v3785
    %3831 = vmatprep.subr.mxu0 %v3788
    %3832 = vmatpush1.msra.mxu0 %v3787
    %3833 = vmatprep.subr.mxu0 %v3790
    %3834 = vmatpush1.msra.mxu0 %v3789
    %3835 = vmatprep.subr.mxu0 %v3792
    %3836 = vmatpush1.msra.mxu0 %v3791
    %3837 = vmatprep.subr.mxu0 %v3794
    %3838 = vmatpush1.msra.mxu0 %v3793
    %3839 = vmatprep.subr.mxu0 %v3796
    %3840 = vmatpush1.msra.mxu0 %v3795
    %3841 = vmatprep.subr.mxu0 %v3798
    %3842 = vmatpush1.msra.mxu0 %v3797
    %3843 = vmatprep.subr.mxu0 %v3800
    %3844 = vmatpush1.msra.mxu0 %v3799
    %3845 = vmatprep.subr.mxu0 %v3802
    %3846 = vmatpush1.msra.mxu0 %v3801
    %3847 = vmatprep.subr.mxu0 %v3804
    %3848 = vmatpush1.msra.mxu0 %v3803
    %3849 = vmatprep.subr.mxu0 %v3806
    %3850 = vmatpush1.msra.mxu0 %v3805
    %3851 = vmatprep.subr.mxu0 %v3808
    %3852 = vmatpush1.msra.mxu0 %v3807
    %3853 = vmatprep.subr.mxu0 %v3810
    %3854 = vmatpush1.msra.mxu0 %v3809
    %3855 = vmatprep.subr.mxu0 %v3812
    %3856 = vmatpush1.msra.mxu0 %v3811
    %3857 = vmatprep.subr.mxu0 0.0
    %3858 = vmatpush1.msra.mxu0 0.0
    %3859 = vmatprep.subr.mxu0 0.0
    %3860 = vmatpush1.msra.mxu0 0.0
    %3861 = vmatprep.subr.mxu0 0.0
    %3862 = vmatpush1.msra.mxu0 0.0
    %3863 = vmatprep.subr.mxu0 0.0
    %3864 = vmatpush1.msra.mxu0 0.0
    %3865 = vmatprep.subr.mxu0 0.0
    %3866 = vmatpush1.msra.mxu0 0.0
    %3867 = vmatprep.subr.mxu0 0.0
    %3868 = vmatpush1.msra.mxu0 0.0
    %3869 = vmatprep.subr.mxu0 0.0
    %3870 = vmatpush1.msra.mxu0 0.0
    %3871 = vmatprep.subr.mxu0 0.0
    %3872 = vmatpush1.msra.mxu0 0.0
    %3873 = vmatprep.subr.mxu0 0.0
    %3874 = vmatpush1.msra.mxu0 0.0
    %3875 = vmatprep.subr.mxu0 0.0
    %3876 = vmatpush1.msra.mxu0 0.0
    %3877 = vmatprep.subr.mxu0 0.0
    %3878 = vmatpush1.msra.mxu0 0.0
    %3879 = vmatprep.subr.mxu0 0.0
    %3880 = vmatpush1.msra.mxu0 0.0
    %3881 = vmatprep.subr.mxu0 0.0
    %3882 = vmatpush1.msra.mxu0 0.0
    %3883 = vmatprep.subr.mxu0 0.0
    %3884 = vmatpush1.msra.mxu0 0.0
    %3885 = vmatprep.subr.mxu0 0.0
    %3886 = vmatpush1.msra.mxu0 0.0
    %3887 = vmatprep.subr.mxu0 0.0
    %3888 = vmatpush1.msra.mxu0 0.0
    %3889 = vmatprep.mubr.f32.mxu0 0.0
    %3890 = vmatmul.mubr.f32.gmra.mrb[0].mxu0 %v3779
    %v3891 = vpop.f32.mrb[0].mxu0
    %v3892 = vadd.f32 %v3818, %v3891
    %v3893 = vpop.f32.mrb[0].mxu0
    %v3894 = vadd.f32 %v3822, %v3893
    %3895 = vmatprep.mubr.f32.mxu0 0.0
    %3896 = vmatmul.mubr.f32.gmra.mrb[0].mxu0 %v3780
    %v3897 = vpop.f32.mrb[0].mxu0
    %v3898 = vadd.f32 %v3818, %v3897
    %v3899 = vpop.f32.mrb[0].mxu0
    %v3900 = vadd.f32 %v3822, %v3899
    %3901 = vdwg.mxu0
    %v3902 = vmax.f32 %v3892, 0.0
    %v3903 = vmax.f32 %v3894, 0.0
    %v3904 = vmax.f32 %v3898, 0.0
    %v3905 = vmax.f32 %v3900, 0.0
    %v3906 = vld [vmem:[#allocation11] sm:$0xff]
    %v3907 = vld [vmem:[#allocation11 + $0x8] sm:$0xff]
    %v3908 = vld [vmem:[#allocation11 + $0x10] sm:$0xff]
    %v3909 = vld [vmem:[#allocation11 + $0x18] sm:$0xff]
    %v3910 = vld [vmem:[#allocation11 + $0x20] sm:$0xff]
    %v3911 = vld [vmem:[#allocation11 + $0x28] sm:$0xff]
    %v3912 = vld [vmem:[#allocation11 + $0x30] sm:$0xff]
    %v3913 = vld [vmem:[#allocation11 + $0x38] sm:$0xff]
    %v3914 = vld [vmem:[#allocation11 + $0x40] sm:$0xff]
    %v3915 = vld [vmem:[#allocation11 + $0x48] sm:$0xff]
    %v3916 = vld [vmem:[#allocation11 + $0x50] sm:$0xff]
    %v3917 = vld [vmem:[#allocation11 + $0x58] sm:$0xff]
    %v3918 = vld [vmem:[#allocation11 + $0x60] sm:$0xff]
    %v3919 = vld [vmem:[#allocation11 + $0x68] sm:$0xff]
    %v3920 = vld [vmem:[#allocation11 + $0x70] sm:$0xff]
    %v3921 = vld [vmem:[#allocation11 + $0x78] sm:$0xff]
    %v3922 = vld [vmem:[#allocation11 + $0x80] sm:$0xff]
    %v3923 = vld [vmem:[#allocation11 + $0x88] sm:$0xff]
    %v3924 = vld [vmem:[#allocation11 + $0x90] sm:$0xff]
    %v3925 = vld [vmem:[#allocation11 + $0x98] sm:$0xff]
    %v3926 = vld [vmem:[#allocation11 + $0xa0] sm:$0xff]
    %v3927 = vld [vmem:[#allocation11 + $0xa8] sm:$0xff]
    %v3928 = vld [vmem:[#allocation11 + $0xb0] sm:$0xff]
    %v3929 = vld [vmem:[#allocation11 + $0xb8] sm:$0xff]
    %v3930 = vld [vmem:[#allocation11 + $0xc0] sm:$0xff]
    %v3931 = vld [vmem:[#allocation11 + $0xc8] sm:$0xff]
    %v3932 = vld [vmem:[#allocation11 + $0xd0] sm:$0xff]
    %v3933 = vld [vmem:[#allocation11 + $0xd8] sm:$0xff]
    %v3934 = vld [vmem:[#allocation11 + $0xe0] sm:$0xff]
    %v3935 = vld [vmem:[#allocation11 + $0xe8] sm:$0xff]
    %v3936 = vld [vmem:[#allocation11 + $0xf0] sm:$0xff]
    %v3937 = vld [vmem:[#allocation11 + $0xf8] sm:$0xff]
    %v3938 = vld [vmem:[%s17] sm:$0x1]
    %v3940 = vlaneseq
    %v3941 = vshrl.u32 %v3940, 7
    %v3942 = vsub.s32 0, %v3941
    %v3943 = vrot.slane %v3938, %v3942
    %3945 = vmatprep.subr.mxu0 0.0
    %3946 = vmatpush1.msra.mxu0 %v3906
    %3947 = vmatprep.subr.mxu0 0.0
    %3948 = vmatpush1.msra.mxu0 %v3907
    %3949 = vmatprep.subr.mxu0 0.0
    %3950 = vmatpush1.msra.mxu0 %v3908
    %3951 = vmatprep.subr.mxu0 0.0
    %3952 = vmatpush1.msra.mxu0 %v3909
    %3953 = vmatprep.subr.mxu0 0.0
    %3954 = vmatpush1.msra.mxu0 %v3910
    %3955 = vmatprep.subr.mxu0 0.0
    %3956 = vmatpush1.msra.mxu0 %v3911
    %3957 = vmatprep.subr.mxu0 0.0
    %3958 = vmatpush1.msra.mxu0 %v3912
    %3959 = vmatprep.subr.mxu0 0.0
    %3960 = vmatpush1.msra.mxu0 %v3913
    %3961 = vmatprep.subr.mxu0 0.0
    %3962 = vmatpush1.msra.mxu0 %v3914
    %3963 = vmatprep.subr.mxu0 0.0
    %3964 = vmatpush1.msra.mxu0 %v3915
    %3965 = vmatprep.subr.mxu0 0.0
    %3966 = vmatpush1.msra.mxu0 %v3916
    %3967 = vmatprep.subr.mxu0 0.0
    %3968 = vmatpush1.msra.mxu0 %v3917
    %3969 = vmatprep.subr.mxu0 0.0
    %3970 = vmatpush1.msra.mxu0 %v3918
    %3971 = vmatprep.subr.mxu0 0.0
    %3972 = vmatpush1.msra.mxu0 %v3919
    %3973 = vmatprep.subr.mxu0 0.0
    %3974 = vmatpush1.msra.mxu0 %v3920
    %3975 = vmatprep.subr.mxu0 0.0
    %3976 = vmatpush1.msra.mxu0 %v3921
    %3977 = vmatprep.subr.mxu0 0.0
    %3978 = vmatpush1.msra.mxu0 %v3922
    %3979 = vmatprep.subr.mxu0 0.0
    %3980 = vmatpush1.msra.mxu0 %v3923
    %3981 = vmatprep.subr.mxu0 0.0
    %3982 = vmatpush1.msra.mxu0 %v3924
    %3983 = vmatprep.subr.mxu0 0.0
    %3984 = vmatpush1.msra.mxu0 %v3925
    %3985 = vmatprep.subr.mxu0 0.0
    %3986 = vmatpush1.msra.mxu0 %v3926
    %3987 = vmatprep.subr.mxu0 0.0
    %3988 = vmatpush1.msra.mxu0 %v3927
    %3989 = vmatprep.subr.mxu0 0.0
    %3990 = vmatpush1.msra.mxu0 %v3928
    %3991 = vmatprep.subr.mxu0 0.0
    %3992 = vmatpush1.msra.mxu0 %v3929
    %3993 = vmatprep.subr.mxu0 0.0
    %3994 = vmatpush1.msra.mxu0 %v3930
    %3995 = vmatprep.subr.mxu0 0.0
    %3996 = vmatpush1.msra.mxu0 %v3931
    %3997 = vmatprep.subr.mxu0 0.0
    %3998 = vmatpush1.msra.mxu0 %v3932
    %3999 = vmatprep.subr.mxu0 0.0
    %4000 = vmatpush1.msra.mxu0 %v3933
    %4001 = vmatprep.subr.mxu0 0.0
    %4002 = vmatpush1.msra.mxu0 %v3934
    %4003 = vmatprep.subr.mxu0 0.0
    %4004 = vmatpush1.msra.mxu0 %v3935
    %4005 = vmatprep.subr.mxu0 0.0
    %4006 = vmatpush1.msra.mxu0 %v3936
    %4007 = vmatprep.subr.mxu0 0.0
    %4008 = vmatpush1.msra.mxu0 %v3937
    %4009 = vmatprep.mubr.f32.mxu0 %v3903
    %4010 = vmatmul.mubr.f32.gmra.mrb[0].mxu0 %v3902
    %v4011 = vpop.f32.mrb[0].mxu0
    %v4012 = vadd.f32 %v3943, %v4011
    %v4013 = vpop.f32.mrb[0].mxu0
    %4014 = vmatprep.mubr.f32.mxu0 %v3905
    %4015 = vmatmul.mubr.f32.gmra.mrb[0].mxu0 %v3904
    %v4016 = vpop.f32.mrb[0].mxu0
    %v4017 = vadd.f32 %v3943, %v4016
    %v4018 = vpop.f32.mrb[0].mxu0
    %4019 = vdwg.mxu0
    %v4020 = vadd.f32 %v3779, %v4012
    %v4021 = vadd.f32 %v3780, %v4017
    %v4022 = vld [vmem:[#allocation19] sm:$0x1]
    %v4023 = vld [vmem:[#allocation20] sm:$0x1]
    %4024 = vadd.xlane.f32.xlu0 %v4020
    %v4025 = vpop.xlane.xlu0 %4024
    %4026 = vadd.xlane.f32.xlu0 %v4021
    %v4027 = vpop.xlane.xlu0 %4026
    %v4028 = vmul.f32 %v4025, %v1954
    %v4029 = vmul.f32 %v4027, %v1954
    %v4030 = vsub.f32 %v4020, %v4028
    %v4031 = vsub.f32 %v4021, %v4029
    %v4032 = vmul.f32 %v4030, %v4030
    %v4033 = vmul.f32 %v4031, %v4031
    %4034 = vadd.xlane.f32.xlu0 %v4032
    %v4035 = vpop.xlane.xlu0 %4034
    %4036 = vadd.xlane.f32.xlu0 %v4033
    %v4037 = vpop.xlane.xlu0 %4036
    %v4038 = vmul.f32 %v4035, %v1954
    %v4039 = vmul.f32 %v4037, %v1954
    %v4040 = vadd.f32 %v4038, 1e-05
    %v4041 = vadd.f32 %v4039, 1e-05
    %v4042 = vrsqrt.pop %v4040
    %v4043 = vrsqrt.pop %v4041
    %v4044 = vmul.f32 %v4030, %v4042
    %v4045 = vmul.f32 %v4031, %v4043
    %v4047 = vlaneseq
    %v4048 = vshrl.u32 %v4047, 7
    %v4049 = vsub.s32 0, %v4048
    %v4050 = vrot.slane %v4022, %v4049
    %v4052 = vmul.f32 %v4044, %v4050
    %v4053 = vmul.f32 %v4045, %v4050
    %v4055 = vlaneseq
    %v4056 = vshrl.u32 %v4055, 7
    %v4057 = vsub.s32 0, %v4056
    %v4058 = vrot.slane %v4023, %v4057
    %v4060 = vadd.f32 %v4052, %v4058
    %v4061 = vadd.f32 %v4053, %v4058
    %s4062 = scalar_lea.vmem [#allocation2], 384
    %v4063 = vld [vmem:[%s4062] sm:$0xff]
    %v4064 = vld [vmem:[%s4062 + $0x8] sm:$0xff]
    %v4065 = vld [vmem:[%s4062 + $0x10] sm:$0xff]
    %v4066 = vld [vmem:[%s4062 + $0x18] sm:$0xff]
    %v4067 = vld [vmem:[%s4062 + $0x20] sm:$0xff]
    %v4068 = vld [vmem:[%s4062 + $0x28] sm:$0xff]
    %v4069 = vld [vmem:[%s4062 + $0x30] sm:$0xff]
    %v4070 = vld [vmem:[%s4062 + $0x38] sm:$0xff]
    %v4071 = vld [vmem:[%s4062 + $0x40] sm:$0xff]
    %v4072 = vld [vmem:[%s4062 + $0x48] sm:$0xff]
    %v4073 = vld [vmem:[%s4062 + $0x50] sm:$0xff]
    %v4074 = vld [vmem:[%s4062 + $0x58] sm:$0xff]
    %v4075 = vld [vmem:[%s4062 + $0x60] sm:$0xff]
    %v4076 = vld [vmem:[%s4062 + $0x68] sm:$0xff]
    %v4077 = vld [vmem:[%s4062 + $0x70] sm:$0xff]
    %v4078 = vld [vmem:[%s4062 + $0x78] sm:$0xff]
    %v4079 = vld [vmem:[%s4062 + $0x80] sm:$0xff]
    %v4080 = vld [vmem:[%s4062 + $0x88] sm:$0xff]
    %v4081 = vld [vmem:[%s4062 + $0x90] sm:$0xff]
    %v4082 = vld [vmem:[%s4062 + $0x98] sm:$0xff]
    %v4083 = vld [vmem:[%s4062 + $0xa0] sm:$0xff]
    %v4084 = vld [vmem:[%s4062 + $0xa8] sm:$0xff]
    %v4085 = vld [vmem:[%s4062 + $0xb0] sm:$0xff]
    %v4086 = vld [vmem:[%s4062 + $0xb8] sm:$0xff]
    %v4087 = vld [vmem:[%s4062 + $0xc0] sm:$0xff]
    %v4088 = vld [vmem:[%s4062 + $0xc8] sm:$0xff]
    %v4089 = vld [vmem:[%s4062 + $0xd0] sm:$0xff]
    %v4090 = vld [vmem:[%s4062 + $0xd8] sm:$0xff]
    %v4091 = vld [vmem:[%s4062 + $0xe0] sm:$0xff]
    %v4092 = vld [vmem:[%s4062 + $0xe8] sm:$0xff]
    %v4093 = vld [vmem:[%s4062 + $0xf0] sm:$0xff]
    %v4094 = vld [vmem:[%s4062 + $0xf8] sm:$0xff]
    %v4095 = vld [vmem:[%s4062 + $0x100] sm:$0xff]
    %v4096 = vld [vmem:[%s4062 + $0x108] sm:$0xff]
    %v4097 = vld [vmem:[%s4062 + $0x110] sm:$0xff]
    %v4098 = vld [vmem:[%s4062 + $0x118] sm:$0xff]
    %v4099 = vld [vmem:[%s4062 + $0x120] sm:$0xff]
    %v4100 = vld [vmem:[%s4062 + $0x128] sm:$0xff]
    %v4101 = vld [vmem:[%s4062 + $0x130] sm:$0xff]
    %v4102 = vld [vmem:[%s4062 + $0x138] sm:$0xff]
    %v4103 = vld [vmem:[%s4062 + $0x140] sm:$0xff]
    %v4104 = vld [vmem:[%s4062 + $0x148] sm:$0xff]
    %v4105 = vld [vmem:[%s4062 + $0x150] sm:$0xff]
    %v4106 = vld [vmem:[%s4062 + $0x158] sm:$0xff]
    %v4107 = vld [vmem:[%s4062 + $0x160] sm:$0xff]
    %v4108 = vld [vmem:[%s4062 + $0x168] sm:$0xff]
    %v4109 = vld [vmem:[%s4062 + $0x170] sm:$0xff]
    %v4110 = vld [vmem:[%s4062 + $0x178] sm:$0xff]
    %s4111 = scalar_lea.vmem %s5, 3
    %v4112 = vld [vmem:[%s4111] sm:$0x7]
    %v4114 = vlaneseq
    %v4115 = vshrl.u32 %v4114, 7
    %v4116 = vsub.s32 0, %v4115
    %v4117 = vrot.slane %v4112, %v4116
    %v4118 = vlaneseq
    %v4119 = vshrl.u32 %v4118, 7
    %v4120 = vsub.s32 1, %v4119
    %v4121 = vrot.slane %v4112, %v4120
    %v4122 = vlaneseq
    %v4123 = vshrl.u32 %v4122, 7
    %v4124 = vsub.s32 2, %v4123
    %v4125 = vrot.slane %v4112, %v4124
    %4129 = vmatprep.subr.mxu0 %v4064
    %4130 = vmatpush1.msra.mxu0 %v4063
    %4131 = vmatprep.subr.mxu0 %v4067
    %4132 = vmatpush1.msra.mxu0 %v4066
    %4133 = vmatprep.subr.mxu0 %v4070
    %4134 = vmatpush1.msra.mxu0 %v4069
    %4135 = vmatprep.subr.mxu0 %v4073
    %4136 = vmatpush1.msra.mxu0 %v4072
    %4137 = vmatprep.subr.mxu0 %v4076
    %4138 = vmatpush1.msra.mxu0 %v4075
    %4139 = vmatprep.subr.mxu0 %v4079
    %4140 = vmatpush1.msra.mxu0 %v4078
    %4141 = vmatprep.subr.mxu0 %v4082
    %4142 = vmatpush1.msra.mxu0 %v4081
    %4143 = vmatprep.subr.mxu0 %v4085
    %4144 = vmatpush1.msra.mxu0 %v4084
    %4145 = vmatprep.subr.mxu0 %v4088
    %4146 = vmatpush1.msra.mxu0 %v4087
    %4147 = vmatprep.subr.mxu0 %v4091
    %4148 = vmatpush1.msra.mxu0 %v4090
    %4149 = vmatprep.subr.mxu0 %v4094
    %4150 = vmatpush1.msra.mxu0 %v4093
    %4151 = vmatprep.subr.mxu0 %v4097
    %4152 = vmatpush1.msra.mxu0 %v4096
    %4153 = vmatprep.subr.mxu0 %v4100
    %4154 = vmatpush1.msra.mxu0 %v4099
    %4155 = vmatprep.subr.mxu0 %v4103
    %4156 = vmatpush1.msra.mxu0 %v4102
    %4157 = vmatprep.subr.mxu0 %v4106
    %4158 = vmatpush1.msra.mxu0 %v4105
    %4159 = vmatprep.subr.mxu0 %v4109
    %4160 = vmatpush1.msra.mxu0 %v4108
    %4161 = vmatprep.subr.mxu0 0.0
    %4162 = vmatpush1.msra.mxu0 0.0
    %4163 = vmatprep.subr.mxu0 0.0
    %4164 = vmatpush1.msra.mxu0 0.0
    %4165 = vmatprep.subr.mxu0 0.0
    %4166 = vmatpush1.msra.mxu0 0.0
    %4167 = vmatprep.subr.mxu0 0.0
    %4168 = vmatpush1.msra.mxu0 0.0
    %4169 = vmatprep.subr.mxu0 0.0
    %4170 = vmatpush1.msra.mxu0 0.0
    %4171 = vmatprep.subr.mxu0 0.0
    %4172 = vmatpush1.msra.mxu0 0.0
    %4173 = vmatprep.subr.mxu0 0.0
    %4174 = vmatpush1.msra.mxu0 0.0
    %4175 = vmatprep.subr.mxu0 0.0
    %4176 = vmatpush1.msra.mxu0 0.0
    %4177 = vmatprep.subr.mxu0 0.0
    %4178 = vmatpush1.msra.mxu0 0.0
    %4179 = vmatprep.subr.mxu0 0.0
    %4180 = vmatpush1.msra.mxu0 0.0
    %4181 = vmatprep.subr.mxu0 0.0
    %4182 = vmatpush1.msra.mxu0 0.0
    %4183 = vmatprep.subr.mxu0 0.0
    %4184 = vmatpush1.msra.mxu0 0.0
    %4185 = vmatprep.subr.mxu0 0.0
    %4186 = vmatpush1.msra.mxu0 0.0
    %4187 = vmatprep.subr.mxu0 0.0
    %4188 = vmatpush1.msra.mxu0 0.0
    %4189 = vmatprep.subr.mxu0 0.0
    %4190 = vmatpush1.msra.mxu0 0.0
    %4191 = vmatprep.subr.mxu0 0.0
    %4192 = vmatpush1.msra.mxu0 0.0
    %4193 = vmatprep.mubr.f32.mxu0 0.0
    %4194 = vmatmul.mubr.f32.gmra.mrb[0].mxu0 %v4060
    %v4195 = vpop.f32.mrb[0].mxu0
    %v4196 = vadd.f32 %v4117, %v4195
    %v4197 = vpop.f32.mrb[0].mxu0
    %v4198 = vadd.f32 %v4121, %v4197
    %4199 = vmatprep.mubr.f32.mxu0 0.0
    %4200 = vmatmul.mubr.f32.gmra.mrb[0].mxu0 %v4061
    %v4201 = vpop.f32.mrb[0].mxu0
    %v4202 = vadd.f32 %v4117, %v4201
    %v4203 = vpop.f32.mrb[0].mxu0
    %v4204 = vadd.f32 %v4121, %v4203
    %4205 = vdwg.mxu0
    %4206 = vmatprep.subr.mxu0 0.0
    %4207 = vmatpush1.msra.mxu0 %v4065
    %4208 = vmatprep.subr.mxu0 0.0
    %4209 = vmatpush1.msra.mxu0 %v4068
    %4210 = vmatprep.subr.mxu0 0.0
    %4211 = vmatpush1.msra.mxu0 %v4071
    %4212 = vmatprep.subr.mxu0 0.0
    %4213 = vmatpush1.msra.mxu0 %v4074
    %4214 = vmatprep.subr.mxu0 0.0
    %4215 = vmatpush1.msra.mxu0 %v4077
    %4216 = vmatprep.subr.mxu0 0.0
    %4217 = vmatpush1.msra.mxu0 %v4080
    %4218 = vmatprep.subr.mxu0 0.0
    %4219 = vmatpush1.msra.mxu0 %v4083
    %4220 = vmatprep.subr.mxu0 0.0
    %4221 = vmatpush1.msra.mxu0 %v4086
    %4222 = vmatprep.subr.mxu0 0.0
    %4223 = vmatpush1.msra.mxu0 %v4089
    %4224 = vmatprep.subr.mxu0 0.0
    %4225 = vmatpush1.msra.mxu0 %v4092
    %4226 = vmatprep.subr.mxu0 0.0
    %4227 = vmatpush1.msra.mxu0 %v4095
    %4228 = vmatprep.subr.mxu0 0.0
    %4229 = vmatpush1.msra.mxu0 %v4098
    %4230 = vmatprep.subr.mxu0 0.0
    %4231 = vmatpush1.msra.mxu0 %v4101
    %4232 = vmatprep.subr.mxu0 0.0
    %4233 = vmatpush1.msra.mxu0 %v4104
    %4234 = vmatprep.subr.mxu0 0.0
    %4235 = vmatpush1.msra.mxu0 %v4107
    %4236 = vmatprep.subr.mxu0 0.0
    %4237 = vmatpush1.msra.mxu0 %v4110
    %4238 = vmatprep.subr.mxu0 0.0
    %4239 = vmatpush1.msra.mxu0 0.0
    %4240 = vmatprep.subr.mxu0 0.0
    %4241 = vmatpush1.msra.mxu0 0.0
    %4242 = vmatprep.subr.mxu0 0.0
    %4243 = vmatpush1.msra.mxu0 0.0
    %4244 = vmatprep.subr.mxu0 0.0
    %4245 = vmatpush1.msra.mxu0 0.0
    %4246 = vmatprep.subr.mxu0 0.0
    %4247 = vmatpush1.msra.mxu0 0.0
    %4248 = vmatprep.subr.mxu0 0.0
    %4249 = vmatpush1.msra.mxu0 0.0
    %4250 = vmatprep.subr.mxu0 0.0
    %4251 = vmatpush1.msra.mxu0 0.0
    %4252 = vmatprep.subr.mxu0 0.0
    %4253 = vmatpush1.msra.mxu0 0.0
    %4254 = vmatprep.subr.mxu0 0.0
    %4255 = vmatpush1.msra.mxu0 0.0
    %4256 = vmatprep.subr.mxu0 0.0
    %4257 = vmatpush1.msra.mxu0 0.0
    %4258 = vmatprep.subr.mxu0 0.0
    %4259 = vmatpush1.msra.mxu0 0.0
    %4260 = vmatprep.subr.mxu0 0.0
    %4261 = vmatpush1.msra.mxu0 0.0
    %4262 = vmatprep.subr.mxu0 0.0
    %4263 = vmatpush1.msra.mxu0 0.0
    %4264 = vmatprep.subr.mxu0 0.0
    %4265 = vmatpush1.msra.mxu0 0.0
    %4266 = vmatprep.subr.mxu0 0.0
    %4267 = vmatpush1.msra.mxu0 0.0
    %4268 = vmatprep.subr.mxu0 0.0
    %4269 = vmatpush1.msra.mxu0 0.0
    %4270 = vmatprep.mubr.f32.mxu0 0.0
    %4271 = vmatmul.mubr.f32.gmra.mrb[0].mxu0 %v4060
    %v4272 = vpop.f32.mrb[0].mxu0
    %v4273 = vadd.f32 %v4125, %v4272
    %v4274 = vpop.f32.mrb[0].mxu0
    %4275 = vmatprep.mubr.f32.mxu0 0.0
    %4276 = vmatmul.mubr.f32.gmra.mrb[0].mxu0 %v4061
    %v4277 = vpop.f32.mrb[0].mxu0
    %v4278 = vadd.f32 %v4125, %v4277
    %v4279 = vpop.f32.mrb[0].mxu0
    %4280 = vdwg.mxu0
    %v4282 = vsel %vm486, %v4196, 0
    %v4285 = vsel %vm486, %v4198, 0
    %4287 = vmatprep.subr.mxu0 0.0
    %4288 = vmatpush1.xpose.msra.mxu0 %v4285
    %4289 = vmatprep.subr.mxu0 0.0
    %4290 = vmatpush1.xpose.msra.mxu0 0.0
    %4291 = vmatprep.subr.mxu0 0.0
    %4292 = vmatpush1.xpose.msra.mxu0 0.0
    %4293 = vmatprep.subr.mxu0 0.0
    %4294 = vmatpush1.xpose.msra.mxu0 0.0
    %4295 = vmatprep.subr.mxu0 0.0
    %4296 = vmatpush1.xpose.msra.mxu0 0.0
    %4297 = vmatprep.subr.mxu0 0.0
    %4298 = vmatpush1.xpose.msra.mxu0 0.0
    %4299 = vmatprep.subr.mxu0 0.0
    %4300 = vmatpush1.xpose.msra.mxu0 0.0
    %4301 = vmatprep.subr.mxu0 0.0
    %4302 = vmatpush1.xpose.msra.mxu0 0.0
    %4303 = vmatprep.subr.mxu0 0.0
    %4304 = vmatpush1.xpose.msra.mxu0 0.0
    %4305 = vmatprep.subr.mxu0 0.0
    %4306 = vmatpush1.xpose.msra.mxu0 0.0
    %4307 = vmatprep.subr.mxu0 0.0
    %4308 = vmatpush1.xpose.msra.mxu0 0.0
    %4309 = vmatprep.subr.mxu0 0.0
    %4310 = vmatpush1.xpose.msra.mxu0 0.0
    %4311 = vmatprep.subr.mxu0 0.0
    %4312 = vmatpush1.xpose.msra.mxu0 0.0
    %4313 = vmatprep.subr.mxu0 0.0
    %4314 = vmatpush1.xpose.msra.mxu0 0.0
    %4315 = vmatprep.subr.mxu0 0.0
    %4316 = vmatpush1.xpose.msra.mxu0 0.0
    %4317 = vmatprep.subr.mxu0 0.0
    %4318 = vmatpush1.xpose.msra.mxu0 0.0
    %4319 = vmatprep.subr.mxu0 0.0
    %4320 = vmatpush1.xpose.msra.mxu0 0.0
    %4321 = vmatprep.subr.mxu0 0.0
    %4322 = vmatpush1.xpose.msra.mxu0 0.0
    %4323 = vmatprep.subr.mxu0 0.0
    %4324 = vmatpush1.xpose.msra.mxu0 0.0
    %4325 = vmatprep.subr.mxu0 0.0
    %4326 = vmatpush1.xpose.msra.mxu0 0.0
    %4327 = vmatprep.subr.mxu0 0.0
    %4328 = vmatpush1.xpose.msra.mxu0 0.0
    %4329 = vmatprep.subr.mxu0 0.0
    %4330 = vmatpush1.xpose.msra.mxu0 0.0
    %4331 = vmatprep.subr.mxu0 0.0
    %4332 = vmatpush1.xpose.msra.mxu0 0.0
    %4333 = vmatprep.subr.mxu0 0.0
    %4334 = vmatpush1.xpose.msra.mxu0 0.0
    %4335 = vmatprep.subr.mxu0 0.0
    %4336 = vmatpush1.xpose.msra.mxu0 0.0
    %4337 = vmatprep.subr.mxu0 0.0
    %4338 = vmatpush1.xpose.msra.mxu0 0.0
    %4339 = vmatprep.subr.mxu0 0.0
    %4340 = vmatpush1.xpose.msra.mxu0 0.0
    %4341 = vmatprep.subr.mxu0 0.0
    %4342 = vmatpush1.xpose.msra.mxu0 0.0
    %4343 = vmatprep.subr.mxu0 0.0
    %4344 = vmatpush1.xpose.msra.mxu0 0.0
    %4345 = vmatprep.subr.mxu0 0.0
    %4346 = vmatpush1.xpose.msra.mxu0 0.0
    %4347 = vmatprep.subr.mxu0 0.0
    %4348 = vmatpush1.xpose.msra.mxu0 0.0
    %4349 = vmatprep.subr.mxu0 0.0
    %4350 = vmatpush1.xpose.msra.mxu0 0.0
    %4351 = vmatprep.mubr.f32.mxu0 0.0
    %4352 = vmatmul.mubr.f32.gmra.mrb[0].mxu0 %v4282
    %v4353 = vpop.f32.mrb[0].mxu0
    %v4354 = vadd.f32 0.0, %v4353
    %v4355 = vpop.f32.mrb[0].mxu0
    %4356 = vdwg.mxu0
    %v4357 = vmul.f32 %v4354, 0.17677669
    %v4358 = vsel %vm268, %v4357, -1e+09
    %v4359 = vsel %vm565, %v4358, -inf
    %4360 = vmax.xlane.f32.xlu0 %v4359
    %v4361 = vpop.xlane.xlu0 %4360
    %v4362 = vsub.f32 %v4358, %v4361
    %v4363 = vmul.f32 %v4362, 1.442695
    %v4364 = vpow.pop %v4363
    %v4365 = vsel %vm565, %v4364, 0.0
    %4366 = vadd.xlane.f32.xlu0 %v4365
    %v4367 = vpop.xlane.xlu0 %4366
    %v4368 = vrcp.pop %v4367
    %v4369 = vmul.f32 %v4364, %v4368
    %v4371 = vsel %vm565, %v4369, 0
    %4373 = vmatprep.subr.mxu0 0.0
    %4374 = vmatpush1.msra.mxu0 %v4273
    %4375 = vmatprep.subr.mxu0 0.0
    %4376 = vmatpush1.msra.mxu0 0.0
    %4377 = vmatprep.subr.mxu0 0.0
    %4378 = vmatpush1.msra.mxu0 0.0
    %4379 = vmatprep.subr.mxu0 0.0
    %4380 = vmatpush1.msra.mxu0 0.0
    %4381 = vmatprep.subr.mxu0 0.0
    %4382 = vmatpush1.msra.mxu0 0.0
    %4383 = vmatprep.subr.mxu0 0.0
    %4384 = vmatpush1.msra.mxu0 0.0
    %4385 = vmatprep.subr.mxu0 0.0
    %4386 = vmatpush1.msra.mxu0 0.0
    %4387 = vmatprep.subr.mxu0 0.0
    %4388 = vmatpush1.msra.mxu0 0.0
    %4389 = vmatprep.subr.mxu0 0.0
    %4390 = vmatpush1.msra.mxu0 0.0
    %4391 = vmatprep.subr.mxu0 0.0
    %4392 = vmatpush1.msra.mxu0 0.0
    %4393 = vmatprep.subr.mxu0 0.0
    %4394 = vmatpush1.msra.mxu0 0.0
    %4395 = vmatprep.subr.mxu0 0.0
    %4396 = vmatpush1.msra.mxu0 0.0
    %4397 = vmatprep.subr.mxu0 0.0
    %4398 = vmatpush1.msra.mxu0 0.0
    %4399 = vmatprep.subr.mxu0 0.0
    %4400 = vmatpush1.msra.mxu0 0.0
    %4401 = vmatprep.subr.mxu0 0.0
    %4402 = vmatpush1.msra.mxu0 0.0
    %4403 = vmatprep.subr.mxu0 0.0
    %4404 = vmatpush1.msra.mxu0 0.0
    %4405 = vmatprep.subr.mxu0 0.0
    %4406 = vmatpush1.msra.mxu0 0.0
    %4407 = vmatprep.subr.mxu0 0.0
    %4408 = vmatpush1.msra.mxu0 0.0
    %4409 = vmatprep.subr.mxu0 0.0
    %4410 = vmatpush1.msra.mxu0 0.0
    %4411 = vmatprep.subr.mxu0 0.0
    %4412 = vmatpush1.msra.mxu0 0.0
    %4413 = vmatprep.subr.mxu0 0.0
    %4414 = vmatpush1.msra.mxu0 0.0
    %4415 = vmatprep.subr.mxu0 0.0
    %4416 = vmatpush1.msra.mxu0 0.0
    %4417 = vmatprep.subr.mxu0 0.0
    %4418 = vmatpush1.msra.mxu0 0.0
    %4419 = vmatprep.subr.mxu0 0.0
    %4420 = vmatpush1.msra.mxu0 0.0
    %4421 = vmatprep.subr.mxu0 0.0
    %4422 = vmatpush1.msra.mxu0 0.0
    %4423 = vmatprep.subr.mxu0 0.0
    %4424 = vmatpush1.msra.mxu0 0.0
    %4425 = vmatprep.subr.mxu0 0.0
    %4426 = vmatpush1.msra.mxu0 0.0
    %4427 = vmatprep.subr.mxu0 0.0
    %4428 = vmatpush1.msra.mxu0 0.0
    %4429 = vmatprep.subr.mxu0 0.0
    %4430 = vmatpush1.msra.mxu0 0.0
    %4431 = vmatprep.subr.mxu0 0.0
    %4432 = vmatpush1.msra.mxu0 0.0
    %4433 = vmatprep.subr.mxu0 0.0
    %4434 = vmatpush1.msra.mxu0 0.0
    %4435 = vmatprep.subr.mxu0 0.0
    %4436 = vmatpush1.msra.mxu0 0.0
    %4437 = vmatprep.mubr.f32.mxu0 0.0
    %4438 = vmatmul.mubr.f32.gmra.mrb[0].mxu0 %v4371
    %v4439 = vpop.f32.mrb[0].mxu0
    %v4440 = vadd.f32 0.0, %v4439
    %v4441 = vpop.f32.mrb[0].mxu0
    %4442 = vdwg.mxu0
    %4443 = vst.msk [vmem:[#allocation23] sm:$0xff] %vm565, %v4369
    %4444 = vrot.lane.b32.xlu0 %v4196, 96
    %v4445 = vpop.permute.xlu0 %4444
    %4446 = vrot.lane.b32.xlu0 %v4198, 96
    %v4447 = vpop.permute.xlu0 %4446
    %v4448 = vsel %vm486, %v4445, 0
    %v4450 = vsel %vm486, %v4447, 0
    %4452 = vmatprep.subr.mxu0 0.0
    %4453 = vmatpush1.xpose.msra.mxu0 %v4450
    %4454 = vmatprep.subr.mxu0 0.0
    %4455 = vmatpush1.xpose.msra.mxu0 0.0
    %4456 = vmatprep.subr.mxu0 0.0
    %4457 = vmatpush1.xpose.msra.mxu0 0.0
    %4458 = vmatprep.subr.mxu0 0.0
    %4459 = vmatpush1.xpose.msra.mxu0 0.0
    %4460 = vmatprep.subr.mxu0 0.0
    %4461 = vmatpush1.xpose.msra.mxu0 0.0
    %4462 = vmatprep.subr.mxu0 0.0
    %4463 = vmatpush1.xpose.msra.mxu0 0.0
    %4464 = vmatprep.subr.mxu0 0.0
    %4465 = vmatpush1.xpose.msra.mxu0 0.0
    %4466 = vmatprep.subr.mxu0 0.0
    %4467 = vmatpush1.xpose.msra.mxu0 0.0
    %4468 = vmatprep.subr.mxu0 0.0
    %4469 = vmatpush1.xpose.msra.mxu0 0.0
    %4470 = vmatprep.subr.mxu0 0.0
    %4471 = vmatpush1.xpose.msra.mxu0 0.0
    %4472 = vmatprep.subr.mxu0 0.0
    %4473 = vmatpush1.xpose.msra.mxu0 0.0
    %4474 = vmatprep.subr.mxu0 0.0
    %4475 = vmatpush1.xpose.msra.mxu0 0.0
    %4476 = vmatprep.subr.mxu0 0.0
    %4477 = vmatpush1.xpose.msra.mxu0 0.0
    %4478 = vmatprep.subr.mxu0 0.0
    %4479 = vmatpush1.xpose.msra.mxu0 0.0
    %4480 = vmatprep.subr.mxu0 0.0
    %4481 = vmatpush1.xpose.msra.mxu0 0.0
    %4482 = vmatprep.subr.mxu0 0.0
    %4483 = vmatpush1.xpose.msra.mxu0 0.0
    %4484 = vmatprep.subr.mxu0 0.0
    %4485 = vmatpush1.xpose.msra.mxu0 0.0
    %4486 = vmatprep.subr.mxu0 0.0
    %4487 = vmatpush1.xpose.msra.mxu0 0.0
    %4488 = vmatprep.subr.mxu0 0.0
    %4489 = vmatpush1.xpose.msra.mxu0 0.0
    %4490 = vmatprep.subr.mxu0 0.0
    %4491 = vmatpush1.xpose.msra.mxu0 0.0
    %4492 = vmatprep.subr.mxu0 0.0
    %4493 = vmatpush1.xpose.msra.mxu0 0.0
    %4494 = vmatprep.subr.mxu0 0.0
    %4495 = vmatpush1.xpose.msra.mxu0 0.0
    %4496 = vmatprep.subr.mxu0 0.0
    %4497 = vmatpush1.xpose.msra.mxu0 0.0
    %4498 = vmatprep.subr.mxu0 0.0
    %4499 = vmatpush1.xpose.msra.mxu0 0.0
    %4500 = vmatprep.subr.mxu0 0.0
    %4501 = vmatpush1.xpose.msra.mxu0 0.0
    %4502 = vmatprep.subr.mxu0 0.0
    %4503 = vmatpush1.xpose.msra.mxu0 0.0
    %4504 = vmatprep.subr.mxu0 0.0
    %4505 = vmatpush1.xpose.msra.mxu0 0.0
    %4506 = vmatprep.subr.mxu0 0.0
    %4507 = vmatpush1.xpose.msra.mxu0 0.0
    %4508 = vmatprep.subr.mxu0 0.0
    %4509 = vmatpush1.xpose.msra.mxu0 0.0
    %4510 = vmatprep.subr.mxu0 0.0
    %4511 = vmatpush1.xpose.msra.mxu0 0.0
    %4512 = vmatprep.subr.mxu0 0.0
    %4513 = vmatpush1.xpose.msra.mxu0 0.0
    %4514 = vmatprep.subr.mxu0 0.0
    %4515 = vmatpush1.xpose.msra.mxu0 0.0
    %4516 = vmatprep.mubr.f32.mxu0 0.0
    %4517 = vmatmul.mubr.f32.gmra.mrb[0].mxu0 %v4448
    %v4518 = vpop.f32.mrb[0].mxu0
    %v4519 = vadd.f32 0.0, %v4518
    %v4520 = vpop.f32.mrb[0].mxu0
    %4521 = vdwg.mxu0
    %v4522 = vmul.f32 %v4519, 0.17677669
    %v4523 = vsel %vm268, %v4522, -1e+09
    %v4524 = vsel %vm565, %v4523, -inf
    %4525 = vmax.xlane.f32.xlu0 %v4524
    %v4526 = vpop.xlane.xlu0 %4525
    %v4527 = vsub.f32 %v4523, %v4526
    %v4528 = vmul.f32 %v4527, 1.442695
    %v4529 = vpow.pop %v4528
    %v4530 = vsel %vm565, %v4529, 0.0
    %4531 = vadd.xlane.f32.xlu0 %v4530
    %v4532 = vpop.xlane.xlu0 %4531
    %v4533 = vrcp.pop %v4532
    %v4534 = vmul.f32 %v4529, %v4533
    %4536 = vrot.lane.b32.xlu0 %v4273, 96
    %v4537 = vpop.permute.xlu0 %4536
    %v4540 = vsel %vm565, %v4534, 0
    %4542 = vmatprep.subr.mxu0 0.0
    %4543 = vmatpush1.msra.mxu0 %v4537
    %4544 = vmatprep.subr.mxu0 0.0
    %4545 = vmatpush1.msra.mxu0 0.0
    %4546 = vmatprep.subr.mxu0 0.0
    %4547 = vmatpush1.msra.mxu0 0.0
    %4548 = vmatprep.subr.mxu0 0.0
    %4549 = vmatpush1.msra.mxu0 0.0
    %4550 = vmatprep.subr.mxu0 0.0
    %4551 = vmatpush1.msra.mxu0 0.0
    %4552 = vmatprep.subr.mxu0 0.0
    %4553 = vmatpush1.msra.mxu0 0.0
    %4554 = vmatprep.subr.mxu0 0.0
    %4555 = vmatpush1.msra.mxu0 0.0
    %4556 = vmatprep.subr.mxu0 0.0
    %4557 = vmatpush1.msra.mxu0 0.0
    %4558 = vmatprep.subr.mxu0 0.0
    %4559 = vmatpush1.msra.mxu0 0.0
    %4560 = vmatprep.subr.mxu0 0.0
    %4561 = vmatpush1.msra.mxu0 0.0
    %4562 = vmatprep.subr.mxu0 0.0
    %4563 = vmatpush1.msra.mxu0 0.0
    %4564 = vmatprep.subr.mxu0 0.0
    %4565 = vmatpush1.msra.mxu0 0.0
    %4566 = vmatprep.subr.mxu0 0.0
    %4567 = vmatpush1.msra.mxu0 0.0
    %4568 = vmatprep.subr.mxu0 0.0
    %4569 = vmatpush1.msra.mxu0 0.0
    %4570 = vmatprep.subr.mxu0 0.0
    %4571 = vmatpush1.msra.mxu0 0.0
    %4572 = vmatprep.subr.mxu0 0.0
    %4573 = vmatpush1.msra.mxu0 0.0
    %4574 = vmatprep.subr.mxu0 0.0
    %4575 = vmatpush1.msra.mxu0 0.0
    %4576 = vmatprep.subr.mxu0 0.0
    %4577 = vmatpush1.msra.mxu0 0.0
    %4578 = vmatprep.subr.mxu0 0.0
    %4579 = vmatpush1.msra.mxu0 0.0
    %4580 = vmatprep.subr.mxu0 0.0
    %4581 = vmatpush1.msra.mxu0 0.0
    %4582 = vmatprep.subr.mxu0 0.0
    %4583 = vmatpush1.msra.mxu0 0.0
    %4584 = vmatprep.subr.mxu0 0.0
    %4585 = vmatpush1.msra.mxu0 0.0
    %4586 = vmatprep.subr.mxu0 0.0
    %4587 = vmatpush1.msra.mxu0 0.0
    %4588 = vmatprep.subr.mxu0 0.0
    %4589 = vmatpush1.msra.mxu0 0.0
    %4590 = vmatprep.subr.mxu0 0.0
    %4591 = vmatpush1.msra.mxu0 0.0
    %4592 = vmatprep.subr.mxu0 0.0
    %4593 = vmatpush1.msra.mxu0 0.0
    %4594 = vmatprep.subr.mxu0 0.0
    %4595 = vmatpush1.msra.mxu0 0.0
    %4596 = vmatprep.subr.mxu0 0.0
    %4597 = vmatpush1.msra.mxu0 0.0
    %4598 = vmatprep.subr.mxu0 0.0
    %4599 = vmatpush1.msra.mxu0 0.0
    %4600 = vmatprep.subr.mxu0 0.0
    %4601 = vmatpush1.msra.mxu0 0.0
    %4602 = vmatprep.subr.mxu0 0.0
    %4603 = vmatpush1.msra.mxu0 0.0
    %4604 = vmatprep.subr.mxu0 0.0
    %4605 = vmatpush1.msra.mxu0 0.0
    %4606 = vmatprep.mubr.f32.mxu0 0.0
    %4607 = vmatmul.mubr.f32.gmra.mrb[0].mxu0 %v4540
    %v4608 = vpop.f32.mrb[0].mxu0
    %v4609 = vadd.f32 0.0, %v4608
    %v4610 = vpop.f32.mrb[0].mxu0
    %4611 = vdwg.mxu0
    %s4612 = scalar_lea.vmem [#allocation23], 8
    %4613 = vst.msk [vmem:[%s4612] sm:$0xff] %vm565, %v4534
    %4614 = vrot.lane.b32.xlu0 %v4196, 64
    %v4615 = vpop.permute.xlu0 %4614
    %4616 = vrot.lane.b32.xlu0 %v4198, 64
    %v4617 = vpop.permute.xlu0 %4616
    %v4618 = vsel %vm486, %v4615, 0
    %v4620 = vsel %vm486, %v4617, 0
    %4622 = vmatprep.subr.mxu0 0.0
    %4623 = vmatpush1.xpose.msra.mxu0 %v4620
    %4624 = vmatprep.subr.mxu0 0.0
    %4625 = vmatpush1.xpose.msra.mxu0 0.0
    %4626 = vmatprep.subr.mxu0 0.0
    %4627 = vmatpush1.xpose.msra.mxu0 0.0
    %4628 = vmatprep.subr.mxu0 0.0
    %4629 = vmatpush1.xpose.msra.mxu0 0.0
    %4630 = vmatprep.subr.mxu0 0.0
    %4631 = vmatpush1.xpose.msra.mxu0 0.0
    %4632 = vmatprep.subr.mxu0 0.0
    %4633 = vmatpush1.xpose.msra.mxu0 0.0
    %4634 = vmatprep.subr.mxu0 0.0
    %4635 = vmatpush1.xpose.msra.mxu0 0.0
    %4636 = vmatprep.subr.mxu0 0.0
    %4637 = vmatpush1.xpose.msra.mxu0 0.0
    %4638 = vmatprep.subr.mxu0 0.0
    %4639 = vmatpush1.xpose.msra.mxu0 0.0
    %4640 = vmatprep.subr.mxu0 0.0
    %4641 = vmatpush1.xpose.msra.mxu0 0.0
    %4642 = vmatprep.subr.mxu0 0.0
    %4643 = vmatpush1.xpose.msra.mxu0 0.0
    %4644 = vmatprep.subr.mxu0 0.0
    %4645 = vmatpush1.xpose.msra.mxu0 0.0
    %4646 = vmatprep.subr.mxu0 0.0
    %4647 = vmatpush1.xpose.msra.mxu0 0.0
    %4648 = vmatprep.subr.mxu0 0.0
    %4649 = vmatpush1.xpose.msra.mxu0 0.0
    %4650 = vmatprep.subr.mxu0 0.0
    %4651 = vmatpush1.xpose.msra.mxu0 0.0
    %4652 = vmatprep.subr.mxu0 0.0
    %4653 = vmatpush1.xpose.msra.mxu0 0.0
    %4654 = vmatprep.subr.mxu0 0.0
    %4655 = vmatpush1.xpose.msra.mxu0 0.0
    %4656 = vmatprep.subr.mxu0 0.0
    %4657 = vmatpush1.xpose.msra.mxu0 0.0
    %4658 = vmatprep.subr.mxu0 0.0
    %4659 = vmatpush1.xpose.msra.mxu0 0.0
    %4660 = vmatprep.subr.mxu0 0.0
    %4661 = vmatpush1.xpose.msra.mxu0 0.0
    %4662 = vmatprep.subr.mxu0 0.0
    %4663 = vmatpush1.xpose.msra.mxu0 0.0
    %4664 = vmatprep.subr.mxu0 0.0
    %4665 = vmatpush1.xpose.msra.mxu0 0.0
    %4666 = vmatprep.subr.mxu0 0.0
    %4667 = vmatpush1.xpose.msra.mxu0 0.0
    %4668 = vmatprep.subr.mxu0 0.0
    %4669 = vmatpush1.xpose.msra.mxu0 0.0
    %4670 = vmatprep.subr.mxu0 0.0
    %4671 = vmatpush1.xpose.msra.mxu0 0.0
    %4672 = vmatprep.subr.mxu0 0.0
    %4673 = vmatpush1.xpose.msra.mxu0 0.0
    %4674 = vmatprep.subr.mxu0 0.0
    %4675 = vmatpush1.xpose.msra.mxu0 0.0
    %4676 = vmatprep.subr.mxu0 0.0
    %4677 = vmatpush1.xpose.msra.mxu0 0.0
    %4678 = vmatprep.subr.mxu0 0.0
    %4679 = vmatpush1.xpose.msra.mxu0 0.0
    %4680 = vmatprep.subr.mxu0 0.0
    %4681 = vmatpush1.xpose.msra.mxu0 0.0
    %4682 = vmatprep.subr.mxu0 0.0
    %4683 = vmatpush1.xpose.msra.mxu0 0.0
    %4684 = vmatprep.subr.mxu0 0.0
    %4685 = vmatpush1.xpose.msra.mxu0 0.0
    %4686 = vmatprep.mubr.f32.mxu0 0.0
    %4687 = vmatmul.mubr.f32.gmra.mrb[0].mxu0 %v4618
    %v4688 = vpop.f32.mrb[0].mxu0
    %v4689 = vadd.f32 0.0, %v4688
    %v4690 = vpop.f32.mrb[0].mxu0
    %4691 = vdwg.mxu0
    %v4692 = vmul.f32 %v4689, 0.17677669
    %v4693 = vsel %vm268, %v4692, -1e+09
    %v4694 = vsel %vm565, %v4693, -inf
    %4695 = vmax.xlane.f32.xlu0 %v4694
    %v4696 = vpop.xlane.xlu0 %4695
    %v4697 = vsub.f32 %v4693, %v4696
    %v4698 = vmul.f32 %v4697, 1.442695
    %v4699 = vpow.pop %v4698
    %v4700 = vsel %vm565, %v4699, 0.0
    %4701 = vadd.xlane.f32.xlu0 %v4700
    %v4702 = vpop.xlane.xlu0 %4701
    %v4703 = vrcp.pop %v4702
    %v4704 = vmul.f32 %v4699, %v4703
    %4705 = vrot.lane.b32.xlu0 %v4273, 64
    %v4706 = vpop.permute.xlu0 %4705
    %v4709 = vsel %vm565, %v4704, 0
    %4711 = vmatprep.subr.mxu0 0.0
    %4712 = vmatpush1.msra.mxu0 %v4706
    %4713 = vmatprep.subr.mxu0 0.0
    %4714 = vmatpush1.msra.mxu0 0.0
    %4715 = vmatprep.subr.mxu0 0.0
    %4716 = vmatpush1.msra.mxu0 0.0
    %4717 = vmatprep.subr.mxu0 0.0
    %4718 = vmatpush1.msra.mxu0 0.0
    %4719 = vmatprep.subr.mxu0 0.0
    %4720 = vmatpush1.msra.mxu0 0.0
    %4721 = vmatprep.subr.mxu0 0.0
    %4722 = vmatpush1.msra.mxu0 0.0
    %4723 = vmatprep.subr.mxu0 0.0
    %4724 = vmatpush1.msra.mxu0 0.0
    %4725 = vmatprep.subr.mxu0 0.0
    %4726 = vmatpush1.msra.mxu0 0.0
    %4727 = vmatprep.subr.mxu0 0.0
    %4728 = vmatpush1.msra.mxu0 0.0
    %4729 = vmatprep.subr.mxu0 0.0
    %4730 = vmatpush1.msra.mxu0 0.0
    %4731 = vmatprep.subr.mxu0 0.0
    %4732 = vmatpush1.msra.mxu0 0.0
    %4733 = vmatprep.subr.mxu0 0.0
    %4734 = vmatpush1.msra.mxu0 0.0
    %4735 = vmatprep.subr.mxu0 0.0
    %4736 = vmatpush1.msra.mxu0 0.0
    %4737 = vmatprep.subr.mxu0 0.0
    %4738 = vmatpush1.msra.mxu0 0.0
    %4739 = vmatprep.subr.mxu0 0.0
    %4740 = vmatpush1.msra.mxu0 0.0
    %4741 = vmatprep.subr.mxu0 0.0
    %4742 = vmatpush1.msra.mxu0 0.0
    %4743 = vmatprep.subr.mxu0 0.0
    %4744 = vmatpush1.msra.mxu0 0.0
    %4745 = vmatprep.subr.mxu0 0.0
    %4746 = vmatpush1.msra.mxu0 0.0
    %4747 = vmatprep.subr.mxu0 0.0
    %4748 = vmatpush1.msra.mxu0 0.0
    %4749 = vmatprep.subr.mxu0 0.0
    %4750 = vmatpush1.msra.mxu0 0.0
    %4751 = vmatprep.subr.mxu0 0.0
    %4752 = vmatpush1.msra.mxu0 0.0
    %4753 = vmatprep.subr.mxu0 0.0
    %4754 = vmatpush1.msra.mxu0 0.0
    %4755 = vmatprep.subr.mxu0 0.0
    %4756 = vmatpush1.msra.mxu0 0.0
    %4757 = vmatprep.subr.mxu0 0.0
    %4758 = vmatpush1.msra.mxu0 0.0
    %4759 = vmatprep.subr.mxu0 0.0
    %4760 = vmatpush1.msra.mxu0 0.0
    %4761 = vmatprep.subr.mxu0 0.0
    %4762 = vmatpush1.msra.mxu0 0.0
    %4763 = vmatprep.subr.mxu0 0.0
    %4764 = vmatpush1.msra.mxu0 0.0
    %4765 = vmatprep.subr.mxu0 0.0
    %4766 = vmatpush1.msra.mxu0 0.0
    %4767 = vmatprep.subr.mxu0 0.0
    %4768 = vmatpush1.msra.mxu0 0.0
    %4769 = vmatprep.subr.mxu0 0.0
    %4770 = vmatpush1.msra.mxu0 0.0
    %4771 = vmatprep.subr.mxu0 0.0
    %4772 = vmatpush1.msra.mxu0 0.0
    %4773 = vmatprep.subr.mxu0 0.0
    %4774 = vmatpush1.msra.mxu0 0.0
    %4775 = vmatprep.mubr.f32.mxu0 0.0
    %4776 = vmatmul.mubr.f32.gmra.mrb[0].mxu0 %v4709
    %v4777 = vpop.f32.mrb[0].mxu0
    %v4778 = vadd.f32 0.0, %v4777
    %v4779 = vpop.f32.mrb[0].mxu0
    %4780 = vdwg.mxu0
    %s4781 = scalar_lea.vmem [#allocation23], 16
    %4782 = vst.msk [vmem:[%s4781] sm:$0xff] %vm565, %v4704
    %4783 = vrot.lane.b32.xlu0 %v4196, 32
    %v4784 = vpop.permute.xlu0 %4783
    %4785 = vrot.lane.b32.xlu0 %v4198, 32
    %v4786 = vpop.permute.xlu0 %4785
    %v4787 = vsel %vm486, %v4784, 0
    %v4789 = vsel %vm486, %v4786, 0
    %4791 = vmatprep.subr.mxu0 0.0
    %4792 = vmatpush1.xpose.msra.mxu0 %v4789
    %4793 = vmatprep.subr.mxu0 0.0
    %4794 = vmatpush1.xpose.msra.mxu0 0.0
    %4795 = vmatprep.subr.mxu0 0.0
    %4796 = vmatpush1.xpose.msra.mxu0 0.0
    %4797 = vmatprep.subr.mxu0 0.0
    %4798 = vmatpush1.xpose.msra.mxu0 0.0
    %4799 = vmatprep.subr.mxu0 0.0
    %4800 = vmatpush1.xpose.msra.mxu0 0.0
    %4801 = vmatprep.subr.mxu0 0.0
    %4802 = vmatpush1.xpose.msra.mxu0 0.0
    %4803 = vmatprep.subr.mxu0 0.0
    %4804 = vmatpush1.xpose.msra.mxu0 0.0
    %4805 = vmatprep.subr.mxu0 0.0
    %4806 = vmatpush1.xpose.msra.mxu0 0.0
    %4807 = vmatprep.subr.mxu0 0.0
    %4808 = vmatpush1.xpose.msra.mxu0 0.0
    %4809 = vmatprep.subr.mxu0 0.0
    %4810 = vmatpush1.xpose.msra.mxu0 0.0
    %4811 = vmatprep.subr.mxu0 0.0
    %4812 = vmatpush1.xpose.msra.mxu0 0.0
    %4813 = vmatprep.subr.mxu0 0.0
    %4814 = vmatpush1.xpose.msra.mxu0 0.0
    %4815 = vmatprep.subr.mxu0 0.0
    %4816 = vmatpush1.xpose.msra.mxu0 0.0
    %4817 = vmatprep.subr.mxu0 0.0
    %4818 = vmatpush1.xpose.msra.mxu0 0.0
    %4819 = vmatprep.subr.mxu0 0.0
    %4820 = vmatpush1.xpose.msra.mxu0 0.0
    %4821 = vmatprep.subr.mxu0 0.0
    %4822 = vmatpush1.xpose.msra.mxu0 0.0
    %4823 = vmatprep.subr.mxu0 0.0
    %4824 = vmatpush1.xpose.msra.mxu0 0.0
    %4825 = vmatprep.subr.mxu0 0.0
    %4826 = vmatpush1.xpose.msra.mxu0 0.0
    %4827 = vmatprep.subr.mxu0 0.0
    %4828 = vmatpush1.xpose.msra.mxu0 0.0
    %4829 = vmatprep.subr.mxu0 0.0
    %4830 = vmatpush1.xpose.msra.mxu0 0.0
    %4831 = vmatprep.subr.mxu0 0.0
    %4832 = vmatpush1.xpose.msra.mxu0 0.0
    %4833 = vmatprep.subr.mxu0 0.0
    %4834 = vmatpush1.xpose.msra.mxu0 0.0
    %4835 = vmatprep.subr.mxu0 0.0
    %4836 = vmatpush1.xpose.msra.mxu0 0.0
    %4837 = vmatprep.subr.mxu0 0.0
    %4838 = vmatpush1.xpose.msra.mxu0 0.0
    %4839 = vmatprep.subr.mxu0 0.0
    %4840 = vmatpush1.xpose.msra.mxu0 0.0
    %4841 = vmatprep.subr.mxu0 0.0
    %4842 = vmatpush1.xpose.msra.mxu0 0.0
    %4843 = vmatprep.subr.mxu0 0.0
    %4844 = vmatpush1.xpose.msra.mxu0 0.0
    %4845 = vmatprep.subr.mxu0 0.0
    %4846 = vmatpush1.xpose.msra.mxu0 0.0
    %4847 = vmatprep.subr.mxu0 0.0
    %4848 = vmatpush1.xpose.msra.mxu0 0.0
    %4849 = vmatprep.subr.mxu0 0.0
    %4850 = vmatpush1.xpose.msra.mxu0 0.0
    %4851 = vmatprep.subr.mxu0 0.0
    %4852 = vmatpush1.xpose.msra.mxu0 0.0
    %4853 = vmatprep.subr.mxu0 0.0
    %4854 = vmatpush1.xpose.msra.mxu0 0.0
    %4855 = vmatprep.mubr.f32.mxu0 0.0
    %4856 = vmatmul.mubr.f32.gmra.mrb[0].mxu0 %v4787
    %v4857 = vpop.f32.mrb[0].mxu0
    %v4858 = vadd.f32 0.0, %v4857
    %v4859 = vpop.f32.mrb[0].mxu0
    %4860 = vdwg.mxu0
    %v4861 = vmul.f32 %v4858, 0.17677669
    %v4862 = vsel %vm268, %v4861, -1e+09
    %v4863 = vsel %vm565, %v4862, -inf
    %4864 = vmax.xlane.f32.xlu0 %v4863
    %v4865 = vpop.xlane.xlu0 %4864
    %v4866 = vsub.f32 %v4862, %v4865
    %v4867 = vmul.f32 %v4866, 1.442695
    %v4868 = vpow.pop %v4867
    %v4869 = vsel %vm565, %v4868, 0.0
    %4870 = vadd.xlane.f32.xlu0 %v4869
    %v4871 = vpop.xlane.xlu0 %4870
    %v4872 = vrcp.pop %v4871
    %v4873 = vmul.f32 %v4868, %v4872
    %4874 = vrot.lane.b32.xlu0 %v4273, 32
    %v4875 = vpop.permute.xlu0 %4874
    %v4878 = vsel %vm565, %v4873, 0
    %4880 = vmatprep.subr.mxu0 0.0
    %4881 = vmatpush1.msra.mxu0 %v4875
    %4882 = vmatprep.subr.mxu0 0.0
    %4883 = vmatpush1.msra.mxu0 0.0
    %4884 = vmatprep.subr.mxu0 0.0
    %4885 = vmatpush1.msra.mxu0 0.0
    %4886 = vmatprep.subr.mxu0 0.0
    %4887 = vmatpush1.msra.mxu0 0.0
    %4888 = vmatprep.subr.mxu0 0.0
    %4889 = vmatpush1.msra.mxu0 0.0
    %4890 = vmatprep.subr.mxu0 0.0
    %4891 = vmatpush1.msra.mxu0 0.0
    %4892 = vmatprep.subr.mxu0 0.0
    %4893 = vmatpush1.msra.mxu0 0.0
    %4894 = vmatprep.subr.mxu0 0.0
    %4895 = vmatpush1.msra.mxu0 0.0
    %4896 = vmatprep.subr.mxu0 0.0
    %4897 = vmatpush1.msra.mxu0 0.0
    %4898 = vmatprep.subr.mxu0 0.0
    %4899 = vmatpush1.msra.mxu0 0.0
    %4900 = vmatprep.subr.mxu0 0.0
    %4901 = vmatpush1.msra.mxu0 0.0
    %4902 = vmatprep.subr.mxu0 0.0
    %4903 = vmatpush1.msra.mxu0 0.0
    %4904 = vmatprep.subr.mxu0 0.0
    %4905 = vmatpush1.msra.mxu0 0.0
    %4906 = vmatprep.subr.mxu0 0.0
    %4907 = vmatpush1.msra.mxu0 0.0
    %4908 = vmatprep.subr.mxu0 0.0
    %4909 = vmatpush1.msra.mxu0 0.0
    %4910 = vmatprep.subr.mxu0 0.0
    %4911 = vmatpush1.msra.mxu0 0.0
    %4912 = vmatprep.subr.mxu0 0.0
    %4913 = vmatpush1.msra.mxu0 0.0
    %4914 = vmatprep.subr.mxu0 0.0
    %4915 = vmatpush1.msra.mxu0 0.0
    %4916 = vmatprep.subr.mxu0 0.0
    %4917 = vmatpush1.msra.mxu0 0.0
    %4918 = vmatprep.subr.mxu0 0.0
    %4919 = vmatpush1.msra.mxu0 0.0
    %4920 = vmatprep.subr.mxu0 0.0
    %4921 = vmatpush1.msra.mxu0 0.0
    %4922 = vmatprep.subr.mxu0 0.0
    %4923 = vmatpush1.msra.mxu0 0.0
    %4924 = vmatprep.subr.mxu0 0.0
    %4925 = vmatpush1.msra.mxu0 0.0
    %4926 = vmatprep.subr.mxu0 0.0
    %4927 = vmatpush1.msra.mxu0 0.0
    %4928 = vmatprep.subr.mxu0 0.0
    %4929 = vmatpush1.msra.mxu0 0.0
    %4930 = vmatprep.subr.mxu0 0.0
    %4931 = vmatpush1.msra.mxu0 0.0
    %4932 = vmatprep.subr.mxu0 0.0
    %4933 = vmatpush1.msra.mxu0 0.0
    %4934 = vmatprep.subr.mxu0 0.0
    %4935 = vmatpush1.msra.mxu0 0.0
    %4936 = vmatprep.subr.mxu0 0.0
    %4937 = vmatpush1.msra.mxu0 0.0
    %4938 = vmatprep.subr.mxu0 0.0
    %4939 = vmatpush1.msra.mxu0 0.0
    %4940 = vmatprep.subr.mxu0 0.0
    %4941 = vmatpush1.msra.mxu0 0.0
    %4942 = vmatprep.subr.mxu0 0.0
    %4943 = vmatpush1.msra.mxu0 0.0
    %4944 = vmatprep.mubr.f32.mxu0 0.0
    %4945 = vmatmul.mubr.f32.gmra.mrb[0].mxu0 %v4878
    %v4946 = vpop.f32.mrb[0].mxu0
    %v4947 = vadd.f32 0.0, %v4946
    %v4948 = vpop.f32.mrb[0].mxu0
    %4949 = vdwg.mxu0
    %s4950 = scalar_lea.vmem [#allocation23], 24
    %4951 = vst.msk [vmem:[%s4950] sm:$0xff] %vm565, %v4873
    %4953 = vrot.lane.b32.xlu0 %v4609, 32
    %v4954 = vpop.permute.xlu0 %4953
    %4957 = vrot.lane.b32.xlu0 %v4778, 64
    %v4958 = vpop.permute.xlu0 %4957
    %4961 = vrot.lane.b32.xlu0 %v4947, 96
    %v4962 = vpop.permute.xlu0 %4961
    %v4964 = vsel %vm486, %v4440, %v4954
    %v4965 = vsel %vm1165, %v4964, %v4958
    %v4966 = vsel %vm1167, %v4965, %v4962
    %v4968 = vsel %vm486, %v4202, 0
    %v4971 = vsel %vm486, %v4204, 0
    %4973 = vmatprep.subr.mxu0 0.0
    %4974 = vmatpush1.xpose.msra.mxu0 %v4971
    %4975 = vmatprep.subr.mxu0 0.0
    %4976 = vmatpush1.xpose.msra.mxu0 0.0
    %4977 = vmatprep.subr.mxu0 0.0
    %4978 = vmatpush1.xpose.msra.mxu0 0.0
    %4979 = vmatprep.subr.mxu0 0.0
    %4980 = vmatpush1.xpose.msra.mxu0 0.0
    %4981 = vmatprep.subr.mxu0 0.0
    %4982 = vmatpush1.xpose.msra.mxu0 0.0
    %4983 = vmatprep.subr.mxu0 0.0
    %4984 = vmatpush1.xpose.msra.mxu0 0.0
    %4985 = vmatprep.subr.mxu0 0.0
    %4986 = vmatpush1.xpose.msra.mxu0 0.0
    %4987 = vmatprep.subr.mxu0 0.0
    %4988 = vmatpush1.xpose.msra.mxu0 0.0
    %4989 = vmatprep.subr.mxu0 0.0
    %4990 = vmatpush1.xpose.msra.mxu0 0.0
    %4991 = vmatprep.subr.mxu0 0.0
    %4992 = vmatpush1.xpose.msra.mxu0 0.0
    %4993 = vmatprep.subr.mxu0 0.0
    %4994 = vmatpush1.xpose.msra.mxu0 0.0
    %4995 = vmatprep.subr.mxu0 0.0
    %4996 = vmatpush1.xpose.msra.mxu0 0.0
    %4997 = vmatprep.subr.mxu0 0.0
    %4998 = vmatpush1.xpose.msra.mxu0 0.0
    %4999 = vmatprep.subr.mxu0 0.0
    %5000 = vmatpush1.xpose.msra.mxu0 0.0
    %5001 = vmatprep.subr.mxu0 0.0
    %5002 = vmatpush1.xpose.msra.mxu0 0.0
    %5003 = vmatprep.subr.mxu0 0.0
    %5004 = vmatpush1.xpose.msra.mxu0 0.0
    %5005 = vmatprep.subr.mxu0 0.0
    %5006 = vmatpush1.xpose.msra.mxu0 0.0
    %5007 = vmatprep.subr.mxu0 0.0
    %5008 = vmatpush1.xpose.msra.mxu0 0.0
    %5009 = vmatprep.subr.mxu0 0.0
    %5010 = vmatpush1.xpose.msra.mxu0 0.0
    %5011 = vmatprep.subr.mxu0 0.0
    %5012 = vmatpush1.xpose.msra.mxu0 0.0
    %5013 = vmatprep.subr.mxu0 0.0
    %5014 = vmatpush1.xpose.msra.mxu0 0.0
    %5015 = vmatprep.subr.mxu0 0.0
    %5016 = vmatpush1.xpose.msra.mxu0 0.0
    %5017 = vmatprep.subr.mxu0 0.0
    %5018 = vmatpush1.xpose.msra.mxu0 0.0
    %5019 = vmatprep.subr.mxu0 0.0
    %5020 = vmatpush1.xpose.msra.mxu0 0.0
    %5021 = vmatprep.subr.mxu0 0.0
    %5022 = vmatpush1.xpose.msra.mxu0 0.0
    %5023 = vmatprep.subr.mxu0 0.0
    %5024 = vmatpush1.xpose.msra.mxu0 0.0
    %5025 = vmatprep.subr.mxu0 0.0
    %5026 = vmatpush1.xpose.msra.mxu0 0.0
    %5027 = vmatprep.subr.mxu0 0.0
    %5028 = vmatpush1.xpose.msra.mxu0 0.0
    %5029 = vmatprep.subr.mxu0 0.0
    %5030 = vmatpush1.xpose.msra.mxu0 0.0
    %5031 = vmatprep.subr.mxu0 0.0
    %5032 = vmatpush1.xpose.msra.mxu0 0.0
    %5033 = vmatprep.subr.mxu0 0.0
    %5034 = vmatpush1.xpose.msra.mxu0 0.0
    %5035 = vmatprep.subr.mxu0 0.0
    %5036 = vmatpush1.xpose.msra.mxu0 0.0
    %5037 = vmatprep.mubr.f32.mxu0 0.0
    %5038 = vmatmul.mubr.f32.gmra.mrb[0].mxu0 %v4968
    %v5039 = vpop.f32.mrb[0].mxu0
    %v5040 = vadd.f32 0.0, %v5039
    %v5041 = vpop.f32.mrb[0].mxu0
    %5042 = vdwg.mxu0
    %v5043 = vmul.f32 %v5040, 0.17677669
    %v5044 = vsel %vm268, %v5043, -1e+09
    %v5045 = vsel %vm565, %v5044, -inf
    %5046 = vmax.xlane.f32.xlu0 %v5045
    %v5047 = vpop.xlane.xlu0 %5046
    %v5048 = vsub.f32 %v5044, %v5047
    %v5049 = vmul.f32 %v5048, 1.442695
    %v5050 = vpow.pop %v5049
    %v5051 = vsel %vm565, %v5050, 0.0
    %5052 = vadd.xlane.f32.xlu0 %v5051
    %v5053 = vpop.xlane.xlu0 %5052
    %v5054 = vrcp.pop %v5053
    %v5055 = vmul.f32 %v5050, %v5054
    %v5057 = vsel %vm565, %v5055, 0
    %5059 = vmatprep.subr.mxu0 0.0
    %5060 = vmatpush1.msra.mxu0 %v4278
    %5061 = vmatprep.subr.mxu0 0.0
    %5062 = vmatpush1.msra.mxu0 0.0
    %5063 = vmatprep.subr.mxu0 0.0
    %5064 = vmatpush1.msra.mxu0 0.0
    %5065 = vmatprep.subr.mxu0 0.0
    %5066 = vmatpush1.msra.mxu0 0.0
    %5067 = vmatprep.subr.mxu0 0.0
    %5068 = vmatpush1.msra.mxu0 0.0
    %5069 = vmatprep.subr.mxu0 0.0
    %5070 = vmatpush1.msra.mxu0 0.0
    %5071 = vmatprep.subr.mxu0 0.0
    %5072 = vmatpush1.msra.mxu0 0.0
    %5073 = vmatprep.subr.mxu0 0.0
    %5074 = vmatpush1.msra.mxu0 0.0
    %5075 = vmatprep.subr.mxu0 0.0
    %5076 = vmatpush1.msra.mxu0 0.0
    %5077 = vmatprep.subr.mxu0 0.0
    %5078 = vmatpush1.msra.mxu0 0.0
    %5079 = vmatprep.subr.mxu0 0.0
    %5080 = vmatpush1.msra.mxu0 0.0
    %5081 = vmatprep.subr.mxu0 0.0
    %5082 = vmatpush1.msra.mxu0 0.0
    %5083 = vmatprep.subr.mxu0 0.0
    %5084 = vmatpush1.msra.mxu0 0.0
    %5085 = vmatprep.subr.mxu0 0.0
    %5086 = vmatpush1.msra.mxu0 0.0
    %5087 = vmatprep.subr.mxu0 0.0
    %5088 = vmatpush1.msra.mxu0 0.0
    %5089 = vmatprep.subr.mxu0 0.0
    %5090 = vmatpush1.msra.mxu0 0.0
    %5091 = vmatprep.subr.mxu0 0.0
    %5092 = vmatpush1.msra.mxu0 0.0
    %5093 = vmatprep.subr.mxu0 0.0
    %5094 = vmatpush1.msra.mxu0 0.0
    %5095 = vmatprep.subr.mxu0 0.0
    %5096 = vmatpush1.msra.mxu0 0.0
    %5097 = vmatprep.subr.mxu0 0.0
    %5098 = vmatpush1.msra.mxu0 0.0
    %5099 = vmatprep.subr.mxu0 0.0
    %5100 = vmatpush1.msra.mxu0 0.0
    %5101 = vmatprep.subr.mxu0 0.0
    %5102 = vmatpush1.msra.mxu0 0.0
    %5103 = vmatprep.subr.mxu0 0.0
    %5104 = vmatpush1.msra.mxu0 0.0
    %5105 = vmatprep.subr.mxu0 0.0
    %5106 = vmatpush1.msra.mxu0 0.0
    %5107 = vmatprep.subr.mxu0 0.0
    %5108 = vmatpush1.msra.mxu0 0.0
    %5109 = vmatprep.subr.mxu0 0.0
    %5110 = vmatpush1.msra.mxu0 0.0
    %5111 = vmatprep.subr.mxu0 0.0
    %5112 = vmatpush1.msra.mxu0 0.0
    %5113 = vmatprep.subr.mxu0 0.0
    %5114 = vmatpush1.msra.mxu0 0.0
    %5115 = vmatprep.subr.mxu0 0.0
    %5116 = vmatpush1.msra.mxu0 0.0
    %5117 = vmatprep.subr.mxu0 0.0
    %5118 = vmatpush1.msra.mxu0 0.0
    %5119 = vmatprep.subr.mxu0 0.0
    %5120 = vmatpush1.msra.mxu0 0.0
    %5121 = vmatprep.subr.mxu0 0.0
    %5122 = vmatpush1.msra.mxu0 0.0
    %5123 = vmatprep.mubr.f32.mxu0 0.0
    %5124 = vmatmul.mubr.f32.gmra.mrb[0].mxu0 %v5057
    %v5125 = vpop.f32.mrb[0].mxu0
    %v5126 = vadd.f32 0.0, %v5125
    %v5127 = vpop.f32.mrb[0].mxu0
    %5128 = vdwg.mxu0
    %s5129 = scalar_lea.vmem [#allocation23], 32
    %5130 = vst.msk [vmem:[%s5129] sm:$0xff] %vm565, %v5055
    %5131 = vrot.lane.b32.xlu0 %v4202, 96
    %v5132 = vpop.permute.xlu0 %5131
    %5133 = vrot.lane.b32.xlu0 %v4204, 96
    %v5134 = vpop.permute.xlu0 %5133
    %v5135 = vsel %vm486, %v5132, 0
    %v5137 = vsel %vm486, %v5134, 0
    %5139 = vmatprep.subr.mxu0 0.0
    %5140 = vmatpush1.xpose.msra.mxu0 %v5137
    %5141 = vmatprep.subr.mxu0 0.0
    %5142 = vmatpush1.xpose.msra.mxu0 0.0
    %5143 = vmatprep.subr.mxu0 0.0
    %5144 = vmatpush1.xpose.msra.mxu0 0.0
    %5145 = vmatprep.subr.mxu0 0.0
    %5146 = vmatpush1.xpose.msra.mxu0 0.0
    %5147 = vmatprep.subr.mxu0 0.0
    %5148 = vmatpush1.xpose.msra.mxu0 0.0
    %5149 = vmatprep.subr.mxu0 0.0
    %5150 = vmatpush1.xpose.msra.mxu0 0.0
    %5151 = vmatprep.subr.mxu0 0.0
    %5152 = vmatpush1.xpose.msra.mxu0 0.0
    %5153 = vmatprep.subr.mxu0 0.0
    %5154 = vmatpush1.xpose.msra.mxu0 0.0
    %5155 = vmatprep.subr.mxu0 0.0
    %5156 = vmatpush1.xpose.msra.mxu0 0.0
    %5157 = vmatprep.subr.mxu0 0.0
    %5158 = vmatpush1.xpose.msra.mxu0 0.0
    %5159 = vmatprep.subr.mxu0 0.0
    %5160 = vmatpush1.xpose.msra.mxu0 0.0
    %5161 = vmatprep.subr.mxu0 0.0
    %5162 = vmatpush1.xpose.msra.mxu0 0.0
    %5163 = vmatprep.subr.mxu0 0.0
    %5164 = vmatpush1.xpose.msra.mxu0 0.0
    %5165 = vmatprep.subr.mxu0 0.0
    %5166 = vmatpush1.xpose.msra.mxu0 0.0
    %5167 = vmatprep.subr.mxu0 0.0
    %5168 = vmatpush1.xpose.msra.mxu0 0.0
    %5169 = vmatprep.subr.mxu0 0.0
    %5170 = vmatpush1.xpose.msra.mxu0 0.0
    %5171 = vmatprep.subr.mxu0 0.0
    %5172 = vmatpush1.xpose.msra.mxu0 0.0
    %5173 = vmatprep.subr.mxu0 0.0
    %5174 = vmatpush1.xpose.msra.mxu0 0.0
    %5175 = vmatprep.subr.mxu0 0.0
    %5176 = vmatpush1.xpose.msra.mxu0 0.0
    %5177 = vmatprep.subr.mxu0 0.0
    %5178 = vmatpush1.xpose.msra.mxu0 0.0
    %5179 = vmatprep.subr.mxu0 0.0
    %5180 = vmatpush1.xpose.msra.mxu0 0.0
    %5181 = vmatprep.subr.mxu0 0.0
    %5182 = vmatpush1.xpose.msra.mxu0 0.0
    %5183 = vmatprep.subr.mxu0 0.0
    %5184 = vmatpush1.xpose.msra.mxu0 0.0
    %5185 = vmatprep.subr.mxu0 0.0
    %5186 = vmatpush1.xpose.msra.mxu0 0.0
    %5187 = vmatprep.subr.mxu0 0.0
    %5188 = vmatpush1.xpose.msra.mxu0 0.0
    %5189 = vmatprep.subr.mxu0 0.0
    %5190 = vmatpush1.xpose.msra.mxu0 0.0
    %5191 = vmatprep.subr.mxu0 0.0
    %5192 = vmatpush1.xpose.msra.mxu0 0.0
    %5193 = vmatprep.subr.mxu0 0.0
    %5194 = vmatpush1.xpose.msra.mxu0 0.0
    %5195 = vmatprep.subr.mxu0 0.0
    %5196 = vmatpush1.xpose.msra.mxu0 0.0
    %5197 = vmatprep.subr.mxu0 0.0
    %5198 = vmatpush1.xpose.msra.mxu0 0.0
    %5199 = vmatprep.subr.mxu0 0.0
    %5200 = vmatpush1.xpose.msra.mxu0 0.0
    %5201 = vmatprep.subr.mxu0 0.0
    %5202 = vmatpush1.xpose.msra.mxu0 0.0
    %5203 = vmatprep.mubr.f32.mxu0 0.0
    %5204 = vmatmul.mubr.f32.gmra.mrb[0].mxu0 %v5135
    %v5205 = vpop.f32.mrb[0].mxu0
    %v5206 = vadd.f32 0.0, %v5205
    %v5207 = vpop.f32.mrb[0].mxu0
    %5208 = vdwg.mxu0
    %v5209 = vmul.f32 %v5206, 0.17677669
    %v5210 = vsel %vm268, %v5209, -1e+09
    %v5211 = vsel %vm565, %v5210, -inf
    %5212 = vmax.xlane.f32.xlu0 %v5211
    %v5213 = vpop.xlane.xlu0 %5212
    %v5214 = vsub.f32 %v5210, %v5213
    %v5215 = vmul.f32 %v5214, 1.442695
    %v5216 = vpow.pop %v5215
    %v5217 = vsel %vm565, %v5216, 0.0
    %5218 = vadd.xlane.f32.xlu0 %v5217
    %v5219 = vpop.xlane.xlu0 %5218
    %v5220 = vrcp.pop %v5219
    %v5221 = vmul.f32 %v5216, %v5220
    %5223 = vrot.lane.b32.xlu0 %v4278, 96
    %v5224 = vpop.permute.xlu0 %5223
    %v5227 = vsel %vm565, %v5221, 0
    %5229 = vmatprep.subr.mxu0 0.0
    %5230 = vmatpush1.msra.mxu0 %v5224
    %5231 = vmatprep.subr.mxu0 0.0
    %5232 = vmatpush1.msra.mxu0 0.0
    %5233 = vmatprep.subr.mxu0 0.0
    %5234 = vmatpush1.msra.mxu0 0.0
    %5235 = vmatprep.subr.mxu0 0.0
    %5236 = vmatpush1.msra.mxu0 0.0
    %5237 = vmatprep.subr.mxu0 0.0
    %5238 = vmatpush1.msra.mxu0 0.0
    %5239 = vmatprep.subr.mxu0 0.0
    %5240 = vmatpush1.msra.mxu0 0.0
    %5241 = vmatprep.subr.mxu0 0.0
    %5242 = vmatpush1.msra.mxu0 0.0
    %5243 = vmatprep.subr.mxu0 0.0
    %5244 = vmatpush1.msra.mxu0 0.0
    %5245 = vmatprep.subr.mxu0 0.0
    %5246 = vmatpush1.msra.mxu0 0.0
    %5247 = vmatprep.subr.mxu0 0.0
    %5248 = vmatpush1.msra.mxu0 0.0
    %5249 = vmatprep.subr.mxu0 0.0
    %5250 = vmatpush1.msra.mxu0 0.0
    %5251 = vmatprep.subr.mxu0 0.0
    %5252 = vmatpush1.msra.mxu0 0.0
    %5253 = vmatprep.subr.mxu0 0.0
    %5254 = vmatpush1.msra.mxu0 0.0
    %5255 = vmatprep.subr.mxu0 0.0
    %5256 = vmatpush1.msra.mxu0 0.0
    %5257 = vmatprep.subr.mxu0 0.0
    %5258 = vmatpush1.msra.mxu0 0.0
    %5259 = vmatprep.subr.mxu0 0.0
    %5260 = vmatpush1.msra.mxu0 0.0
    %5261 = vmatprep.subr.mxu0 0.0
    %5262 = vmatpush1.msra.mxu0 0.0
    %5263 = vmatprep.subr.mxu0 0.0
    %5264 = vmatpush1.msra.mxu0 0.0
    %5265 = vmatprep.subr.mxu0 0.0
    %5266 = vmatpush1.msra.mxu0 0.0
    %5267 = vmatprep.subr.mxu0 0.0
    %5268 = vmatpush1.msra.mxu0 0.0
    %5269 = vmatprep.subr.mxu0 0.0
    %5270 = vmatpush1.msra.mxu0 0.0
    %5271 = vmatprep.subr.mxu0 0.0
    %5272 = vmatpush1.msra.mxu0 0.0
    %5273 = vmatprep.subr.mxu0 0.0
    %5274 = vmatpush1.msra.mxu0 0.0
    %5275 = vmatprep.subr.mxu0 0.0
    %5276 = vmatpush1.msra.mxu0 0.0
    %5277 = vmatprep.subr.mxu0 0.0
    %5278 = vmatpush1.msra.mxu0 0.0
    %5279 = vmatprep.subr.mxu0 0.0
    %5280 = vmatpush1.msra.mxu0 0.0
    %5281 = vmatprep.subr.mxu0 0.0
    %5282 = vmatpush1.msra.mxu0 0.0
    %5283 = vmatprep.subr.mxu0 0.0
    %5284 = vmatpush1.msra.mxu0 0.0
    %5285 = vmatprep.subr.mxu0 0.0
    %5286 = vmatpush1.msra.mxu0 0.0
    %5287 = vmatprep.subr.mxu0 0.0
    %5288 = vmatpush1.msra.mxu0 0.0
    %5289 = vmatprep.subr.mxu0 0.0
    %5290 = vmatpush1.msra.mxu0 0.0
    %5291 = vmatprep.subr.mxu0 0.0
    %5292 = vmatpush1.msra.mxu0 0.0
    %5293 = vmatprep.mubr.f32.mxu0 0.0
    %5294 = vmatmul.mubr.f32.gmra.mrb[0].mxu0 %v5227
    %v5295 = vpop.f32.mrb[0].mxu0
    %v5296 = vadd.f32 0.0, %v5295
    %v5297 = vpop.f32.mrb[0].mxu0
    %5298 = vdwg.mxu0
    %s5299 = scalar_lea.vmem [#allocation23], 40
    %5300 = vst.msk [vmem:[%s5299] sm:$0xff] %vm565, %v5221
    %5301 = vrot.lane.b32.xlu0 %v4202, 64
    %v5302 = vpop.permute.xlu0 %5301
    %5303 = vrot.lane.b32.xlu0 %v4204, 64
    %v5304 = vpop.permute.xlu0 %5303
    %v5305 = vsel %vm486, %v5302, 0
    %v5307 = vsel %vm486, %v5304, 0
    %5309 = vmatprep.subr.mxu0 0.0
    %5310 = vmatpush1.xpose.msra.mxu0 %v5307
    %5311 = vmatprep.subr.mxu0 0.0
    %5312 = vmatpush1.xpose.msra.mxu0 0.0
    %5313 = vmatprep.subr.mxu0 0.0
    %5314 = vmatpush1.xpose.msra.mxu0 0.0
    %5315 = vmatprep.subr.mxu0 0.0
    %5316 = vmatpush1.xpose.msra.mxu0 0.0
    %5317 = vmatprep.subr.mxu0 0.0
    %5318 = vmatpush1.xpose.msra.mxu0 0.0
    %5319 = vmatprep.subr.mxu0 0.0
    %5320 = vmatpush1.xpose.msra.mxu0 0.0
    %5321 = vmatprep.subr.mxu0 0.0
    %5322 = vmatpush1.xpose.msra.mxu0 0.0
    %5323 = vmatprep.subr.mxu0 0.0
    %5324 = vmatpush1.xpose.msra.mxu0 0.0
    %5325 = vmatprep.subr.mxu0 0.0
    %5326 = vmatpush1.xpose.msra.mxu0 0.0
    %5327 = vmatprep.subr.mxu0 0.0
    %5328 = vmatpush1.xpose.msra.mxu0 0.0
    %5329 = vmatprep.subr.mxu0 0.0
    %5330 = vmatpush1.xpose.msra.mxu0 0.0
    %5331 = vmatprep.subr.mxu0 0.0
    %5332 = vmatpush1.xpose.msra.mxu0 0.0
    %5333 = vmatprep.subr.mxu0 0.0
    %5334 = vmatpush1.xpose.msra.mxu0 0.0
    %5335 = vmatprep.subr.mxu0 0.0
    %5336 = vmatpush1.xpose.msra.mxu0 0.0
    %5337 = vmatprep.subr.mxu0 0.0
    %5338 = vmatpush1.xpose.msra.mxu0 0.0
    %5339 = vmatprep.subr.mxu0 0.0
    %5340 = vmatpush1.xpose.msra.mxu0 0.0
    %5341 = vmatprep.subr.mxu0 0.0
    %5342 = vmatpush1.xpose.msra.mxu0 0.0
    %5343 = vmatprep.subr.mxu0 0.0
    %5344 = vmatpush1.xpose.msra.mxu0 0.0
    %5345 = vmatprep.subr.mxu0 0.0
    %5346 = vmatpush1.xpose.msra.mxu0 0.0
    %5347 = vmatprep.subr.mxu0 0.0
    %5348 = vmatpush1.xpose.msra.mxu0 0.0
    %5349 = vmatprep.subr.mxu0 0.0
    %5350 = vmatpush1.xpose.msra.mxu0 0.0
    %5351 = vmatprep.subr.mxu0 0.0
    %5352 = vmatpush1.xpose.msra.mxu0 0.0
    %5353 = vmatprep.subr.mxu0 0.0
    %5354 = vmatpush1.xpose.msra.mxu0 0.0
    %5355 = vmatprep.subr.mxu0 0.0
    %5356 = vmatpush1.xpose.msra.mxu0 0.0
    %5357 = vmatprep.subr.mxu0 0.0
    %5358 = vmatpush1.xpose.msra.mxu0 0.0
    %5359 = vmatprep.subr.mxu0 0.0
    %5360 = vmatpush1.xpose.msra.mxu0 0.0
    %5361 = vmatprep.subr.mxu0 0.0
    %5362 = vmatpush1.xpose.msra.mxu0 0.0
    %5363 = vmatprep.subr.mxu0 0.0
    %5364 = vmatpush1.xpose.msra.mxu0 0.0
    %5365 = vmatprep.subr.mxu0 0.0
    %5366 = vmatpush1.xpose.msra.mxu0 0.0
    %5367 = vmatprep.subr.mxu0 0.0
    %5368 = vmatpush1.xpose.msra.mxu0 0.0
    %5369 = vmatprep.subr.mxu0 0.0
    %5370 = vmatpush1.xpose.msra.mxu0 0.0
    %5371 = vmatprep.subr.mxu0 0.0
    %5372 = vmatpush1.xpose.msra.mxu0 0.0
    %5373 = vmatprep.mubr.f32.mxu0 0.0
    %5374 = vmatmul.mubr.f32.gmra.mrb[0].mxu0 %v5305
    %v5375 = vpop.f32.mrb[0].mxu0
    %v5376 = vadd.f32 0.0, %v5375
    %v5377 = vpop.f32.mrb[0].mxu0
    %5378 = vdwg.mxu0
    %v5379 = vmul.f32 %v5376, 0.17677669
    %v5380 = vsel %vm268, %v5379, -1e+09
    %v5381 = vsel %vm565, %v5380, -inf
    %5382 = vmax.xlane.f32.xlu0 %v5381
    %v5383 = vpop.xlane.xlu0 %5382
    %v5384 = vsub.f32 %v5380, %v5383
    %v5385 = vmul.f32 %v5384, 1.442695
    %v5386 = vpow.pop %v5385
    %v5387 = vsel %vm565, %v5386, 0.0
    %5388 = vadd.xlane.f32.xlu0 %v5387
    %v5389 = vpop.xlane.xlu0 %5388
    %v5390 = vrcp.pop %v5389
    %v5391 = vmul.f32 %v5386, %v5390
    %5392 = vrot.lane.b32.xlu0 %v4278, 64
    %v5393 = vpop.permute.xlu0 %5392
    %v5396 = vsel %vm565, %v5391, 0
    %5398 = vmatprep.subr.mxu0 0.0
    %5399 = vmatpush1.msra.mxu0 %v5393
    %5400 = vmatprep.subr.mxu0 0.0
    %5401 = vmatpush1.msra.mxu0 0.0
    %5402 = vmatprep.subr.mxu0 0.0
    %5403 = vmatpush1.msra.mxu0 0.0
    %5404 = vmatprep.subr.mxu0 0.0
    %5405 = vmatpush1.msra.mxu0 0.0
    %5406 = vmatprep.subr.mxu0 0.0
    %5407 = vmatpush1.msra.mxu0 0.0
    %5408 = vmatprep.subr.mxu0 0.0
    %5409 = vmatpush1.msra.mxu0 0.0
    %5410 = vmatprep.subr.mxu0 0.0
    %5411 = vmatpush1.msra.mxu0 0.0
    %5412 = vmatprep.subr.mxu0 0.0
    %5413 = vmatpush1.msra.mxu0 0.0
    %5414 = vmatprep.subr.mxu0 0.0
    %5415 = vmatpush1.msra.mxu0 0.0
    %5416 = vmatprep.subr.mxu0 0.0
    %5417 = vmatpush1.msra.mxu0 0.0
    %5418 = vmatprep.subr.mxu0 0.0
    %5419 = vmatpush1.msra.mxu0 0.0
    %5420 = vmatprep.subr.mxu0 0.0
    %5421 = vmatpush1.msra.mxu0 0.0
    %5422 = vmatprep.subr.mxu0 0.0
    %5423 = vmatpush1.msra.mxu0 0.0
    %5424 = vmatprep.subr.mxu0 0.0
    %5425 = vmatpush1.msra.mxu0 0.0
    %5426 = vmatprep.subr.mxu0 0.0
    %5427 = vmatpush1.msra.mxu0 0.0
    %5428 = vmatprep.subr.mxu0 0.0
    %5429 = vmatpush1.msra.mxu0 0.0
    %5430 = vmatprep.subr.mxu0 0.0
    %5431 = vmatpush1.msra.mxu0 0.0
    %5432 = vmatprep.subr.mxu0 0.0
    %5433 = vmatpush1.msra.mxu0 0.0
    %5434 = vmatprep.subr.mxu0 0.0
    %5435 = vmatpush1.msra.mxu0 0.0
    %5436 = vmatprep.subr.mxu0 0.0
    %5437 = vmatpush1.msra.mxu0 0.0
    %5438 = vmatprep.subr.mxu0 0.0
    %5439 = vmatpush1.msra.mxu0 0.0
    %5440 = vmatprep.subr.mxu0 0.0
    %5441 = vmatpush1.msra.mxu0 0.0
    %5442 = vmatprep.subr.mxu0 0.0
    %5443 = vmatpush1.msra.mxu0 0.0
    %5444 = vmatprep.subr.mxu0 0.0
    %5445 = vmatpush1.msra.mxu0 0.0
    %5446 = vmatprep.subr.mxu0 0.0
    %5447 = vmatpush1.msra.mxu0 0.0
    %5448 = vmatprep.subr.mxu0 0.0
    %5449 = vmatpush1.msra.mxu0 0.0
    %5450 = vmatprep.subr.mxu0 0.0
    %5451 = vmatpush1.msra.mxu0 0.0
    %5452 = vmatprep.subr.mxu0 0.0
    %5453 = vmatpush1.msra.mxu0 0.0
    %5454 = vmatprep.subr.mxu0 0.0
    %5455 = vmatpush1.msra.mxu0 0.0
    %5456 = vmatprep.subr.mxu0 0.0
    %5457 = vmatpush1.msra.mxu0 0.0
    %5458 = vmatprep.subr.mxu0 0.0
    %5459 = vmatpush1.msra.mxu0 0.0
    %5460 = vmatprep.subr.mxu0 0.0
    %5461 = vmatpush1.msra.mxu0 0.0
    %5462 = vmatprep.mubr.f32.mxu0 0.0
    %5463 = vmatmul.mubr.f32.gmra.mrb[0].mxu0 %v5396
    %v5464 = vpop.f32.mrb[0].mxu0
    %v5465 = vadd.f32 0.0, %v5464
    %v5466 = vpop.f32.mrb[0].mxu0
    %5467 = vdwg.mxu0
    %s5468 = scalar_lea.vmem [#allocation23], 48
    %5469 = vst.msk [vmem:[%s5468] sm:$0xff] %vm565, %v5391
    %5470 = vrot.lane.b32.xlu0 %v4202, 32
    %v5471 = vpop.permute.xlu0 %5470
    %5472 = vrot.lane.b32.xlu0 %v4204, 32
    %v5473 = vpop.permute.xlu0 %5472
    %v5474 = vsel %vm486, %v5471, 0
    %v5476 = vsel %vm486, %v5473, 0
    %5478 = vmatprep.subr.mxu0 0.0
    %5479 = vmatpush1.xpose.msra.mxu0 %v5476
    %5480 = vmatprep.subr.mxu0 0.0
    %5481 = vmatpush1.xpose.msra.mxu0 0.0
    %5482 = vmatprep.subr.mxu0 0.0
    %5483 = vmatpush1.xpose.msra.mxu0 0.0
    %5484 = vmatprep.subr.mxu0 0.0
    %5485 = vmatpush1.xpose.msra.mxu0 0.0
    %5486 = vmatprep.subr.mxu0 0.0
    %5487 = vmatpush1.xpose.msra.mxu0 0.0
    %5488 = vmatprep.subr.mxu0 0.0
    %5489 = vmatpush1.xpose.msra.mxu0 0.0
    %5490 = vmatprep.subr.mxu0 0.0
    %5491 = vmatpush1.xpose.msra.mxu0 0.0
    %5492 = vmatprep.subr.mxu0 0.0
    %5493 = vmatpush1.xpose.msra.mxu0 0.0
    %5494 = vmatprep.subr.mxu0 0.0
    %5495 = vmatpush1.xpose.msra.mxu0 0.0
    %5496 = vmatprep.subr.mxu0 0.0
    %5497 = vmatpush1.xpose.msra.mxu0 0.0
    %5498 = vmatprep.subr.mxu0 0.0
    %5499 = vmatpush1.xpose.msra.mxu0 0.0
    %5500 = vmatprep.subr.mxu0 0.0
    %5501 = vmatpush1.xpose.msra.mxu0 0.0
    %5502 = vmatprep.subr.mxu0 0.0
    %5503 = vmatpush1.xpose.msra.mxu0 0.0
    %5504 = vmatprep.subr.mxu0 0.0
    %5505 = vmatpush1.xpose.msra.mxu0 0.0
    %5506 = vmatprep.subr.mxu0 0.0
    %5507 = vmatpush1.xpose.msra.mxu0 0.0
    %5508 = vmatprep.subr.mxu0 0.0
    %5509 = vmatpush1.xpose.msra.mxu0 0.0
    %5510 = vmatprep.subr.mxu0 0.0
    %5511 = vmatpush1.xpose.msra.mxu0 0.0
    %5512 = vmatprep.subr.mxu0 0.0
    %5513 = vmatpush1.xpose.msra.mxu0 0.0
    %5514 = vmatprep.subr.mxu0 0.0
    %5515 = vmatpush1.xpose.msra.mxu0 0.0
    %5516 = vmatprep.subr.mxu0 0.0
    %5517 = vmatpush1.xpose.msra.mxu0 0.0
    %5518 = vmatprep.subr.mxu0 0.0
    %5519 = vmatpush1.xpose.msra.mxu0 0.0
    %5520 = vmatprep.subr.mxu0 0.0
    %5521 = vmatpush1.xpose.msra.mxu0 0.0
    %5522 = vmatprep.subr.mxu0 0.0
    %5523 = vmatpush1.xpose.msra.mxu0 0.0
    %5524 = vmatprep.subr.mxu0 0.0
    %5525 = vmatpush1.xpose.msra.mxu0 0.0
    %5526 = vmatprep.subr.mxu0 0.0
    %5527 = vmatpush1.xpose.msra.mxu0 0.0
    %5528 = vmatprep.subr.mxu0 0.0
    %5529 = vmatpush1.xpose.msra.mxu0 0.0
    %5530 = vmatprep.subr.mxu0 0.0
    %5531 = vmatpush1.xpose.msra.mxu0 0.0
    %5532 = vmatprep.subr.mxu0 0.0
    %5533 = vmatpush1.xpose.msra.mxu0 0.0
    %5534 = vmatprep.subr.mxu0 0.0
    %5535 = vmatpush1.xpose.msra.mxu0 0.0
    %5536 = vmatprep.subr.mxu0 0.0
    %5537 = vmatpush1.xpose.msra.mxu0 0.0
    %5538 = vmatprep.subr.mxu0 0.0
    %5539 = vmatpush1.xpose.msra.mxu0 0.0
    %5540 = vmatprep.subr.mxu0 0.0
    %5541 = vmatpush1.xpose.msra.mxu0 0.0
    %5542 = vmatprep.mubr.f32.mxu0 0.0
    %5543 = vmatmul.mubr.f32.gmra.mrb[0].mxu0 %v5474
    %v5544 = vpop.f32.mrb[0].mxu0
    %v5545 = vadd.f32 0.0, %v5544
    %v5546 = vpop.f32.mrb[0].mxu0
    %5547 = vdwg.mxu0
    %v5548 = vmul.f32 %v5545, 0.17677669
    %v5549 = vsel %vm268, %v5548, -1e+09
    %v5550 = vsel %vm565, %v5549, -inf
    %5551 = vmax.xlane.f32.xlu0 %v5550
    %v5552 = vpop.xlane.xlu0 %5551
    %v5553 = vsub.f32 %v5549, %v5552
    %v5554 = vmul.f32 %v5553, 1.442695
    %v5555 = vpow.pop %v5554
    %v5556 = vsel %vm565, %v5555, 0.0
    %5557 = vadd.xlane.f32.xlu0 %v5556
    %v5558 = vpop.xlane.xlu0 %5557
    %v5559 = vrcp.pop %v5558
    %v5560 = vmul.f32 %v5555, %v5559
    %5561 = vrot.lane.b32.xlu0 %v4278, 32
    %v5562 = vpop.permute.xlu0 %5561
    %v5565 = vsel %vm565, %v5560, 0
    %5567 = vmatprep.subr.mxu0 0.0
    %5568 = vmatpush1.msra.mxu0 %v5562
    %5569 = vmatprep.subr.mxu0 0.0
    %5570 = vmatpush1.msra.mxu0 0.0
    %5571 = vmatprep.subr.mxu0 0.0
    %5572 = vmatpush1.msra.mxu0 0.0
    %5573 = vmatprep.subr.mxu0 0.0
    %5574 = vmatpush1.msra.mxu0 0.0
    %5575 = vmatprep.subr.mxu0 0.0
    %5576 = vmatpush1.msra.mxu0 0.0
    %5577 = vmatprep.subr.mxu0 0.0
    %5578 = vmatpush1.msra.mxu0 0.0
    %5579 = vmatprep.subr.mxu0 0.0
    %5580 = vmatpush1.msra.mxu0 0.0
    %5581 = vmatprep.subr.mxu0 0.0
    %5582 = vmatpush1.msra.mxu0 0.0
    %5583 = vmatprep.subr.mxu0 0.0
    %5584 = vmatpush1.msra.mxu0 0.0
    %5585 = vmatprep.subr.mxu0 0.0
    %5586 = vmatpush1.msra.mxu0 0.0
    %5587 = vmatprep.subr.mxu0 0.0
    %5588 = vmatpush1.msra.mxu0 0.0
    %5589 = vmatprep.subr.mxu0 0.0
    %5590 = vmatpush1.msra.mxu0 0.0
    %5591 = vmatprep.subr.mxu0 0.0
    %5592 = vmatpush1.msra.mxu0 0.0
    %5593 = vmatprep.subr.mxu0 0.0
    %5594 = vmatpush1.msra.mxu0 0.0
    %5595 = vmatprep.subr.mxu0 0.0
    %5596 = vmatpush1.msra.mxu0 0.0
    %5597 = vmatprep.subr.mxu0 0.0
    %5598 = vmatpush1.msra.mxu0 0.0
    %5599 = vmatprep.subr.mxu0 0.0
    %5600 = vmatpush1.msra.mxu0 0.0
    %5601 = vmatprep.subr.mxu0 0.0
    %5602 = vmatpush1.msra.mxu0 0.0
    %5603 = vmatprep.subr.mxu0 0.0
    %5604 = vmatpush1.msra.mxu0 0.0
    %5605 = vmatprep.subr.mxu0 0.0
    %5606 = vmatpush1.msra.mxu0 0.0
    %5607 = vmatprep.subr.mxu0 0.0
    %5608 = vmatpush1.msra.mxu0 0.0
    %5609 = vmatprep.subr.mxu0 0.0
    %5610 = vmatpush1.msra.mxu0 0.0
    %5611 = vmatprep.subr.mxu0 0.0
    %5612 = vmatpush1.msra.mxu0 0.0
    %5613 = vmatprep.subr.mxu0 0.0
    %5614 = vmatpush1.msra.mxu0 0.0
    %5615 = vmatprep.subr.mxu0 0.0
    %5616 = vmatpush1.msra.mxu0 0.0
    %5617 = vmatprep.subr.mxu0 0.0
    %5618 = vmatpush1.msra.mxu0 0.0
    %5619 = vmatprep.subr.mxu0 0.0
    %5620 = vmatpush1.msra.mxu0 0.0
    %5621 = vmatprep.subr.mxu0 0.0
    %5622 = vmatpush1.msra.mxu0 0.0
    %5623 = vmatprep.subr.mxu0 0.0
    %5624 = vmatpush1.msra.mxu0 0.0
    %5625 = vmatprep.subr.mxu0 0.0
    %5626 = vmatpush1.msra.mxu0 0.0
    %5627 = vmatprep.subr.mxu0 0.0
    %5628 = vmatpush1.msra.mxu0 0.0
    %5629 = vmatprep.subr.mxu0 0.0
    %5630 = vmatpush1.msra.mxu0 0.0
    %5631 = vmatprep.mubr.f32.mxu0 0.0
    %5632 = vmatmul.mubr.f32.gmra.mrb[0].mxu0 %v5565
    %v5633 = vpop.f32.mrb[0].mxu0
    %v5634 = vadd.f32 0.0, %v5633
    %v5635 = vpop.f32.mrb[0].mxu0
    %5636 = vdwg.mxu0
    %s5637 = scalar_lea.vmem [#allocation23], 56
    %5638 = vst.msk [vmem:[%s5637] sm:$0xff] %vm565, %v5560
    %5640 = vrot.lane.b32.xlu0 %v5296, 32
    %v5641 = vpop.permute.xlu0 %5640
    %5644 = vrot.lane.b32.xlu0 %v5465, 64
    %v5645 = vpop.permute.xlu0 %5644
    %5648 = vrot.lane.b32.xlu0 %v5634, 96
    %v5649 = vpop.permute.xlu0 %5648
    %v5651 = vsel %vm486, %v5126, %v5641
    %v5652 = vsel %vm1165, %v5651, %v5645
    %v5653 = vsel %vm1167, %v5652, %v5649
    %s5654 = scalar_lea.vmem [#allocation5], 128
    %v5655 = vld [vmem:[%s5654] sm:$0xff]
    %v5656 = vld [vmem:[%s5654 + $0x8] sm:$0xff]
    %v5657 = vld [vmem:[%s5654 + $0x10] sm:$0xff]
    %v5658 = vld [vmem:[%s5654 + $0x18] sm:$0xff]
    %v5659 = vld [vmem:[%s5654 + $0x20] sm:$0xff]
    %v5660 = vld [vmem:[%s5654 + $0x28] sm:$0xff]
    %v5661 = vld [vmem:[%s5654 + $0x30] sm:$0xff]
    %v5662 = vld [vmem:[%s5654 + $0x38] sm:$0xff]
    %v5663 = vld [vmem:[%s5654 + $0x40] sm:$0xff]
    %v5664 = vld [vmem:[%s5654 + $0x48] sm:$0xff]
    %v5665 = vld [vmem:[%s5654 + $0x50] sm:$0xff]
    %v5666 = vld [vmem:[%s5654 + $0x58] sm:$0xff]
    %v5667 = vld [vmem:[%s5654 + $0x60] sm:$0xff]
    %v5668 = vld [vmem:[%s5654 + $0x68] sm:$0xff]
    %v5669 = vld [vmem:[%s5654 + $0x70] sm:$0xff]
    %v5670 = vld [vmem:[%s5654 + $0x78] sm:$0xff]
    %s5671 = scalar_lea.vmem %s7, 1
    %v5672 = vld [vmem:[%s5671] sm:$0x1]
    %v5674 = vlaneseq
    %v5675 = vshrl.u32 %v5674, 7
    %v5676 = vsub.s32 0, %v5675
    %v5677 = vrot.slane %v5672, %v5676
    %5679 = vmatprep.subr.mxu0 0.0
    %5680 = vmatpush1.msra.mxu0 %v5655
    %5681 = vmatprep.subr.mxu0 0.0
    %5682 = vmatpush1.msra.mxu0 %v5656
    %5683 = vmatprep.subr.mxu0 0.0
    %5684 = vmatpush1.msra.mxu0 %v5657
    %5685 = vmatprep.subr.mxu0 0.0
    %5686 = vmatpush1.msra.mxu0 %v5658
    %5687 = vmatprep.subr.mxu0 0.0
    %5688 = vmatpush1.msra.mxu0 %v5659
    %5689 = vmatprep.subr.mxu0 0.0
    %5690 = vmatpush1.msra.mxu0 %v5660
    %5691 = vmatprep.subr.mxu0 0.0
    %5692 = vmatpush1.msra.mxu0 %v5661
    %5693 = vmatprep.subr.mxu0 0.0
    %5694 = vmatpush1.msra.mxu0 %v5662
    %5695 = vmatprep.subr.mxu0 0.0
    %5696 = vmatpush1.msra.mxu0 %v5663
    %5697 = vmatprep.subr.mxu0 0.0
    %5698 = vmatpush1.msra.mxu0 %v5664
    %5699 = vmatprep.subr.mxu0 0.0
    %5700 = vmatpush1.msra.mxu0 %v5665
    %5701 = vmatprep.subr.mxu0 0.0
    %5702 = vmatpush1.msra.mxu0 %v5666
    %5703 = vmatprep.subr.mxu0 0.0
    %5704 = vmatpush1.msra.mxu0 %v5667
    %5705 = vmatprep.subr.mxu0 0.0
    %5706 = vmatpush1.msra.mxu0 %v5668
    %5707 = vmatprep.subr.mxu0 0.0
    %5708 = vmatpush1.msra.mxu0 %v5669
    %5709 = vmatprep.subr.mxu0 0.0
    %5710 = vmatpush1.msra.mxu0 %v5670
    %5711 = vmatprep.subr.mxu0 0.0
    %5712 = vmatpush1.msra.mxu0 0.0
    %5713 = vmatprep.subr.mxu0 0.0
    %5714 = vmatpush1.msra.mxu0 0.0
    %5715 = vmatprep.subr.mxu0 0.0
    %5716 = vmatpush1.msra.mxu0 0.0
    %5717 = vmatprep.subr.mxu0 0.0
    %5718 = vmatpush1.msra.mxu0 0.0
    %5719 = vmatprep.subr.mxu0 0.0
    %5720 = vmatpush1.msra.mxu0 0.0
    %5721 = vmatprep.subr.mxu0 0.0
    %5722 = vmatpush1.msra.mxu0 0.0
    %5723 = vmatprep.subr.mxu0 0.0
    %5724 = vmatpush1.msra.mxu0 0.0
    %5725 = vmatprep.subr.mxu0 0.0
    %5726 = vmatpush1.msra.mxu0 0.0
    %5727 = vmatprep.subr.mxu0 0.0
    %5728 = vmatpush1.msra.mxu0 0.0
    %5729 = vmatprep.subr.mxu0 0.0
    %5730 = vmatpush1.msra.mxu0 0.0
    %5731 = vmatprep.subr.mxu0 0.0
    %5732 = vmatpush1.msra.mxu0 0.0
    %5733 = vmatprep.subr.mxu0 0.0
    %5734 = vmatpush1.msra.mxu0 0.0
    %5735 = vmatprep.subr.mxu0 0.0
    %5736 = vmatpush1.msra.mxu0 0.0
    %5737 = vmatprep.subr.mxu0 0.0
    %5738 = vmatpush1.msra.mxu0 0.0
    %5739 = vmatprep.subr.mxu0 0.0
    %5740 = vmatpush1.msra.mxu0 0.0
    %5741 = vmatprep.subr.mxu0 0.0
    %5742 = vmatpush1.msra.mxu0 0.0
    %5743 = vmatprep.mubr.f32.mxu0 0.0
    %5744 = vmatmul.mubr.f32.gmra.mrb[0].mxu0 %v4966
    %v5745 = vpop.f32.mrb[0].mxu0
    %v5746 = vadd.f32 %v5677, %v5745
    %v5747 = vpop.f32.mrb[0].mxu0
    %5748 = vmatprep.mubr.f32.mxu0 0.0
    %5749 = vmatmul.mubr.f32.gmra.mrb[0].mxu0 %v5653
    %v5750 = vpop.f32.mrb[0].mxu0
    %v5751 = vadd.f32 %v5677, %v5750
    %v5752 = vpop.f32.mrb[0].mxu0
    %5753 = vdwg.mxu0
    %v5754 = vadd.f32 %v4060, %v5746
    %v5755 = vadd.f32 %v4061, %v5751
    %s5756 = scalar_lea.vmem [#allocation13], 1
    %v5757 = vld [vmem:[%s5756] sm:$0x1]
    %s5758 = scalar_lea.vmem [#allocation14], 1
    %v5759 = vld [vmem:[%s5758] sm:$0x1]
    %5760 = vadd.xlane.f32.xlu0 %v5754
    %v5761 = vpop.xlane.xlu0 %5760
    %5762 = vadd.xlane.f32.xlu0 %v5755
    %v5763 = vpop.xlane.xlu0 %5762
    %v5764 = vmul.f32 %v5761, %v1954
    %v5765 = vmul.f32 %v5763, %v1954
    %v5766 = vsub.f32 %v5754, %v5764
    %v5767 = vsub.f32 %v5755, %v5765
    %v5768 = vmul.f32 %v5766, %v5766
    %v5769 = vmul.f32 %v5767, %v5767
    %5770 = vadd.xlane.f32.xlu0 %v5768
    %v5771 = vpop.xlane.xlu0 %5770
    %5772 = vadd.xlane.f32.xlu0 %v5769
    %v5773 = vpop.xlane.xlu0 %5772
    %v5774 = vmul.f32 %v5771, %v1954
    %v5775 = vmul.f32 %v5773, %v1954
    %v5776 = vadd.f32 %v5774, 1e-05
    %v5777 = vadd.f32 %v5775, 1e-05
    %v5778 = vrsqrt.pop %v5776
    %v5779 = vrsqrt.pop %v5777
    %v5780 = vmul.f32 %v5766, %v5778
    %v5781 = vmul.f32 %v5767, %v5779
    %v5783 = vlaneseq
    %v5784 = vshrl.u32 %v5783, 7
    %v5785 = vsub.s32 0, %v5784
    %v5786 = vrot.slane %v5757, %v5785
    %v5788 = vmul.f32 %v5780, %v5786
    %v5789 = vmul.f32 %v5781, %v5786
    %v5791 = vlaneseq
    %v5792 = vshrl.u32 %v5791, 7
    %v5793 = vsub.s32 0, %v5792
    %v5794 = vrot.slane %v5759, %v5793
    %v5796 = vadd.f32 %v5788, %v5794
    %v5797 = vadd.f32 %v5789, %v5794
    %s5798 = scalar_lea.vmem [#allocation7], 128
    %v5799 = vld [vmem:[%s5798] sm:$0xff]
    %v5800 = vld [vmem:[%s5798 + $0x8] sm:$0xff]
    %v5801 = vld [vmem:[%s5798 + $0x10] sm:$0xff]
    %v5802 = vld [vmem:[%s5798 + $0x18] sm:$0xff]
    %v5803 = vld [vmem:[%s5798 + $0x20] sm:$0xff]
    %v5804 = vld [vmem:[%s5798 + $0x28] sm:$0xff]
    %v5805 = vld [vmem:[%s5798 + $0x30] sm:$0xff]
    %v5806 = vld [vmem:[%s5798 + $0x38] sm:$0xff]
    %v5807 = vld [vmem:[%s5798 + $0x40] sm:$0xff]
    %v5808 = vld [vmem:[%s5798 + $0x48] sm:$0xff]
    %v5809 = vld [vmem:[%s5798 + $0x50] sm:$0xff]
    %v5810 = vld [vmem:[%s5798 + $0x58] sm:$0xff]
    %v5811 = vld [vmem:[%s5798 + $0x60] sm:$0xff]
    %v5812 = vld [vmem:[%s5798 + $0x68] sm:$0xff]
    %v5813 = vld [vmem:[%s5798 + $0x70] sm:$0xff]
    %v5814 = vld [vmem:[%s5798 + $0x78] sm:$0xff]
    %s5815 = scalar_lea.vmem %s9, 1
    %v5816 = vld [vmem:[%s5815] sm:$0x1]
    %v5818 = vlaneseq
    %v5819 = vshrl.u32 %v5818, 7
    %v5820 = vsub.s32 0, %v5819
    %v5821 = vrot.slane %v5816, %v5820
    %5823 = vmatprep.subr.mxu0 0.0
    %5824 = vmatpush1.msra.mxu0 %v5799
    %5825 = vmatprep.subr.mxu0 0.0
    %5826 = vmatpush1.msra.mxu0 %v5800
    %5827 = vmatprep.subr.mxu0 0.0
    %5828 = vmatpush1.msra.mxu0 %v5801
    %5829 = vmatprep.subr.mxu0 0.0
    %5830 = vmatpush1.msra.mxu0 %v5802
    %5831 = vmatprep.subr.mxu0 0.0
    %5832 = vmatpush1.msra.mxu0 %v5803
    %5833 = vmatprep.subr.mxu0 0.0
    %5834 = vmatpush1.msra.mxu0 %v5804
    %5835 = vmatprep.subr.mxu0 0.0
    %5836 = vmatpush1.msra.mxu0 %v5805
    %5837 = vmatprep.subr.mxu0 0.0
    %5838 = vmatpush1.msra.mxu0 %v5806
    %5839 = vmatprep.subr.mxu0 0.0
    %5840 = vmatpush1.msra.mxu0 %v5807
    %5841 = vmatprep.subr.mxu0 0.0
    %5842 = vmatpush1.msra.mxu0 %v5808
    %5843 = vmatprep.subr.mxu0 0.0
    %5844 = vmatpush1.msra.mxu0 %v5809
    %5845 = vmatprep.subr.mxu0 0.0
    %5846 = vmatpush1.msra.mxu0 %v5810
    %5847 = vmatprep.subr.mxu0 0.0
    %5848 = vmatpush1.msra.mxu0 %v5811
    %5849 = vmatprep.subr.mxu0 0.0
    %5850 = vmatpush1.msra.mxu0 %v5812
    %5851 = vmatprep.subr.mxu0 0.0
    %5852 = vmatpush1.msra.mxu0 %v5813
    %5853 = vmatprep.subr.mxu0 0.0
    %5854 = vmatpush1.msra.mxu0 %v5814
    %5855 = vmatprep.subr.mxu0 0.0
    %5856 = vmatpush1.msra.mxu0 0.0
    %5857 = vmatprep.subr.mxu0 0.0
    %5858 = vmatpush1.msra.mxu0 0.0
    %5859 = vmatprep.subr.mxu0 0.0
    %5860 = vmatpush1.msra.mxu0 0.0
    %5861 = vmatprep.subr.mxu0 0.0
    %5862 = vmatpush1.msra.mxu0 0.0
    %5863 = vmatprep.subr.mxu0 0.0
    %5864 = vmatpush1.msra.mxu0 0.0
    %5865 = vmatprep.subr.mxu0 0.0
    %5866 = vmatpush1.msra.mxu0 0.0
    %5867 = vmatprep.subr.mxu0 0.0
    %5868 = vmatpush1.msra.mxu0 0.0
    %5869 = vmatprep.subr.mxu0 0.0
    %5870 = vmatpush1.msra.mxu0 0.0
    %5871 = vmatprep.subr.mxu0 0.0
    %5872 = vmatpush1.msra.mxu0 0.0
    %5873 = vmatprep.subr.mxu0 0.0
    %5874 = vmatpush1.msra.mxu0 0.0
    %5875 = vmatprep.subr.mxu0 0.0
    %5876 = vmatpush1.msra.mxu0 0.0
    %5877 = vmatprep.subr.mxu0 0.0
    %5878 = vmatpush1.msra.mxu0 0.0
    %5879 = vmatprep.subr.mxu0 0.0
    %5880 = vmatpush1.msra.mxu0 0.0
    %5881 = vmatprep.subr.mxu0 0.0
    %5882 = vmatpush1.msra.mxu0 0.0
    %5883 = vmatprep.subr.mxu0 0.0
    %5884 = vmatpush1.msra.mxu0 0.0
    %5885 = vmatprep.subr.mxu0 0.0
    %5886 = vmatpush1.msra.mxu0 0.0
    %5887 = vmatprep.mubr.f32.mxu0 0.0
    %5888 = vmatmul.mubr.f32.gmra.mrb[0].mxu0 %v5796
    %v5889 = vpop.f32.mrb[0].mxu0
    %v5890 = vadd.f32 %v5821, %v5889
    %v5891 = vpop.f32.mrb[0].mxu0
    %5892 = vmatprep.mubr.f32.mxu0 0.0
    %5893 = vmatmul.mubr.f32.gmra.mrb[0].mxu0 %v5797
    %v5894 = vpop.f32.mrb[0].mxu0
    %v5895 = vadd.f32 %v5821, %v5894
    %v5896 = vpop.f32.mrb[0].mxu0
    %5897 = vdwg.mxu0
    %s5898 = scalar_lea.vmem %s10, 256
    %v5899 = vld [vmem:[%s5898] sm:$0xff]
    %v5900 = vld [vmem:[%s5898 + $0x8] sm:$0xff]
    %v5901 = vld [vmem:[%s5898 + $0x10] sm:$0xff]
    %v5902 = vld [vmem:[%s5898 + $0x18] sm:$0xff]
    %v5903 = vld [vmem:[%s5898 + $0x20] sm:$0xff]
    %v5904 = vld [vmem:[%s5898 + $0x28] sm:$0xff]
    %v5905 = vld [vmem:[%s5898 + $0x30] sm:$0xff]
    %v5906 = vld [vmem:[%s5898 + $0x38] sm:$0xff]
    %v5907 = vld [vmem:[%s5898 + $0x40] sm:$0xff]
    %v5908 = vld [vmem:[%s5898 + $0x48] sm:$0xff]
    %v5909 = vld [vmem:[%s5898 + $0x50] sm:$0xff]
    %v5910 = vld [vmem:[%s5898 + $0x58] sm:$0xff]
    %v5911 = vld [vmem:[%s5898 + $0x60] sm:$0xff]
    %v5912 = vld [vmem:[%s5898 + $0x68] sm:$0xff]
    %v5913 = vld [vmem:[%s5898 + $0x70] sm:$0xff]
    %v5914 = vld [vmem:[%s5898 + $0x78] sm:$0xff]
    %v5915 = vld [vmem:[%s5898 + $0x80] sm:$0xff]
    %v5916 = vld [vmem:[%s5898 + $0x88] sm:$0xff]
    %v5917 = vld [vmem:[%s5898 + $0x90] sm:$0xff]
    %v5918 = vld [vmem:[%s5898 + $0x98] sm:$0xff]
    %v5919 = vld [vmem:[%s5898 + $0xa0] sm:$0xff]
    %v5920 = vld [vmem:[%s5898 + $0xa8] sm:$0xff]
    %v5921 = vld [vmem:[%s5898 + $0xb0] sm:$0xff]
    %v5922 = vld [vmem:[%s5898 + $0xb8] sm:$0xff]
    %v5923 = vld [vmem:[%s5898 + $0xc0] sm:$0xff]
    %v5924 = vld [vmem:[%s5898 + $0xc8] sm:$0xff]
    %v5925 = vld [vmem:[%s5898 + $0xd0] sm:$0xff]
    %v5926 = vld [vmem:[%s5898 + $0xd8] sm:$0xff]
    %v5927 = vld [vmem:[%s5898 + $0xe0] sm:$0xff]
    %v5928 = vld [vmem:[%s5898 + $0xe8] sm:$0xff]
    %v5929 = vld [vmem:[%s5898 + $0xf0] sm:$0xff]
    %v5930 = vld [vmem:[%s5898 + $0xf8] sm:$0xff]
    %s5931 = scalar_lea.vmem %s11, 2
    %v5932 = vld [vmem:[%s5931] sm:$0x3]
    %v5934 = vlaneseq
    %v5935 = vshrl.u32 %v5934, 7
    %v5936 = vsub.s32 0, %v5935
    %v5937 = vrot.slane %v5932, %v5936
    %v5938 = vlaneseq
    %v5939 = vshrl.u32 %v5938, 7
    %v5940 = vsub.s32 1, %v5939
    %v5941 = vrot.slane %v5932, %v5940
    %5944 = vmatprep.subr.mxu0 %v5900
    %5945 = vmatpush1.msra.mxu0 %v5899
    %5946 = vmatprep.subr.mxu0 %v5902
    %5947 = vmatpush1.msra.mxu0 %v5901
    %5948 = vmatprep.subr.mxu0 %v5904
    %5949 = vmatpush1.msra.mxu0 %v5903
    %5950 = vmatprep.subr.mxu0 %v5906
    %5951 = vmatpush1.msra.mxu0 %v5905
    %5952 = vmatprep.subr.mxu0 %v5908
    %5953 = vmatpush1.msra.mxu0 %v5907
    %5954 = vmatprep.subr.mxu0 %v5910
    %5955 = vmatpush1.msra.mxu0 %v5909
    %5956 = vmatprep.subr.mxu0 %v5912
    %5957 = vmatpush1.msra.mxu0 %v5911
    %5958 = vmatprep.subr.mxu0 %v5914
    %5959 = vmatpush1.msra.mxu0 %v5913
    %5960 = vmatprep.subr.mxu0 %v5916
    %5961 = vmatpush1.msra.mxu0 %v5915
    %5962 = vmatprep.subr.mxu0 %v5918
    %5963 = vmatpush1.msra.mxu0 %v5917
    %5964 = vmatprep.subr.mxu0 %v5920
    %5965 = vmatpush1.msra.mxu0 %v5919
    %5966 = vmatprep.subr.mxu0 %v5922
    %5967 = vmatpush1.msra.mxu0 %v5921
    %5968 = vmatprep.subr.mxu0 %v5924
    %5969 = vmatpush1.msra.mxu0 %v5923
    %5970 = vmatprep.subr.mxu0 %v5926
    %5971 = vmatpush1.msra.mxu0 %v5925
    %5972 = vmatprep.subr.mxu0 %v5928
    %5973 = vmatpush1.msra.mxu0 %v5927
    %5974 = vmatprep.subr.mxu0 %v5930
    %5975 = vmatpush1.msra.mxu0 %v5929
    %5976 = vmatprep.subr.mxu0 0.0
    %5977 = vmatpush1.msra.mxu0 0.0
    %5978 = vmatprep.subr.mxu0 0.0
    %5979 = vmatpush1.msra.mxu0 0.0
    %5980 = vmatprep.subr.mxu0 0.0
    %5981 = vmatpush1.msra.mxu0 0.0
    %5982 = vmatprep.subr.mxu0 0.0
    %5983 = vmatpush1.msra.mxu0 0.0
    %5984 = vmatprep.subr.mxu0 0.0
    %5985 = vmatpush1.msra.mxu0 0.0
    %5986 = vmatprep.subr.mxu0 0.0
    %5987 = vmatpush1.msra.mxu0 0.0
    %5988 = vmatprep.subr.mxu0 0.0
    %5989 = vmatpush1.msra.mxu0 0.0
    %5990 = vmatprep.subr.mxu0 0.0
    %5991 = vmatpush1.msra.mxu0 0.0
    %5992 = vmatprep.subr.mxu0 0.0
    %5993 = vmatpush1.msra.mxu0 0.0
    %5994 = vmatprep.subr.mxu0 0.0
    %5995 = vmatpush1.msra.mxu0 0.0
    %5996 = vmatprep.subr.mxu0 0.0
    %5997 = vmatpush1.msra.mxu0 0.0
    %5998 = vmatprep.subr.mxu0 0.0
    %5999 = vmatpush1.msra.mxu0 0.0
    %6000 = vmatprep.subr.mxu0 0.0
    %6001 = vmatpush1.msra.mxu0 0.0
    %6002 = vmatprep.subr.mxu0 0.0
    %6003 = vmatpush1.msra.mxu0 0.0
    %6004 = vmatprep.subr.mxu0 0.0
    %6005 = vmatpush1.msra.mxu0 0.0
    %6006 = vmatprep.subr.mxu0 0.0
    %6007 = vmatpush1.msra.mxu0 0.0
    %6008 = vmatprep.mubr.f32.mxu0 0.0
    %6009 = vmatmul.mubr.f32.gmra.mrb[0].mxu0 %v259
    %v6010 = vpop.f32.mrb[0].mxu0
    %v6011 = vadd.f32 %v5937, %v6010
    %v6012 = vpop.f32.mrb[0].mxu0
    %v6013 = vadd.f32 %v5941, %v6012
    %6014 = vmatprep.mubr.f32.mxu0 0.0
    %6015 = vmatmul.mubr.f32.gmra.mrb[0].mxu0 %v260
    %v6016 = vpop.f32.mrb[0].mxu0
    %v6017 = vadd.f32 %v5937, %v6016
    %v6018 = vpop.f32.mrb[0].mxu0
    %v6019 = vadd.f32 %v5941, %v6018
    %6020 = vmatprep.mubr.f32.mxu0 0.0
    %6021 = vmatmul.mubr.f32.gmra.mrb[0].mxu0 %v261
    %v6022 = vpop.f32.mrb[0].mxu0
    %v6023 = vadd.f32 %v5937, %v6022
    %v6024 = vpop.f32.mrb[0].mxu0
    %v6025 = vadd.f32 %v5941, %v6024
    %6026 = vmatprep.mubr.f32.mxu0 0.0
    %6027 = vmatmul.mubr.f32.gmra.mrb[0].mxu0 %v262
    %v6028 = vpop.f32.mrb[0].mxu0
    %v6029 = vadd.f32 %v5937, %v6028
    %v6030 = vpop.f32.mrb[0].mxu0
    %v6031 = vadd.f32 %v5941, %v6030
    %6032 = vdwg.mxu0
    %v6034 = vsel %vm486, %v5890, 0
    %v6037 = vsel %vm486, %v6011, 0
    %v6040 = vsel %vm486, %v6017, 0
    %6042 = vmatprep.subr.mxu0 0.0
    %6043 = vmatpush1.xpose.msra.mxu0 %v6037
    %6044 = vmatprep.subr.mxu0 0.0
    %6045 = vmatpush1.xpose.msra.mxu0 %v6040
    %6046 = vmatprep.subr.mxu0 0.0
    %6047 = vmatpush1.xpose.msra.mxu0 0.0
    %6048 = vmatprep.subr.mxu0 0.0
    %6049 = vmatpush1.xpose.msra.mxu0 0.0
    %6050 = vmatprep.subr.mxu0 0.0
    %6051 = vmatpush1.xpose.msra.mxu0 0.0
    %6052 = vmatprep.subr.mxu0 0.0
    %6053 = vmatpush1.xpose.msra.mxu0 0.0
    %6054 = vmatprep.subr.mxu0 0.0
    %6055 = vmatpush1.xpose.msra.mxu0 0.0
    %6056 = vmatprep.subr.mxu0 0.0
    %6057 = vmatpush1.xpose.msra.mxu0 0.0
    %6058 = vmatprep.subr.mxu0 0.0
    %6059 = vmatpush1.xpose.msra.mxu0 0.0
    %6060 = vmatprep.subr.mxu0 0.0
    %6061 = vmatpush1.xpose.msra.mxu0 0.0
    %6062 = vmatprep.subr.mxu0 0.0
    %6063 = vmatpush1.xpose.msra.mxu0 0.0
    %6064 = vmatprep.subr.mxu0 0.0
    %6065 = vmatpush1.xpose.msra.mxu0 0.0
    %6066 = vmatprep.subr.mxu0 0.0
    %6067 = vmatpush1.xpose.msra.mxu0 0.0
    %6068 = vmatprep.subr.mxu0 0.0
    %6069 = vmatpush1.xpose.msra.mxu0 0.0
    %6070 = vmatprep.subr.mxu0 0.0
    %6071 = vmatpush1.xpose.msra.mxu0 0.0
    %6072 = vmatprep.subr.mxu0 0.0
    %6073 = vmatpush1.xpose.msra.mxu0 0.0
    %6074 = vmatprep.subr.mxu0 0.0
    %6075 = vmatpush1.xpose.msra.mxu0 0.0
    %6076 = vmatprep.subr.mxu0 0.0
    %6077 = vmatpush1.xpose.msra.mxu0 0.0
    %6078 = vmatprep.subr.mxu0 0.0
    %6079 = vmatpush1.xpose.msra.mxu0 0.0
    %6080 = vmatprep.subr.mxu0 0.0
    %6081 = vmatpush1.xpose.msra.mxu0 0.0
    %6082 = vmatprep.subr.mxu0 0.0
    %6083 = vmatpush1.xpose.msra.mxu0 0.0
    %6084 = vmatprep.subr.mxu0 0.0
    %6085 = vmatpush1.xpose.msra.mxu0 0.0
    %6086 = vmatprep.subr.mxu0 0.0
    %6087 = vmatpush1.xpose.msra.mxu0 0.0
    %6088 = vmatprep.subr.mxu0 0.0
    %6089 = vmatpush1.xpose.msra.mxu0 0.0
    %6090 = vmatprep.subr.mxu0 0.0
    %6091 = vmatpush1.xpose.msra.mxu0 0.0
    %6092 = vmatprep.subr.mxu0 0.0
    %6093 = vmatpush1.xpose.msra.mxu0 0.0
    %6094 = vmatprep.subr.mxu0 0.0
    %6095 = vmatpush1.xpose.msra.mxu0 0.0
    %6096 = vmatprep.subr.mxu0 0.0
    %6097 = vmatpush1.xpose.msra.mxu0 0.0
    %6098 = vmatprep.subr.mxu0 0.0
    %6099 = vmatpush1.xpose.msra.mxu0 0.0
    %6100 = vmatprep.subr.mxu0 0.0
    %6101 = vmatpush1.xpose.msra.mxu0 0.0
    %6102 = vmatprep.subr.mxu0 0.0
    %6103 = vmatpush1.xpose.msra.mxu0 0.0
    %6104 = vmatprep.subr.mxu0 0.0
    %6105 = vmatpush1.xpose.msra.mxu0 0.0
    %6106 = vmatprep.mubr.f32.mxu0 0.0
    %6107 = vmatmul.mubr.f32.gmra.mrb[0].mxu0 %v6034
    %v6108 = vpop.f32.mrb[0].mxu0
    %v6109 = vadd.f32 0.0, %v6108
    %v6110 = vpop.f32.mrb[0].mxu0
    %6111 = vdwg.mxu0
    %v6112 = vmul.f32 %v6109, 0.17677669
    %v6113 = vsel %vm2306, %v6112, -1e+09
    %v6114 = vsel %vm2308, %v6113, -inf
    %6115 = vmax.xlane.f32.xlu0 %v6114
    %v6116 = vpop.xlane.xlu0 %6115
    %v6117 = vsub.f32 %v6113, %v6116
    %v6118 = vmul.f32 %v6117, 1.442695
    %v6119 = vpow.pop %v6118
    %v6120 = vsel %vm2308, %v6119, 0.0
    %6121 = vadd.xlane.f32.xlu0 %v6120
    %v6122 = vpop.xlane.xlu0 %6121
    %v6123 = vrcp.pop %v6122
    %v6124 = vmul.f32 %v6119, %v6123
    %v6126 = vsel %vm2308, %v6124, 0
    %6128 = vmatprep.subr.mxu0 0.0
    %6129 = vmatpush1.msra.mxu0 %v6013
    %6130 = vmatprep.subr.mxu0 0.0
    %6131 = vmatpush1.msra.mxu0 %v6019
    %6132 = vmatprep.subr.mxu0 0.0
    %6133 = vmatpush1.msra.mxu0 0.0
    %6134 = vmatprep.subr.mxu0 0.0
    %6135 = vmatpush1.msra.mxu0 0.0
    %6136 = vmatprep.subr.mxu0 0.0
    %6137 = vmatpush1.msra.mxu0 0.0
    %6138 = vmatprep.subr.mxu0 0.0
    %6139 = vmatpush1.msra.mxu0 0.0
    %6140 = vmatprep.subr.mxu0 0.0
    %6141 = vmatpush1.msra.mxu0 0.0
    %6142 = vmatprep.subr.mxu0 0.0
    %6143 = vmatpush1.msra.mxu0 0.0
    %6144 = vmatprep.subr.mxu0 0.0
    %6145 = vmatpush1.msra.mxu0 0.0
    %6146 = vmatprep.subr.mxu0 0.0
    %6147 = vmatpush1.msra.mxu0 0.0
    %6148 = vmatprep.subr.mxu0 0.0
    %6149 = vmatpush1.msra.mxu0 0.0
    %6150 = vmatprep.subr.mxu0 0.0
    %6151 = vmatpush1.msra.mxu0 0.0
    %6152 = vmatprep.subr.mxu0 0.0
    %6153 = vmatpush1.msra.mxu0 0.0
    %6154 = vmatprep.subr.mxu0 0.0
    %6155 = vmatpush1.msra.mxu0 0.0
    %6156 = vmatprep.subr.mxu0 0.0
    %6157 = vmatpush1.msra.mxu0 0.0
    %6158 = vmatprep.subr.mxu0 0.0
    %6159 = vmatpush1.msra.mxu0 0.0
    %6160 = vmatprep.subr.mxu0 0.0
    %6161 = vmatpush1.msra.mxu0 0.0
    %6162 = vmatprep.subr.mxu0 0.0
    %6163 = vmatpush1.msra.mxu0 0.0
    %6164 = vmatprep.subr.mxu0 0.0
    %6165 = vmatpush1.msra.mxu0 0.0
    %6166 = vmatprep.subr.mxu0 0.0
    %6167 = vmatpush1.msra.mxu0 0.0
    %6168 = vmatprep.subr.mxu0 0.0
    %6169 = vmatpush1.msra.mxu0 0.0
    %6170 = vmatprep.subr.mxu0 0.0
    %6171 = vmatpush1.msra.mxu0 0.0
    %6172 = vmatprep.subr.mxu0 0.0
    %6173 = vmatpush1.msra.mxu0 0.0
    %6174 = vmatprep.subr.mxu0 0.0
    %6175 = vmatpush1.msra.mxu0 0.0
    %6176 = vmatprep.subr.mxu0 0.0
    %6177 = vmatpush1.msra.mxu0 0.0
    %6178 = vmatprep.subr.mxu0 0.0
    %6179 = vmatpush1.msra.mxu0 0.0
    %6180 = vmatprep.subr.mxu0 0.0
    %6181 = vmatpush1.msra.mxu0 0.0
    %6182 = vmatprep.subr.mxu0 0.0
    %6183 = vmatpush1.msra.mxu0 0.0
    %6184 = vmatprep.subr.mxu0 0.0
    %6185 = vmatpush1.msra.mxu0 0.0
    %6186 = vmatprep.subr.mxu0 0.0
    %6187 = vmatpush1.msra.mxu0 0.0
    %6188 = vmatprep.subr.mxu0 0.0
    %6189 = vmatpush1.msra.mxu0 0.0
    %6190 = vmatprep.subr.mxu0 0.0
    %6191 = vmatpush1.msra.mxu0 0.0
    %6192 = vmatprep.mubr.f32.mxu0 0.0
    %6193 = vmatmul.mubr.f32.gmra.mrb[0].mxu0 %v6126
    %v6194 = vpop.f32.mrb[0].mxu0
    %v6195 = vadd.f32 0.0, %v6194
    %v6196 = vpop.f32.mrb[0].mxu0
    %6197 = vdwg.mxu0
    %6198 = vst.msk [vmem:[#allocation25] sm:$0xff] %vm2308, %v6124
    %6199 = vrot.lane.b32.xlu0 %v5890, 96
    %v6200 = vpop.permute.xlu0 %6199
    %6201 = vrot.lane.b32.xlu0 %v6011, 96
    %v6202 = vpop.permute.xlu0 %6201
    %6203 = vrot.lane.b32.xlu0 %v6017, 96
    %v6204 = vpop.permute.xlu0 %6203
    %v6205 = vsel %vm486, %v6200, 0
    %v6207 = vsel %vm486, %v6202, 0
    %v6209 = vsel %vm486, %v6204, 0
    %6211 = vmatprep.subr.mxu0 0.0
    %6212 = vmatpush1.xpose.msra.mxu0 %v6207
    %6213 = vmatprep.subr.mxu0 0.0
    %6214 = vmatpush1.xpose.msra.mxu0 %v6209
    %6215 = vmatprep.subr.mxu0 0.0
    %6216 = vmatpush1.xpose.msra.mxu0 0.0
    %6217 = vmatprep.subr.mxu0 0.0
    %6218 = vmatpush1.xpose.msra.mxu0 0.0
    %6219 = vmatprep.subr.mxu0 0.0
    %6220 = vmatpush1.xpose.msra.mxu0 0.0
    %6221 = vmatprep.subr.mxu0 0.0
    %6222 = vmatpush1.xpose.msra.mxu0 0.0
    %6223 = vmatprep.subr.mxu0 0.0
    %6224 = vmatpush1.xpose.msra.mxu0 0.0
    %6225 = vmatprep.subr.mxu0 0.0
    %6226 = vmatpush1.xpose.msra.mxu0 0.0
    %6227 = vmatprep.subr.mxu0 0.0
    %6228 = vmatpush1.xpose.msra.mxu0 0.0
    %6229 = vmatprep.subr.mxu0 0.0
    %6230 = vmatpush1.xpose.msra.mxu0 0.0
    %6231 = vmatprep.subr.mxu0 0.0
    %6232 = vmatpush1.xpose.msra.mxu0 0.0
    %6233 = vmatprep.subr.mxu0 0.0
    %6234 = vmatpush1.xpose.msra.mxu0 0.0
    %6235 = vmatprep.subr.mxu0 0.0
    %6236 = vmatpush1.xpose.msra.mxu0 0.0
    %6237 = vmatprep.subr.mxu0 0.0
    %6238 = vmatpush1.xpose.msra.mxu0 0.0
    %6239 = vmatprep.subr.mxu0 0.0
    %6240 = vmatpush1.xpose.msra.mxu0 0.0
    %6241 = vmatprep.subr.mxu0 0.0
    %6242 = vmatpush1.xpose.msra.mxu0 0.0
    %6243 = vmatprep.subr.mxu0 0.0
    %6244 = vmatpush1.xpose.msra.mxu0 0.0
    %6245 = vmatprep.subr.mxu0 0.0
    %6246 = vmatpush1.xpose.msra.mxu0 0.0
    %6247 = vmatprep.subr.mxu0 0.0
    %6248 = vmatpush1.xpose.msra.mxu0 0.0
    %6249 = vmatprep.subr.mxu0 0.0
    %6250 = vmatpush1.xpose.msra.mxu0 0.0
    %6251 = vmatprep.subr.mxu0 0.0
    %6252 = vmatpush1.xpose.msra.mxu0 0.0
    %6253 = vmatprep.subr.mxu0 0.0
    %6254 = vmatpush1.xpose.msra.mxu0 0.0
    %6255 = vmatprep.subr.mxu0 0.0
    %6256 = vmatpush1.xpose.msra.mxu0 0.0
    %6257 = vmatprep.subr.mxu0 0.0
    %6258 = vmatpush1.xpose.msra.mxu0 0.0
    %6259 = vmatprep.subr.mxu0 0.0
    %6260 = vmatpush1.xpose.msra.mxu0 0.0
    %6261 = vmatprep.subr.mxu0 0.0
    %6262 = vmatpush1.xpose.msra.mxu0 0.0
    %6263 = vmatprep.subr.mxu0 0.0
    %6264 = vmatpush1.xpose.msra.mxu0 0.0
    %6265 = vmatprep.subr.mxu0 0.0
    %6266 = vmatpush1.xpose.msra.mxu0 0.0
    %6267 = vmatprep.subr.mxu0 0.0
    %6268 = vmatpush1.xpose.msra.mxu0 0.0
    %6269 = vmatprep.subr.mxu0 0.0
    %6270 = vmatpush1.xpose.msra.mxu0 0.0
    %6271 = vmatprep.subr.mxu0 0.0
    %6272 = vmatpush1.xpose.msra.mxu0 0.0
    %6273 = vmatprep.subr.mxu0 0.0
    %6274 = vmatpush1.xpose.msra.mxu0 0.0
    %6275 = vmatprep.mubr.f32.mxu0 0.0
    %6276 = vmatmul.mubr.f32.gmra.mrb[0].mxu0 %v6205
    %v6277 = vpop.f32.mrb[0].mxu0
    %v6278 = vadd.f32 0.0, %v6277
    %v6279 = vpop.f32.mrb[0].mxu0
    %6280 = vdwg.mxu0
    %v6281 = vmul.f32 %v6278, 0.17677669
    %v6282 = vsel %vm2306, %v6281, -1e+09
    %v6283 = vsel %vm2308, %v6282, -inf
    %6284 = vmax.xlane.f32.xlu0 %v6283
    %v6285 = vpop.xlane.xlu0 %6284
    %v6286 = vsub.f32 %v6282, %v6285
    %v6287 = vmul.f32 %v6286, 1.442695
    %v6288 = vpow.pop %v6287
    %v6289 = vsel %vm2308, %v6288, 0.0
    %6290 = vadd.xlane.f32.xlu0 %v6289
    %v6291 = vpop.xlane.xlu0 %6290
    %v6292 = vrcp.pop %v6291
    %v6293 = vmul.f32 %v6288, %v6292
    %6296 = vrot.lane.b32.xlu0 %v6013, 96
    %v6297 = vpop.permute.xlu0 %6296
    %6298 = vrot.lane.b32.xlu0 %v6019, 96
    %v6299 = vpop.permute.xlu0 %6298
    %v6303 = vsel %vm2308, %v6293, 0
    %6305 = vmatprep.subr.mxu0 0.0
    %6306 = vmatpush1.msra.mxu0 %v6297
    %6307 = vmatprep.subr.mxu0 0.0
    %6308 = vmatpush1.msra.mxu0 %v6299
    %6309 = vmatprep.subr.mxu0 0.0
    %6310 = vmatpush1.msra.mxu0 0.0
    %6311 = vmatprep.subr.mxu0 0.0
    %6312 = vmatpush1.msra.mxu0 0.0
    %6313 = vmatprep.subr.mxu0 0.0
    %6314 = vmatpush1.msra.mxu0 0.0
    %6315 = vmatprep.subr.mxu0 0.0
    %6316 = vmatpush1.msra.mxu0 0.0
    %6317 = vmatprep.subr.mxu0 0.0
    %6318 = vmatpush1.msra.mxu0 0.0
    %6319 = vmatprep.subr.mxu0 0.0
    %6320 = vmatpush1.msra.mxu0 0.0
    %6321 = vmatprep.subr.mxu0 0.0
    %6322 = vmatpush1.msra.mxu0 0.0
    %6323 = vmatprep.subr.mxu0 0.0
    %6324 = vmatpush1.msra.mxu0 0.0
    %6325 = vmatprep.subr.mxu0 0.0
    %6326 = vmatpush1.msra.mxu0 0.0
    %6327 = vmatprep.subr.mxu0 0.0
    %6328 = vmatpush1.msra.mxu0 0.0
    %6329 = vmatprep.subr.mxu0 0.0
    %6330 = vmatpush1.msra.mxu0 0.0
    %6331 = vmatprep.subr.mxu0 0.0
    %6332 = vmatpush1.msra.mxu0 0.0
    %6333 = vmatprep.subr.mxu0 0.0
    %6334 = vmatpush1.msra.mxu0 0.0
    %6335 = vmatprep.subr.mxu0 0.0
    %6336 = vmatpush1.msra.mxu0 0.0
    %6337 = vmatprep.subr.mxu0 0.0
    %6338 = vmatpush1.msra.mxu0 0.0
    %6339 = vmatprep.subr.mxu0 0.0
    %6340 = vmatpush1.msra.mxu0 0.0
    %6341 = vmatprep.subr.mxu0 0.0
    %6342 = vmatpush1.msra.mxu0 0.0
    %6343 = vmatprep.subr.mxu0 0.0
    %6344 = vmatpush1.msra.mxu0 0.0
    %6345 = vmatprep.subr.mxu0 0.0
    %6346 = vmatpush1.msra.mxu0 0.0
    %6347 = vmatprep.subr.mxu0 0.0
    %6348 = vmatpush1.msra.mxu0 0.0
    %6349 = vmatprep.subr.mxu0 0.0
    %6350 = vmatpush1.msra.mxu0 0.0
    %6351 = vmatprep.subr.mxu0 0.0
    %6352 = vmatpush1.msra.mxu0 0.0
    %6353 = vmatprep.subr.mxu0 0.0
    %6354 = vmatpush1.msra.mxu0 0.0
    %6355 = vmatprep.subr.mxu0 0.0
    %6356 = vmatpush1.msra.mxu0 0.0
    %6357 = vmatprep.subr.mxu0 0.0
    %6358 = vmatpush1.msra.mxu0 0.0
    %6359 = vmatprep.subr.mxu0 0.0
    %6360 = vmatpush1.msra.mxu0 0.0
    %6361 = vmatprep.subr.mxu0 0.0
    %6362 = vmatpush1.msra.mxu0 0.0
    %6363 = vmatprep.subr.mxu0 0.0
    %6364 = vmatpush1.msra.mxu0 0.0
    %6365 = vmatprep.subr.mxu0 0.0
    %6366 = vmatpush1.msra.mxu0 0.0
    %6367 = vmatprep.subr.mxu0 0.0
    %6368 = vmatpush1.msra.mxu0 0.0
    %6369 = vmatprep.mubr.f32.mxu0 0.0
    %6370 = vmatmul.mubr.f32.gmra.mrb[0].mxu0 %v6303
    %v6371 = vpop.f32.mrb[0].mxu0
    %v6372 = vadd.f32 0.0, %v6371
    %v6373 = vpop.f32.mrb[0].mxu0
    %6374 = vdwg.mxu0
    %s6375 = scalar_lea.vmem [#allocation25], 8
    %6376 = vst.msk [vmem:[%s6375] sm:$0xff] %vm2308, %v6293
    %6377 = vrot.lane.b32.xlu0 %v5890, 64
    %v6378 = vpop.permute.xlu0 %6377
    %6379 = vrot.lane.b32.xlu0 %v6011, 64
    %v6380 = vpop.permute.xlu0 %6379
    %6381 = vrot.lane.b32.xlu0 %v6017, 64
    %v6382 = vpop.permute.xlu0 %6381
    %v6383 = vsel %vm486, %v6378, 0
    %v6385 = vsel %vm486, %v6380, 0
    %v6387 = vsel %vm486, %v6382, 0
    %6389 = vmatprep.subr.mxu0 0.0
    %6390 = vmatpush1.xpose.msra.mxu0 %v6385
    %6391 = vmatprep.subr.mxu0 0.0
    %6392 = vmatpush1.xpose.msra.mxu0 %v6387
    %6393 = vmatprep.subr.mxu0 0.0
    %6394 = vmatpush1.xpose.msra.mxu0 0.0
    %6395 = vmatprep.subr.mxu0 0.0
    %6396 = vmatpush1.xpose.msra.mxu0 0.0
    %6397 = vmatprep.subr.mxu0 0.0
    %6398 = vmatpush1.xpose.msra.mxu0 0.0
    %6399 = vmatprep.subr.mxu0 0.0
    %6400 = vmatpush1.xpose.msra.mxu0 0.0
    %6401 = vmatprep.subr.mxu0 0.0
    %6402 = vmatpush1.xpose.msra.mxu0 0.0
    %6403 = vmatprep.subr.mxu0 0.0
    %6404 = vmatpush1.xpose.msra.mxu0 0.0
    %6405 = vmatprep.subr.mxu0 0.0
    %6406 = vmatpush1.xpose.msra.mxu0 0.0
    %6407 = vmatprep.subr.mxu0 0.0
    %6408 = vmatpush1.xpose.msra.mxu0 0.0
    %6409 = vmatprep.subr.mxu0 0.0
    %6410 = vmatpush1.xpose.msra.mxu0 0.0
    %6411 = vmatprep.subr.mxu0 0.0
    %6412 = vmatpush1.xpose.msra.mxu0 0.0
    %6413 = vmatprep.subr.mxu0 0.0
    %6414 = vmatpush1.xpose.msra.mxu0 0.0
    %6415 = vmatprep.subr.mxu0 0.0
    %6416 = vmatpush1.xpose.msra.mxu0 0.0
    %6417 = vmatprep.subr.mxu0 0.0
    %6418 = vmatpush1.xpose.msra.mxu0 0.0
    %6419 = vmatprep.subr.mxu0 0.0
    %6420 = vmatpush1.xpose.msra.mxu0 0.0
    %6421 = vmatprep.subr.mxu0 0.0
    %6422 = vmatpush1.xpose.msra.mxu0 0.0
    %6423 = vmatprep.subr.mxu0 0.0
    %6424 = vmatpush1.xpose.msra.mxu0 0.0
    %6425 = vmatprep.subr.mxu0 0.0
    %6426 = vmatpush1.xpose.msra.mxu0 0.0
    %6427 = vmatprep.subr.mxu0 0.0
    %6428 = vmatpush1.xpose.msra.mxu0 0.0
    %6429 = vmatprep.subr.mxu0 0.0
    %6430 = vmatpush1.xpose.msra.mxu0 0.0
    %6431 = vmatprep.subr.mxu0 0.0
    %6432 = vmatpush1.xpose.msra.mxu0 0.0
    %6433 = vmatprep.subr.mxu0 0.0
    %6434 = vmatpush1.xpose.msra.mxu0 0.0
    %6435 = vmatprep.subr.mxu0 0.0
    %6436 = vmatpush1.xpose.msra.mxu0 0.0
    %6437 = vmatprep.subr.mxu0 0.0
    %6438 = vmatpush1.xpose.msra.mxu0 0.0
    %6439 = vmatprep.subr.mxu0 0.0
    %6440 = vmatpush1.xpose.msra.mxu0 0.0
    %6441 = vmatprep.subr.mxu0 0.0
    %6442 = vmatpush1.xpose.msra.mxu0 0.0
    %6443 = vmatprep.subr.mxu0 0.0
    %6444 = vmatpush1.xpose.msra.mxu0 0.0
    %6445 = vmatprep.subr.mxu0 0.0
    %6446 = vmatpush1.xpose.msra.mxu0 0.0
    %6447 = vmatprep.subr.mxu0 0.0
    %6448 = vmatpush1.xpose.msra.mxu0 0.0
    %6449 = vmatprep.subr.mxu0 0.0
    %6450 = vmatpush1.xpose.msra.mxu0 0.0
    %6451 = vmatprep.subr.mxu0 0.0
    %6452 = vmatpush1.xpose.msra.mxu0 0.0
    %6453 = vmatprep.mubr.f32.mxu0 0.0
    %6454 = vmatmul.mubr.f32.gmra.mrb[0].mxu0 %v6383
    %v6455 = vpop.f32.mrb[0].mxu0
    %v6456 = vadd.f32 0.0, %v6455
    %v6457 = vpop.f32.mrb[0].mxu0
    %6458 = vdwg.mxu0
    %v6459 = vmul.f32 %v6456, 0.17677669
    %v6460 = vsel %vm2306, %v6459, -1e+09
    %v6461 = vsel %vm2308, %v6460, -inf
    %6462 = vmax.xlane.f32.xlu0 %v6461
    %v6463 = vpop.xlane.xlu0 %6462
    %v6464 = vsub.f32 %v6460, %v6463
    %v6465 = vmul.f32 %v6464, 1.442695
    %v6466 = vpow.pop %v6465
    %v6467 = vsel %vm2308, %v6466, 0.0
    %6468 = vadd.xlane.f32.xlu0 %v6467
    %v6469 = vpop.xlane.xlu0 %6468
    %v6470 = vrcp.pop %v6469
    %v6471 = vmul.f32 %v6466, %v6470
    %6472 = vrot.lane.b32.xlu0 %v6013, 64
    %v6473 = vpop.permute.xlu0 %6472
    %6474 = vrot.lane.b32.xlu0 %v6019, 64
    %v6475 = vpop.permute.xlu0 %6474
    %v6479 = vsel %vm2308, %v6471, 0
    %6481 = vmatprep.subr.mxu0 0.0
    %6482 = vmatpush1.msra.mxu0 %v6473
    %6483 = vmatprep.subr.mxu0 0.0
    %6484 = vmatpush1.msra.mxu0 %v6475
    %6485 = vmatprep.subr.mxu0 0.0
    %6486 = vmatpush1.msra.mxu0 0.0
    %6487 = vmatprep.subr.mxu0 0.0
    %6488 = vmatpush1.msra.mxu0 0.0
    %6489 = vmatprep.subr.mxu0 0.0
    %6490 = vmatpush1.msra.mxu0 0.0
    %6491 = vmatprep.subr.mxu0 0.0
    %6492 = vmatpush1.msra.mxu0 0.0
    %6493 = vmatprep.subr.mxu0 0.0
    %6494 = vmatpush1.msra.mxu0 0.0
    %6495 = vmatprep.subr.mxu0 0.0
    %6496 = vmatpush1.msra.mxu0 0.0
    %6497 = vmatprep.subr.mxu0 0.0
    %6498 = vmatpush1.msra.mxu0 0.0
    %6499 = vmatprep.subr.mxu0 0.0
    %6500 = vmatpush1.msra.mxu0 0.0
    %6501 = vmatprep.subr.mxu0 0.0
    %6502 = vmatpush1.msra.mxu0 0.0
    %6503 = vmatprep.subr.mxu0 0.0
    %6504 = vmatpush1.msra.mxu0 0.0
    %6505 = vmatprep.subr.mxu0 0.0
    %6506 = vmatpush1.msra.mxu0 0.0
    %6507 = vmatprep.subr.mxu0 0.0
    %6508 = vmatpush1.msra.mxu0 0.0
    %6509 = vmatprep.subr.mxu0 0.0
    %6510 = vmatpush1.msra.mxu0 0.0
    %6511 = vmatprep.subr.mxu0 0.0
    %6512 = vmatpush1.msra.mxu0 0.0
    %6513 = vmatprep.subr.mxu0 0.0
    %6514 = vmatpush1.msra.mxu0 0.0
    %6515 = vmatprep.subr.mxu0 0.0
    %6516 = vmatpush1.msra.mxu0 0.0
    %6517 = vmatprep.subr.mxu0 0.0
    %6518 = vmatpush1.msra.mxu0 0.0
    %6519 = vmatprep.subr.mxu0 0.0
    %6520 = vmatpush1.msra.mxu0 0.0
    %6521 = vmatprep.subr.mxu0 0.0
    %6522 = vmatpush1.msra.mxu0 0.0
    %6523 = vmatprep.subr.mxu0 0.0
    %6524 = vmatpush1.msra.mxu0 0.0
    %6525 = vmatprep.subr.mxu0 0.0
    %6526 = vmatpush1.msra.mxu0 0.0
    %6527 = vmatprep.subr.mxu0 0.0
    %6528 = vmatpush1.msra.mxu0 0.0
    %6529 = vmatprep.subr.mxu0 0.0
    %6530 = vmatpush1.msra.mxu0 0.0
    %6531 = vmatprep.subr.mxu0 0.0
    %6532 = vmatpush1.msra.mxu0 0.0
    %6533 = vmatprep.subr.mxu0 0.0
    %6534 = vmatpush1.msra.mxu0 0.0
    %6535 = vmatprep.subr.mxu0 0.0
    %6536 = vmatpush1.msra.mxu0 0.0
    %6537 = vmatprep.subr.mxu0 0.0
    %6538 = vmatpush1.msra.mxu0 0.0
    %6539 = vmatprep.subr.mxu0 0.0
    %6540 = vmatpush1.msra.mxu0 0.0
    %6541 = vmatprep.subr.mxu0 0.0
    %6542 = vmatpush1.msra.mxu0 0.0
    %6543 = vmatprep.subr.mxu0 0.0
    %6544 = vmatpush1.msra.mxu0 0.0
    %6545 = vmatprep.mubr.f32.mxu0 0.0
    %6546 = vmatmul.mubr.f32.gmra.mrb[0].mxu0 %v6479
    %v6547 = vpop.f32.mrb[0].mxu0
    %v6548 = vadd.f32 0.0, %v6547
    %v6549 = vpop.f32.mrb[0].mxu0
    %6550 = vdwg.mxu0
    %s6551 = scalar_lea.vmem [#allocation25], 16
    %6552 = vst.msk [vmem:[%s6551] sm:$0xff] %vm2308, %v6471
    %6553 = vrot.lane.b32.xlu0 %v5890, 32
    %v6554 = vpop.permute.xlu0 %6553
    %6555 = vrot.lane.b32.xlu0 %v6011, 32
    %v6556 = vpop.permute.xlu0 %6555
    %6557 = vrot.lane.b32.xlu0 %v6017, 32
    %v6558 = vpop.permute.xlu0 %6557
    %v6559 = vsel %vm486, %v6554, 0
    %v6561 = vsel %vm486, %v6556, 0
    %v6563 = vsel %vm486, %v6558, 0
    %6565 = vmatprep.subr.mxu0 0.0
    %6566 = vmatpush1.xpose.msra.mxu0 %v6561
    %6567 = vmatprep.subr.mxu0 0.0
    %6568 = vmatpush1.xpose.msra.mxu0 %v6563
    %6569 = vmatprep.subr.mxu0 0.0
    %6570 = vmatpush1.xpose.msra.mxu0 0.0
    %6571 = vmatprep.subr.mxu0 0.0
    %6572 = vmatpush1.xpose.msra.mxu0 0.0
    %6573 = vmatprep.subr.mxu0 0.0
    %6574 = vmatpush1.xpose.msra.mxu0 0.0
    %6575 = vmatprep.subr.mxu0 0.0
    %6576 = vmatpush1.xpose.msra.mxu0 0.0
    %6577 = vmatprep.subr.mxu0 0.0
    %6578 = vmatpush1.xpose.msra.mxu0 0.0
    %6579 = vmatprep.subr.mxu0 0.0
    %6580 = vmatpush1.xpose.msra.mxu0 0.0
    %6581 = vmatprep.subr.mxu0 0.0
    %6582 = vmatpush1.xpose.msra.mxu0 0.0
    %6583 = vmatprep.subr.mxu0 0.0
    %6584 = vmatpush1.xpose.msra.mxu0 0.0
    %6585 = vmatprep.subr.mxu0 0.0
    %6586 = vmatpush1.xpose.msra.mxu0 0.0
    %6587 = vmatprep.subr.mxu0 0.0
    %6588 = vmatpush1.xpose.msra.mxu0 0.0
    %6589 = vmatprep.subr.mxu0 0.0
    %6590 = vmatpush1.xpose.msra.mxu0 0.0
    %6591 = vmatprep.subr.mxu0 0.0
    %6592 = vmatpush1.xpose.msra.mxu0 0.0
    %6593 = vmatprep.subr.mxu0 0.0
    %6594 = vmatpush1.xpose.msra.mxu0 0.0
    %6595 = vmatprep.subr.mxu0 0.0
    %6596 = vmatpush1.xpose.msra.mxu0 0.0
    %6597 = vmatprep.subr.mxu0 0.0
    %6598 = vmatpush1.xpose.msra.mxu0 0.0
    %6599 = vmatprep.subr.mxu0 0.0
    %6600 = vmatpush1.xpose.msra.mxu0 0.0
    %6601 = vmatprep.subr.mxu0 0.0
    %6602 = vmatpush1.xpose.msra.mxu0 0.0
    %6603 = vmatprep.subr.mxu0 0.0
    %6604 = vmatpush1.xpose.msra.mxu0 0.0
    %6605 = vmatprep.subr.mxu0 0.0
    %6606 = vmatpush1.xpose.msra.mxu0 0.0
    %6607 = vmatprep.subr.mxu0 0.0
    %6608 = vmatpush1.xpose.msra.mxu0 0.0
    %6609 = vmatprep.subr.mxu0 0.0
    %6610 = vmatpush1.xpose.msra.mxu0 0.0
    %6611 = vmatprep.subr.mxu0 0.0
    %6612 = vmatpush1.xpose.msra.mxu0 0.0
    %6613 = vmatprep.subr.mxu0 0.0
    %6614 = vmatpush1.xpose.msra.mxu0 0.0
    %6615 = vmatprep.subr.mxu0 0.0
    %6616 = vmatpush1.xpose.msra.mxu0 0.0
    %6617 = vmatprep.subr.mxu0 0.0
    %6618 = vmatpush1.xpose.msra.mxu0 0.0
    %6619 = vmatprep.subr.mxu0 0.0
    %6620 = vmatpush1.xpose.msra.mxu0 0.0
    %6621 = vmatprep.subr.mxu0 0.0
    %6622 = vmatpush1.xpose.msra.mxu0 0.0
    %6623 = vmatprep.subr.mxu0 0.0
    %6624 = vmatpush1.xpose.msra.mxu0 0.0
    %6625 = vmatprep.subr.mxu0 0.0
    %6626 = vmatpush1.xpose.msra.mxu0 0.0
    %6627 = vmatprep.subr.mxu0 0.0
    %6628 = vmatpush1.xpose.msra.mxu0 0.0
    %6629 = vmatprep.mubr.f32.mxu0 0.0
    %6630 = vmatmul.mubr.f32.gmra.mrb[0].mxu0 %v6559
    %v6631 = vpop.f32.mrb[0].mxu0
    %v6632 = vadd.f32 0.0, %v6631
    %v6633 = vpop.f32.mrb[0].mxu0
    %6634 = vdwg.mxu0
    %v6635 = vmul.f32 %v6632, 0.17677669
    %v6636 = vsel %vm2306, %v6635, -1e+09
    %v6637 = vsel %vm2308, %v6636, -inf
    %6638 = vmax.xlane.f32.xlu0 %v6637
    %v6639 = vpop.xlane.xlu0 %6638
    %v6640 = vsub.f32 %v6636, %v6639
    %v6641 = vmul.f32 %v6640, 1.442695
    %v6642 = vpow.pop %v6641
    %v6643 = vsel %vm2308, %v6642, 0.0
    %6644 = vadd.xlane.f32.xlu0 %v6643
    %v6645 = vpop.xlane.xlu0 %6644
    %v6646 = vrcp.pop %v6645
    %v6647 = vmul.f32 %v6642, %v6646
    %6648 = vrot.lane.b32.xlu0 %v6013, 32
    %v6649 = vpop.permute.xlu0 %6648
    %6650 = vrot.lane.b32.xlu0 %v6019, 32
    %v6651 = vpop.permute.xlu0 %6650
    %v6655 = vsel %vm2308, %v6647, 0
    %6657 = vmatprep.subr.mxu0 0.0
    %6658 = vmatpush1.msra.mxu0 %v6649
    %6659 = vmatprep.subr.mxu0 0.0
    %6660 = vmatpush1.msra.mxu0 %v6651
    %6661 = vmatprep.subr.mxu0 0.0
    %6662 = vmatpush1.msra.mxu0 0.0
    %6663 = vmatprep.subr.mxu0 0.0
    %6664 = vmatpush1.msra.mxu0 0.0
    %6665 = vmatprep.subr.mxu0 0.0
    %6666 = vmatpush1.msra.mxu0 0.0
    %6667 = vmatprep.subr.mxu0 0.0
    %6668 = vmatpush1.msra.mxu0 0.0
    %6669 = vmatprep.subr.mxu0 0.0
    %6670 = vmatpush1.msra.mxu0 0.0
    %6671 = vmatprep.subr.mxu0 0.0
    %6672 = vmatpush1.msra.mxu0 0.0
    %6673 = vmatprep.subr.mxu0 0.0
    %6674 = vmatpush1.msra.mxu0 0.0
    %6675 = vmatprep.subr.mxu0 0.0
    %6676 = vmatpush1.msra.mxu0 0.0
    %6677 = vmatprep.subr.mxu0 0.0
    %6678 = vmatpush1.msra.mxu0 0.0
    %6679 = vmatprep.subr.mxu0 0.0
    %6680 = vmatpush1.msra.mxu0 0.0
    %6681 = vmatprep.subr.mxu0 0.0
    %6682 = vmatpush1.msra.mxu0 0.0
    %6683 = vmatprep.subr.mxu0 0.0
    %6684 = vmatpush1.msra.mxu0 0.0
    %6685 = vmatprep.subr.mxu0 0.0
    %6686 = vmatpush1.msra.mxu0 0.0
    %6687 = vmatprep.subr.mxu0 0.0
    %6688 = vmatpush1.msra.mxu0 0.0
    %6689 = vmatprep.subr.mxu0 0.0
    %6690 = vmatpush1.msra.mxu0 0.0
    %6691 = vmatprep.subr.mxu0 0.0
    %6692 = vmatpush1.msra.mxu0 0.0
    %6693 = vmatprep.subr.mxu0 0.0
    %6694 = vmatpush1.msra.mxu0 0.0
    %6695 = vmatprep.subr.mxu0 0.0
    %6696 = vmatpush1.msra.mxu0 0.0
    %6697 = vmatprep.subr.mxu0 0.0
    %6698 = vmatpush1.msra.mxu0 0.0
    %6699 = vmatprep.subr.mxu0 0.0
    %6700 = vmatpush1.msra.mxu0 0.0
    %6701 = vmatprep.subr.mxu0 0.0
    %6702 = vmatpush1.msra.mxu0 0.0
    %6703 = vmatprep.subr.mxu0 0.0
    %6704 = vmatpush1.msra.mxu0 0.0
    %6705 = vmatprep.subr.mxu0 0.0
    %6706 = vmatpush1.msra.mxu0 0.0
    %6707 = vmatprep.subr.mxu0 0.0
    %6708 = vmatpush1.msra.mxu0 0.0
    %6709 = vmatprep.subr.mxu0 0.0
    %6710 = vmatpush1.msra.mxu0 0.0
    %6711 = vmatprep.subr.mxu0 0.0
    %6712 = vmatpush1.msra.mxu0 0.0
    %6713 = vmatprep.subr.mxu0 0.0
    %6714 = vmatpush1.msra.mxu0 0.0
    %6715 = vmatprep.subr.mxu0 0.0
    %6716 = vmatpush1.msra.mxu0 0.0
    %6717 = vmatprep.subr.mxu0 0.0
    %6718 = vmatpush1.msra.mxu0 0.0
    %6719 = vmatprep.subr.mxu0 0.0
    %6720 = vmatpush1.msra.mxu0 0.0
    %6721 = vmatprep.mubr.f32.mxu0 0.0
    %6722 = vmatmul.mubr.f32.gmra.mrb[0].mxu0 %v6655
    %v6723 = vpop.f32.mrb[0].mxu0
    %v6724 = vadd.f32 0.0, %v6723
    %v6725 = vpop.f32.mrb[0].mxu0
    %6726 = vdwg.mxu0
    %s6727 = scalar_lea.vmem [#allocation25], 24
    %6728 = vst.msk [vmem:[%s6727] sm:$0xff] %vm2308, %v6647
    %6730 = vrot.lane.b32.xlu0 %v6372, 32
    %v6731 = vpop.permute.xlu0 %6730
    %6734 = vrot.lane.b32.xlu0 %v6548, 64
    %v6735 = vpop.permute.xlu0 %6734
    %6738 = vrot.lane.b32.xlu0 %v6724, 96
    %v6739 = vpop.permute.xlu0 %6738
    %v6741 = vsel %vm486, %v6195, %v6731
    %v6742 = vsel %vm1165, %v6741, %v6735
    %v6743 = vsel %vm1167, %v6742, %v6739
    %v6745 = vsel %vm486, %v5895, 0
    %v6748 = vsel %vm486, %v6023, 0
    %v6751 = vsel %vm486, %v6029, 0
    %6753 = vmatprep.subr.mxu0 0.0
    %6754 = vmatpush1.xpose.msra.mxu0 %v6748
    %6755 = vmatprep.subr.mxu0 0.0
    %6756 = vmatpush1.xpose.msra.mxu0 %v6751
    %6757 = vmatprep.subr.mxu0 0.0
    %6758 = vmatpush1.xpose.msra.mxu0 0.0
    %6759 = vmatprep.subr.mxu0 0.0
    %6760 = vmatpush1.xpose.msra.mxu0 0.0
    %6761 = vmatprep.subr.mxu0 0.0
    %6762 = vmatpush1.xpose.msra.mxu0 0.0
    %6763 = vmatprep.subr.mxu0 0.0
    %6764 = vmatpush1.xpose.msra.mxu0 0.0
    %6765 = vmatprep.subr.mxu0 0.0
    %6766 = vmatpush1.xpose.msra.mxu0 0.0
    %6767 = vmatprep.subr.mxu0 0.0
    %6768 = vmatpush1.xpose.msra.mxu0 0.0
    %6769 = vmatprep.subr.mxu0 0.0
    %6770 = vmatpush1.xpose.msra.mxu0 0.0
    %6771 = vmatprep.subr.mxu0 0.0
    %6772 = vmatpush1.xpose.msra.mxu0 0.0
    %6773 = vmatprep.subr.mxu0 0.0
    %6774 = vmatpush1.xpose.msra.mxu0 0.0
    %6775 = vmatprep.subr.mxu0 0.0
    %6776 = vmatpush1.xpose.msra.mxu0 0.0
    %6777 = vmatprep.subr.mxu0 0.0
    %6778 = vmatpush1.xpose.msra.mxu0 0.0
    %6779 = vmatprep.subr.mxu0 0.0
    %6780 = vmatpush1.xpose.msra.mxu0 0.0
    %6781 = vmatprep.subr.mxu0 0.0
    %6782 = vmatpush1.xpose.msra.mxu0 0.0
    %6783 = vmatprep.subr.mxu0 0.0
    %6784 = vmatpush1.xpose.msra.mxu0 0.0
    %6785 = vmatprep.subr.mxu0 0.0
    %6786 = vmatpush1.xpose.msra.mxu0 0.0
    %6787 = vmatprep.subr.mxu0 0.0
    %6788 = vmatpush1.xpose.msra.mxu0 0.0
    %6789 = vmatprep.subr.mxu0 0.0
    %6790 = vmatpush1.xpose.msra.mxu0 0.0
    %6791 = vmatprep.subr.mxu0 0.0
    %6792 = vmatpush1.xpose.msra.mxu0 0.0
    %6793 = vmatprep.subr.mxu0 0.0
    %6794 = vmatpush1.xpose.msra.mxu0 0.0
    %6795 = vmatprep.subr.mxu0 0.0
    %6796 = vmatpush1.xpose.msra.mxu0 0.0
    %6797 = vmatprep.subr.mxu0 0.0
    %6798 = vmatpush1.xpose.msra.mxu0 0.0
    %6799 = vmatprep.subr.mxu0 0.0
    %6800 = vmatpush1.xpose.msra.mxu0 0.0
    %6801 = vmatprep.subr.mxu0 0.0
    %6802 = vmatpush1.xpose.msra.mxu0 0.0
    %6803 = vmatprep.subr.mxu0 0.0
    %6804 = vmatpush1.xpose.msra.mxu0 0.0
    %6805 = vmatprep.subr.mxu0 0.0
    %6806 = vmatpush1.xpose.msra.mxu0 0.0
    %6807 = vmatprep.subr.mxu0 0.0
    %6808 = vmatpush1.xpose.msra.mxu0 0.0
    %6809 = vmatprep.subr.mxu0 0.0
    %6810 = vmatpush1.xpose.msra.mxu0 0.0
    %6811 = vmatprep.subr.mxu0 0.0
    %6812 = vmatpush1.xpose.msra.mxu0 0.0
    %6813 = vmatprep.subr.mxu0 0.0
    %6814 = vmatpush1.xpose.msra.mxu0 0.0
    %6815 = vmatprep.subr.mxu0 0.0
    %6816 = vmatpush1.xpose.msra.mxu0 0.0
    %6817 = vmatprep.mubr.f32.mxu0 0.0
    %6818 = vmatmul.mubr.f32.gmra.mrb[0].mxu0 %v6745
    %v6819 = vpop.f32.mrb[0].mxu0
    %v6820 = vadd.f32 0.0, %v6819
    %v6821 = vpop.f32.mrb[0].mxu0
    %6822 = vdwg.mxu0
    %v6823 = vmul.f32 %v6820, 0.17677669
    %v6824 = vsel %vm3016, %v6823, -1e+09
    %v6825 = vsel %vm2308, %v6824, -inf
    %6826 = vmax.xlane.f32.xlu0 %v6825
    %v6827 = vpop.xlane.xlu0 %6826
    %v6828 = vsub.f32 %v6824, %v6827
    %v6829 = vmul.f32 %v6828, 1.442695
    %v6830 = vpow.pop %v6829
    %v6831 = vsel %vm2308, %v6830, 0.0
    %6832 = vadd.xlane.f32.xlu0 %v6831
    %v6833 = vpop.xlane.xlu0 %6832
    %v6834 = vrcp.pop %v6833
    %v6835 = vmul.f32 %v6830, %v6834
    %v6837 = vsel %vm2308, %v6835, 0
    %6839 = vmatprep.subr.mxu0 0.0
    %6840 = vmatpush1.msra.mxu0 %v6025
    %6841 = vmatprep.subr.mxu0 0.0
    %6842 = vmatpush1.msra.mxu0 %v6031
    %6843 = vmatprep.subr.mxu0 0.0
    %6844 = vmatpush1.msra.mxu0 0.0
    %6845 = vmatprep.subr.mxu0 0.0
    %6846 = vmatpush1.msra.mxu0 0.0
    %6847 = vmatprep.subr.mxu0 0.0
    %6848 = vmatpush1.msra.mxu0 0.0
    %6849 = vmatprep.subr.mxu0 0.0
    %6850 = vmatpush1.msra.mxu0 0.0
    %6851 = vmatprep.subr.mxu0 0.0
    %6852 = vmatpush1.msra.mxu0 0.0
    %6853 = vmatprep.subr.mxu0 0.0
    %6854 = vmatpush1.msra.mxu0 0.0
    %6855 = vmatprep.subr.mxu0 0.0
    %6856 = vmatpush1.msra.mxu0 0.0
    %6857 = vmatprep.subr.mxu0 0.0
    %6858 = vmatpush1.msra.mxu0 0.0
    %6859 = vmatprep.subr.mxu0 0.0
    %6860 = vmatpush1.msra.mxu0 0.0
    %6861 = vmatprep.subr.mxu0 0.0
    %6862 = vmatpush1.msra.mxu0 0.0
    %6863 = vmatprep.subr.mxu0 0.0
    %6864 = vmatpush1.msra.mxu0 0.0
    %6865 = vmatprep.subr.mxu0 0.0
    %6866 = vmatpush1.msra.mxu0 0.0
    %6867 = vmatprep.subr.mxu0 0.0
    %6868 = vmatpush1.msra.mxu0 0.0
    %6869 = vmatprep.subr.mxu0 0.0
    %6870 = vmatpush1.msra.mxu0 0.0
    %6871 = vmatprep.subr.mxu0 0.0
    %6872 = vmatpush1.msra.mxu0 0.0
    %6873 = vmatprep.subr.mxu0 0.0
    %6874 = vmatpush1.msra.mxu0 0.0
    %6875 = vmatprep.subr.mxu0 0.0
    %6876 = vmatpush1.msra.mxu0 0.0
    %6877 = vmatprep.subr.mxu0 0.0
    %6878 = vmatpush1.msra.mxu0 0.0
    %6879 = vmatprep.subr.mxu0 0.0
    %6880 = vmatpush1.msra.mxu0 0.0
    %6881 = vmatprep.subr.mxu0 0.0
    %6882 = vmatpush1.msra.mxu0 0.0
    %6883 = vmatprep.subr.mxu0 0.0
    %6884 = vmatpush1.msra.mxu0 0.0
    %6885 = vmatprep.subr.mxu0 0.0
    %6886 = vmatpush1.msra.mxu0 0.0
    %6887 = vmatprep.subr.mxu0 0.0
    %6888 = vmatpush1.msra.mxu0 0.0
    %6889 = vmatprep.subr.mxu0 0.0
    %6890 = vmatpush1.msra.mxu0 0.0
    %6891 = vmatprep.subr.mxu0 0.0
    %6892 = vmatpush1.msra.mxu0 0.0
    %6893 = vmatprep.subr.mxu0 0.0
    %6894 = vmatpush1.msra.mxu0 0.0
    %6895 = vmatprep.subr.mxu0 0.0
    %6896 = vmatpush1.msra.mxu0 0.0
    %6897 = vmatprep.subr.mxu0 0.0
    %6898 = vmatpush1.msra.mxu0 0.0
    %6899 = vmatprep.subr.mxu0 0.0
    %6900 = vmatpush1.msra.mxu0 0.0
    %6901 = vmatprep.subr.mxu0 0.0
    %6902 = vmatpush1.msra.mxu0 0.0
    %6903 = vmatprep.mubr.f32.mxu0 0.0
    %6904 = vmatmul.mubr.f32.gmra.mrb[0].mxu0 %v6837
    %v6905 = vpop.f32.mrb[0].mxu0
    %v6906 = vadd.f32 0.0, %v6905
    %v6907 = vpop.f32.mrb[0].mxu0
    %6908 = vdwg.mxu0
    %s6909 = scalar_lea.vmem [#allocation25], 32
    %6910 = vst.msk [vmem:[%s6909] sm:$0xff] %vm2308, %v6835
    %6911 = vrot.lane.b32.xlu0 %v5895, 96
    %v6912 = vpop.permute.xlu0 %6911
    %6913 = vrot.lane.b32.xlu0 %v6023, 96
    %v6914 = vpop.permute.xlu0 %6913
    %6915 = vrot.lane.b32.xlu0 %v6029, 96
    %v6916 = vpop.permute.xlu0 %6915
    %v6917 = vsel %vm486, %v6912, 0
    %v6919 = vsel %vm486, %v6914, 0
    %v6921 = vsel %vm486, %v6916, 0
    %6923 = vmatprep.subr.mxu0 0.0
    %6924 = vmatpush1.xpose.msra.mxu0 %v6919
    %6925 = vmatprep.subr.mxu0 0.0
    %6926 = vmatpush1.xpose.msra.mxu0 %v6921
    %6927 = vmatprep.subr.mxu0 0.0
    %6928 = vmatpush1.xpose.msra.mxu0 0.0
    %6929 = vmatprep.subr.mxu0 0.0
    %6930 = vmatpush1.xpose.msra.mxu0 0.0
    %6931 = vmatprep.subr.mxu0 0.0
    %6932 = vmatpush1.xpose.msra.mxu0 0.0
    %6933 = vmatprep.subr.mxu0 0.0
    %6934 = vmatpush1.xpose.msra.mxu0 0.0
    %6935 = vmatprep.subr.mxu0 0.0
    %6936 = vmatpush1.xpose.msra.mxu0 0.0
    %6937 = vmatprep.subr.mxu0 0.0
    %6938 = vmatpush1.xpose.msra.mxu0 0.0
    %6939 = vmatprep.subr.mxu0 0.0
    %6940 = vmatpush1.xpose.msra.mxu0 0.0
    %6941 = vmatprep.subr.mxu0 0.0
    %6942 = vmatpush1.xpose.msra.mxu0 0.0
    %6943 = vmatprep.subr.mxu0 0.0
    %6944 = vmatpush1.xpose.msra.mxu0 0.0
    %6945 = vmatprep.subr.mxu0 0.0
    %6946 = vmatpush1.xpose.msra.mxu0 0.0
    %6947 = vmatprep.subr.mxu0 0.0
    %6948 = vmatpush1.xpose.msra.mxu0 0.0
    %6949 = vmatprep.subr.mxu0 0.0
    %6950 = vmatpush1.xpose.msra.mxu0 0.0
    %6951 = vmatprep.subr.mxu0 0.0
    %6952 = vmatpush1.xpose.msra.mxu0 0.0
    %6953 = vmatprep.subr.mxu0 0.0
    %6954 = vmatpush1.xpose.msra.mxu0 0.0
    %6955 = vmatprep.subr.mxu0 0.0
    %6956 = vmatpush1.xpose.msra.mxu0 0.0
    %6957 = vmatprep.subr.mxu0 0.0
    %6958 = vmatpush1.xpose.msra.mxu0 0.0
    %6959 = vmatprep.subr.mxu0 0.0
    %6960 = vmatpush1.xpose.msra.mxu0 0.0
    %6961 = vmatprep.subr.mxu0 0.0
    %6962 = vmatpush1.xpose.msra.mxu0 0.0
    %6963 = vmatprep.subr.mxu0 0.0
    %6964 = vmatpush1.xpose.msra.mxu0 0.0
    %6965 = vmatprep.subr.mxu0 0.0
    %6966 = vmatpush1.xpose.msra.mxu0 0.0
    %6967 = vmatprep.subr.mxu0 0.0
    %6968 = vmatpush1.xpose.msra.mxu0 0.0
    %6969 = vmatprep.subr.mxu0 0.0
    %6970 = vmatpush1.xpose.msra.mxu0 0.0
    %6971 = vmatprep.subr.mxu0 0.0
    %6972 = vmatpush1.xpose.msra.mxu0 0.0
    %6973 = vmatprep.subr.mxu0 0.0
    %6974 = vmatpush1.xpose.msra.mxu0 0.0
    %6975 = vmatprep.subr.mxu0 0.0
    %6976 = vmatpush1.xpose.msra.mxu0 0.0
    %6977 = vmatprep.subr.mxu0 0.0
    %6978 = vmatpush1.xpose.msra.mxu0 0.0
    %6979 = vmatprep.subr.mxu0 0.0
    %6980 = vmatpush1.xpose.msra.mxu0 0.0
    %6981 = vmatprep.subr.mxu0 0.0
    %6982 = vmatpush1.xpose.msra.mxu0 0.0
    %6983 = vmatprep.subr.mxu0 0.0
    %6984 = vmatpush1.xpose.msra.mxu0 0.0
    %6985 = vmatprep.subr.mxu0 0.0
    %6986 = vmatpush1.xpose.msra.mxu0 0.0
    %6987 = vmatprep.mubr.f32.mxu0 0.0
    %6988 = vmatmul.mubr.f32.gmra.mrb[0].mxu0 %v6917
    %v6989 = vpop.f32.mrb[0].mxu0
    %v6990 = vadd.f32 0.0, %v6989
    %v6991 = vpop.f32.mrb[0].mxu0
    %6992 = vdwg.mxu0
    %v6993 = vmul.f32 %v6990, 0.17677669
    %v6994 = vsel %vm3016, %v6993, -1e+09
    %v6995 = vsel %vm2308, %v6994, -inf
    %6996 = vmax.xlane.f32.xlu0 %v6995
    %v6997 = vpop.xlane.xlu0 %6996
    %v6998 = vsub.f32 %v6994, %v6997
    %v6999 = vmul.f32 %v6998, 1.442695
    %v7000 = vpow.pop %v6999
    %v7001 = vsel %vm2308, %v7000, 0.0
    %7002 = vadd.xlane.f32.xlu0 %v7001
    %v7003 = vpop.xlane.xlu0 %7002
    %v7004 = vrcp.pop %v7003
    %v7005 = vmul.f32 %v7000, %v7004
    %7008 = vrot.lane.b32.xlu0 %v6025, 96
    %v7009 = vpop.permute.xlu0 %7008
    %7010 = vrot.lane.b32.xlu0 %v6031, 96
    %v7011 = vpop.permute.xlu0 %7010
    %v7015 = vsel %vm2308, %v7005, 0
    %7017 = vmatprep.subr.mxu0 0.0
    %7018 = vmatpush1.msra.mxu0 %v7009
    %7019 = vmatprep.subr.mxu0 0.0
    %7020 = vmatpush1.msra.mxu0 %v7011
    %7021 = vmatprep.subr.mxu0 0.0
    %7022 = vmatpush1.msra.mxu0 0.0
    %7023 = vmatprep.subr.mxu0 0.0
    %7024 = vmatpush1.msra.mxu0 0.0
    %7025 = vmatprep.subr.mxu0 0.0
    %7026 = vmatpush1.msra.mxu0 0.0
    %7027 = vmatprep.subr.mxu0 0.0
    %7028 = vmatpush1.msra.mxu0 0.0
    %7029 = vmatprep.subr.mxu0 0.0
    %7030 = vmatpush1.msra.mxu0 0.0
    %7031 = vmatprep.subr.mxu0 0.0
    %7032 = vmatpush1.msra.mxu0 0.0
    %7033 = vmatprep.subr.mxu0 0.0
    %7034 = vmatpush1.msra.mxu0 0.0
    %7035 = vmatprep.subr.mxu0 0.0
    %7036 = vmatpush1.msra.mxu0 0.0
    %7037 = vmatprep.subr.mxu0 0.0
    %7038 = vmatpush1.msra.mxu0 0.0
    %7039 = vmatprep.subr.mxu0 0.0
    %7040 = vmatpush1.msra.mxu0 0.0
    %7041 = vmatprep.subr.mxu0 0.0
    %7042 = vmatpush1.msra.mxu0 0.0
    %7043 = vmatprep.subr.mxu0 0.0
    %7044 = vmatpush1.msra.mxu0 0.0
    %7045 = vmatprep.subr.mxu0 0.0
    %7046 = vmatpush1.msra.mxu0 0.0
    %7047 = vmatprep.subr.mxu0 0.0
    %7048 = vmatpush1.msra.mxu0 0.0
    %7049 = vmatprep.subr.mxu0 0.0
    %7050 = vmatpush1.msra.mxu0 0.0
    %7051 = vmatprep.subr.mxu0 0.0
    %7052 = vmatpush1.msra.mxu0 0.0
    %7053 = vmatprep.subr.mxu0 0.0
    %7054 = vmatpush1.msra.mxu0 0.0
    %7055 = vmatprep.subr.mxu0 0.0
    %7056 = vmatpush1.msra.mxu0 0.0
    %7057 = vmatprep.subr.mxu0 0.0
    %7058 = vmatpush1.msra.mxu0 0.0
    %7059 = vmatprep.subr.mxu0 0.0
    %7060 = vmatpush1.msra.mxu0 0.0
    %7061 = vmatprep.subr.mxu0 0.0
    %7062 = vmatpush1.msra.mxu0 0.0
    %7063 = vmatprep.subr.mxu0 0.0
    %7064 = vmatpush1.msra.mxu0 0.0
    %7065 = vmatprep.subr.mxu0 0.0
    %7066 = vmatpush1.msra.mxu0 0.0
    %7067 = vmatprep.subr.mxu0 0.0
    %7068 = vmatpush1.msra.mxu0 0.0
    %7069 = vmatprep.subr.mxu0 0.0
    %7070 = vmatpush1.msra.mxu0 0.0
    %7071 = vmatprep.subr.mxu0 0.0
    %7072 = vmatpush1.msra.mxu0 0.0
    %7073 = vmatprep.subr.mxu0 0.0
    %7074 = vmatpush1.msra.mxu0 0.0
    %7075 = vmatprep.subr.mxu0 0.0
    %7076 = vmatpush1.msra.mxu0 0.0
    %7077 = vmatprep.subr.mxu0 0.0
    %7078 = vmatpush1.msra.mxu0 0.0
    %7079 = vmatprep.subr.mxu0 0.0
    %7080 = vmatpush1.msra.mxu0 0.0
    %7081 = vmatprep.mubr.f32.mxu0 0.0
    %7082 = vmatmul.mubr.f32.gmra.mrb[0].mxu0 %v7015
    %v7083 = vpop.f32.mrb[0].mxu0
    %v7084 = vadd.f32 0.0, %v7083
    %v7085 = vpop.f32.mrb[0].mxu0
    %7086 = vdwg.mxu0
    %s7087 = scalar_lea.vmem [#allocation25], 40
    %7088 = vst.msk [vmem:[%s7087] sm:$0xff] %vm2308, %v7005
    %7089 = vrot.lane.b32.xlu0 %v5895, 64
    %v7090 = vpop.permute.xlu0 %7089
    %7091 = vrot.lane.b32.xlu0 %v6023, 64
    %v7092 = vpop.permute.xlu0 %7091
    %7093 = vrot.lane.b32.xlu0 %v6029, 64
    %v7094 = vpop.permute.xlu0 %7093
    %v7095 = vsel %vm486, %v7090, 0
    %v7097 = vsel %vm486, %v7092, 0
    %v7099 = vsel %vm486, %v7094, 0
    %7101 = vmatprep.subr.mxu0 0.0
    %7102 = vmatpush1.xpose.msra.mxu0 %v7097
    %7103 = vmatprep.subr.mxu0 0.0
    %7104 = vmatpush1.xpose.msra.mxu0 %v7099
    %7105 = vmatprep.subr.mxu0 0.0
    %7106 = vmatpush1.xpose.msra.mxu0 0.0
    %7107 = vmatprep.subr.mxu0 0.0
    %7108 = vmatpush1.xpose.msra.mxu0 0.0
    %7109 = vmatprep.subr.mxu0 0.0
    %7110 = vmatpush1.xpose.msra.mxu0 0.0
    %7111 = vmatprep.subr.mxu0 0.0
    %7112 = vmatpush1.xpose.msra.mxu0 0.0
    %7113 = vmatprep.subr.mxu0 0.0
    %7114 = vmatpush1.xpose.msra.mxu0 0.0
    %7115 = vmatprep.subr.mxu0 0.0
    %7116 = vmatpush1.xpose.msra.mxu0 0.0
    %7117 = vmatprep.subr.mxu0 0.0
    %7118 = vmatpush1.xpose.msra.mxu0 0.0
    %7119 = vmatprep.subr.mxu0 0.0
    %7120 = vmatpush1.xpose.msra.mxu0 0.0
    %7121 = vmatprep.subr.mxu0 0.0
    %7122 = vmatpush1.xpose.msra.mxu0 0.0
    %7123 = vmatprep.subr.mxu0 0.0
    %7124 = vmatpush1.xpose.msra.mxu0 0.0
    %7125 = vmatprep.subr.mxu0 0.0
    %7126 = vmatpush1.xpose.msra.mxu0 0.0
    %7127 = vmatprep.subr.mxu0 0.0
    %7128 = vmatpush1.xpose.msra.mxu0 0.0
    %7129 = vmatprep.subr.mxu0 0.0
    %7130 = vmatpush1.xpose.msra.mxu0 0.0
    %7131 = vmatprep.subr.mxu0 0.0
    %7132 = vmatpush1.xpose.msra.mxu0 0.0
    %7133 = vmatprep.subr.mxu0 0.0
    %7134 = vmatpush1.xpose.msra.mxu0 0.0
    %7135 = vmatprep.subr.mxu0 0.0
    %7136 = vmatpush1.xpose.msra.mxu0 0.0
    %7137 = vmatprep.subr.mxu0 0.0
    %7138 = vmatpush1.xpose.msra.mxu0 0.0
    %7139 = vmatprep.subr.mxu0 0.0
    %7140 = vmatpush1.xpose.msra.mxu0 0.0
    %7141 = vmatprep.subr.mxu0 0.0
    %7142 = vmatpush1.xpose.msra.mxu0 0.0
    %7143 = vmatprep.subr.mxu0 0.0
    %7144 = vmatpush1.xpose.msra.mxu0 0.0
    %7145 = vmatprep.subr.mxu0 0.0
    %7146 = vmatpush1.xpose.msra.mxu0 0.0
    %7147 = vmatprep.subr.mxu0 0.0
    %7148 = vmatpush1.xpose.msra.mxu0 0.0
    %7149 = vmatprep.subr.mxu0 0.0
    %7150 = vmatpush1.xpose.msra.mxu0 0.0
    %7151 = vmatprep.subr.mxu0 0.0
    %7152 = vmatpush1.xpose.msra.mxu0 0.0
    %7153 = vmatprep.subr.mxu0 0.0
    %7154 = vmatpush1.xpose.msra.mxu0 0.0
    %7155 = vmatprep.subr.mxu0 0.0
    %7156 = vmatpush1.xpose.msra.mxu0 0.0
    %7157 = vmatprep.subr.mxu0 0.0
    %7158 = vmatpush1.xpose.msra.mxu0 0.0
    %7159 = vmatprep.subr.mxu0 0.0
    %7160 = vmatpush1.xpose.msra.mxu0 0.0
    %7161 = vmatprep.subr.mxu0 0.0
    %7162 = vmatpush1.xpose.msra.mxu0 0.0
    %7163 = vmatprep.subr.mxu0 0.0
    %7164 = vmatpush1.xpose.msra.mxu0 0.0
    %7165 = vmatprep.mubr.f32.mxu0 0.0
    %7166 = vmatmul.mubr.f32.gmra.mrb[0].mxu0 %v7095
    %v7167 = vpop.f32.mrb[0].mxu0
    %v7168 = vadd.f32 0.0, %v7167
    %v7169 = vpop.f32.mrb[0].mxu0
    %7170 = vdwg.mxu0
    %v7171 = vmul.f32 %v7168, 0.17677669
    %v7172 = vsel %vm3016, %v7171, -1e+09
    %v7173 = vsel %vm2308, %v7172, -inf
    %7174 = vmax.xlane.f32.xlu0 %v7173
    %v7175 = vpop.xlane.xlu0 %7174
    %v7176 = vsub.f32 %v7172, %v7175
    %v7177 = vmul.f32 %v7176, 1.442695
    %v7178 = vpow.pop %v7177
    %v7179 = vsel %vm2308, %v7178, 0.0
    %7180 = vadd.xlane.f32.xlu0 %v7179
    %v7181 = vpop.xlane.xlu0 %7180
    %v7182 = vrcp.pop %v7181
    %v7183 = vmul.f32 %v7178, %v7182
    %7184 = vrot.lane.b32.xlu0 %v6025, 64
    %v7185 = vpop.permute.xlu0 %7184
    %7186 = vrot.lane.b32.xlu0 %v6031, 64
    %v7187 = vpop.permute.xlu0 %7186
    %v7191 = vsel %vm2308, %v7183, 0
    %7193 = vmatprep.subr.mxu0 0.0
    %7194 = vmatpush1.msra.mxu0 %v7185
    %7195 = vmatprep.subr.mxu0 0.0
    %7196 = vmatpush1.msra.mxu0 %v7187
    %7197 = vmatprep.subr.mxu0 0.0
    %7198 = vmatpush1.msra.mxu0 0.0
    %7199 = vmatprep.subr.mxu0 0.0
    %7200 = vmatpush1.msra.mxu0 0.0
    %7201 = vmatprep.subr.mxu0 0.0
    %7202 = vmatpush1.msra.mxu0 0.0
    %7203 = vmatprep.subr.mxu0 0.0
    %7204 = vmatpush1.msra.mxu0 0.0
    %7205 = vmatprep.subr.mxu0 0.0
    %7206 = vmatpush1.msra.mxu0 0.0
    %7207 = vmatprep.subr.mxu0 0.0
    %7208 = vmatpush1.msra.mxu0 0.0
    %7209 = vmatprep.subr.mxu0 0.0
    %7210 = vmatpush1.msra.mxu0 0.0
    %7211 = vmatprep.subr.mxu0 0.0
    %7212 = vmatpush1.msra.mxu0 0.0
    %7213 = vmatprep.subr.mxu0 0.0
    %7214 = vmatpush1.msra.mxu0 0.0
    %7215 = vmatprep.subr.mxu0 0.0
    %7216 = vmatpush1.msra.mxu0 0.0
    %7217 = vmatprep.subr.mxu0 0.0
    %7218 = vmatpush1.msra.mxu0 0.0
    %7219 = vmatprep.subr.mxu0 0.0
    %7220 = vmatpush1.msra.mxu0 0.0
    %7221 = vmatprep.subr.mxu0 0.0
    %7222 = vmatpush1.msra.mxu0 0.0
    %7223 = vmatprep.subr.mxu0 0.0
    %7224 = vmatpush1.msra.mxu0 0.0
    %7225 = vmatprep.subr.mxu0 0.0
    %7226 = vmatpush1.msra.mxu0 0.0
    %7227 = vmatprep.subr.mxu0 0.0
    %7228 = vmatpush1.msra.mxu0 0.0
    %7229 = vmatprep.subr.mxu0 0.0
    %7230 = vmatpush1.msra.mxu0 0.0
    %7231 = vmatprep.subr.mxu0 0.0
    %7232 = vmatpush1.msra.mxu0 0.0
    %7233 = vmatprep.subr.mxu0 0.0
    %7234 = vmatpush1.msra.mxu0 0.0
    %7235 = vmatprep.subr.mxu0 0.0
    %7236 = vmatpush1.msra.mxu0 0.0
    %7237 = vmatprep.subr.mxu0 0.0
    %7238 = vmatpush1.msra.mxu0 0.0
    %7239 = vmatprep.subr.mxu0 0.0
    %7240 = vmatpush1.msra.mxu0 0.0
    %7241 = vmatprep.subr.mxu0 0.0
    %7242 = vmatpush1.msra.mxu0 0.0
    %7243 = vmatprep.subr.mxu0 0.0
    %7244 = vmatpush1.msra.mxu0 0.0
    %7245 = vmatprep.subr.mxu0 0.0
    %7246 = vmatpush1.msra.mxu0 0.0
    %7247 = vmatprep.subr.mxu0 0.0
    %7248 = vmatpush1.msra.mxu0 0.0
    %7249 = vmatprep.subr.mxu0 0.0
    %7250 = vmatpush1.msra.mxu0 0.0
    %7251 = vmatprep.subr.mxu0 0.0
    %7252 = vmatpush1.msra.mxu0 0.0
    %7253 = vmatprep.subr.mxu0 0.0
    %7254 = vmatpush1.msra.mxu0 0.0
    %7255 = vmatprep.subr.mxu0 0.0
    %7256 = vmatpush1.msra.mxu0 0.0
    %7257 = vmatprep.mubr.f32.mxu0 0.0
    %7258 = vmatmul.mubr.f32.gmra.mrb[0].mxu0 %v7191
    %v7259 = vpop.f32.mrb[0].mxu0
    %v7260 = vadd.f32 0.0, %v7259
    %v7261 = vpop.f32.mrb[0].mxu0
    %7262 = vdwg.mxu0
    %s7263 = scalar_lea.vmem [#allocation25], 48
    %7264 = vst.msk [vmem:[%s7263] sm:$0xff] %vm2308, %v7183
    %7265 = vrot.lane.b32.xlu0 %v5895, 32
    %v7266 = vpop.permute.xlu0 %7265
    %7267 = vrot.lane.b32.xlu0 %v6023, 32
    %v7268 = vpop.permute.xlu0 %7267
    %7269 = vrot.lane.b32.xlu0 %v6029, 32
    %v7270 = vpop.permute.xlu0 %7269
    %v7271 = vsel %vm486, %v7266, 0
    %v7273 = vsel %vm486, %v7268, 0
    %v7275 = vsel %vm486, %v7270, 0
    %7277 = vmatprep.subr.mxu0 0.0
    %7278 = vmatpush1.xpose.msra.mxu0 %v7273
    %7279 = vmatprep.subr.mxu0 0.0
    %7280 = vmatpush1.xpose.msra.mxu0 %v7275
    %7281 = vmatprep.subr.mxu0 0.0
    %7282 = vmatpush1.xpose.msra.mxu0 0.0
    %7283 = vmatprep.subr.mxu0 0.0
    %7284 = vmatpush1.xpose.msra.mxu0 0.0
    %7285 = vmatprep.subr.mxu0 0.0
    %7286 = vmatpush1.xpose.msra.mxu0 0.0
    %7287 = vmatprep.subr.mxu0 0.0
    %7288 = vmatpush1.xpose.msra.mxu0 0.0
    %7289 = vmatprep.subr.mxu0 0.0
    %7290 = vmatpush1.xpose.msra.mxu0 0.0
    %7291 = vmatprep.subr.mxu0 0.0
    %7292 = vmatpush1.xpose.msra.mxu0 0.0
    %7293 = vmatprep.subr.mxu0 0.0
    %7294 = vmatpush1.xpose.msra.mxu0 0.0
    %7295 = vmatprep.subr.mxu0 0.0
    %7296 = vmatpush1.xpose.msra.mxu0 0.0
    %7297 = vmatprep.subr.mxu0 0.0
    %7298 = vmatpush1.xpose.msra.mxu0 0.0
    %7299 = vmatprep.subr.mxu0 0.0
    %7300 = vmatpush1.xpose.msra.mxu0 0.0
    %7301 = vmatprep.subr.mxu0 0.0
    %7302 = vmatpush1.xpose.msra.mxu0 0.0
    %7303 = vmatprep.subr.mxu0 0.0
    %7304 = vmatpush1.xpose.msra.mxu0 0.0
    %7305 = vmatprep.subr.mxu0 0.0
    %7306 = vmatpush1.xpose.msra.mxu0 0.0
    %7307 = vmatprep.subr.mxu0 0.0
    %7308 = vmatpush1.xpose.msra.mxu0 0.0
    %7309 = vmatprep.subr.mxu0 0.0
    %7310 = vmatpush1.xpose.msra.mxu0 0.0
    %7311 = vmatprep.subr.mxu0 0.0
    %7312 = vmatpush1.xpose.msra.mxu0 0.0
    %7313 = vmatprep.subr.mxu0 0.0
    %7314 = vmatpush1.xpose.msra.mxu0 0.0
    %7315 = vmatprep.subr.mxu0 0.0
    %7316 = vmatpush1.xpose.msra.mxu0 0.0
    %7317 = vmatprep.subr.mxu0 0.0
    %7318 = vmatpush1.xpose.msra.mxu0 0.0
    %7319 = vmatprep.subr.mxu0 0.0
    %7320 = vmatpush1.xpose.msra.mxu0 0.0
    %7321 = vmatprep.subr.mxu0 0.0
    %7322 = vmatpush1.xpose.msra.mxu0 0.0
    %7323 = vmatprep.subr.mxu0 0.0
    %7324 = vmatpush1.xpose.msra.mxu0 0.0
    %7325 = vmatprep.subr.mxu0 0.0
    %7326 = vmatpush1.xpose.msra.mxu0 0.0
    %7327 = vmatprep.subr.mxu0 0.0
    %7328 = vmatpush1.xpose.msra.mxu0 0.0
    %7329 = vmatprep.subr.mxu0 0.0
    %7330 = vmatpush1.xpose.msra.mxu0 0.0
    %7331 = vmatprep.subr.mxu0 0.0
    %7332 = vmatpush1.xpose.msra.mxu0 0.0
    %7333 = vmatprep.subr.mxu0 0.0
    %7334 = vmatpush1.xpose.msra.mxu0 0.0
    %7335 = vmatprep.subr.mxu0 0.0
    %7336 = vmatpush1.xpose.msra.mxu0 0.0
    %7337 = vmatprep.subr.mxu0 0.0
    %7338 = vmatpush1.xpose.msra.mxu0 0.0
    %7339 = vmatprep.subr.mxu0 0.0
    %7340 = vmatpush1.xpose.msra.mxu0 0.0
    %7341 = vmatprep.mubr.f32.mxu0 0.0
    %7342 = vmatmul.mubr.f32.gmra.mrb[0].mxu0 %v7271
    %v7343 = vpop.f32.mrb[0].mxu0
    %v7344 = vadd.f32 0.0, %v7343
    %v7345 = vpop.f32.mrb[0].mxu0
    %7346 = vdwg.mxu0
    %v7347 = vmul.f32 %v7344, 0.17677669
    %v7348 = vsel %vm3016, %v7347, -1e+09
    %v7349 = vsel %vm2308, %v7348, -inf
    %7350 = vmax.xlane.f32.xlu0 %v7349
    %v7351 = vpop.xlane.xlu0 %7350
    %v7352 = vsub.f32 %v7348, %v7351
    %v7353 = vmul.f32 %v7352, 1.442695
    %v7354 = vpow.pop %v7353
    %v7355 = vsel %vm2308, %v7354, 0.0
    %7356 = vadd.xlane.f32.xlu0 %v7355
    %v7357 = vpop.xlane.xlu0 %7356
    %v7358 = vrcp.pop %v7357
    %v7359 = vmul.f32 %v7354, %v7358
    %7360 = vrot.lane.b32.xlu0 %v6025, 32
    %v7361 = vpop.permute.xlu0 %7360
    %7362 = vrot.lane.b32.xlu0 %v6031, 32
    %v7363 = vpop.permute.xlu0 %7362
    %v7367 = vsel %vm2308, %v7359, 0
    %7369 = vmatprep.subr.mxu0 0.0
    %7370 = vmatpush1.msra.mxu0 %v7361
    %7371 = vmatprep.subr.mxu0 0.0
    %7372 = vmatpush1.msra.mxu0 %v7363
    %7373 = vmatprep.subr.mxu0 0.0
    %7374 = vmatpush1.msra.mxu0 0.0
    %7375 = vmatprep.subr.mxu0 0.0
    %7376 = vmatpush1.msra.mxu0 0.0
    %7377 = vmatprep.subr.mxu0 0.0
    %7378 = vmatpush1.msra.mxu0 0.0
    %7379 = vmatprep.subr.mxu0 0.0
    %7380 = vmatpush1.msra.mxu0 0.0
    %7381 = vmatprep.subr.mxu0 0.0
    %7382 = vmatpush1.msra.mxu0 0.0
    %7383 = vmatprep.subr.mxu0 0.0
    %7384 = vmatpush1.msra.mxu0 0.0
    %7385 = vmatprep.subr.mxu0 0.0
    %7386 = vmatpush1.msra.mxu0 0.0
    %7387 = vmatprep.subr.mxu0 0.0
    %7388 = vmatpush1.msra.mxu0 0.0
    %7389 = vmatprep.subr.mxu0 0.0
    %7390 = vmatpush1.msra.mxu0 0.0
    %7391 = vmatprep.subr.mxu0 0.0
    %7392 = vmatpush1.msra.mxu0 0.0
    %7393 = vmatprep.subr.mxu0 0.0
    %7394 = vmatpush1.msra.mxu0 0.0
    %7395 = vmatprep.subr.mxu0 0.0
    %7396 = vmatpush1.msra.mxu0 0.0
    %7397 = vmatprep.subr.mxu0 0.0
    %7398 = vmatpush1.msra.mxu0 0.0
    %7399 = vmatprep.subr.mxu0 0.0
    %7400 = vmatpush1.msra.mxu0 0.0
    %7401 = vmatprep.subr.mxu0 0.0
    %7402 = vmatpush1.msra.mxu0 0.0
    %7403 = vmatprep.subr.mxu0 0.0
    %7404 = vmatpush1.msra.mxu0 0.0
    %7405 = vmatprep.subr.mxu0 0.0
    %7406 = vmatpush1.msra.mxu0 0.0
    %7407 = vmatprep.subr.mxu0 0.0
    %7408 = vmatpush1.msra.mxu0 0.0
    %7409 = vmatprep.subr.mxu0 0.0
    %7410 = vmatpush1.msra.mxu0 0.0
    %7411 = vmatprep.subr.mxu0 0.0
    %7412 = vmatpush1.msra.mxu0 0.0
    %7413 = vmatprep.subr.mxu0 0.0
    %7414 = vmatpush1.msra.mxu0 0.0
    %7415 = vmatprep.subr.mxu0 0.0
    %7416 = vmatpush1.msra.mxu0 0.0
    %7417 = vmatprep.subr.mxu0 0.0
    %7418 = vmatpush1.msra.mxu0 0.0
    %7419 = vmatprep.subr.mxu0 0.0
    %7420 = vmatpush1.msra.mxu0 0.0
    %7421 = vmatprep.subr.mxu0 0.0
    %7422 = vmatpush1.msra.mxu0 0.0
    %7423 = vmatprep.subr.mxu0 0.0
    %7424 = vmatpush1.msra.mxu0 0.0
    %7425 = vmatprep.subr.mxu0 0.0
    %7426 = vmatpush1.msra.mxu0 0.0
    %7427 = vmatprep.subr.mxu0 0.0
    %7428 = vmatpush1.msra.mxu0 0.0
    %7429 = vmatprep.subr.mxu0 0.0
    %7430 = vmatpush1.msra.mxu0 0.0
    %7431 = vmatprep.subr.mxu0 0.0
    %7432 = vmatpush1.msra.mxu0 0.0
    %7433 = vmatprep.mubr.f32.mxu0 0.0
    %7434 = vmatmul.mubr.f32.gmra.mrb[0].mxu0 %v7367
    %v7435 = vpop.f32.mrb[0].mxu0
    %v7436 = vadd.f32 0.0, %v7435
    %v7437 = vpop.f32.mrb[0].mxu0
    %7438 = vdwg.mxu0
    %s7439 = scalar_lea.vmem [#allocation25], 56
    %7440 = vst.msk [vmem:[%s7439] sm:$0xff] %vm2308, %v7359
    %7442 = vrot.lane.b32.xlu0 %v7084, 32
    %v7443 = vpop.permute.xlu0 %7442
    %7446 = vrot.lane.b32.xlu0 %v7260, 64
    %v7447 = vpop.permute.xlu0 %7446
    %7450 = vrot.lane.b32.xlu0 %v7436, 96
    %v7451 = vpop.permute.xlu0 %7450
    %v7453 = vsel %vm486, %v6906, %v7443
    %v7454 = vsel %vm1165, %v7453, %v7447
    %v7455 = vsel %vm1167, %v7454, %v7451
    %s7456 = scalar_lea.vmem [#allocation8], 128
    %v7457 = vld [vmem:[%s7456] sm:$0xff]
    %v7458 = vld [vmem:[%s7456 + $0x8] sm:$0xff]
    %v7459 = vld [vmem:[%s7456 + $0x10] sm:$0xff]
    %v7460 = vld [vmem:[%s7456 + $0x18] sm:$0xff]
    %v7461 = vld [vmem:[%s7456 + $0x20] sm:$0xff]
    %v7462 = vld [vmem:[%s7456 + $0x28] sm:$0xff]
    %v7463 = vld [vmem:[%s7456 + $0x30] sm:$0xff]
    %v7464 = vld [vmem:[%s7456 + $0x38] sm:$0xff]
    %v7465 = vld [vmem:[%s7456 + $0x40] sm:$0xff]
    %v7466 = vld [vmem:[%s7456 + $0x48] sm:$0xff]
    %v7467 = vld [vmem:[%s7456 + $0x50] sm:$0xff]
    %v7468 = vld [vmem:[%s7456 + $0x58] sm:$0xff]
    %v7469 = vld [vmem:[%s7456 + $0x60] sm:$0xff]
    %v7470 = vld [vmem:[%s7456 + $0x68] sm:$0xff]
    %v7471 = vld [vmem:[%s7456 + $0x70] sm:$0xff]
    %v7472 = vld [vmem:[%s7456 + $0x78] sm:$0xff]
    %s7473 = scalar_lea.vmem %s13, 1
    %v7474 = vld [vmem:[%s7473] sm:$0x1]
    %v7476 = vlaneseq
    %v7477 = vshrl.u32 %v7476, 7
    %v7478 = vsub.s32 0, %v7477
    %v7479 = vrot.slane %v7474, %v7478
    %7481 = vmatprep.subr.mxu0 0.0
    %7482 = vmatpush1.msra.mxu0 %v7457
    %7483 = vmatprep.subr.mxu0 0.0
    %7484 = vmatpush1.msra.mxu0 %v7458
    %7485 = vmatprep.subr.mxu0 0.0
    %7486 = vmatpush1.msra.mxu0 %v7459
    %7487 = vmatprep.subr.mxu0 0.0
    %7488 = vmatpush1.msra.mxu0 %v7460
    %7489 = vmatprep.subr.mxu0 0.0
    %7490 = vmatpush1.msra.mxu0 %v7461
    %7491 = vmatprep.subr.mxu0 0.0
    %7492 = vmatpush1.msra.mxu0 %v7462
    %7493 = vmatprep.subr.mxu0 0.0
    %7494 = vmatpush1.msra.mxu0 %v7463
    %7495 = vmatprep.subr.mxu0 0.0
    %7496 = vmatpush1.msra.mxu0 %v7464
    %7497 = vmatprep.subr.mxu0 0.0
    %7498 = vmatpush1.msra.mxu0 %v7465
    %7499 = vmatprep.subr.mxu0 0.0
    %7500 = vmatpush1.msra.mxu0 %v7466
    %7501 = vmatprep.subr.mxu0 0.0
    %7502 = vmatpush1.msra.mxu0 %v7467
    %7503 = vmatprep.subr.mxu0 0.0
    %7504 = vmatpush1.msra.mxu0 %v7468
    %7505 = vmatprep.subr.mxu0 0.0
    %7506 = vmatpush1.msra.mxu0 %v7469
    %7507 = vmatprep.subr.mxu0 0.0
    %7508 = vmatpush1.msra.mxu0 %v7470
    %7509 = vmatprep.subr.mxu0 0.0
    %7510 = vmatpush1.msra.mxu0 %v7471
    %7511 = vmatprep.subr.mxu0 0.0
    %7512 = vmatpush1.msra.mxu0 %v7472
    %7513 = vmatprep.subr.mxu0 0.0
    %7514 = vmatpush1.msra.mxu0 0.0
    %7515 = vmatprep.subr.mxu0 0.0
    %7516 = vmatpush1.msra.mxu0 0.0
    %7517 = vmatprep.subr.mxu0 0.0
    %7518 = vmatpush1.msra.mxu0 0.0
    %7519 = vmatprep.subr.mxu0 0.0
    %7520 = vmatpush1.msra.mxu0 0.0
    %7521 = vmatprep.subr.mxu0 0.0
    %7522 = vmatpush1.msra.mxu0 0.0
    %7523 = vmatprep.subr.mxu0 0.0
    %7524 = vmatpush1.msra.mxu0 0.0
    %7525 = vmatprep.subr.mxu0 0.0
    %7526 = vmatpush1.msra.mxu0 0.0
    %7527 = vmatprep.subr.mxu0 0.0
    %7528 = vmatpush1.msra.mxu0 0.0
    %7529 = vmatprep.subr.mxu0 0.0
    %7530 = vmatpush1.msra.mxu0 0.0
    %7531 = vmatprep.subr.mxu0 0.0
    %7532 = vmatpush1.msra.mxu0 0.0
    %7533 = vmatprep.subr.mxu0 0.0
    %7534 = vmatpush1.msra.mxu0 0.0
    %7535 = vmatprep.subr.mxu0 0.0
    %7536 = vmatpush1.msra.mxu0 0.0
    %7537 = vmatprep.subr.mxu0 0.0
    %7538 = vmatpush1.msra.mxu0 0.0
    %7539 = vmatprep.subr.mxu0 0.0
    %7540 = vmatpush1.msra.mxu0 0.0
    %7541 = vmatprep.subr.mxu0 0.0
    %7542 = vmatpush1.msra.mxu0 0.0
    %7543 = vmatprep.subr.mxu0 0.0
    %7544 = vmatpush1.msra.mxu0 0.0
    %7545 = vmatprep.mubr.f32.mxu0 0.0
    %7546 = vmatmul.mubr.f32.gmra.mrb[0].mxu0 %v6743
    %v7547 = vpop.f32.mrb[0].mxu0
    %v7548 = vadd.f32 %v7479, %v7547
    %v7549 = vpop.f32.mrb[0].mxu0
    %7550 = vmatprep.mubr.f32.mxu0 0.0
    %7551 = vmatmul.mubr.f32.gmra.mrb[0].mxu0 %v7455
    %v7552 = vpop.f32.mrb[0].mxu0
    %v7553 = vadd.f32 %v7479, %v7552
    %v7554 = vpop.f32.mrb[0].mxu0
    %7555 = vdwg.mxu0
    %v7556 = vadd.f32 %v5796, %v7548
    %v7557 = vadd.f32 %v5797, %v7553
    %s7558 = scalar_lea.vmem [#allocation16], 1
    %v7559 = vld [vmem:[%s7558] sm:$0x1]
    %s7560 = scalar_lea.vmem [#allocation17], 1
    %v7561 = vld [vmem:[%s7560] sm:$0x1]
    %7562 = vadd.xlane.f32.xlu0 %v7556
    %v7563 = vpop.xlane.xlu0 %7562
    %7564 = vadd.xlane.f32.xlu0 %v7557
    %v7565 = vpop.xlane.xlu0 %7564
    %v7566 = vmul.f32 %v7563, %v1954
    %v7567 = vmul.f32 %v7565, %v1954
    %v7568 = vsub.f32 %v7556, %v7566
    %v7569 = vsub.f32 %v7557, %v7567
    %v7570 = vmul.f32 %v7568, %v7568
    %v7571 = vmul.f32 %v7569, %v7569
    %7572 = vadd.xlane.f32.xlu0 %v7570
    %v7573 = vpop.xlane.xlu0 %7572
    %7574 = vadd.xlane.f32.xlu0 %v7571
    %v7575 = vpop.xlane.xlu0 %7574
    %v7576 = vmul.f32 %v7573, %v1954
    %v7577 = vmul.f32 %v7575, %v1954
    %v7578 = vadd.f32 %v7576, 1e-05
    %v7579 = vadd.f32 %v7577, 1e-05
    %v7580 = vrsqrt.pop %v7578
    %v7581 = vrsqrt.pop %v7579
    %v7582 = vmul.f32 %v7568, %v7580
    %v7583 = vmul.f32 %v7569, %v7581
    %v7585 = vlaneseq
    %v7586 = vshrl.u32 %v7585, 7
    %v7587 = vsub.s32 0, %v7586
    %v7588 = vrot.slane %v7559, %v7587
    %v7590 = vmul.f32 %v7582, %v7588
    %v7591 = vmul.f32 %v7583, %v7588
    %v7593 = vlaneseq
    %v7594 = vshrl.u32 %v7593, 7
    %v7595 = vsub.s32 0, %v7594
    %v7596 = vrot.slane %v7561, %v7595
    %v7598 = vadd.f32 %v7590, %v7596
    %v7599 = vadd.f32 %v7591, %v7596
    %s7600 = scalar_lea.vmem [#allocation10], 256
    %v7601 = vld [vmem:[%s7600] sm:$0xff]
    %v7602 = vld [vmem:[%s7600 + $0x8] sm:$0xff]
    %v7603 = vld [vmem:[%s7600 + $0x10] sm:$0xff]
    %v7604 = vld [vmem:[%s7600 + $0x18] sm:$0xff]
    %v7605 = vld [vmem:[%s7600 + $0x20] sm:$0xff]
    %v7606 = vld [vmem:[%s7600 + $0x28] sm:$0xff]
    %v7607 = vld [vmem:[%s7600 + $0x30] sm:$0xff]
    %v7608 = vld [vmem:[%s7600 + $0x38] sm:$0xff]
    %v7609 = vld [vmem:[%s7600 + $0x40] sm:$0xff]
    %v7610 = vld [vmem:[%s7600 + $0x48] sm:$0xff]
    %v7611 = vld [vmem:[%s7600 + $0x50] sm:$0xff]
    %v7612 = vld [vmem:[%s7600 + $0x58] sm:$0xff]
    %v7613 = vld [vmem:[%s7600 + $0x60] sm:$0xff]
    %v7614 = vld [vmem:[%s7600 + $0x68] sm:$0xff]
    %v7615 = vld [vmem:[%s7600 + $0x70] sm:$0xff]
    %v7616 = vld [vmem:[%s7600 + $0x78] sm:$0xff]
    %v7617 = vld [vmem:[%s7600 + $0x80] sm:$0xff]
    %v7618 = vld [vmem:[%s7600 + $0x88] sm:$0xff]
    %v7619 = vld [vmem:[%s7600 + $0x90] sm:$0xff]
    %v7620 = vld [vmem:[%s7600 + $0x98] sm:$0xff]
    %v7621 = vld [vmem:[%s7600 + $0xa0] sm:$0xff]
    %v7622 = vld [vmem:[%s7600 + $0xa8] sm:$0xff]
    %v7623 = vld [vmem:[%s7600 + $0xb0] sm:$0xff]
    %v7624 = vld [vmem:[%s7600 + $0xb8] sm:$0xff]
    %v7625 = vld [vmem:[%s7600 + $0xc0] sm:$0xff]
    %v7626 = vld [vmem:[%s7600 + $0xc8] sm:$0xff]
    %v7627 = vld [vmem:[%s7600 + $0xd0] sm:$0xff]
    %v7628 = vld [vmem:[%s7600 + $0xd8] sm:$0xff]
    %v7629 = vld [vmem:[%s7600 + $0xe0] sm:$0xff]
    %v7630 = vld [vmem:[%s7600 + $0xe8] sm:$0xff]
    %v7631 = vld [vmem:[%s7600 + $0xf0] sm:$0xff]
    %v7632 = vld [vmem:[%s7600 + $0xf8] sm:$0xff]
    %s7633 = scalar_lea.vmem %s15, 2
    %v7634 = vld [vmem:[%s7633] sm:$0x3]
    %v7636 = vlaneseq
    %v7637 = vshrl.u32 %v7636, 7
    %v7638 = vsub.s32 0, %v7637
    %v7639 = vrot.slane %v7634, %v7638
    %v7640 = vlaneseq
    %v7641 = vshrl.u32 %v7640, 7
    %v7642 = vsub.s32 1, %v7641
    %v7643 = vrot.slane %v7634, %v7642
    %7646 = vmatprep.subr.mxu0 %v7602
    %7647 = vmatpush1.msra.mxu0 %v7601
    %7648 = vmatprep.subr.mxu0 %v7604
    %7649 = vmatpush1.msra.mxu0 %v7603
    %7650 = vmatprep.subr.mxu0 %v7606
    %7651 = vmatpush1.msra.mxu0 %v7605
    %7652 = vmatprep.subr.mxu0 %v7608
    %7653 = vmatpush1.msra.mxu0 %v7607
    %7654 = vmatprep.subr.mxu0 %v7610
    %7655 = vmatpush1.msra.mxu0 %v7609
    %7656 = vmatprep.subr.mxu0 %v7612
    %7657 = vmatpush1.msra.mxu0 %v7611
    %7658 = vmatprep.subr.mxu0 %v7614
    %7659 = vmatpush1.msra.mxu0 %v7613
    %7660 = vmatprep.subr.mxu0 %v7616
    %7661 = vmatpush1.msra.mxu0 %v7615
    %7662 = vmatprep.subr.mxu0 %v7618
    %7663 = vmatpush1.msra.mxu0 %v7617
    %7664 = vmatprep.subr.mxu0 %v7620
    %7665 = vmatpush1.msra.mxu0 %v7619
    %7666 = vmatprep.subr.mxu0 %v7622
    %7667 = vmatpush1.msra.mxu0 %v7621
    %7668 = vmatprep.subr.mxu0 %v7624
    %7669 = vmatpush1.msra.mxu0 %v7623
    %7670 = vmatprep.subr.mxu0 %v7626
    %7671 = vmatpush1.msra.mxu0 %v7625
    %7672 = vmatprep.subr.mxu0 %v7628
    %7673 = vmatpush1.msra.mxu0 %v7627
    %7674 = vmatprep.subr.mxu0 %v7630
    %7675 = vmatpush1.msra.mxu0 %v7629
    %7676 = vmatprep.subr.mxu0 %v7632
    %7677 = vmatpush1.msra.mxu0 %v7631
    %7678 = vmatprep.subr.mxu0 0.0
    %7679 = vmatpush1.msra.mxu0 0.0
    %7680 = vmatprep.subr.mxu0 0.0
    %7681 = vmatpush1.msra.mxu0 0.0
    %7682 = vmatprep.subr.mxu0 0.0
    %7683 = vmatpush1.msra.mxu0 0.0
    %7684 = vmatprep.subr.mxu0 0.0
    %7685 = vmatpush1.msra.mxu0 0.0
    %7686 = vmatprep.subr.mxu0 0.0
    %7687 = vmatpush1.msra.mxu0 0.0
    %7688 = vmatprep.subr.mxu0 0.0
    %7689 = vmatpush1.msra.mxu0 0.0
    %7690 = vmatprep.subr.mxu0 0.0
    %7691 = vmatpush1.msra.mxu0 0.0
    %7692 = vmatprep.subr.mxu0 0.0
    %7693 = vmatpush1.msra.mxu0 0.0
    %7694 = vmatprep.subr.mxu0 0.0
    %7695 = vmatpush1.msra.mxu0 0.0
    %7696 = vmatprep.subr.mxu0 0.0
    %7697 = vmatpush1.msra.mxu0 0.0
    %7698 = vmatprep.subr.mxu0 0.0
    %7699 = vmatpush1.msra.mxu0 0.0
    %7700 = vmatprep.subr.mxu0 0.0
    %7701 = vmatpush1.msra.mxu0 0.0
    %7702 = vmatprep.subr.mxu0 0.0
    %7703 = vmatpush1.msra.mxu0 0.0
    %7704 = vmatprep.subr.mxu0 0.0
    %7705 = vmatpush1.msra.mxu0 0.0
    %7706 = vmatprep.subr.mxu0 0.0
    %7707 = vmatpush1.msra.mxu0 0.0
    %7708 = vmatprep.subr.mxu0 0.0
    %7709 = vmatpush1.msra.mxu0 0.0
    %7710 = vmatprep.mubr.f32.mxu0 0.0
    %7711 = vmatmul.mubr.f32.gmra.mrb[0].mxu0 %v7598
    %v7712 = vpop.f32.mrb[0].mxu0
    %v7713 = vadd.f32 %v7639, %v7712
    %v7714 = vpop.f32.mrb[0].mxu0
    %v7715 = vadd.f32 %v7643, %v7714
    %7716 = vmatprep.mubr.f32.mxu0 0.0
    %7717 = vmatmul.mubr.f32.gmra.mrb[0].mxu0 %v7599
    %v7718 = vpop.f32.mrb[0].mxu0
    %v7719 = vadd.f32 %v7639, %v7718
    %v7720 = vpop.f32.mrb[0].mxu0
    %v7721 = vadd.f32 %v7643, %v7720
    %7722 = vdwg.mxu0
    %v7723 = vmax.f32 %v7713, 0.0
    %v7724 = vmax.f32 %v7715, 0.0
    %v7725 = vmax.f32 %v7719, 0.0
    %v7726 = vmax.f32 %v7721, 0.0
    %s7727 = scalar_lea.vmem [#allocation11], 256
    %v7728 = vld [vmem:[%s7727] sm:$0xff]
    %v7729 = vld [vmem:[%s7727 + $0x8] sm:$0xff]
    %v7730 = vld [vmem:[%s7727 + $0x10] sm:$0xff]
    %v7731 = vld [vmem:[%s7727 + $0x18] sm:$0xff]
    %v7732 = vld [vmem:[%s7727 + $0x20] sm:$0xff]
    %v7733 = vld [vmem:[%s7727 + $0x28] sm:$0xff]
    %v7734 = vld [vmem:[%s7727 + $0x30] sm:$0xff]
    %v7735 = vld [vmem:[%s7727 + $0x38] sm:$0xff]
    %v7736 = vld [vmem:[%s7727 + $0x40] sm:$0xff]
    %v7737 = vld [vmem:[%s7727 + $0x48] sm:$0xff]
    %v7738 = vld [vmem:[%s7727 + $0x50] sm:$0xff]
    %v7739 = vld [vmem:[%s7727 + $0x58] sm:$0xff]
    %v7740 = vld [vmem:[%s7727 + $0x60] sm:$0xff]
    %v7741 = vld [vmem:[%s7727 + $0x68] sm:$0xff]
    %v7742 = vld [vmem:[%s7727 + $0x70] sm:$0xff]
    %v7743 = vld [vmem:[%s7727 + $0x78] sm:$0xff]
    %v7744 = vld [vmem:[%s7727 + $0x80] sm:$0xff]
    %v7745 = vld [vmem:[%s7727 + $0x88] sm:$0xff]
    %v7746 = vld [vmem:[%s7727 + $0x90] sm:$0xff]
    %v7747 = vld [vmem:[%s7727 + $0x98] sm:$0xff]
    %v7748 = vld [vmem:[%s7727 + $0xa0] sm:$0xff]
    %v7749 = vld [vmem:[%s7727 + $0xa8] sm:$0xff]
    %v7750 = vld [vmem:[%s7727 + $0xb0] sm:$0xff]
    %v7751 = vld [vmem:[%s7727 + $0xb8] sm:$0xff]
    %v7752 = vld [vmem:[%s7727 + $0xc0] sm:$0xff]
    %v7753 = vld [vmem:[%s7727 + $0xc8] sm:$0xff]
    %v7754 = vld [vmem:[%s7727 + $0xd0] sm:$0xff]
    %v7755 = vld [vmem:[%s7727 + $0xd8] sm:$0xff]
    %v7756 = vld [vmem:[%s7727 + $0xe0] sm:$0xff]
    %v7757 = vld [vmem:[%s7727 + $0xe8] sm:$0xff]
    %v7758 = vld [vmem:[%s7727 + $0xf0] sm:$0xff]
    %v7759 = vld [vmem:[%s7727 + $0xf8] sm:$0xff]
    %s7760 = scalar_lea.vmem %s17, 1
    %v7761 = vld [vmem:[%s7760] sm:$0x1]
    %v7763 = vlaneseq
    %v7764 = vshrl.u32 %v7763, 7
    %v7765 = vsub.s32 0, %v7764
    %v7766 = vrot.slane %v7761, %v7765
    %7768 = vmatprep.subr.mxu0 0.0
    %7769 = vmatpush1.msra.mxu0 %v7728
    %7770 = vmatprep.subr.mxu0 0.0
    %7771 = vmatpush1.msra.mxu0 %v7729
    %7772 = vmatprep.subr.mxu0 0.0
    %7773 = vmatpush1.msra.mxu0 %v7730
    %7774 = vmatprep.subr.mxu0 0.0
    %7775 = vmatpush1.msra.mxu0 %v7731
    %7776 = vmatprep.subr.mxu0 0.0
    %7777 = vmatpush1.msra.mxu0 %v7732
    %7778 = vmatprep.subr.mxu0 0.0
    %7779 = vmatpush1.msra.mxu0 %v7733
    %7780 = vmatprep.subr.mxu0 0.0
    %7781 = vmatpush1.msra.mxu0 %v7734
    %7782 = vmatprep.subr.mxu0 0.0
    %7783 = vmatpush1.msra.mxu0 %v7735
    %7784 = vmatprep.subr.mxu0 0.0
    %7785 = vmatpush1.msra.mxu0 %v7736
    %7786 = vmatprep.subr.mxu0 0.0
    %7787 = vmatpush1.msra.mxu0 %v7737
    %7788 = vmatprep.subr.mxu0 0.0
    %7789 = vmatpush1.msra.mxu0 %v7738
    %7790 = vmatprep.subr.mxu0 0.0
    %7791 = vmatpush1.msra.mxu0 %v7739
    %7792 = vmatprep.subr.mxu0 0.0
    %7793 = vmatpush1.msra.mxu0 %v7740
    %7794 = vmatprep.subr.mxu0 0.0
    %7795 = vmatpush1.msra.mxu0 %v7741
    %7796 = vmatprep.subr.mxu0 0.0
    %7797 = vmatpush1.msra.mxu0 %v7742
    %7798 = vmatprep.subr.mxu0 0.0
    %7799 = vmatpush1.msra.mxu0 %v7743
    %7800 = vmatprep.subr.mxu0 0.0
    %7801 = vmatpush1.msra.mxu0 %v7744
    %7802 = vmatprep.subr.mxu0 0.0
    %7803 = vmatpush1.msra.mxu0 %v7745
    %7804 = vmatprep.subr.mxu0 0.0
    %7805 = vmatpush1.msra.mxu0 %v7746
    %7806 = vmatprep.subr.mxu0 0.0
    %7807 = vmatpush1.msra.mxu0 %v7747
    %7808 = vmatprep.subr.mxu0 0.0
    %7809 = vmatpush1.msra.mxu0 %v7748
    %7810 = vmatprep.subr.mxu0 0.0
    %7811 = vmatpush1.msra.mxu0 %v7749
    %7812 = vmatprep.subr.mxu0 0.0
    %7813 = vmatpush1.msra.mxu0 %v7750
    %7814 = vmatprep.subr.mxu0 0.0
    %7815 = vmatpush1.msra.mxu0 %v7751
    %7816 = vmatprep.subr.mxu0 0.0
    %7817 = vmatpush1.msra.mxu0 %v7752
    %7818 = vmatprep.subr.mxu0 0.0
    %7819 = vmatpush1.msra.mxu0 %v7753
    %7820 = vmatprep.subr.mxu0 0.0
    %7821 = vmatpush1.msra.mxu0 %v7754
    %7822 = vmatprep.subr.mxu0 0.0
    %7823 = vmatpush1.msra.mxu0 %v7755
    %7824 = vmatprep.subr.mxu0 0.0
    %7825 = vmatpush1.msra.mxu0 %v7756
    %7826 = vmatprep.subr.mxu0 0.0
    %7827 = vmatpush1.msra.mxu0 %v7757
    %7828 = vmatprep.subr.mxu0 0.0
    %7829 = vmatpush1.msra.mxu0 %v7758
    %7830 = vmatprep.subr.mxu0 0.0
    %7831 = vmatpush1.msra.mxu0 %v7759
    %7832 = vmatprep.mubr.f32.mxu0 %v7724
    %7833 = vmatmul.mubr.f32.gmra.mrb[0].mxu0 %v7723
    %v7834 = vpop.f32.mrb[0].mxu0
    %v7835 = vadd.f32 %v7766, %v7834
    %v7836 = vpop.f32.mrb[0].mxu0
    %7837 = vmatprep.mubr.f32.mxu0 %v7726
    %7838 = vmatmul.mubr.f32.gmra.mrb[0].mxu0 %v7725
    %v7839 = vpop.f32.mrb[0].mxu0
    %v7840 = vadd.f32 %v7766, %v7839
    %v7841 = vpop.f32.mrb[0].mxu0
    %7842 = vdwg.mxu0
    %v7843 = vadd.f32 %v7598, %v7835
    %v7844 = vadd.f32 %v7599, %v7840
    %s7845 = scalar_lea.vmem [#allocation19], 1
    %v7846 = vld [vmem:[%s7845] sm:$0x1]
    %s7847 = scalar_lea.vmem [#allocation20], 1
    %v7848 = vld [vmem:[%s7847] sm:$0x1]
    %7849 = vadd.xlane.f32.xlu0 %v7843
    %v7850 = vpop.xlane.xlu0 %7849
    %7851 = vadd.xlane.f32.xlu0 %v7844
    %v7852 = vpop.xlane.xlu0 %7851
    %v7853 = vmul.f32 %v7850, %v1954
    %v7854 = vmul.f32 %v7852, %v1954
    %v7855 = vsub.f32 %v7843, %v7853
    %v7856 = vsub.f32 %v7844, %v7854
    %v7857 = vmul.f32 %v7855, %v7855
    %v7858 = vmul.f32 %v7856, %v7856
    %7859 = vadd.xlane.f32.xlu0 %v7857
    %v7860 = vpop.xlane.xlu0 %7859
    %7861 = vadd.xlane.f32.xlu0 %v7858
    %v7862 = vpop.xlane.xlu0 %7861
    %v7863 = vmul.f32 %v7860, %v1954
    %v7864 = vmul.f32 %v7862, %v1954
    %v7865 = vadd.f32 %v7863, 1e-05
    %v7866 = vadd.f32 %v7864, 1e-05
    %v7867 = vrsqrt.pop %v7865
    %v7868 = vrsqrt.pop %v7866
    %v7869 = vmul.f32 %v7855, %v7867
    %v7870 = vmul.f32 %v7856, %v7868
    %v7872 = vlaneseq
    %v7873 = vshrl.u32 %v7872, 7
    %v7874 = vsub.s32 0, %v7873
    %v7875 = vrot.slane %v7846, %v7874
    %v7877 = vmul.f32 %v7869, %v7875
    %v7878 = vmul.f32 %v7870, %v7875
    %v7880 = vlaneseq
    %v7881 = vshrl.u32 %v7880, 7
    %v7882 = vsub.s32 0, %v7881
    %v7883 = vrot.slane %v7848, %v7882
    %v7885 = vadd.f32 %v7877, %v7883
    %v7886 = vadd.f32 %v7878, %v7883
    %v7887 = vld [vmem:[%s24] sm:$0xff]
    %v7888 = vld [vmem:[%s24 + $0x8] sm:$0xff]
    %v7889 = vld [vmem:[%s24 + $0x10] sm:$0xff]
    %v7890 = vld [vmem:[%s24 + $0x18] sm:$0xff]
    %v7891 = vld [vmem:[%s24 + $0x20] sm:$0xff]
    %v7892 = vld [vmem:[%s24 + $0x28] sm:$0xff]
    %v7893 = vld [vmem:[%s24 + $0x30] sm:$0xff]
    %v7894 = vld [vmem:[%s24 + $0x38] sm:$0xff]
    %v7895 = vld [vmem:[%s24 + $0x40] sm:$0xff]
    %v7896 = vld [vmem:[%s24 + $0x48] sm:$0xff]
    %v7897 = vld [vmem:[%s24 + $0x50] sm:$0xff]
    %v7898 = vld [vmem:[%s24 + $0x58] sm:$0xff]
    %v7899 = vld [vmem:[%s24 + $0x60] sm:$0xff]
    %v7900 = vld [vmem:[%s24 + $0x68] sm:$0xff]
    %v7901 = vld [vmem:[%s24 + $0x70] sm:$0xff]
    %v7902 = vld [vmem:[%s24 + $0x78] sm:$0xff]
    %v7903 = vld [vmem:[%s25] sm:$0x1]
    %v7905 = vlaneseq
    %v7906 = vshrl.u32 %v7905, 7
    %v7907 = vsub.s32 0, %v7906
    %v7908 = vrot.slane %v7903, %v7907
    %7910 = vmatprep.subr.mxu0 0.0
    %7911 = vmatpush1.msra.mxu0 %v7887
    %7912 = vmatprep.subr.mxu0 0.0
    %7913 = vmatpush1.msra.mxu0 %v7888
    %7914 = vmatprep.subr.mxu0 0.0
    %7915 = vmatpush1.msra.mxu0 %v7889
    %7916 = vmatprep.subr.mxu0 0.0
    %7917 = vmatpush1.msra.mxu0 %v7890
    %7918 = vmatprep.subr.mxu0 0.0
    %7919 = vmatpush1.msra.mxu0 %v7891
    %7920 = vmatprep.subr.mxu0 0.0
    %7921 = vmatpush1.msra.mxu0 %v7892
    %7922 = vmatprep.subr.mxu0 0.0
    %7923 = vmatpush1.msra.mxu0 %v7893
    %7924 = vmatprep.subr.mxu0 0.0
    %7925 = vmatpush1.msra.mxu0 %v7894
    %7926 = vmatprep.subr.mxu0 0.0
    %7927 = vmatpush1.msra.mxu0 %v7895
    %7928 = vmatprep.subr.mxu0 0.0
    %7929 = vmatpush1.msra.mxu0 %v7896
    %7930 = vmatprep.subr.mxu0 0.0
    %7931 = vmatpush1.msra.mxu0 %v7897
    %7932 = vmatprep.subr.mxu0 0.0
    %7933 = vmatpush1.msra.mxu0 %v7898
    %7934 = vmatprep.subr.mxu0 0.0
    %7935 = vmatpush1.msra.mxu0 %v7899
    %7936 = vmatprep.subr.mxu0 0.0
    %7937 = vmatpush1.msra.mxu0 %v7900
    %7938 = vmatprep.subr.mxu0 0.0
    %7939 = vmatpush1.msra.mxu0 %v7901
    %7940 = vmatprep.subr.mxu0 0.0
    %7941 = vmatpush1.msra.mxu0 %v7902
    %7942 = vmatprep.subr.mxu0 0.0
    %7943 = vmatpush1.msra.mxu0 0.0
    %7944 = vmatprep.subr.mxu0 0.0
    %7945 = vmatpush1.msra.mxu0 0.0
    %7946 = vmatprep.subr.mxu0 0.0
    %7947 = vmatpush1.msra.mxu0 0.0
    %7948 = vmatprep.subr.mxu0 0.0
    %7949 = vmatpush1.msra.mxu0 0.0
    %7950 = vmatprep.subr.mxu0 0.0
    %7951 = vmatpush1.msra.mxu0 0.0
    %7952 = vmatprep.subr.mxu0 0.0
    %7953 = vmatpush1.msra.mxu0 0.0
    %7954 = vmatprep.subr.mxu0 0.0
    %7955 = vmatpush1.msra.mxu0 0.0
    %7956 = vmatprep.subr.mxu0 0.0
    %7957 = vmatpush1.msra.mxu0 0.0
    %7958 = vmatprep.subr.mxu0 0.0
    %7959 = vmatpush1.msra.mxu0 0.0
    %7960 = vmatprep.subr.mxu0 0.0
    %7961 = vmatpush1.msra.mxu0 0.0
    %7962 = vmatprep.subr.mxu0 0.0
    %7963 = vmatpush1.msra.mxu0 0.0
    %7964 = vmatprep.subr.mxu0 0.0
    %7965 = vmatpush1.msra.mxu0 0.0
    %7966 = vmatprep.subr.mxu0 0.0
    %7967 = vmatpush1.msra.mxu0 0.0
    %7968 = vmatprep.subr.mxu0 0.0
    %7969 = vmatpush1.msra.mxu0 0.0
    %7970 = vmatprep.subr.mxu0 0.0
    %7971 = vmatpush1.msra.mxu0 0.0
    %7972 = vmatprep.subr.mxu0 0.0
    %7973 = vmatpush1.msra.mxu0 0.0
    %7974 = vmatprep.mubr.f32.mxu0 0.0
    %7975 = vmatmul.mubr.f32.gmra.mrb[0].mxu0 %v7885
    %v7976 = vpop.f32.mrb[0].mxu0
    %v7977 = vadd.f32 %v7908, %v7976
    %v7978 = vpop.f32.mrb[0].mxu0
    %7979 = vmatprep.mubr.f32.mxu0 0.0
    %7980 = vmatmul.mubr.f32.gmra.mrb[0].mxu0 %v7886
    %v7981 = vpop.f32.mrb[0].mxu0
    %v7982 = vadd.f32 %v7908, %v7981
    %v7983 = vpop.f32.mrb[0].mxu0
    %7984 = vdwg.mxu0
    %7985 = vst [vmem:[#allocation22] sm:$0xff] %v7977
    %7986 = vst [vmem:[#allocation22 + $0x8] sm:$0xff] %v7982
    // Predicated region
    $region154: #{transformer_decoder.1} parent=1 // pred_check
      _
    $region155: #{transformer_decoder.1} parent=1 // pred_check_branch
      %7988 = sbr.rel (0) target = $region157
    $region156: #{transformer_decoder.1} parent=1 // pred_region
      %s7990 = ssub.s32 256, 256
      %7991 = vsyncadd [#allocation4], %s7990
      %s7992 = sshll.u32 [#allocation22], 4
      %s7993 = int_to_ptr.vmem [resolvable:$true] %s7992
      %7998 = dma.vmem_to_hbm [thread:$0]  %s7993, 256, %s26, [#allocation4], 128, 128, 8
    $region157: #{transformer_decoder.1} parent=1 // pred_fallthru
      _
    // Predicated region
    $region158: #{transformer_decoder.1} parent=1 // pred_check
      _
    $region159: #{transformer_decoder.1} parent=1 // pred_check_branch
      %8000 = sbr.rel (0) target = $region161
    $region160: #{transformer_decoder.1} parent=1 // pred_region
      %s8002 = ssub.s32 1024, 1024
      %8003 = vsyncadd [#allocation24], %s8002
      %s8004 = sshll.u32 [#allocation23], 4
      %s8005 = int_to_ptr.vmem [resolvable:$true] %s8004
      %8010 = dma.vmem_to_hbm [thread:$0]  %s8005, 1024, %s27, [#allocation24], 128, 128, 8
    $region161: #{transformer_decoder.1} parent=1 // pred_fallthru
      _
    // Predicated region
    $region162: #{transformer_decoder.1} parent=1 // pred_check
      _
    $region163: #{transformer_decoder.1} parent=1 // pred_check_branch
      %8012 = sbr.rel (0) target = $region165
    $region164: #{transformer_decoder.1} parent=1 // pred_region
      %s8014 = ssub.s32 1024, 1024
      %8015 = vsyncadd [#allocation24], %s8014
      %s8016 = sshll.u32 [#allocation25], 4
      %s8017 = int_to_ptr.vmem [resolvable:$true] %s8016
      %8022 = dma.vmem_to_hbm [thread:$0]  %s8017, 1024, %s28, [#allocation24], 128, 128, 8
    $region165: #{transformer_decoder.1} parent=1 // pred_fallthru
      _
    // Predicated region
    $region166: #{transformer_decoder.1} parent=1 // pred_check
      _
    $region167: #{transformer_decoder.1} parent=1 // pred_check_branch
      %8024 = sbr.rel (0) target = $region169
    $region168: #{transformer_decoder.1} parent=1 // pred_region
      %8025 = dma.done [#allocation4], 256
    $region169: #{transformer_decoder.1} parent=1 // pred_fallthru
      _
    // Predicated region
    $region170: #{transformer_decoder.1} parent=1 // pred_check
      _
    $region171: #{transformer_decoder.1} parent=1 // pred_check_branch
      %8027 = sbr.rel (0) target = $region173
    $region172: #{transformer_decoder.1} parent=1 // pred_region
      %8028 = dma.done [#allocation24], 1024
    $region173: #{transformer_decoder.1} parent=1 // pred_fallthru
      _
    // Predicated region
    $region174: #{transformer_decoder.1} parent=1 // pred_check
      _
    $region175: #{transformer_decoder.1} parent=1 // pred_check_branch
      %8030 = sbr.rel (0) target = $region177
    $region176: #{transformer_decoder.1} parent=1 // pred_region
      %8031 = dma.done [#allocation24], 1024
    $region177: #{transformer_decoder.1} parent=1 // pred_fallthru
      _
    %8032 = vsyncpa [#allocation3], 1
    %8033 = vsyncpa [#allocation6], 1
    %8034 = vsyncpa [#allocation9], 1
    %8035 = vsyncpa [#allocation12], 1
    %8036 = vsyncpa [#allocation15], 1
    %8037 = vsyncpa [#allocation18], 1
    %8038 = vsyncpa [#allocation21], 1
    %8039 = vsyncpa [#allocation4], 1
    %8040 = vsyncpa [#allocation24], 1

</llo_original>
